<compile_context>
chip_gen: v5e
topology: v5e:2x2
jax: 0.10.0
libtpu: 0.0.40
codegen_flags: <defaults>
</compile_context>

<pallas_src>
import functools
import math

import jax
import jax.numpy as jnp
from jax.experimental import pallas as pl
from jax.experimental.pallas import tpu as pltpu


# ----------------------------------------------------------------------------
# Pallas kernels
# ----------------------------------------------------------------------------
def _matmul_bias_kernel(x_ref, w_ref, b_ref, out_ref, acc_ref):
    """Tiled bf16 matmul with f32 accumulation; adds bias in the epilogue."""
    k = pl.program_id(2)

    @pl.when(k == 0)
    def _():
        acc_ref[...] = jnp.zeros_like(acc_ref)

    acc_ref[...] += jnp.dot(x_ref[...], w_ref[...],
                            preferred_element_type=jnp.float32)

    @pl.when(k == pl.num_programs(2) - 1)
    def _():
        out_ref[...] = acc_ref[...] + b_ref[...]


def _bn_stats_kernel(pre_ref, s_ref, ss_ref):
    """Accumulate per-channel sum and sum-of-squares across M tiles."""
    m = pl.program_id(0)

    @pl.when(m == 0)
    def _():
        s_ref[...] = jnp.zeros_like(s_ref)
        ss_ref[...] = jnp.zeros_like(ss_ref)

    x = pre_ref[...]
    s_ref[...] += jnp.sum(x, axis=0, keepdims=True)
    ss_ref[...] += jnp.sum(x * x, axis=0, keepdims=True)


def _bn_lif_core(pre, s, ss, gamma, beta, mem, *, inv_m, inv_thr,
                 threshold, leak, eps):
    """Shared BN (training-mode, global stats) + LIF math. Returns spike/mem."""
    mean = s * inv_m
    var = jnp.maximum(ss * inv_m - mean * mean, 0.0)     # biased var (PyTorch)
    scale = gamma * jax.lax.rsqrt(var + eps)
    shift = beta - mean * scale
    new_mem = leak * mem + pre * scale + shift
    mem_thr = new_mem * inv_thr - 1.0
    spike = jnp.where(mem_thr >= 0.0, 1.0, 0.0)           # Surrogate_BP: ge(0)
    rst = jnp.where(mem_thr > 0.0, threshold, 0.0)        # reset: gt(0)
    return spike, new_mem - rst


def _bn_lif_kernel(pre_ref, s_ref, ss_ref, g_ref, b_ref, mem_ref,
                   spike_ref, memout_ref, *, inv_m, inv_thr,
                   threshold, leak, eps):
    spike, mem_new = _bn_lif_core(
        pre_ref[...], s_ref[...], ss_ref[...], g_ref[...], b_ref[...],
        mem_ref[...], inv_m=inv_m, inv_thr=inv_thr,
        threshold=threshold, leak=leak, eps=eps)
    spike_ref[...] = spike.astype(spike_ref.dtype)
    memout_ref[...] = mem_new


def _bn_lif_res_kernel(pre_ref, s_ref, ss_ref, g_ref, b_ref, mem_ref, res_ref,
                       spike_ref, memout_ref, comb_ref, *, inv_m, inv_thr,
                       threshold, leak, eps):
    spike, mem_new = _bn_lif_core(
        pre_ref[...], s_ref[...], ss_ref[...], g_ref[...], b_ref[...],
        mem_ref[...], inv_m=inv_m, inv_thr=inv_thr,
        threshold=threshold, leak=leak, eps=eps)
    spike_ref[...] = spike.astype(spike_ref.dtype)
    memout_ref[...] = mem_new
    # Fused residual add: next conv's input = this spike + previous spike map.
    comb_ref[...] = (spike + res_ref[...].astype(jnp.float32)
                     ).astype(comb_ref.dtype)


def _bn_lif_fc2_kernel(pre_ref, s_ref, ss_ref, g_ref, b_ref, mem1_ref,
                       w2_ref, b2_ref, mem2_ref, mem1_out_ref, mem2_out_ref,
                       *, inv_m, inv_thr, threshold, leak, eps):
    """FC1 BN+LIF with the fc2 classifier accumulation fused in the epilogue."""
    spike, mem1_new = _bn_lif_core(
        pre_ref[...], s_ref[...], ss_ref[...], g_ref[...], b_ref[...],
        mem1_ref[...], inv_m=inv_m, inv_thr=inv_thr,
        threshold=threshold, leak=leak, eps=eps)
    mem1_out_ref[...] = mem1_new
    mem2_out_ref[...] = (mem2_ref[...] + b2_ref[...] +
                         jnp.dot(spike.astype(w2_ref.dtype), w2_ref[...],
                                 preferred_element_type=jnp.float32))


# ----------------------------------------------------------------------------
# Pallas wrappers
# ----------------------------------------------------------------------------
def _pick_tile(dim, prefs):
    for p in prefs:
        if p <= dim and dim % p == 0:
            return p
    return dim  # full dimension (always a legal block)


def tiled_matmul_bias(x, w, b):
    """pre = x @ w + b; bf16 inputs, f32 output; tiled on (M, N, K)."""
    M, K = x.shape
    K2, N = w.shape
    assert K == K2
    tm = _pick_tile(M, (512, 256, 128, 64, 32, 16, 8))
    tn = _pick_tile(N, (256, 128))
    tk = _pick_tile(K, (512, 384, 256, 128))
    grid = (M // tm, N // tn, K // tk)

    return pl.pallas_call(
        _matmul_bias_kernel,
        out_shape=jax.ShapeDtypeStruct((M, N), jnp.float32),
        grid_spec=pltpu.PrefetchScalarGridSpec(
            num_scalar_prefetch=0,
            grid=grid,
            in_specs=[
                pl.BlockSpec((tm, tk), lambda i, j, k: (i, k)),
                pl.BlockSpec((tk, tn), lambda i, j, k: (k, j)),
                pl.BlockSpec((1, tn), lambda i, j, k: (0, j)),
            ],
            out_specs=pl.BlockSpec((tm, tn), lambda i, j, k: (i, j)),
            scratch_shapes=[pltpu.VMEM((tm, tn), jnp.float32)],
        ),
        compiler_params=pltpu.CompilerParams(
            dimension_semantics=("parallel", "parallel", "arbitrary")),
    )(x, w, b.reshape(1, N))


def bn_batch_stats(pre):
    """Per-channel (sum, sum_sq) over all rows of pre, accumulated over M tiles."""
    M, N = pre.shape
    tm = _pick_tile(M, (512, 256, 128, 64, 32, 16, 8))
    nm = M // tm
    return pl.pallas_call(
        _bn_stats_kernel,
        out_shape=(jax.ShapeDtypeStruct((1, N), jnp.float32),
                   jax.ShapeDtypeStruct((1, N), jnp.float32)),
        grid_spec=pltpu.PrefetchScalarGridSpec(
            num_scalar_prefetch=0,
            grid=(nm,),
            in_specs=[pl.BlockSpec((tm, N), lambda m: (m, 0))],
            out_specs=[pl.BlockSpec((1, N), lambda m: (0, 0)),
                       pl.BlockSpec((1, N), lambda m: (0, 0))],
        ),
        compiler_params=pltpu.CompilerParams(
            dimension_semantics=("arbitrary",)),
    )(pre)


def bn_lif(pre, s, ss, gamma, beta, mem, res=None, *, threshold, leak, eps):
    """BN (global stats) + LIF update, tiled over rows.

    Returns (spike_bf16, mem_new_f32) or, with a residual spike map `res`,
    (spike_bf16, mem_new_f32, (spike + res)_bf16)."""
    M, N = pre.shape
    tm = _pick_tile(M, (512, 256, 128, 64, 32, 16, 8))
    nm = M // tm

    kern_fn = _bn_lif_kernel if res is None else _bn_lif_res_kernel
    kern = functools.partial(kern_fn, inv_m=1.0 / M,
                             inv_thr=1.0 / float(threshold),
                             threshold=float(threshold),
                             leak=float(leak), eps=float(eps))

    in_specs = [
        pl.BlockSpec((tm, N), lambda m: (m, 0)),   # pre-activation
        pl.BlockSpec((1, N), lambda m: (0, 0)),    # sum
        pl.BlockSpec((1, N), lambda m: (0, 0)),    # sum of squares
        pl.BlockSpec((1, N), lambda m: (0, 0)),    # gamma
        pl.BlockSpec((1, N), lambda m: (0, 0)),    # beta
        pl.BlockSpec((tm, N), lambda m: (m, 0)),   # membrane (in, aliased)
    ]
    out_shapes = [jax.ShapeDtypeStruct((M, N), jnp.bfloat16),   # spikes
                  jax.ShapeDtypeStruct((M, N), jnp.float32)]    # membrane (out)
    out_specs = [pl.BlockSpec((tm, N), lambda m: (m, 0)),
                 pl.BlockSpec((tm, N), lambda m: (m, 0))]
    args = [pre, s, ss, gamma.reshape(1, N), beta.reshape(1, N), mem]
    if res is not None:
        in_specs.append(pl.BlockSpec((tm, N), lambda m: (m, 0)))
        out_shapes.append(jax.ShapeDtypeStruct((M, N), jnp.bfloat16))
        out_specs.append(pl.BlockSpec((tm, N), lambda m: (m, 0)))
        args.append(res)

    return pl.pallas_call(
        kern,
        out_shape=tuple(out_shapes),
        grid_spec=pltpu.PrefetchScalarGridSpec(
            num_scalar_prefetch=0,
            grid=(nm,),
            in_specs=in_specs,
            out_specs=out_specs,
        ),
        input_output_aliases={5: 1},   # membrane in <-> membrane out
        compiler_params=pltpu.CompilerParams(
            dimension_semantics=("parallel",)),
    )(*args)


def bn_lif_fc2(pre, s, ss, gamma, beta, mem1, w2, b2, mem2, *,
               threshold, leak, eps):
    """FC1 BN+LIF fused with fc2 accumulation: returns (mem_fc1, mem_fc2)."""
    M, N = pre.shape
    _, NP = w2.shape
    kern = functools.partial(_bn_lif_fc2_kernel, inv_m=1.0 / M,
                             inv_thr=1.0 / float(threshold),
                             threshold=float(threshold),
                             leak=float(leak), eps=float(eps))
    return pl.pallas_call(
        kern,
        out_shape=(jax.ShapeDtypeStruct((M, N), jnp.float32),
                   jax.ShapeDtypeStruct((M, NP), jnp.float32)),
        grid_spec=pltpu.PrefetchScalarGridSpec(
            num_scalar_prefetch=0,
            grid=(1,),
            in_specs=[
                pl.BlockSpec((M, N), lambda i: (0, 0)),    # pre
                pl.BlockSpec((1, N), lambda i: (0, 0)),    # sum
                pl.BlockSpec((1, N), lambda i: (0, 0)),    # sumsq
                pl.BlockSpec((1, N), lambda i: (0, 0)),    # gamma
                pl.BlockSpec((1, N), lambda i: (0, 0)),    # beta
                pl.BlockSpec((M, N), lambda i: (0, 0)),    # mem_fc1 (aliased)
                pl.BlockSpec((N, NP), lambda i: (0, 0)),   # fc2 weight (bf16)
                pl.BlockSpec((1, NP), lambda i: (0, 0)),   # fc2 bias
                pl.BlockSpec((M, NP), lambda i: (0, 0)),   # mem_fc2 (aliased)
            ],
            out_specs=[pl.BlockSpec((M, N), lambda i: (0, 0)),
                       pl.BlockSpec((M, NP), lambda i: (0, 0))],
        ),
        input_output_aliases={5: 0, 8: 1},
        compiler_params=pltpu.CompilerParams(
            dimension_semantics=("arbitrary",)),
    )(pre, s, ss, gamma.reshape(1, N), beta.reshape(1, N), mem1,
      w2, b2.reshape(1, NP), mem2)


# ----------------------------------------------------------------------------
# JAX glue: im2col (bf16), pooling, parameter init
# ----------------------------------------------------------------------------
def im2col_3x3(x_nhwc):
    """(B,H,W,C) -> (B*H*W, 9*C) patches of a 3x3, pad=1, stride=1 conv."""
    B, H, W, C = x_nhwc.shape
    xp = jnp.pad(x_nhwc, ((0, 0), (1, 1), (1, 1), (0, 0)))
    patches = [xp[:, dy:dy + H, dx:dx + W, :]
               for dy in range(3) for dx in range(3)]
    p = jnp.stack(patches, axis=3)                     # (B, H, W, 9, C)
    return p.reshape(B * H * W, 9 * C)


def conv_w_to_matrix(w):
    """PyTorch (Cout, Cin, 3, 3) -> (9*Cin, Cout), row = (ky*3+kx)*Cin + ci."""
    cout, cin = w.shape[0], w.shape[1]
    return jnp.transpose(w, (2, 3, 1, 0)).reshape(9 * cin, cout)


def maxpool2x2(x_nhwc):
    B, H, W, C = x_nhwc.shape
    return x_nhwc.reshape(B, H // 2, 2, W // 2, 2, C).max(axis=(2, 4))


def init_params(key, img_size, num_cls):
    ks = jax.random.split(key, 16)
    p = {}
    chans = [(128, 3), (128, 128), (128, 128), (128, 128),
             (128, 128), (128, 128), (256, 128)]
    for i, (co, ci) in enumerate(chans, start=1):
        n = 3 * 3 * co
        w = jax.random.normal(ks[i], (co, ci, 3, 3), jnp.float32) \
            * math.sqrt(2.0 / n)
        wm = conv_w_to_matrix(w)                       # (9*ci, co)
        if i == 1:                                     # pad contraction to 128
            wm = jnp.pad(wm, ((0, 128 - wm.shape[0]), (0, 0)))
        p[f'conv{i}_w'] = wm.astype(jnp.bfloat16)
        p[f'conv{i}_b'] = jnp.zeros((co,), jnp.float32)
        p[f'bn{i}_gamma'] = jnp.ones((co,), jnp.float32)
        p[f'bn{i}_beta'] = jnp.zeros((co,), jnp.float32)

    hp = img_size // 2
    kfc = hp * hp * 256
    fc1_w_torch = jax.random.normal(ks[8], (kfc, 1024), jnp.float32) * 0.01
    # Pre-permute rows from PyTorch NCHW-flatten order to NHWC-flatten order
    # so the pooled NHWC tensor feeds fc1 without a runtime transpose.
    c = jnp.arange(256)
    y = jnp.arange(hp)
    x = jnp.arange(hp)
    nchw_idx = (c[None, None, :] * (hp * hp)
                + y[:, None, None] * hp
                + x[None, :, None]).reshape(-1)
    p['fc1_w'] = fc1_w_torch[nchw_idx].astype(jnp.bfloat16)
    p['fc1_b'] = jnp.zeros((1024,), jnp.float32)
    p['bnfc_gamma'] = jnp.ones((1024,), jnp.float32)
    p['bnfc_beta'] = jnp.zeros((1024,), jnp.float32)

    NP = 128                                           # fc2 out padded to lane
    fc2_w = jax.random.normal(ks[9], (1024, num_cls), jnp.float32) * 0.01
    p['fc2_w'] = jnp.pad(fc2_w, ((0, 0), (0, NP - num_cls))).astype(jnp.bfloat16)
    p['fc2_b'] = jnp.zeros((NP,), jnp.float32)
    return p


# ----------------------------------------------------------------------------
# Full forward pass (SNN over num_steps timesteps)
# ----------------------------------------------------------------------------
def snn_vgg9_forward(params, x_nchw, *, num_steps, leak_mem=1.0,
                     threshold=1.0, eps=1e-4, num_cls=10):
    B, Cin, H, W = x_nchw.shape
    x = jnp.transpose(x_nchw, (0, 2, 3, 1)).astype(jnp.bfloat16)   # NHWC bf16
    M = B * H * W

    # im2col of the (time-constant) input; contraction padded to 128 lanes.
    cols_in = im2col_3x3(x)                                        # (M, 9*Cin)
    cols_in = jnp.pad(cols_in, ((0, 0), (0, 128 - cols_in.shape[1])))

    n_cout = [128, 128, 128, 128, 128, 128, 256]
    mems = [jnp.zeros((M, c), jnp.float32) for c in n_cout]
    mem_fc1 = jnp.zeros((B, 1024), jnp.float32)
    NP = params['fc2_w'].shape[1]
    mem_fc2 = jnp.zeros((B, NP), jnp.float32)

    def conv_layer(i, cols, mem, res=None):
        pre = tiled_matmul_bias(cols, params[f'conv{i}_w'], params[f'conv{i}_b'])
        s, ss = bn_batch_stats(pre)
        return bn_lif(pre, s, ss, params[f'bn{i}_gamma'], params[f'bn{i}_beta'],
                      mem, res=res, threshold=threshold, leak=leak_mem, eps=eps)

    for _ in range(num_steps):
        s1, mems[0] = conv_layer(1, cols_in, mems[0])
        s2, mems[1], in3 = conv_layer(
            2, im2col_3x3(s1.reshape(B, H, W, 128)), mems[1], res=s1)
        s3, mems[2], in4 = conv_layer(
            3, im2col_3x3(in3.reshape(B, H, W, 128)), mems[2], res=s1)
        s4, mems[3], in5 = conv_layer(
            4, im2col_3x3(in4.reshape(B, H, W, 128)), mems[3], res=s3)
        s5, mems[4], in6 = conv_layer(
            5, im2col_3x3(in5.reshape(B, H, W, 128)), mems[4], res=s4)
        s6, mems[5], in7 = conv_layer(
            6, im2col_3x3(in6.reshape(B, H, W, 128)), mems[5], res=s5)
        s7, mems[6] = conv_layer(
            7, im2col_3x3(in7.reshape(B, H, W, 128)), mems[6])

        pooled = maxpool2x2(s7.reshape(B, H, W, 256))      # (B, H/2, W/2, 256)
        # TODO(synk): dropout(0.2) treated as identity (inference behaviour).
        flat = pooled.reshape(B, -1)                       # NHWC flatten (bf16)

        pre_fc = tiled_matmul_bias(flat, params['fc1_w'], params['fc1_b'])
        sf, ssf = bn_batch_stats(pre_fc)
        mem_fc1, mem_fc2 = bn_lif_fc2(
            pre_fc, sf, ssf, params['bnfc_gamma'], params['bnfc_beta'],
            mem_fc1, params['fc2_w'], params['fc2_b'], mem_fc2,
            threshold=threshold, leak=leak_mem, eps=eps)

    return mem_fc2[:, :num_cls] / num_steps


# ----------------------------------------------------------------------------
# Main
# ----------------------------------------------------------------------------
if __name__ == "__main__":
    key = jax.random.PRNGKey(0)
    kx, kp = jax.random.split(key)

    B, C, H, W = 2, 3, 8, 8          # small shapes; module channels kept as-is
    NUM_STEPS = 2
    NUM_CLS = 10

    x = jax.random.normal(kx, (B, C, H, W), jnp.float32)
    params = init_params(kp, img_size=H, num_cls=NUM_CLS)

    fwd = jax.jit(functools.partial(
        snn_vgg9_forward, num_steps=NUM_STEPS, leak_mem=1.0,
        threshold=1.0, eps=1e-4, num_cls=NUM_CLS))

    out = fwd(params, x)
    jax.block_until_ready(out)
    assert out.shape == (B, NUM_CLS)
    assert bool(jnp.all(jnp.isfinite(out)))
    print("KERNEL_OK")
</pallas_src>

<mosaic_0001>
module attributes {stable_mosaic.version = 11 : i64} {
  func.func @_matmul_bias_kernel(%arg0: i32, %arg1: i32, %arg2: i32, %arg3: memref<128x128xbf16, #tpu.memory_space<vmem>>, %arg4: memref<128x128xbf16, #tpu.memory_space<vmem>>, %arg5: memref<1x128xf32, #tpu.memory_space<vmem>>, %arg6: memref<128x128xf32, #tpu.memory_space<vmem>>, %arg7: memref<128x128xf32, #tpu.memory_space<vmem>>) attributes {dimension_semantics = [#tpu.dimension_semantics<parallel>, #tpu.dimension_semantics<parallel>, #tpu.dimension_semantics<arbitrary>], iteration_bounds = array<i64: 1, 1, 1>, scalar_prefetch = 0 : i64, scratch_operands = 1 : i64, tpu.core_type = #tpu.core_type<tc>, window_params = [{transform_indices = @transform_0, window_bounds = array<i64: 128, 128>}, {transform_indices = @transform_1, window_bounds = array<i64: 128, 128>}, {transform_indices = @transform_2, window_bounds = array<i64: 1, 128>}, {transform_indices = @transform_3, window_bounds = array<i64: 128, 128>}]} {
    %c0_i32 = arith.constant 0 : i32
    %0 = arith.cmpi eq, %arg2, %c0_i32 : i32
    %1 = arith.extui %0 : i1 to i32
    %c0_i32_0 = arith.constant 0 : i32
    %2 = arith.cmpi ne, %1, %c0_i32_0 : i32
    scf.if %2 {
      %cst_10 = arith.constant 0.000000e+00 : f32
      %12 = vector.broadcast %cst_10 : f32 to vector<128x128xf32>
      %c0_11 = arith.constant 0 : index
      %c0_12 = arith.constant 0 : index
      %13 = vector.load %arg7[%c0_11, %c0_12] : memref<128x128xf32, #tpu.memory_space<vmem>>, vector<128x128xf32>
      tpu.vector_store %arg7[%c0_11, %c0_12], %12 {strides = array<i32>} : memref<128x128xf32, #tpu.memory_space<vmem>>, vector<128x128xf32>,
    } else {
    }
    %c0 = arith.constant 0 : index
    %c0_1 = arith.constant 0 : index
    %3 = vector.load %arg7[%c0, %c0_1] : memref<128x128xf32, #tpu.memory_space<vmem>>, vector<128x128xf32>
    %c0_2 = arith.constant 0 : index
    %c0_3 = arith.constant 0 : index
    %4 = vector.load %arg3[%c0_2, %c0_3] : memref<128x128xbf16, #tpu.memory_space<vmem>>, vector<128x128xbf16>
    %c0_4 = arith.constant 0 : index
    %c0_5 = arith.constant 0 : index
    %5 = vector.load %arg4[%c0_4, %c0_5] : memref<128x128xbf16, #tpu.memory_space<vmem>>, vector<128x128xbf16>
    %cst = arith.constant dense<0.000000e+00> : vector<128x128xf32>
    %6 = tpu.matmul %4, %5, %cst {dimension_numbers = #tpu.dot_dimension_numbers<[1], [0], [0], [1], [0, 0, 1, 1], [], []>} : vector<128x128xbf16>, vector<128x128xbf16>, vector<128x128xf32> -> vector<128x128xf32>
    %7 = arith.addf %3, %6 : vector<128x128xf32>
    %c0_6 = arith.constant 0 : index
    %c0_7 = arith.constant 0 : index
    %8 = vector.load %arg7[%c0_6, %c0_7] : memref<128x128xf32, #tpu.memory_space<vmem>>, vector<128x128xf32>
    tpu.vector_store %arg7[%c0_6, %c0_7], %7 {strides = array<i32>} : memref<128x128xf32, #tpu.memory_space<vmem>>, vector<128x128xf32>,
    %c0_i32_8 = arith.constant 0 : i32
    %9 = arith.cmpi eq, %arg2, %c0_i32_8 : i32
    %10 = arith.extui %9 : i1 to i32
    %c0_i32_9 = arith.constant 0 : i32
    %11 = arith.cmpi ne, %10, %c0_i32_9 : i32
    scf.if %11 {
      %c0_10 = arith.constant 0 : index
      %c0_11 = arith.constant 0 : index
      %12 = vector.load %arg7[%c0_10, %c0_11] : memref<128x128xf32, #tpu.memory_space<vmem>>, vector<128x128xf32>
      %c0_12 = arith.constant 0 : index
      %c0_13 = arith.constant 0 : index
      %13 = vector.load %arg5[%c0_12, %c0_13] : memref<1x128xf32, #tpu.memory_space<vmem>>, vector<1x128xf32>
      %14 = vector.broadcast %13 : vector<1x128xf32> to vector<128x128xf32>
      %15 = arith.addf %12, %14 : vector<128x128xf32>
      %c0_14 = arith.constant 0 : index
      %c0_15 = arith.constant 0 : index
      %16 = vector.load %arg6[%c0_14, %c0_15] : memref<128x128xf32, #tpu.memory_space<vmem>>, vector<128x128xf32>
      tpu.vector_store %arg6[%c0_14, %c0_15], %15 {strides = array<i32>} : memref<128x128xf32, #tpu.memory_space<vmem>>, vector<128x128xf32>,
    } else {
    }
    return
  }
  func.func @transform_0(%arg0: i32, %arg1: i32, %arg2: i32) -> (i32, i32) {
    %c0_i32 = arith.constant 0 : i32
    return %arg0, %arg2 : i32, i32
  }
  func.func @transform_1(%arg0: i32, %arg1: i32, %arg2: i32) -> (i32, i32) {
    %c0_i32 = arith.constant 0 : i32
    return %arg2, %arg1 : i32, i32
  }
  func.func @transform_2(%arg0: i32, %arg1: i32, %arg2: i32) -> (i32, i32) {
    %c0_i32 = arith.constant 0 : i32
    %c0_i32_0 = arith.constant 0 : i32
    return %c0_i32, %arg1 : i32, i32
  }
  func.func @transform_3(%arg0: i32, %arg1: i32, %arg2: i32) -> (i32, i32) {
    %c0_i32 = arith.constant 0 : i32
    return %arg0, %arg1 : i32, i32
  }
}

module attributes {stable_mosaic.version = 11 : i64} {
  func.func @_bn_stats_kernel(%arg0: i32, %arg1: memref<128x128xf32, #tpu.memory_space<vmem>>, %arg2: memref<1x128xf32, #tpu.memory_space<vmem>>, %arg3: memref<1x128xf32, #tpu.memory_space<vmem>>) attributes {dimension_semantics = [#tpu.dimension_semantics<arbitrary>], iteration_bounds = array<i64: 1>, scalar_prefetch = 0 : i64, scratch_operands = 0 : i64, tpu.core_type = #tpu.core_type<tc>, window_params = [{transform_indices = @transform_0, window_bounds = array<i64: 128, 128>}, {pipeline_mode = #tpu.pipeline_mode<synchronous>, transform_indices = @transform_1, window_bounds = array<i64: 1, 128>}, {pipeline_mode = #tpu.pipeline_mode<synchronous>, transform_indices = @transform_2, window_bounds = array<i64: 1, 128>}]} {
    %c0_i32 = arith.constant 0 : i32
    %0 = arith.cmpi eq, %arg0, %c0_i32 : i32
    %1 = arith.extui %0 : i1 to i32
    %c0_i32_0 = arith.constant 0 : i32
    %2 = arith.cmpi ne, %1, %c0_i32_0 : i32
    scf.if %2 {
      %cst_11 = arith.constant 0.000000e+00 : f32
      %15 = vector.broadcast %cst_11 : f32 to vector<1x128xf32>
      %c0_12 = arith.constant 0 : index
      %c0_13 = arith.constant 0 : index
      %16 = vector.load %arg2[%c0_12, %c0_13] : memref<1x128xf32, #tpu.memory_space<vmem>>, vector<1x128xf32>
      tpu.vector_store %arg2[%c0_12, %c0_13], %15 {strides = array<i32>} : memref<1x128xf32, #tpu.memory_space<vmem>>, vector<1x128xf32>,
      %cst_14 = arith.constant 0.000000e+00 : f32
      %17 = vector.broadcast %cst_14 : f32 to vector<1x128xf32>
      %c0_15 = arith.constant 0 : index
      %c0_16 = arith.constant 0 : index
      %18 = vector.load %arg3[%c0_15, %c0_16] : memref<1x128xf32, #tpu.memory_space<vmem>>, vector<1x128xf32>
      tpu.vector_store %arg3[%c0_15, %c0_16], %17 {strides = array<i32>} : memref<1x128xf32, #tpu.memory_space<vmem>>, vector<1x128xf32>,
    } else {
    }
    %c0 = arith.constant 0 : index
    %c0_1 = arith.constant 0 : index
    %3 = vector.load %arg1[%c0, %c0_1] : memref<128x128xf32, #tpu.memory_space<vmem>>, vector<128x128xf32>
    %c0_2 = arith.constant 0 : index
    %c0_3 = arith.constant 0 : index
    %4 = vector.load %arg2[%c0_2, %c0_3] : memref<1x128xf32, #tpu.memory_space<vmem>>, vector<1x128xf32>
    %cst = arith.constant dense<0.000000e+00> : vector<128xf32>
    %5 = vector.multi_reduction <add>, %3, %cst [0] : vector<128x128xf32> to vector<128xf32>
    %6 = vector.shape_cast %5 : vector<128xf32> to vector<1x128xf32>
    %7 = arith.addf %4, %6 : vector<1x128xf32>
    %c0_4 = arith.constant 0 : index
    %c0_5 = arith.constant 0 : index
    %8 = vector.load %arg2[%c0_4, %c0_5] : memref<1x128xf32, #tpu.memory_space<vmem>>, vector<1x128xf32>
    tpu.vector_store %arg2[%c0_4, %c0_5], %7 {strides = array<i32>} : memref<1x128xf32, #tpu.memory_space<vmem>>, vector<1x128xf32>,
    %c0_6 = arith.constant 0 : index
    %c0_7 = arith.constant 0 : index
    %9 = vector.load %arg3[%c0_6, %c0_7] : memref<1x128xf32, #tpu.memory_space<vmem>>, vector<1x128xf32>
    %10 = arith.mulf %3, %3 : vector<128x128xf32>
    %cst_8 = arith.constant dense<0.000000e+00> : vector<128xf32>
    %11 = vector.multi_reduction <add>, %10, %cst_8 [0] : vector<128x128xf32> to vector<128xf32>
    %12 = vector.shape_cast %11 : vector<128xf32> to vector<1x128xf32>
    %13 = arith.addf %9, %12 : vector<1x128xf32>
    %c0_9 = arith.constant 0 : index
    %c0_10 = arith.constant 0 : index
    %14 = vector.load %arg3[%c0_9, %c0_10] : memref<1x128xf32, #tpu.memory_space<vmem>>, vector<1x128xf32>
    tpu.vector_store %arg3[%c0_9, %c0_10], %13 {strides = array<i32>} : memref<1x128xf32, #tpu.memory_space<vmem>>, vector<1x128xf32>,
    return
  }
  func.func @transform_0(%arg0: i32) -> (i32, i32) {
    %c0_i32 = arith.constant 0 : i32
    %c0_i32_0 = arith.constant 0 : i32
    return %arg0, %c0_i32 : i32, i32
  }
  func.func @transform_1(%arg0: i32) -> (i32, i32) {
    %c0_i32 = arith.constant 0 : i32
    %c0_i32_0 = arith.constant 0 : i32
    %c0_i32_1 = arith.constant 0 : i32
    return %c0_i32, %c0_i32_0 : i32, i32
  }
  func.func @transform_2(%arg0: i32) -> (i32, i32) {
    %c0_i32 = arith.constant 0 : i32
    %c0_i32_0 = arith.constant 0 : i32
    %c0_i32_1 = arith.constant 0 : i32
    return %c0_i32, %c0_i32_0 : i32, i32
  }
}

module attributes {stable_mosaic.version = 11 : i64} {
  func.func @_bn_lif_kernel(%arg0: i32, %arg1: memref<128x128xf32, #tpu.memory_space<vmem>>, %arg2: memref<1x128xf32, #tpu.memory_space<vmem>>, %arg3: memref<1x128xf32, #tpu.memory_space<vmem>>, %arg4: memref<1x128xf32, #tpu.memory_space<vmem>>, %arg5: memref<1x128xf32, #tpu.memory_space<vmem>>, %arg6: memref<128x128xf32, #tpu.memory_space<vmem>>, %arg7: memref<128x128xbf16, #tpu.memory_space<vmem>>, %arg8: memref<128x128xf32, #tpu.memory_space<vmem>>) attributes {dimension_semantics = [#tpu.dimension_semantics<parallel>], iteration_bounds = array<i64: 1>, scalar_prefetch = 0 : i64, scratch_operands = 0 : i64, tpu.core_type = #tpu.core_type<tc>, window_params = [{transform_indices = @transform_0, window_bounds = array<i64: 128, 128>}, {pipeline_mode = #tpu.pipeline_mode<synchronous>, transform_indices = @transform_1, window_bounds = array<i64: 1, 128>}, {pipeline_mode = #tpu.pipeline_mode<synchronous>, transform_indices = @transform_2, window_bounds = array<i64: 1, 128>}, {pipeline_mode = #tpu.pipeline_mode<synchronous>, transform_indices = @transform_3, window_bounds = array<i64: 1, 128>}, {pipeline_mode = #tpu.pipeline_mode<synchronous>, transform_indices = @transform_4, window_bounds = array<i64: 1, 128>}, {transform_indices = @transform_5, window_bounds = array<i64: 128, 128>}, {transform_indices = @transform_6, window_bounds = array<i64: 128, 128>}, {transform_indices = @transform_7, window_bounds = array<i64: 128, 128>}]} {
    %c0 = arith.constant 0 : index
    %c0_0 = arith.constant 0 : index
    %0 = vector.load %arg1[%c0, %c0_0] : memref<128x128xf32, #tpu.memory_space<vmem>>, vector<128x128xf32>
    %c0_1 = arith.constant 0 : index
    %c0_2 = arith.constant 0 : index
    %1 = vector.load %arg2[%c0_1, %c0_2] : memref<1x128xf32, #tpu.memory_space<vmem>>, vector<1x128xf32>
    %c0_3 = arith.constant 0 : index
    %c0_4 = arith.constant 0 : index
    %2 = vector.load %arg3[%c0_3, %c0_4] : memref<1x128xf32, #tpu.memory_space<vmem>>, vector<1x128xf32>
    %c0_5 = arith.constant 0 : index
    %c0_6 = arith.constant 0 : index
    %3 = vector.load %arg4[%c0_5, %c0_6] : memref<1x128xf32, #tpu.memory_space<vmem>>, vector<1x128xf32>
    %c0_7 = arith.constant 0 : index
    %c0_8 = arith.constant 0 : index
    %4 = vector.load %arg5[%c0_7, %c0_8] : memref<1x128xf32, #tpu.memory_space<vmem>>, vector<1x128xf32>
    %c0_9 = arith.constant 0 : index
    %c0_10 = arith.constant 0 : index
    %5 = vector.load %arg6[%c0_9, %c0_10] : memref<128x128xf32, #tpu.memory_space<vmem>>, vector<128x128xf32>
    %cst = arith.constant 7.812500e-03 : f32
    %6 = vector.broadcast %cst : f32 to vector<1x128xf32>
    %7 = arith.mulf %1, %6 : vector<1x128xf32>
    %cst_11 = arith.constant 7.812500e-03 : f32
    %8 = vector.broadcast %cst_11 : f32 to vector<1x128xf32>
    %9 = arith.mulf %2, %8 : vector<1x128xf32>
    %10 = arith.mulf %7, %7 : vector<1x128xf32>
    %11 = arith.subf %9, %10 : vector<1x128xf32>
    %cst_12 = arith.constant 0.000000e+00 : f32
    %12 = vector.broadcast %cst_12 : f32 to vector<1x128xf32>
    %13 = arith.maximumf %11, %12 : vector<1x128xf32>
    %cst_13 = arith.constant 9.99999974E-5 : f32
    %14 = vector.broadcast %cst_13 : f32 to vector<1x128xf32>
    %15 = arith.addf %13, %14 : vector<1x128xf32>
    %16 = math.rsqrt %15 : vector<1x128xf32>
    %17 = arith.mulf %3, %16 : vector<1x128xf32>
    %18 = arith.mulf %7, %17 : vector<1x128xf32>
    %19 = arith.subf %4, %18 : vector<1x128xf32>
    %cst_14 = arith.constant 1.000000e+00 : f32
    %20 = vector.broadcast %cst_14 : f32 to vector<128x128xf32>
    %21 = arith.mulf %20, %5 : vector<128x128xf32>
    %22 = vector.broadcast %17 : vector<1x128xf32> to vector<128x128xf32>
    %23 = arith.mulf %0, %22 : vector<128x128xf32>
    %24 = arith.addf %21, %23 : vector<128x128xf32>
    %25 = vector.broadcast %19 : vector<1x128xf32> to vector<128x128xf32>
    %26 = arith.addf %24, %25 : vector<128x128xf32>
    %cst_15 = arith.constant 1.000000e+00 : f32
    %27 = vector.broadcast %cst_15 : f32 to vector<128x128xf32>
    %28 = arith.mulf %26, %27 : vector<128x128xf32>
    %cst_16 = arith.constant 1.000000e+00 : f32
    %29 = vector.broadcast %cst_16 : f32 to vector<128x128xf32>
    %30 = arith.subf %28, %29 : vector<128x128xf32>
    %cst_17 = arith.constant 0.000000e+00 : f32
    %31 = vector.broadcast %cst_17 : f32 to vector<128x128xf32>
    %32 = arith.cmpf oge, %30, %31 : vector<128x128xf32>
    %cst_18 = arith.constant 1.000000e+00 : f32
    %cst_19 = arith.constant 0.000000e+00 : f32
    %33 = vector.broadcast %cst_18 : f32 to vector<128x128xf32>
    %34 = vector.broadcast %cst_19 : f32 to vector<128x128xf32>
    %35 = arith.select %32, %33, %34 : vector<128x128xi1>, vector<128x128xf32>
    %cst_20 = arith.constant 0.000000e+00 : f32
    %36 = vector.broadcast %cst_20 : f32 to vector<128x128xf32>
    %37 = arith.cmpf ogt, %30, %36 : vector<128x128xf32>
    %cst_21 = arith.constant 1.000000e+00 : f32
    %cst_22 = arith.constant 0.000000e+00 : f32
    %38 = vector.broadcast %cst_21 : f32 to vector<128x128xf32>
    %39 = vector.broadcast %cst_22 : f32 to vector<128x128xf32>
    %40 = arith.select %37, %38, %39 : vector<128x128xi1>, vector<128x128xf32>
    %41 = arith.subf %26, %40 : vector<128x128xf32>
    %42 = arith.truncf %35 : vector<128x128xf32> to vector<128x128xbf16>
    %c0_23 = arith.constant 0 : index
    %c0_24 = arith.constant 0 : index
    %43 = vector.load %arg7[%c0_23, %c0_24] : memref<128x128xbf16, #tpu.memory_space<vmem>>, vector<128x128xbf16>
    tpu.vector_store %arg7[%c0_23, %c0_24], %42 {strides = array<i32>} : memref<128x128xbf16, #tpu.memory_space<vmem>>, vector<128x128xbf16>,
    %c0_25 = arith.constant 0 : index
    %c0_26 = arith.constant 0 : index
    %44 = vector.load %arg8[%c0_25, %c0_26] : memref<128x128xf32, #tpu.memory_space<vmem>>, vector<128x128xf32>
    tpu.vector_store %arg8[%c0_25, %c0_26], %41 {strides = array<i32>} : memref<128x128xf32, #tpu.memory_space<vmem>>, vector<128x128xf32>,
    return
  }
  func.func @transform_0(%arg0: i32) -> (i32, i32) {
    %c0_i32 = arith.constant 0 : i32
    %c0_i32_0 = arith.constant 0 : i32
    return %arg0, %c0_i32 : i32, i32
  }
  func.func @transform_1(%arg0: i32) -> (i32, i32) {
    %c0_i32 = arith.constant 0 : i32
    %c0_i32_0 = arith.constant 0 : i32
    %c0_i32_1 = arith.constant 0 : i32
    return %c0_i32, %c0_i32_0 : i32, i32
  }
  func.func @transform_2(%arg0: i32) -> (i32, i32) {
    %c0_i32 = arith.constant 0 : i32
    %c0_i32_0 = arith.constant 0 : i32
    %c0_i32_1 = arith.constant 0 : i32
    return %c0_i32, %c0_i32_0 : i32, i32
  }
  func.func @transform_3(%arg0: i32) -> (i32, i32) {
    %c0_i32 = arith.constant 0 : i32
    %c0_i32_0 = arith.constant 0 : i32
    %c0_i32_1 = arith.constant 0 : i32
    return %c0_i32, %c0_i32_0 : i32, i32
  }
  func.func @transform_4(%arg0: i32) -> (i32, i32) {
    %c0_i32 = arith.constant 0 : i32
    %c0_i32_0 = arith.constant 0 : i32
    %c0_i32_1 = arith.constant 0 : i32
    return %c0_i32, %c0_i32_0 : i32, i32
  }
  func.func @transform_5(%arg0: i32) -> (i32, i32) {
    %c0_i32 = arith.constant 0 : i32
    %c0_i32_0 = arith.constant 0 : i32
    return %arg0, %c0_i32 : i32, i32
  }
  func.func @transform_6(%arg0: i32) -> (i32, i32) {
    %c0_i32 = arith.constant 0 : i32
    %c0_i32_0 = arith.constant 0 : i32
    return %arg0, %c0_i32 : i32, i32
  }
  func.func @transform_7(%arg0: i32) -> (i32, i32) {
    %c0_i32 = arith.constant 0 : i32
    %c0_i32_0 = arith.constant 0 : i32
    return %arg0, %c0_i32 : i32, i32
  }
}

module attributes {stable_mosaic.version = 11 : i64} {
  func.func @_matmul_bias_kernel(%arg0: i32, %arg1: i32, %arg2: i32, %arg3: memref<128x384xbf16, #tpu.memory_space<vmem>>, %arg4: memref<384x256xbf16, #tpu.memory_space<vmem>>, %arg5: memref<1x256xf32, #tpu.memory_space<vmem>>, %arg6: memref<128x256xf32, #tpu.memory_space<vmem>>, %arg7: memref<128x256xf32, #tpu.memory_space<vmem>>) attributes {dimension_semantics = [#tpu.dimension_semantics<parallel>, #tpu.dimension_semantics<parallel>, #tpu.dimension_semantics<arbitrary>], iteration_bounds = array<i64: 1, 1, 3>, scalar_prefetch = 0 : i64, scratch_operands = 1 : i64, tpu.core_type = #tpu.core_type<tc>, window_params = [{transform_indices = @transform_0, window_bounds = array<i64: 128, 384>}, {transform_indices = @transform_1, window_bounds = array<i64: 384, 256>}, {transform_indices = @transform_2, window_bounds = array<i64: 1, 256>}, {transform_indices = @transform_3, window_bounds = array<i64: 128, 256>}]} {
    %c0_i32 = arith.constant 0 : i32
    %0 = arith.cmpi eq, %arg2, %c0_i32 : i32
    %1 = arith.extui %0 : i1 to i32
    %c0_i32_0 = arith.constant 0 : i32
    %2 = arith.cmpi ne, %1, %c0_i32_0 : i32
    scf.if %2 {
      %cst_9 = arith.constant 0.000000e+00 : f32
      %12 = vector.broadcast %cst_9 : f32 to vector<128x256xf32>
      %c0_10 = arith.constant 0 : index
      %c0_11 = arith.constant 0 : index
      %13 = vector.load %arg7[%c0_10, %c0_11] : memref<128x256xf32, #tpu.memory_space<vmem>>, vector<128x256xf32>
      tpu.vector_store %arg7[%c0_10, %c0_11], %12 {strides = array<i32>} : memref<128x256xf32, #tpu.memory_space<vmem>>, vector<128x256xf32>,
    } else {
    }
    %c0 = arith.constant 0 : index
    %c0_1 = arith.constant 0 : index
    %3 = vector.load %arg7[%c0, %c0_1] : memref<128x256xf32, #tpu.memory_space<vmem>>, vector<128x256xf32>
    %c0_2 = arith.constant 0 : index
    %c0_3 = arith.constant 0 : index
    %4 = vector.load %arg3[%c0_2, %c0_3] : memref<128x384xbf16, #tpu.memory_space<vmem>>, vector<128x384xbf16>
    %c0_4 = arith.constant 0 : index
    %c0_5 = arith.constant 0 : index
    %5 = vector.load %arg4[%c0_4, %c0_5] : memref<384x256xbf16, #tpu.memory_space<vmem>>, vector<384x256xbf16>
    %cst = arith.constant dense<0.000000e+00> : vector<128x256xf32>
    %6 = tpu.matmul %4, %5, %cst {dimension_numbers = #tpu.dot_dimension_numbers<[1], [0], [0], [1], [0, 0, 1, 1], [], []>} : vector<128x384xbf16>, vector<384x256xbf16>, vector<128x256xf32> -> vector<128x256xf32>
    %7 = arith.addf %3, %6 : vector<128x256xf32>
    %c0_6 = arith.constant 0 : index
    %c0_7 = arith.constant 0 : index
    %8 = vector.load %arg7[%c0_6, %c0_7] : memref<128x256xf32, #tpu.memory_space<vmem>>, vector<128x256xf32>
    tpu.vector_store %arg7[%c0_6, %c0_7], %7 {strides = array<i32>} : memref<128x256xf32, #tpu.memory_space<vmem>>, vector<128x256xf32>,
    %c2_i32 = arith.constant 2 : i32
    %9 = arith.cmpi eq, %arg2, %c2_i32 : i32
    %10 = arith.extui %9 : i1 to i32
    %c0_i32_8 = arith.constant 0 : i32
    %11 = arith.cmpi ne, %10, %c0_i32_8 : i32
    scf.if %11 {
      %c0_9 = arith.constant 0 : index
      %c0_10 = arith.constant 0 : index
      %12 = vector.load %arg7[%c0_9, %c0_10] : memref<128x256xf32, #tpu.memory_space<vmem>>, vector<128x256xf32>
      %c0_11 = arith.constant 0 : index
      %c0_12 = arith.constant 0 : index
      %13 = vector.load %arg5[%c0_11, %c0_12] : memref<1x256xf32, #tpu.memory_space<vmem>>, vector<1x256xf32>
      %14 = vector.broadcast %13 : vector<1x256xf32> to vector<128x256xf32>
      %15 = arith.addf %12, %14 : vector<128x256xf32>
      %c0_13 = arith.constant 0 : index
      %c0_14 = arith.constant 0 : index
      %16 = vector.load %arg6[%c0_13, %c0_14] : memref<128x256xf32, #tpu.memory_space<vmem>>, vector<128x256xf32>
      tpu.vector_store %arg6[%c0_13, %c0_14], %15 {strides = array<i32>} : memref<128x256xf32, #tpu.memory_space<vmem>>, vector<128x256xf32>,
    } else {
    }
    return
  }
  func.func @transform_0(%arg0: i32, %arg1: i32, %arg2: i32) -> (i32, i32) {
    %c0_i32 = arith.constant 0 : i32
    return %arg0, %arg2 : i32, i32
  }
  func.func @transform_1(%arg0: i32, %arg1: i32, %arg2: i32) -> (i32, i32) {
    %c0_i32 = arith.constant 0 : i32
    return %arg2, %arg1 : i32, i32
  }
  func.func @transform_2(%arg0: i32, %arg1: i32, %arg2: i32) -> (i32, i32) {
    %c0_i32 = arith.constant 0 : i32
    %c0_i32_0 = arith.constant 0 : i32
    return %c0_i32, %arg1 : i32, i32
  }
  func.func @transform_3(%arg0: i32, %arg1: i32, %arg2: i32) -> (i32, i32) {
    %c0_i32 = arith.constant 0 : i32
    return %arg0, %arg1 : i32, i32
  }
}

module attributes {stable_mosaic.version = 11 : i64} {
  func.func @_matmul_bias_kernel(%arg0: i32, %arg1: i32, %arg2: i32, %arg3: memref<128x384xbf16, #tpu.memory_space<vmem>>, %arg4: memref<384x128xbf16, #tpu.memory_space<vmem>>, %arg5: memref<1x128xf32, #tpu.memory_space<vmem>>, %arg6: memref<128x128xf32, #tpu.memory_space<vmem>>, %arg7: memref<128x128xf32, #tpu.memory_space<vmem>>) attributes {dimension_semantics = [#tpu.dimension_semantics<parallel>, #tpu.dimension_semantics<parallel>, #tpu.dimension_semantics<arbitrary>], iteration_bounds = array<i64: 1, 1, 3>, scalar_prefetch = 0 : i64, scratch_operands = 1 : i64, tpu.core_type = #tpu.core_type<tc>, window_params = [{transform_indices = @transform_0, window_bounds = array<i64: 128, 384>}, {transform_indices = @transform_1, window_bounds = array<i64: 384, 128>}, {transform_indices = @transform_2, window_bounds = array<i64: 1, 128>}, {transform_indices = @transform_3, window_bounds = array<i64: 128, 128>}]} {
    %c0_i32 = arith.constant 0 : i32
    %0 = arith.cmpi eq, %arg2, %c0_i32 : i32
    %1 = arith.extui %0 : i1 to i32
    %c0_i32_0 = arith.constant 0 : i32
    %2 = arith.cmpi ne, %1, %c0_i32_0 : i32
    scf.if %2 {
      %cst_9 = arith.constant 0.000000e+00 : f32
      %12 = vector.broadcast %cst_9 : f32 to vector<128x128xf32>
      %c0_10 = arith.constant 0 : index
      %c0_11 = arith.constant 0 : index
      %13 = vector.load %arg7[%c0_10, %c0_11] : memref<128x128xf32, #tpu.memory_space<vmem>>, vector<128x128xf32>
      tpu.vector_store %arg7[%c0_10, %c0_11], %12 {strides = array<i32>} : memref<128x128xf32, #tpu.memory_space<vmem>>, vector<128x128xf32>,
    } else {
    }
    %c0 = arith.constant 0 : index
    %c0_1 = arith.constant 0 : index
    %3 = vector.load %arg7[%c0, %c0_1] : memref<128x128xf32, #tpu.memory_space<vmem>>, vector<128x128xf32>
    %c0_2 = arith.constant 0 : index
    %c0_3 = arith.constant 0 : index
    %4 = vector.load %arg3[%c0_2, %c0_3] : memref<128x384xbf16, #tpu.memory_space<vmem>>, vector<128x384xbf16>
    %c0_4 = arith.constant 0 : index
    %c0_5 = arith.constant 0 : index
    %5 = vector.load %arg4[%c0_4, %c0_5] : memref<384x128xbf16, #tpu.memory_space<vmem>>, vector<384x128xbf16>
    %cst = arith.constant dense<0.000000e+00> : vector<128x128xf32>
    %6 = tpu.matmul %4, %5, %cst {dimension_numbers = #tpu.dot_dimension_numbers<[1], [0], [0], [1], [0, 0, 1, 1], [], []>} : vector<128x384xbf16>, vector<384x128xbf16>, vector<128x128xf32> -> vector<128x128xf32>
    %7 = arith.addf %3, %6 : vector<128x128xf32>
    %c0_6 = arith.constant 0 : index
    %c0_7 = arith.constant 0 : index
    %8 = vector.load %arg7[%c0_6, %c0_7] : memref<128x128xf32, #tpu.memory_space<vmem>>, vector<128x128xf32>
    tpu.vector_store %arg7[%c0_6, %c0_7], %7 {strides = array<i32>} : memref<128x128xf32, #tpu.memory_space<vmem>>, vector<128x128xf32>,
    %c2_i32 = arith.constant 2 : i32
    %9 = arith.cmpi eq, %arg2, %c2_i32 : i32
    %10 = arith.extui %9 : i1 to i32
    %c0_i32_8 = arith.constant 0 : i32
    %11 = arith.cmpi ne, %10, %c0_i32_8 : i32
    scf.if %11 {
      %c0_9 = arith.constant 0 : index
      %c0_10 = arith.constant 0 : index
      %12 = vector.load %arg7[%c0_9, %c0_10] : memref<128x128xf32, #tpu.memory_space<vmem>>, vector<128x128xf32>
      %c0_11 = arith.constant 0 : index
      %c0_12 = arith.constant 0 : index
      %13 = vector.load %arg5[%c0_11, %c0_12] : memref<1x128xf32, #tpu.memory_space<vmem>>, vector<1x128xf32>
      %14 = vector.broadcast %13 : vector<1x128xf32> to vector<128x128xf32>
      %15 = arith.addf %12, %14 : vector<128x128xf32>
      %c0_13 = arith.constant 0 : index
      %c0_14 = arith.constant 0 : index
      %16 = vector.load %arg6[%c0_13, %c0_14] : memref<128x128xf32, #tpu.memory_space<vmem>>, vector<128x128xf32>
      tpu.vector_store %arg6[%c0_13, %c0_14], %15 {strides = array<i32>} : memref<128x128xf32, #tpu.memory_space<vmem>>, vector<128x128xf32>,
    } else {
    }
    return
  }
  func.func @transform_0(%arg0: i32, %arg1: i32, %arg2: i32) -> (i32, i32) {
    %c0_i32 = arith.constant 0 : i32
    return %arg0, %arg2 : i32, i32
  }
  func.func @transform_1(%arg0: i32, %arg1: i32, %arg2: i32) -> (i32, i32) {
    %c0_i32 = arith.constant 0 : i32
    return %arg2, %arg1 : i32, i32
  }
  func.func @transform_2(%arg0: i32, %arg1: i32, %arg2: i32) -> (i32, i32) {
    %c0_i32 = arith.constant 0 : i32
    %c0_i32_0 = arith.constant 0 : i32
    return %c0_i32, %arg1 : i32, i32
  }
  func.func @transform_3(%arg0: i32, %arg1: i32, %arg2: i32) -> (i32, i32) {
    %c0_i32 = arith.constant 0 : i32
    return %arg0, %arg1 : i32, i32
  }
}

module attributes {stable_mosaic.version = 11 : i64} {
  func.func @_bn_lif_res_kernel(%arg0: i32, %arg1: memref<128x128xf32, #tpu.memory_space<vmem>>, %arg2: memref<1x128xf32, #tpu.memory_space<vmem>>, %arg3: memref<1x128xf32, #tpu.memory_space<vmem>>, %arg4: memref<1x128xf32, #tpu.memory_space<vmem>>, %arg5: memref<1x128xf32, #tpu.memory_space<vmem>>, %arg6: memref<128x128xf32, #tpu.memory_space<vmem>>, %arg7: memref<128x128xbf16, #tpu.memory_space<vmem>>, %arg8: memref<128x128xbf16, #tpu.memory_space<vmem>>, %arg9: memref<128x128xf32, #tpu.memory_space<vmem>>, %arg10: memref<128x128xbf16, #tpu.memory_space<vmem>>) attributes {dimension_semantics = [#tpu.dimension_semantics<parallel>], iteration_bounds = array<i64: 1>, scalar_prefetch = 0 : i64, scratch_operands = 0 : i64, tpu.core_type = #tpu.core_type<tc>, window_params = [{transform_indices = @transform_0, window_bounds = array<i64: 128, 128>}, {pipeline_mode = #tpu.pipeline_mode<synchronous>, transform_indices = @transform_1, window_bounds = array<i64: 1, 128>}, {pipeline_mode = #tpu.pipeline_mode<synchronous>, transform_indices = @transform_2, window_bounds = array<i64: 1, 128>}, {pipeline_mode = #tpu.pipeline_mode<synchronous>, transform_indices = @transform_3, window_bounds = array<i64: 1, 128>}, {pipeline_mode = #tpu.pipeline_mode<synchronous>, transform_indices = @transform_4, window_bounds = array<i64: 1, 128>}, {transform_indices = @transform_5, window_bounds = array<i64: 128, 128>}, {transform_indices = @transform_6, window_bounds = array<i64: 128, 128>}, {transform_indices = @transform_7, window_bounds = array<i64: 128, 128>}, {transform_indices = @transform_8, window_bounds = array<i64: 128, 128>}, {transform_indices = @transform_9, window_bounds = array<i64: 128, 128>}]} {
    %c0 = arith.constant 0 : index
    %c0_0 = arith.constant 0 : index
    %0 = vector.load %arg1[%c0, %c0_0] : memref<128x128xf32, #tpu.memory_space<vmem>>, vector<128x128xf32>
    %c0_1 = arith.constant 0 : index
    %c0_2 = arith.constant 0 : index
    %1 = vector.load %arg2[%c0_1, %c0_2] : memref<1x128xf32, #tpu.memory_space<vmem>>, vector<1x128xf32>
    %c0_3 = arith.constant 0 : index
    %c0_4 = arith.constant 0 : index
    %2 = vector.load %arg3[%c0_3, %c0_4] : memref<1x128xf32, #tpu.memory_space<vmem>>, vector<1x128xf32>
    %c0_5 = arith.constant 0 : index
    %c0_6 = arith.constant 0 : index
    %3 = vector.load %arg4[%c0_5, %c0_6] : memref<1x128xf32, #tpu.memory_space<vmem>>, vector<1x128xf32>
    %c0_7 = arith.constant 0 : index
    %c0_8 = arith.constant 0 : index
    %4 = vector.load %arg5[%c0_7, %c0_8] : memref<1x128xf32, #tpu.memory_space<vmem>>, vector<1x128xf32>
    %c0_9 = arith.constant 0 : index
    %c0_10 = arith.constant 0 : index
    %5 = vector.load %arg6[%c0_9, %c0_10] : memref<128x128xf32, #tpu.memory_space<vmem>>, vector<128x128xf32>
    %cst = arith.constant 7.812500e-03 : f32
    %6 = vector.broadcast %cst : f32 to vector<1x128xf32>
    %7 = arith.mulf %1, %6 : vector<1x128xf32>
    %cst_11 = arith.constant 7.812500e-03 : f32
    %8 = vector.broadcast %cst_11 : f32 to vector<1x128xf32>
    %9 = arith.mulf %2, %8 : vector<1x128xf32>
    %10 = arith.mulf %7, %7 : vector<1x128xf32>
    %11 = arith.subf %9, %10 : vector<1x128xf32>
    %cst_12 = arith.constant 0.000000e+00 : f32
    %12 = vector.broadcast %cst_12 : f32 to vector<1x128xf32>
    %13 = arith.maximumf %11, %12 : vector<1x128xf32>
    %cst_13 = arith.constant 9.99999974E-5 : f32
    %14 = vector.broadcast %cst_13 : f32 to vector<1x128xf32>
    %15 = arith.addf %13, %14 : vector<1x128xf32>
    %16 = math.rsqrt %15 : vector<1x128xf32>
    %17 = arith.mulf %3, %16 : vector<1x128xf32>
    %18 = arith.mulf %7, %17 : vector<1x128xf32>
    %19 = arith.subf %4, %18 : vector<1x128xf32>
    %cst_14 = arith.constant 1.000000e+00 : f32
    %20 = vector.broadcast %cst_14 : f32 to vector<128x128xf32>
    %21 = arith.mulf %20, %5 : vector<128x128xf32>
    %22 = vector.broadcast %17 : vector<1x128xf32> to vector<128x128xf32>
    %23 = arith.mulf %0, %22 : vector<128x128xf32>
    %24 = arith.addf %21, %23 : vector<128x128xf32>
    %25 = vector.broadcast %19 : vector<1x128xf32> to vector<128x128xf32>
    %26 = arith.addf %24, %25 : vector<128x128xf32>
    %cst_15 = arith.constant 1.000000e+00 : f32
    %27 = vector.broadcast %cst_15 : f32 to vector<128x128xf32>
    %28 = arith.mulf %26, %27 : vector<128x128xf32>
    %cst_16 = arith.constant 1.000000e+00 : f32
    %29 = vector.broadcast %cst_16 : f32 to vector<128x128xf32>
    %30 = arith.subf %28, %29 : vector<128x128xf32>
    %cst_17 = arith.constant 0.000000e+00 : f32
    %31 = vector.broadcast %cst_17 : f32 to vector<128x128xf32>
    %32 = arith.cmpf oge, %30, %31 : vector<128x128xf32>
    %cst_18 = arith.constant 1.000000e+00 : f32
    %cst_19 = arith.constant 0.000000e+00 : f32
    %33 = vector.broadcast %cst_18 : f32 to vector<128x128xf32>
    %34 = vector.broadcast %cst_19 : f32 to vector<128x128xf32>
    %35 = arith.select %32, %33, %34 : vector<128x128xi1>, vector<128x128xf32>
    %cst_20 = arith.constant 0.000000e+00 : f32
    %36 = vector.broadcast %cst_20 : f32 to vector<128x128xf32>
    %37 = arith.cmpf ogt, %30, %36 : vector<128x128xf32>
    %cst_21 = arith.constant 1.000000e+00 : f32
    %cst_22 = arith.constant 0.000000e+00 : f32
    %38 = vector.broadcast %cst_21 : f32 to vector<128x128xf32>
    %39 = vector.broadcast %cst_22 : f32 to vector<128x128xf32>
    %40 = arith.select %37, %38, %39 : vector<128x128xi1>, vector<128x128xf32>
    %41 = arith.subf %26, %40 : vector<128x128xf32>
    %42 = arith.truncf %35 : vector<128x128xf32> to vector<128x128xbf16>
    %c0_23 = arith.constant 0 : index
    %c0_24 = arith.constant 0 : index
    %43 = vector.load %arg8[%c0_23, %c0_24] : memref<128x128xbf16, #tpu.memory_space<vmem>>, vector<128x128xbf16>
    tpu.vector_store %arg8[%c0_23, %c0_24], %42 {strides = array<i32>} : memref<128x128xbf16, #tpu.memory_space<vmem>>, vector<128x128xbf16>,
    %c0_25 = arith.constant 0 : index
    %c0_26 = arith.constant 0 : index
    %44 = vector.load %arg9[%c0_25, %c0_26] : memref<128x128xf32, #tpu.memory_space<vmem>>, vector<128x128xf32>
    tpu.vector_store %arg9[%c0_25, %c0_26], %41 {strides = array<i32>} : memref<128x128xf32, #tpu.memory_space<vmem>>, vector<128x128xf32>,
    %c0_27 = arith.constant 0 : index
    %c0_28 = arith.constant 0 : index
    %45 = vector.load %arg7[%c0_27, %c0_28] : memref<128x128xbf16, #tpu.memory_space<vmem>>, vector<128x128xbf16>
    %46 = arith.extf %45 : vector<128x128xbf16> to vector<128x128xf32>
    %47 = arith.addf %35, %46 : vector<128x128xf32>
    %48 = arith.truncf %47 : vector<128x128xf32> to vector<128x128xbf16>
    %c0_29 = arith.constant 0 : index
    %c0_30 = arith.constant 0 : index
    %49 = vector.load %arg10[%c0_29, %c0_30] : memref<128x128xbf16, #tpu.memory_space<vmem>>, vector<128x128xbf16>
    tpu.vector_store %arg10[%c0_29, %c0_30], %48 {strides = array<i32>} : memref<128x128xbf16, #tpu.memory_space<vmem>>, vector<128x128xbf16>,
    return
  }
  func.func @transform_0(%arg0: i32) -> (i32, i32) {
    %c0_i32 = arith.constant 0 : i32
    %c0_i32_0 = arith.constant 0 : i32
    return %arg0, %c0_i32 : i32, i32
  }
  func.func @transform_1(%arg0: i32) -> (i32, i32) {
    %c0_i32 = arith.constant 0 : i32
    %c0_i32_0 = arith.constant 0 : i32
    %c0_i32_1 = arith.constant 0 : i32
    return %c0_i32, %c0_i32_0 : i32, i32
  }
  func.func @transform_2(%arg0: i32) -> (i32, i32) {
    %c0_i32 = arith.constant 0 : i32
    %c0_i32_0 = arith.constant 0 : i32
    %c0_i32_1 = arith.constant 0 : i32
    return %c0_i32, %c0_i32_0 : i32, i32
  }
  func.func @transform_3(%arg0: i32) -> (i32, i32) {
    %c0_i32 = arith.constant 0 : i32
    %c0_i32_0 = arith.constant 0 : i32
    %c0_i32_1 = arith.constant 0 : i32
    return %c0_i32, %c0_i32_0 : i32, i32
  }
  func.func @transform_4(%arg0: i32) -> (i32, i32) {
    %c0_i32 = arith.constant 0 : i32
    %c0_i32_0 = arith.constant 0 : i32
    %c0_i32_1 = arith.constant 0 : i32
    return %c0_i32, %c0_i32_0 : i32, i32
  }
  func.func @transform_5(%arg0: i32) -> (i32, i32) {
    %c0_i32 = arith.constant 0 : i32
    %c0_i32_0 = arith.constant 0 : i32
    return %arg0, %c0_i32 : i32, i32
  }
  func.func @transform_6(%arg0: i32) -> (i32, i32) {
    %c0_i32 = arith.constant 0 : i32
    %c0_i32_0 = arith.constant 0 : i32
    return %arg0, %c0_i32 : i32, i32
  }
  func.func @transform_7(%arg0: i32) -> (i32, i32) {
    %c0_i32 = arith.constant 0 : i32
    %c0_i32_0 = arith.constant 0 : i32
    return %arg0, %c0_i32 : i32, i32
  }
  func.func @transform_8(%arg0: i32) -> (i32, i32) {
    %c0_i32 = arith.constant 0 : i32
    %c0_i32_0 = arith.constant 0 : i32
    return %arg0, %c0_i32 : i32, i32
  }
  func.func @transform_9(%arg0: i32) -> (i32, i32) {
    %c0_i32 = arith.constant 0 : i32
    %c0_i32_0 = arith.constant 0 : i32
    return %arg0, %c0_i32 : i32, i32
  }
}

module attributes {stable_mosaic.version = 11 : i64} {
  func.func @_bn_lif_res_kernel(%arg0: i32, %arg1: memref<128x128xf32, #tpu.memory_space<vmem>>, %arg2: memref<1x128xf32, #tpu.memory_space<vmem>>, %arg3: memref<1x128xf32, #tpu.memory_space<vmem>>, %arg4: memref<1x128xf32, #tpu.memory_space<vmem>>, %arg5: memref<1x128xf32, #tpu.memory_space<vmem>>, %arg6: memref<128x128xf32, #tpu.memory_space<vmem>>, %arg7: memref<128x128xbf16, #tpu.memory_space<vmem>>, %arg8: memref<128x128xbf16, #tpu.memory_space<vmem>>, %arg9: memref<128x128xf32, #tpu.memory_space<vmem>>, %arg10: memref<128x128xbf16, #tpu.memory_space<vmem>>) attributes {dimension_semantics = [#tpu.dimension_semantics<parallel>], iteration_bounds = array<i64: 1>, scalar_prefetch = 0 : i64, scratch_operands = 0 : i64, tpu.core_type = #tpu.core_type<tc>, window_params = [{transform_indices = @transform_0, window_bounds = array<i64: 128, 128>}, {pipeline_mode = #tpu.pipeline_mode<synchronous>, transform_indices = @transform_1, window_bounds = array<i64: 1, 128>}, {pipeline_mode = #tpu.pipeline_mode<synchronous>, transform_indices = @transform_2, window_bounds = array<i64: 1, 128>}, {pipeline_mode = #tpu.pipeline_mode<synchronous>, transform_indices = @transform_3, window_bounds = array<i64: 1, 128>}, {pipeline_mode = #tpu.pipeline_mode<synchronous>, transform_indices = @transform_4, window_bounds = array<i64: 1, 128>}, {transform_indices = @transform_5, window_bounds = array<i64: 128, 128>}, {transform_indices = @transform_6, window_bounds = array<i64: 128, 128>}, {transform_indices = @transform_7, window_bounds = array<i64: 128, 128>}, {transform_indices = @transform_8, window_bounds = array<i64: 128, 128>}, {transform_indices = @transform_9, window_bounds = array<i64: 128, 128>}]} {
    %c0 = arith.constant 0 : index
    %c0_0 = arith.constant 0 : index
    %0 = vector.load %arg1[%c0, %c0_0] : memref<128x128xf32, #tpu.memory_space<vmem>>, vector<128x128xf32>
    %c0_1 = arith.constant 0 : index
    %c0_2 = arith.constant 0 : index
    %1 = vector.load %arg2[%c0_1, %c0_2] : memref<1x128xf32, #tpu.memory_space<vmem>>, vector<1x128xf32>
    %c0_3 = arith.constant 0 : index
    %c0_4 = arith.constant 0 : index
    %2 = vector.load %arg3[%c0_3, %c0_4] : memref<1x128xf32, #tpu.memory_space<vmem>>, vector<1x128xf32>
    %c0_5 = arith.constant 0 : index
    %c0_6 = arith.constant 0 : index
    %3 = vector.load %arg4[%c0_5, %c0_6] : memref<1x128xf32, #tpu.memory_space<vmem>>, vector<1x128xf32>
    %c0_7 = arith.constant 0 : index
    %c0_8 = arith.constant 0 : index
    %4 = vector.load %arg5[%c0_7, %c0_8] : memref<1x128xf32, #tpu.memory_space<vmem>>, vector<1x128xf32>
    %c0_9 = arith.constant 0 : index
    %c0_10 = arith.constant 0 : index
    %5 = vector.load %arg6[%c0_9, %c0_10] : memref<128x128xf32, #tpu.memory_space<vmem>>, vector<128x128xf32>
    %cst = arith.constant 7.812500e-03 : f32
    %6 = vector.broadcast %cst : f32 to vector<1x128xf32>
    %7 = arith.mulf %1, %6 : vector<1x128xf32>
    %cst_11 = arith.constant 7.812500e-03 : f32
    %8 = vector.broadcast %cst_11 : f32 to vector<1x128xf32>
    %9 = arith.mulf %2, %8 : vector<1x128xf32>
    %10 = arith.mulf %7, %7 : vector<1x128xf32>
    %11 = arith.subf %9, %10 : vector<1x128xf32>
    %cst_12 = arith.constant 0.000000e+00 : f32
    %12 = vector.broadcast %cst_12 : f32 to vector<1x128xf32>
    %13 = arith.maximumf %11, %12 : vector<1x128xf32>
    %cst_13 = arith.constant 9.99999974E-5 : f32
    %14 = vector.broadcast %cst_13 : f32 to vector<1x128xf32>
    %15 = arith.addf %13, %14 : vector<1x128xf32>
    %16 = math.rsqrt %15 : vector<1x128xf32>
    %17 = arith.mulf %3, %16 : vector<1x128xf32>
    %18 = arith.mulf %7, %17 : vector<1x128xf32>
    %19 = arith.subf %4, %18 : vector<1x128xf32>
    %cst_14 = arith.constant 1.000000e+00 : f32
    %20 = vector.broadcast %cst_14 : f32 to vector<128x128xf32>
    %21 = arith.mulf %20, %5 : vector<128x128xf32>
    %22 = vector.broadcast %17 : vector<1x128xf32> to vector<128x128xf32>
    %23 = arith.mulf %0, %22 : vector<128x128xf32>
    %24 = arith.addf %21, %23 : vector<128x128xf32>
    %25 = vector.broadcast %19 : vector<1x128xf32> to vector<128x128xf32>
    %26 = arith.addf %24, %25 : vector<128x128xf32>
    %cst_15 = arith.constant 1.000000e+00 : f32
    %27 = vector.broadcast %cst_15 : f32 to vector<128x128xf32>
    %28 = arith.mulf %26, %27 : vector<128x128xf32>
    %cst_16 = arith.constant 1.000000e+00 : f32
    %29 = vector.broadcast %cst_16 : f32 to vector<128x128xf32>
    %30 = arith.subf %28, %29 : vector<128x128xf32>
    %cst_17 = arith.constant 0.000000e+00 : f32
    %31 = vector.broadcast %cst_17 : f32 to vector<128x128xf32>
    %32 = arith.cmpf oge, %30, %31 : vector<128x128xf32>
    %cst_18 = arith.constant 1.000000e+00 : f32
    %cst_19 = arith.constant 0.000000e+00 : f32
    %33 = vector.broadcast %cst_18 : f32 to vector<128x128xf32>
    %34 = vector.broadcast %cst_19 : f32 to vector<128x128xf32>
    %35 = arith.select %32, %33, %34 : vector<128x128xi1>, vector<128x128xf32>
    %cst_20 = arith.constant 0.000000e+00 : f32
    %36 = vector.broadcast %cst_20 : f32 to vector<128x128xf32>
    %37 = arith.cmpf ogt, %30, %36 : vector<128x128xf32>
    %cst_21 = arith.constant 1.000000e+00 : f32
    %cst_22 = arith.constant 0.000000e+00 : f32
    %38 = vector.broadcast %cst_21 : f32 to vector<128x128xf32>
    %39 = vector.broadcast %cst_22 : f32 to vector<128x128xf32>
    %40 = arith.select %37, %38, %39 : vector<128x128xi1>, vector<128x128xf32>
    %41 = arith.subf %26, %40 : vector<128x128xf32>
    %42 = arith.truncf %35 : vector<128x128xf32> to vector<128x128xbf16>
    %c0_23 = arith.constant 0 : index
    %c0_24 = arith.constant 0 : index
    %43 = vector.load %arg8[%c0_23, %c0_24] : memref<128x128xbf16, #tpu.memory_space<vmem>>, vector<128x128xbf16>
    tpu.vector_store %arg8[%c0_23, %c0_24], %42 {strides = array<i32>} : memref<128x128xbf16, #tpu.memory_space<vmem>>, vector<128x128xbf16>,
    %c0_25 = arith.constant 0 : index
    %c0_26 = arith.constant 0 : index
    %44 = vector.load %arg9[%c0_25, %c0_26] : memref<128x128xf32, #tpu.memory_space<vmem>>, vector<128x128xf32>
    tpu.vector_store %arg9[%c0_25, %c0_26], %41 {strides = array<i32>} : memref<128x128xf32, #tpu.memory_space<vmem>>, vector<128x128xf32>,
    %c0_27 = arith.constant 0 : index
    %c0_28 = arith.constant 0 : index
    %45 = vector.load %arg7[%c0_27, %c0_28] : memref<128x128xbf16, #tpu.memory_space<vmem>>, vector<128x128xbf16>
    %46 = arith.extf %45 : vector<128x128xbf16> to vector<128x128xf32>
    %47 = arith.addf %35, %46 : vector<128x128xf32>
    %48 = arith.truncf %47 : vector<128x128xf32> to vector<128x128xbf16>
    %c0_29 = arith.constant 0 : index
    %c0_30 = arith.constant 0 : index
    %49 = vector.load %arg10[%c0_29, %c0_30] : memref<128x128xbf16, #tpu.memory_space<vmem>>, vector<128x128xbf16>
    tpu.vector_store %arg10[%c0_29, %c0_30], %48 {strides = array<i32>} : memref<128x128xbf16, #tpu.memory_space<vmem>>, vector<128x128xbf16>,
    return
  }
  func.func @transform_0(%arg0: i32) -> (i32, i32) {
    %c0_i32 = arith.constant 0 : i32
    %c0_i32_0 = arith.constant 0 : i32
    return %arg0, %c0_i32 : i32, i32
  }
  func.func @transform_1(%arg0: i32) -> (i32, i32) {
    %c0_i32 = arith.constant 0 : i32
    %c0_i32_0 = arith.constant 0 : i32
    %c0_i32_1 = arith.constant 0 : i32
    return %c0_i32, %c0_i32_0 : i32, i32
  }
  func.func @transform_2(%arg0: i32) -> (i32, i32) {
    %c0_i32 = arith.constant 0 : i32
    %c0_i32_0 = arith.constant 0 : i32
    %c0_i32_1 = arith.constant 0 : i32
    return %c0_i32, %c0_i32_0 : i32, i32
  }
  func.func @transform_3(%arg0: i32) -> (i32, i32) {
    %c0_i32 = arith.constant 0 : i32
    %c0_i32_0 = arith.constant 0 : i32
    %c0_i32_1 = arith.constant 0 : i32
    return %c0_i32, %c0_i32_0 : i32, i32
  }
  func.func @transform_4(%arg0: i32) -> (i32, i32) {
    %c0_i32 = arith.constant 0 : i32
    %c0_i32_0 = arith.constant 0 : i32
    %c0_i32_1 = arith.constant 0 : i32
    return %c0_i32, %c0_i32_0 : i32, i32
  }
  func.func @transform_5(%arg0: i32) -> (i32, i32) {
    %c0_i32 = arith.constant 0 : i32
    %c0_i32_0 = arith.constant 0 : i32
    return %arg0, %c0_i32 : i32, i32
  }
  func.func @transform_6(%arg0: i32) -> (i32, i32) {
    %c0_i32 = arith.constant 0 : i32
    %c0_i32_0 = arith.constant 0 : i32
    return %arg0, %c0_i32 : i32, i32
  }
  func.func @transform_7(%arg0: i32) -> (i32, i32) {
    %c0_i32 = arith.constant 0 : i32
    %c0_i32_0 = arith.constant 0 : i32
    return %arg0, %c0_i32 : i32, i32
  }
  func.func @transform_8(%arg0: i32) -> (i32, i32) {
    %c0_i32 = arith.constant 0 : i32
    %c0_i32_0 = arith.constant 0 : i32
    return %arg0, %c0_i32 : i32, i32
  }
  func.func @transform_9(%arg0: i32) -> (i32, i32) {
    %c0_i32 = arith.constant 0 : i32
    %c0_i32_0 = arith.constant 0 : i32
    return %arg0, %c0_i32 : i32, i32
  }
}

module attributes {stable_mosaic.version = 11 : i64} {
  func.func @_bn_stats_kernel(%arg0: i32, %arg1: memref<128x256xf32, #tpu.memory_space<vmem>>, %arg2: memref<1x256xf32, #tpu.memory_space<vmem>>, %arg3: memref<1x256xf32, #tpu.memory_space<vmem>>) attributes {dimension_semantics = [#tpu.dimension_semantics<arbitrary>], iteration_bounds = array<i64: 1>, scalar_prefetch = 0 : i64, scratch_operands = 0 : i64, tpu.core_type = #tpu.core_type<tc>, window_params = [{transform_indices = @transform_0, window_bounds = array<i64: 128, 256>}, {pipeline_mode = #tpu.pipeline_mode<synchronous>, transform_indices = @transform_1, window_bounds = array<i64: 1, 256>}, {pipeline_mode = #tpu.pipeline_mode<synchronous>, transform_indices = @transform_2, window_bounds = array<i64: 1, 256>}]} {
    %c0_i32 = arith.constant 0 : i32
    %0 = arith.cmpi eq, %arg0, %c0_i32 : i32
    %1 = arith.extui %0 : i1 to i32
    %c0_i32_0 = arith.constant 0 : i32
    %2 = arith.cmpi ne, %1, %c0_i32_0 : i32
    scf.if %2 {
      %cst_11 = arith.constant 0.000000e+00 : f32
      %15 = vector.broadcast %cst_11 : f32 to vector<1x256xf32>
      %c0_12 = arith.constant 0 : index
      %c0_13 = arith.constant 0 : index
      %16 = vector.load %arg2[%c0_12, %c0_13] : memref<1x256xf32, #tpu.memory_space<vmem>>, vector<1x256xf32>
      tpu.vector_store %arg2[%c0_12, %c0_13], %15 {strides = array<i32>} : memref<1x256xf32, #tpu.memory_space<vmem>>, vector<1x256xf32>,
      %cst_14 = arith.constant 0.000000e+00 : f32
      %17 = vector.broadcast %cst_14 : f32 to vector<1x256xf32>
      %c0_15 = arith.constant 0 : index
      %c0_16 = arith.constant 0 : index
      %18 = vector.load %arg3[%c0_15, %c0_16] : memref<1x256xf32, #tpu.memory_space<vmem>>, vector<1x256xf32>
      tpu.vector_store %arg3[%c0_15, %c0_16], %17 {strides = array<i32>} : memref<1x256xf32, #tpu.memory_space<vmem>>, vector<1x256xf32>,
    } else {
    }
    %c0 = arith.constant 0 : index
    %c0_1 = arith.constant 0 : index
    %3 = vector.load %arg1[%c0, %c0_1] : memref<128x256xf32, #tpu.memory_space<vmem>>, vector<128x256xf32>
    %c0_2 = arith.constant 0 : index
    %c0_3 = arith.constant 0 : index
    %4 = vector.load %arg2[%c0_2, %c0_3] : memref<1x256xf32, #tpu.memory_space<vmem>>, vector<1x256xf32>
    %cst = arith.constant dense<0.000000e+00> : vector<256xf32>
    %5 = vector.multi_reduction <add>, %3, %cst [0] : vector<128x256xf32> to vector<256xf32>
    %6 = vector.shape_cast %5 : vector<256xf32> to vector<1x256xf32>
    %7 = arith.addf %4, %6 : vector<1x256xf32>
    %c0_4 = arith.constant 0 : index
    %c0_5 = arith.constant 0 : index
    %8 = vector.load %arg2[%c0_4, %c0_5] : memref<1x256xf32, #tpu.memory_space<vmem>>, vector<1x256xf32>
    tpu.vector_store %arg2[%c0_4, %c0_5], %7 {strides = array<i32>} : memref<1x256xf32, #tpu.memory_space<vmem>>, vector<1x256xf32>,
    %c0_6 = arith.constant 0 : index
    %c0_7 = arith.constant 0 : index
    %9 = vector.load %arg3[%c0_6, %c0_7] : memref<1x256xf32, #tpu.memory_space<vmem>>, vector<1x256xf32>
    %10 = arith.mulf %3, %3 : vector<128x256xf32>
    %cst_8 = arith.constant dense<0.000000e+00> : vector<256xf32>
    %11 = vector.multi_reduction <add>, %10, %cst_8 [0] : vector<128x256xf32> to vector<256xf32>
    %12 = vector.shape_cast %11 : vector<256xf32> to vector<1x256xf32>
    %13 = arith.addf %9, %12 : vector<1x256xf32>
    %c0_9 = arith.constant 0 : index
    %c0_10 = arith.constant 0 : index
    %14 = vector.load %arg3[%c0_9, %c0_10] : memref<1x256xf32, #tpu.memory_space<vmem>>, vector<1x256xf32>
    tpu.vector_store %arg3[%c0_9, %c0_10], %13 {strides = array<i32>} : memref<1x256xf32, #tpu.memory_space<vmem>>, vector<1x256xf32>,
    return
  }
  func.func @transform_0(%arg0: i32) -> (i32, i32) {
    %c0_i32 = arith.constant 0 : i32
    %c0_i32_0 = arith.constant 0 : i32
    return %arg0, %c0_i32 : i32, i32
  }
  func.func @transform_1(%arg0: i32) -> (i32, i32) {
    %c0_i32 = arith.constant 0 : i32
    %c0_i32_0 = arith.constant 0 : i32
    %c0_i32_1 = arith.constant 0 : i32
    return %c0_i32, %c0_i32_0 : i32, i32
  }
  func.func @transform_2(%arg0: i32) -> (i32, i32) {
    %c0_i32 = arith.constant 0 : i32
    %c0_i32_0 = arith.constant 0 : i32
    %c0_i32_1 = arith.constant 0 : i32
    return %c0_i32, %c0_i32_0 : i32, i32
  }
}

module attributes {stable_mosaic.version = 11 : i64} {
  func.func @_bn_lif_kernel(%arg0: i32, %arg1: memref<128x256xf32, #tpu.memory_space<vmem>>, %arg2: memref<1x256xf32, #tpu.memory_space<vmem>>, %arg3: memref<1x256xf32, #tpu.memory_space<vmem>>, %arg4: memref<1x256xf32, #tpu.memory_space<vmem>>, %arg5: memref<1x256xf32, #tpu.memory_space<vmem>>, %arg6: memref<128x256xf32, #tpu.memory_space<vmem>>, %arg7: memref<128x256xbf16, #tpu.memory_space<vmem>>, %arg8: memref<128x256xf32, #tpu.memory_space<vmem>>) attributes {dimension_semantics = [#tpu.dimension_semantics<parallel>], iteration_bounds = array<i64: 1>, scalar_prefetch = 0 : i64, scratch_operands = 0 : i64, tpu.core_type = #tpu.core_type<tc>, window_params = [{transform_indices = @transform_0, window_bounds = array<i64: 128, 256>}, {pipeline_mode = #tpu.pipeline_mode<synchronous>, transform_indices = @transform_1, window_bounds = array<i64: 1, 256>}, {pipeline_mode = #tpu.pipeline_mode<synchronous>, transform_indices = @transform_2, window_bounds = array<i64: 1, 256>}, {pipeline_mode = #tpu.pipeline_mode<synchronous>, transform_indices = @transform_3, window_bounds = array<i64: 1, 256>}, {pipeline_mode = #tpu.pipeline_mode<synchronous>, transform_indices = @transform_4, window_bounds = array<i64: 1, 256>}, {transform_indices = @transform_5, window_bounds = array<i64: 128, 256>}, {transform_indices = @transform_6, window_bounds = array<i64: 128, 256>}, {transform_indices = @transform_7, window_bounds = array<i64: 128, 256>}]} {
    %c0 = arith.constant 0 : index
    %c0_0 = arith.constant 0 : index
    %0 = vector.load %arg1[%c0, %c0_0] : memref<128x256xf32, #tpu.memory_space<vmem>>, vector<128x256xf32>
    %c0_1 = arith.constant 0 : index
    %c0_2 = arith.constant 0 : index
    %1 = vector.load %arg2[%c0_1, %c0_2] : memref<1x256xf32, #tpu.memory_space<vmem>>, vector<1x256xf32>
    %c0_3 = arith.constant 0 : index
    %c0_4 = arith.constant 0 : index
    %2 = vector.load %arg3[%c0_3, %c0_4] : memref<1x256xf32, #tpu.memory_space<vmem>>, vector<1x256xf32>
    %c0_5 = arith.constant 0 : index
    %c0_6 = arith.constant 0 : index
    %3 = vector.load %arg4[%c0_5, %c0_6] : memref<1x256xf32, #tpu.memory_space<vmem>>, vector<1x256xf32>
    %c0_7 = arith.constant 0 : index
    %c0_8 = arith.constant 0 : index
    %4 = vector.load %arg5[%c0_7, %c0_8] : memref<1x256xf32, #tpu.memory_space<vmem>>, vector<1x256xf32>
    %c0_9 = arith.constant 0 : index
    %c0_10 = arith.constant 0 : index
    %5 = vector.load %arg6[%c0_9, %c0_10] : memref<128x256xf32, #tpu.memory_space<vmem>>, vector<128x256xf32>
    %cst = arith.constant 7.812500e-03 : f32
    %6 = vector.broadcast %cst : f32 to vector<1x256xf32>
    %7 = arith.mulf %1, %6 : vector<1x256xf32>
    %cst_11 = arith.constant 7.812500e-03 : f32
    %8 = vector.broadcast %cst_11 : f32 to vector<1x256xf32>
    %9 = arith.mulf %2, %8 : vector<1x256xf32>
    %10 = arith.mulf %7, %7 : vector<1x256xf32>
    %11 = arith.subf %9, %10 : vector<1x256xf32>
    %cst_12 = arith.constant 0.000000e+00 : f32
    %12 = vector.broadcast %cst_12 : f32 to vector<1x256xf32>
    %13 = arith.maximumf %11, %12 : vector<1x256xf32>
    %cst_13 = arith.constant 9.99999974E-5 : f32
    %14 = vector.broadcast %cst_13 : f32 to vector<1x256xf32>
    %15 = arith.addf %13, %14 : vector<1x256xf32>
    %16 = math.rsqrt %15 : vector<1x256xf32>
    %17 = arith.mulf %3, %16 : vector<1x256xf32>
    %18 = arith.mulf %7, %17 : vector<1x256xf32>
    %19 = arith.subf %4, %18 : vector<1x256xf32>
    %cst_14 = arith.constant 1.000000e+00 : f32
    %20 = vector.broadcast %cst_14 : f32 to vector<128x256xf32>
    %21 = arith.mulf %20, %5 : vector<128x256xf32>
    %22 = vector.broadcast %17 : vector<1x256xf32> to vector<128x256xf32>
    %23 = arith.mulf %0, %22 : vector<128x256xf32>
    %24 = arith.addf %21, %23 : vector<128x256xf32>
    %25 = vector.broadcast %19 : vector<1x256xf32> to vector<128x256xf32>
    %26 = arith.addf %24, %25 : vector<128x256xf32>
    %cst_15 = arith.constant 1.000000e+00 : f32
    %27 = vector.broadcast %cst_15 : f32 to vector<128x256xf32>
    %28 = arith.mulf %26, %27 : vector<128x256xf32>
    %cst_16 = arith.constant 1.000000e+00 : f32
    %29 = vector.broadcast %cst_16 : f32 to vector<128x256xf32>
    %30 = arith.subf %28, %29 : vector<128x256xf32>
    %cst_17 = arith.constant 0.000000e+00 : f32
    %31 = vector.broadcast %cst_17 : f32 to vector<128x256xf32>
    %32 = arith.cmpf oge, %30, %31 : vector<128x256xf32>
    %cst_18 = arith.constant 1.000000e+00 : f32
    %cst_19 = arith.constant 0.000000e+00 : f32
    %33 = vector.broadcast %cst_18 : f32 to vector<128x256xf32>
    %34 = vector.broadcast %cst_19 : f32 to vector<128x256xf32>
    %35 = arith.select %32, %33, %34 : vector<128x256xi1>, vector<128x256xf32>
    %cst_20 = arith.constant 0.000000e+00 : f32
    %36 = vector.broadcast %cst_20 : f32 to vector<128x256xf32>
    %37 = arith.cmpf ogt, %30, %36 : vector<128x256xf32>
    %cst_21 = arith.constant 1.000000e+00 : f32
    %cst_22 = arith.constant 0.000000e+00 : f32
    %38 = vector.broadcast %cst_21 : f32 to vector<128x256xf32>
    %39 = vector.broadcast %cst_22 : f32 to vector<128x256xf32>
    %40 = arith.select %37, %38, %39 : vector<128x256xi1>, vector<128x256xf32>
    %41 = arith.subf %26, %40 : vector<128x256xf32>
    %42 = arith.truncf %35 : vector<128x256xf32> to vector<128x256xbf16>
    %c0_23 = arith.constant 0 : index
    %c0_24 = arith.constant 0 : index
    %43 = vector.load %arg7[%c0_23, %c0_24] : memref<128x256xbf16, #tpu.memory_space<vmem>>, vector<128x256xbf16>
    tpu.vector_store %arg7[%c0_23, %c0_24], %42 {strides = array<i32>} : memref<128x256xbf16, #tpu.memory_space<vmem>>, vector<128x256xbf16>,
    %c0_25 = arith.constant 0 : index
    %c0_26 = arith.constant 0 : index
    %44 = vector.load %arg8[%c0_25, %c0_26] : memref<128x256xf32, #tpu.memory_space<vmem>>, vector<128x256xf32>
    tpu.vector_store %arg8[%c0_25, %c0_26], %41 {strides = array<i32>} : memref<128x256xf32, #tpu.memory_space<vmem>>, vector<128x256xf32>,
    return
  }
  func.func @transform_0(%arg0: i32) -> (i32, i32) {
    %c0_i32 = arith.constant 0 : i32
    %c0_i32_0 = arith.constant 0 : i32
    return %arg0, %c0_i32 : i32, i32
  }
  func.func @transform_1(%arg0: i32) -> (i32, i32) {
    %c0_i32 = arith.constant 0 : i32
    %c0_i32_0 = arith.constant 0 : i32
    %c0_i32_1 = arith.constant 0 : i32
    return %c0_i32, %c0_i32_0 : i32, i32
  }
  func.func @transform_2(%arg0: i32) -> (i32, i32) {
    %c0_i32 = arith.constant 0 : i32
    %c0_i32_0 = arith.constant 0 : i32
    %c0_i32_1 = arith.constant 0 : i32
    return %c0_i32, %c0_i32_0 : i32, i32
  }
  func.func @transform_3(%arg0: i32) -> (i32, i32) {
    %c0_i32 = arith.constant 0 : i32
    %c0_i32_0 = arith.constant 0 : i32
    %c0_i32_1 = arith.constant 0 : i32
    return %c0_i32, %c0_i32_0 : i32, i32
  }
  func.func @transform_4(%arg0: i32) -> (i32, i32) {
    %c0_i32 = arith.constant 0 : i32
    %c0_i32_0 = arith.constant 0 : i32
    %c0_i32_1 = arith.constant 0 : i32
    return %c0_i32, %c0_i32_0 : i32, i32
  }
  func.func @transform_5(%arg0: i32) -> (i32, i32) {
    %c0_i32 = arith.constant 0 : i32
    %c0_i32_0 = arith.constant 0 : i32
    return %arg0, %c0_i32 : i32, i32
  }
  func.func @transform_6(%arg0: i32) -> (i32, i32) {
    %c0_i32 = arith.constant 0 : i32
    %c0_i32_0 = arith.constant 0 : i32
    return %arg0, %c0_i32 : i32, i32
  }
  func.func @transform_7(%arg0: i32) -> (i32, i32) {
    %c0_i32 = arith.constant 0 : i32
    %c0_i32_0 = arith.constant 0 : i32
    return %arg0, %c0_i32 : i32, i32
  }
}

module attributes {stable_mosaic.version = 11 : i64} {
  func.func @_matmul_bias_kernel(%arg0: i32, %arg1: i32, %arg2: i32, %arg3: memref<2x512xbf16, #tpu.memory_space<vmem>>, %arg4: memref<512x256xbf16, #tpu.memory_space<vmem>>, %arg5: memref<1x256xf32, #tpu.memory_space<vmem>>, %arg6: memref<2x256xf32, #tpu.memory_space<vmem>>, %arg7: memref<2x256xf32, #tpu.memory_space<vmem>>) attributes {dimension_semantics = [#tpu.dimension_semantics<parallel>, #tpu.dimension_semantics<parallel>, #tpu.dimension_semantics<arbitrary>], iteration_bounds = array<i64: 1, 4, 8>, scalar_prefetch = 0 : i64, scratch_operands = 1 : i64, tpu.core_type = #tpu.core_type<tc>, window_params = [{transform_indices = @transform_0, window_bounds = array<i64: 2, 512>}, {transform_indices = @transform_1, window_bounds = array<i64: 512, 256>}, {transform_indices = @transform_2, window_bounds = array<i64: 1, 256>}, {transform_indices = @transform_3, window_bounds = array<i64: 2, 256>}]} {
    %c0_i32 = arith.constant 0 : i32
    %0 = arith.cmpi eq, %arg2, %c0_i32 : i32
    %1 = arith.extui %0 : i1 to i32
    %c0_i32_0 = arith.constant 0 : i32
    %2 = arith.cmpi ne, %1, %c0_i32_0 : i32
    scf.if %2 {
      %cst_9 = arith.constant 0.000000e+00 : f32
      %12 = vector.broadcast %cst_9 : f32 to vector<2x256xf32>
      %c0_10 = arith.constant 0 : index
      %c0_11 = arith.constant 0 : index
      %13 = vector.load %arg7[%c0_10, %c0_11] : memref<2x256xf32, #tpu.memory_space<vmem>>, vector<2x256xf32>
      tpu.vector_store %arg7[%c0_10, %c0_11], %12 {strides = array<i32>} : memref<2x256xf32, #tpu.memory_space<vmem>>, vector<2x256xf32>,
    } else {
    }
    %c0 = arith.constant 0 : index
    %c0_1 = arith.constant 0 : index
    %3 = vector.load %arg7[%c0, %c0_1] : memref<2x256xf32, #tpu.memory_space<vmem>>, vector<2x256xf32>
    %c0_2 = arith.constant 0 : index
    %c0_3 = arith.constant 0 : index
    %4 = vector.load %arg3[%c0_2, %c0_3] : memref<2x512xbf16, #tpu.memory_space<vmem>>, vector<2x512xbf16>
    %c0_4 = arith.constant 0 : index
    %c0_5 = arith.constant 0 : index
    %5 = vector.load %arg4[%c0_4, %c0_5] : memref<512x256xbf16, #tpu.memory_space<vmem>>, vector<512x256xbf16>
    %cst = arith.constant dense<0.000000e+00> : vector<2x256xf32>
    %6 = tpu.matmul %4, %5, %cst {dimension_numbers = #tpu.dot_dimension_numbers<[1], [0], [0], [1], [0, 0, 1, 1], [], []>} : vector<2x512xbf16>, vector<512x256xbf16>, vector<2x256xf32> -> vector<2x256xf32>
    %7 = arith.addf %3, %6 : vector<2x256xf32>
    %c0_6 = arith.constant 0 : index
    %c0_7 = arith.constant 0 : index
    %8 = vector.load %arg7[%c0_6, %c0_7] : memref<2x256xf32, #tpu.memory_space<vmem>>, vector<2x256xf32>
    tpu.vector_store %arg7[%c0_6, %c0_7], %7 {strides = array<i32>} : memref<2x256xf32, #tpu.memory_space<vmem>>, vector<2x256xf32>,
    %c7_i32 = arith.constant 7 : i32
    %9 = arith.cmpi eq, %arg2, %c7_i32 : i32
    %10 = arith.extui %9 : i1 to i32
    %c0_i32_8 = arith.constant 0 : i32
    %11 = arith.cmpi ne, %10, %c0_i32_8 : i32
    scf.if %11 {
      %c0_9 = arith.constant 0 : index
      %c0_10 = arith.constant 0 : index
      %12 = vector.load %arg7[%c0_9, %c0_10] : memref<2x256xf32, #tpu.memory_space<vmem>>, vector<2x256xf32>
      %c0_11 = arith.constant 0 : index
      %c0_12 = arith.constant 0 : index
      %13 = vector.load %arg5[%c0_11, %c0_12] : memref<1x256xf32, #tpu.memory_space<vmem>>, vector<1x256xf32>
      %14 = vector.broadcast %13 : vector<1x256xf32> to vector<2x256xf32>
      %15 = arith.addf %12, %14 : vector<2x256xf32>
      %c0_13 = arith.constant 0 : index
      %c0_14 = arith.constant 0 : index
      %16 = vector.load %arg6[%c0_13, %c0_14] : memref<2x256xf32, #tpu.memory_space<vmem>>, vector<2x256xf32>
      tpu.vector_store %arg6[%c0_13, %c0_14], %15 {strides = array<i32>} : memref<2x256xf32, #tpu.memory_space<vmem>>, vector<2x256xf32>,
    } else {
    }
    return
  }
  func.func @transform_0(%arg0: i32, %arg1: i32, %arg2: i32) -> (i32, i32) {
    %c0_i32 = arith.constant 0 : i32
    return %arg0, %arg2 : i32, i32
  }
  func.func @transform_1(%arg0: i32, %arg1: i32, %arg2: i32) -> (i32, i32) {
    %c0_i32 = arith.constant 0 : i32
    return %arg2, %arg1 : i32, i32
  }
  func.func @transform_2(%arg0: i32, %arg1: i32, %arg2: i32) -> (i32, i32) {
    %c0_i32 = arith.constant 0 : i32
    %c0_i32_0 = arith.constant 0 : i32
    return %c0_i32, %arg1 : i32, i32
  }
  func.func @transform_3(%arg0: i32, %arg1: i32, %arg2: i32) -> (i32, i32) {
    %c0_i32 = arith.constant 0 : i32
    return %arg0, %arg1 : i32, i32
  }
}

module attributes {stable_mosaic.version = 11 : i64} {
  func.func @_bn_stats_kernel(%arg0: i32, %arg1: memref<2x1024xf32, #tpu.memory_space<vmem>>, %arg2: memref<1x1024xf32, #tpu.memory_space<vmem>>, %arg3: memref<1x1024xf32, #tpu.memory_space<vmem>>) attributes {dimension_semantics = [#tpu.dimension_semantics<arbitrary>], iteration_bounds = array<i64: 1>, scalar_prefetch = 0 : i64, scratch_operands = 0 : i64, tpu.core_type = #tpu.core_type<tc>, window_params = [{transform_indices = @transform_0, window_bounds = array<i64: 2, 1024>}, {pipeline_mode = #tpu.pipeline_mode<synchronous>, transform_indices = @transform_1, window_bounds = array<i64: 1, 1024>}, {pipeline_mode = #tpu.pipeline_mode<synchronous>, transform_indices = @transform_2, window_bounds = array<i64: 1, 1024>}]} {
    %c0_i32 = arith.constant 0 : i32
    %0 = arith.cmpi eq, %arg0, %c0_i32 : i32
    %1 = arith.extui %0 : i1 to i32
    %c0_i32_0 = arith.constant 0 : i32
    %2 = arith.cmpi ne, %1, %c0_i32_0 : i32
    scf.if %2 {
      %cst_11 = arith.constant 0.000000e+00 : f32
      %15 = vector.broadcast %cst_11 : f32 to vector<1x1024xf32>
      %c0_12 = arith.constant 0 : index
      %c0_13 = arith.constant 0 : index
      %16 = vector.load %arg2[%c0_12, %c0_13] : memref<1x1024xf32, #tpu.memory_space<vmem>>, vector<1x1024xf32>
      tpu.vector_store %arg2[%c0_12, %c0_13], %15 {strides = array<i32>} : memref<1x1024xf32, #tpu.memory_space<vmem>>, vector<1x1024xf32>,
      %cst_14 = arith.constant 0.000000e+00 : f32
      %17 = vector.broadcast %cst_14 : f32 to vector<1x1024xf32>
      %c0_15 = arith.constant 0 : index
      %c0_16 = arith.constant 0 : index
      %18 = vector.load %arg3[%c0_15, %c0_16] : memref<1x1024xf32, #tpu.memory_space<vmem>>, vector<1x1024xf32>
      tpu.vector_store %arg3[%c0_15, %c0_16], %17 {strides = array<i32>} : memref<1x1024xf32, #tpu.memory_space<vmem>>, vector<1x1024xf32>,
    } else {
    }
    %c0 = arith.constant 0 : index
    %c0_1 = arith.constant 0 : index
    %3 = vector.load %arg1[%c0, %c0_1] : memref<2x1024xf32, #tpu.memory_space<vmem>>, vector<2x1024xf32>
    %c0_2 = arith.constant 0 : index
    %c0_3 = arith.constant 0 : index
    %4 = vector.load %arg2[%c0_2, %c0_3] : memref<1x1024xf32, #tpu.memory_space<vmem>>, vector<1x1024xf32>
    %cst = arith.constant dense<0.000000e+00> : vector<1024xf32>
    %5 = vector.multi_reduction <add>, %3, %cst [0] : vector<2x1024xf32> to vector<1024xf32>
    %6 = vector.shape_cast %5 : vector<1024xf32> to vector<1x1024xf32>
    %7 = arith.addf %4, %6 : vector<1x1024xf32>
    %c0_4 = arith.constant 0 : index
    %c0_5 = arith.constant 0 : index
    %8 = vector.load %arg2[%c0_4, %c0_5] : memref<1x1024xf32, #tpu.memory_space<vmem>>, vector<1x1024xf32>
    tpu.vector_store %arg2[%c0_4, %c0_5], %7 {strides = array<i32>} : memref<1x1024xf32, #tpu.memory_space<vmem>>, vector<1x1024xf32>,
    %c0_6 = arith.constant 0 : index
    %c0_7 = arith.constant 0 : index
    %9 = vector.load %arg3[%c0_6, %c0_7] : memref<1x1024xf32, #tpu.memory_space<vmem>>, vector<1x1024xf32>
    %10 = arith.mulf %3, %3 : vector<2x1024xf32>
    %cst_8 = arith.constant dense<0.000000e+00> : vector<1024xf32>
    %11 = vector.multi_reduction <add>, %10, %cst_8 [0] : vector<2x1024xf32> to vector<1024xf32>
    %12 = vector.shape_cast %11 : vector<1024xf32> to vector<1x1024xf32>
    %13 = arith.addf %9, %12 : vector<1x1024xf32>
    %c0_9 = arith.constant 0 : index
    %c0_10 = arith.constant 0 : index
    %14 = vector.load %arg3[%c0_9, %c0_10] : memref<1x1024xf32, #tpu.memory_space<vmem>>, vector<1x1024xf32>
    tpu.vector_store %arg3[%c0_9, %c0_10], %13 {strides = array<i32>} : memref<1x1024xf32, #tpu.memory_space<vmem>>, vector<1x1024xf32>,
    return
  }
  func.func @transform_0(%arg0: i32) -> (i32, i32) {
    %c0_i32 = arith.constant 0 : i32
    %c0_i32_0 = arith.constant 0 : i32
    return %arg0, %c0_i32 : i32, i32
  }
  func.func @transform_1(%arg0: i32) -> (i32, i32) {
    %c0_i32 = arith.constant 0 : i32
    %c0_i32_0 = arith.constant 0 : i32
    %c0_i32_1 = arith.constant 0 : i32
    return %c0_i32, %c0_i32_0 : i32, i32
  }
  func.func @transform_2(%arg0: i32) -> (i32, i32) {
    %c0_i32 = arith.constant 0 : i32
    %c0_i32_0 = arith.constant 0 : i32
    %c0_i32_1 = arith.constant 0 : i32
    return %c0_i32, %c0_i32_0 : i32, i32
  }
}

module attributes {stable_mosaic.version = 11 : i64} {
  func.func @_bn_lif_fc2_kernel(%arg0: i32, %arg1: memref<2x1024xf32, #tpu.memory_space<vmem>>, %arg2: memref<1x1024xf32, #tpu.memory_space<vmem>>, %arg3: memref<1x1024xf32, #tpu.memory_space<vmem>>, %arg4: memref<1x1024xf32, #tpu.memory_space<vmem>>, %arg5: memref<1x1024xf32, #tpu.memory_space<vmem>>, %arg6: memref<2x1024xf32, #tpu.memory_space<vmem>>, %arg7: memref<1024x128xbf16, #tpu.memory_space<vmem>>, %arg8: memref<1x128xf32, #tpu.memory_space<vmem>>, %arg9: memref<2x128xf32, #tpu.memory_space<vmem>>, %arg10: memref<2x1024xf32, #tpu.memory_space<vmem>>, %arg11: memref<2x128xf32, #tpu.memory_space<vmem>>) attributes {dimension_semantics = [#tpu.dimension_semantics<arbitrary>], iteration_bounds = array<i64: 1>, scalar_prefetch = 0 : i64, scratch_operands = 0 : i64, tpu.core_type = #tpu.core_type<tc>, window_params = [{pipeline_mode = #tpu.pipeline_mode<synchronous>, transform_indices = @transform_0, window_bounds = array<i64: 2, 1024>}, {pipeline_mode = #tpu.pipeline_mode<synchronous>, transform_indices = @transform_1, window_bounds = array<i64: 1, 1024>}, {pipeline_mode = #tpu.pipeline_mode<synchronous>, transform_indices = @transform_2, window_bounds = array<i64: 1, 1024>}, {pipeline_mode = #tpu.pipeline_mode<synchronous>, transform_indices = @transform_3, window_bounds = array<i64: 1, 1024>}, {pipeline_mode = #tpu.pipeline_mode<synchronous>, transform_indices = @transform_4, window_bounds = array<i64: 1, 1024>}, {pipeline_mode = #tpu.pipeline_mode<synchronous>, transform_indices = @transform_5, window_bounds = array<i64: 2, 1024>}, {pipeline_mode = #tpu.pipeline_mode<synchronous>, transform_indices = @transform_6, window_bounds = array<i64: 1024, 128>}, {pipeline_mode = #tpu.pipeline_mode<synchronous>, transform_indices = @transform_7, window_bounds = array<i64: 1, 128>}, {pipeline_mode = #tpu.pipeline_mode<synchronous>, transform_indices = @transform_8, window_bounds = array<i64: 2, 128>}, {pipeline_mode = #tpu.pipeline_mode<synchronous>, transform_indices = @transform_9, window_bounds = array<i64: 2, 1024>}, {pipeline_mode = #tpu.pipeline_mode<synchronous>, transform_indices = @transform_10, window_bounds = array<i64: 2, 128>}]} {
    %c0 = arith.constant 0 : index
    %c0_0 = arith.constant 0 : index
    %0 = vector.load %arg1[%c0, %c0_0] : memref<2x1024xf32, #tpu.memory_space<vmem>>, vector<2x1024xf32>
    %c0_1 = arith.constant 0 : index
    %c0_2 = arith.constant 0 : index
    %1 = vector.load %arg2[%c0_1, %c0_2] : memref<1x1024xf32, #tpu.memory_space<vmem>>, vector<1x1024xf32>
    %c0_3 = arith.constant 0 : index
    %c0_4 = arith.constant 0 : index
    %2 = vector.load %arg3[%c0_3, %c0_4] : memref<1x1024xf32, #tpu.memory_space<vmem>>, vector<1x1024xf32>
    %c0_5 = arith.constant 0 : index
    %c0_6 = arith.constant 0 : index
    %3 = vector.load %arg4[%c0_5, %c0_6] : memref<1x1024xf32, #tpu.memory_space<vmem>>, vector<1x1024xf32>
    %c0_7 = arith.constant 0 : index
    %c0_8 = arith.constant 0 : index
    %4 = vector.load %arg5[%c0_7, %c0_8] : memref<1x1024xf32, #tpu.memory_space<vmem>>, vector<1x1024xf32>
    %c0_9 = arith.constant 0 : index
    %c0_10 = arith.constant 0 : index
    %5 = vector.load %arg6[%c0_9, %c0_10] : memref<2x1024xf32, #tpu.memory_space<vmem>>, vector<2x1024xf32>
    %cst = arith.constant 5.000000e-01 : f32
    %6 = vector.broadcast %cst : f32 to vector<1x1024xf32>
    %7 = arith.mulf %1, %6 : vector<1x1024xf32>
    %cst_11 = arith.constant 5.000000e-01 : f32
    %8 = vector.broadcast %cst_11 : f32 to vector<1x1024xf32>
    %9 = arith.mulf %2, %8 : vector<1x1024xf32>
    %10 = arith.mulf %7, %7 : vector<1x1024xf32>
    %11 = arith.subf %9, %10 : vector<1x1024xf32>
    %cst_12 = arith.constant 0.000000e+00 : f32
    %12 = vector.broadcast %cst_12 : f32 to vector<1x1024xf32>
    %13 = arith.maximumf %11, %12 : vector<1x1024xf32>
    %cst_13 = arith.constant 9.99999974E-5 : f32
    %14 = vector.broadcast %cst_13 : f32 to vector<1x1024xf32>
    %15 = arith.addf %13, %14 : vector<1x1024xf32>
    %16 = math.rsqrt %15 : vector<1x1024xf32>
    %17 = arith.mulf %3, %16 : vector<1x1024xf32>
    %18 = arith.mulf %7, %17 : vector<1x1024xf32>
    %19 = arith.subf %4, %18 : vector<1x1024xf32>
    %cst_14 = arith.constant 1.000000e+00 : f32
    %20 = vector.broadcast %cst_14 : f32 to vector<2x1024xf32>
    %21 = arith.mulf %20, %5 : vector<2x1024xf32>
    %22 = vector.broadcast %17 : vector<1x1024xf32> to vector<2x1024xf32>
    %23 = arith.mulf %0, %22 : vector<2x1024xf32>
    %24 = arith.addf %21, %23 : vector<2x1024xf32>
    %25 = vector.broadcast %19 : vector<1x1024xf32> to vector<2x1024xf32>
    %26 = arith.addf %24, %25 : vector<2x1024xf32>
    %cst_15 = arith.constant 1.000000e+00 : f32
    %27 = vector.broadcast %cst_15 : f32 to vector<2x1024xf32>
    %28 = arith.mulf %26, %27 : vector<2x1024xf32>
    %cst_16 = arith.constant 1.000000e+00 : f32
    %29 = vector.broadcast %cst_16 : f32 to vector<2x1024xf32>
    %30 = arith.subf %28, %29 : vector<2x1024xf32>
    %cst_17 = arith.constant 0.000000e+00 : f32
    %31 = vector.broadcast %cst_17 : f32 to vector<2x1024xf32>
    %32 = arith.cmpf oge, %30, %31 : vector<2x1024xf32>
    %cst_18 = arith.constant 1.000000e+00 : f32
    %cst_19 = arith.constant 0.000000e+00 : f32
    %33 = vector.broadcast %cst_18 : f32 to vector<2x1024xf32>
    %34 = vector.broadcast %cst_19 : f32 to vector<2x1024xf32>
    %35 = arith.select %32, %33, %34 : vector<2x1024xi1>, vector<2x1024xf32>
    %cst_20 = arith.constant 0.000000e+00 : f32
    %36 = vector.broadcast %cst_20 : f32 to vector<2x1024xf32>
    %37 = arith.cmpf ogt, %30, %36 : vector<2x1024xf32>
    %cst_21 = arith.constant 1.000000e+00 : f32
    %cst_22 = arith.constant 0.000000e+00 : f32
    %38 = vector.broadcast %cst_21 : f32 to vector<2x1024xf32>
    %39 = vector.broadcast %cst_22 : f32 to vector<2x1024xf32>
    %40 = arith.select %37, %38, %39 : vector<2x1024xi1>, vector<2x1024xf32>
    %41 = arith.subf %26, %40 : vector<2x1024xf32>
    %c0_23 = arith.constant 0 : index
    %c0_24 = arith.constant 0 : index
    %42 = vector.load %arg10[%c0_23, %c0_24] : memref<2x1024xf32, #tpu.memory_space<vmem>>, vector<2x1024xf32>
    tpu.vector_store %arg10[%c0_23, %c0_24], %41 {strides = array<i32>} : memref<2x1024xf32, #tpu.memory_space<vmem>>, vector<2x1024xf32>,
    %c0_25 = arith.constant 0 : index
    %c0_26 = arith.constant 0 : index
    %43 = vector.load %arg9[%c0_25, %c0_26] : memref<2x128xf32, #tpu.memory_space<vmem>>, vector<2x128xf32>
    %c0_27 = arith.constant 0 : index
    %c0_28 = arith.constant 0 : index
    %44 = vector.load %arg8[%c0_27, %c0_28] : memref<1x128xf32, #tpu.memory_space<vmem>>, vector<1x128xf32>
    %45 = vector.broadcast %44 : vector<1x128xf32> to vector<2x128xf32>
    %46 = arith.addf %43, %45 : vector<2x128xf32>
    %47 = arith.truncf %35 : vector<2x1024xf32> to vector<2x1024xbf16>
    %c0_29 = arith.constant 0 : index
    %c0_30 = arith.constant 0 : index
    %48 = vector.load %arg7[%c0_29, %c0_30] : memref<1024x128xbf16, #tpu.memory_space<vmem>>, vector<1024x128xbf16>
    %cst_31 = arith.constant dense<0.000000e+00> : vector<2x128xf32>
    %49 = tpu.matmul %47, %48, %cst_31 {dimension_numbers = #tpu.dot_dimension_numbers<[1], [0], [0], [1], [0, 0, 1, 1], [], []>} : vector<2x1024xbf16>, vector<1024x128xbf16>, vector<2x128xf32> -> vector<2x128xf32>
    %50 = arith.addf %46, %49 : vector<2x128xf32>
    %c0_32 = arith.constant 0 : index
    %c0_33 = arith.constant 0 : index
    %51 = vector.load %arg11[%c0_32, %c0_33] : memref<2x128xf32, #tpu.memory_space<vmem>>, vector<2x128xf32>
    tpu.vector_store %arg11[%c0_32, %c0_33], %50 {strides = array<i32>} : memref<2x128xf32, #tpu.memory_space<vmem>>, vector<2x128xf32>,
    return
  }
  func.func @transform_0(%arg0: i32) -> (i32, i32) {
    %c0_i32 = arith.constant 0 : i32
    %c0_i32_0 = arith.constant 0 : i32
    %c0_i32_1 = arith.constant 0 : i32
    return %c0_i32, %c0_i32_0 : i32, i32
  }
  func.func @transform_1(%arg0: i32) -> (i32, i32) {
    %c0_i32 = arith.constant 0 : i32
    %c0_i32_0 = arith.constant 0 : i32
    %c0_i32_1 = arith.constant 0 : i32
    return %c0_i32, %c0_i32_0 : i32, i32
  }
  func.func @transform_2(%arg0: i32) -> (i32, i32) {
    %c0_i32 = arith.constant 0 : i32
    %c0_i32_0 = arith.constant 0 : i32
    %c0_i32_1 = arith.constant 0 : i32
    return %c0_i32, %c0_i32_0 : i32, i32
  }
  func.func @transform_3(%arg0: i32) -> (i32, i32) {
    %c0_i32 = arith.constant 0 : i32
    %c0_i32_0 = arith.constant 0 : i32
    %c0_i32_1 = arith.constant 0 : i32
    return %c0_i32, %c0_i32_0 : i32, i32
  }
  func.func @transform_4(%arg0: i32) -> (i32, i32) {
    %c0_i32 = arith.constant 0 : i32
    %c0_i32_0 = arith.constant 0 : i32
    %c0_i32_1 = arith.constant 0 : i32
    return %c0_i32, %c0_i32_0 : i32, i32
  }
  func.func @transform_5(%arg0: i32) -> (i32, i32) {
    %c0_i32 = arith.constant 0 : i32
    %c0_i32_0 = arith.constant 0 : i32
    %c0_i32_1 = arith.constant 0 : i32
    return %c0_i32, %c0_i32_0 : i32, i32
  }
  func.func @transform_6(%arg0: i32) -> (i32, i32) {
    %c0_i32 = arith.constant 0 : i32
    %c0_i32_0 = arith.constant 0 : i32
    %c0_i32_1 = arith.constant 0 : i32
    return %c0_i32, %c0_i32_0 : i32, i32
  }
  func.func @transform_7(%arg0: i32) -> (i32, i32) {
    %c0_i32 = arith.constant 0 : i32
    %c0_i32_0 = arith.constant 0 : i32
    %c0_i32_1 = arith.constant 0 : i32
    return %c0_i32, %c0_i32_0 : i32, i32
  }
  func.func @transform_8(%arg0: i32) -> (i32, i32) {
    %c0_i32 = arith.constant 0 : i32
    %c0_i32_0 = arith.constant 0 : i32
    %c0_i32_1 = arith.constant 0 : i32
    return %c0_i32, %c0_i32_0 : i32, i32
  }
  func.func @transform_9(%arg0: i32) -> (i32, i32) {
    %c0_i32 = arith.constant 0 : i32
    %c0_i32_0 = arith.constant 0 : i32
    %c0_i32_1 = arith.constant 0 : i32
    return %c0_i32, %c0_i32_0 : i32, i32
  }
  func.func @transform_10(%arg0: i32) -> (i32, i32) {
    %c0_i32 = arith.constant 0 : i32
    %c0_i32_0 = arith.constant 0 : i32
    %c0_i32_1 = arith.constant 0 : i32
    return %c0_i32, %c0_i32_0 : i32, i32
  }
}

</mosaic_0001>

<llo_original>
// kernel: snn_vgg9_forward.70
$region0: #{snn_vgg9_forward.70}
  #allocation0 [shape = 'u32[]', space=smem, size = 0x4, offset = 0x4, fixed_abs, tag = 'smem constant byte address 0x4 - core index']
  #allocation1 [shape = 'u32[72,128]{1,0:T(1,128)}', space=vmem, size = 0x9000, scoped, tag = 'internal scratch']
  #allocation2 [shape = 'f32[128,128]{1,0:T(8,128)}', space=vmem, size = 0x10000, scoped, tag = 'scratch operand']
  %s0 = inlined_call_operand.vmem [shape: bf16[128,128], index: 0, kind: input, shape index: {}]
  %s1 = inlined_call_operand.hbm [shape: bf16[128,128], index: 1, kind: input, shape index: {}]
  %s2 = inlined_call_operand.hbm [shape: f32[1,128], index: 2, kind: input, shape index: {}]
  %s3 = inlined_call_operand.vmem [shape: f32[128,128], index: 3, kind: output, shape index: {}]
  %s4 = sld [smem:[#allocation0]]
  $region38: #{snn_vgg9_forward.70} parent=0
    _
  %s6 = ssub.s32 1, %s4
  %s7 = scalar_select 0, %s6, %s4
  $region1: #{snn_vgg9_forward.70} parent=0
    #allocation3 [shape = 'u8[32768]{0}', space=vmem, size = 0x8000, scoped, tag = 'input window, operand 1, single buffered']
    #allocation4 [shape = 's32[1]{0}', space=sflag, size = 0x4, scoped, tag = 'scoped memory for snn_vgg9_forward.70']
    #allocation5 [shape = 'u8[512]{0}', space=vmem, size = 0x400, scoped, tag = 'input window, operand 2, single buffered']
    #allocation6 [shape = 's32[1]{0}', space=sflag, size = 0x4, scoped, tag = 'scoped memory for snn_vgg9_forward.70']
    %8 = vsyncpa [#allocation4], 0
    %9 = vsyncpa [#allocation6], 0
    // Predicated region
    $region2: #{snn_vgg9_forward.70} parent=1 // pred_check
      _
    $region3: #{snn_vgg9_forward.70} parent=1 // pred_check_branch
      %11 = sbr.rel (0) target = $region5
    $region4: #{snn_vgg9_forward.70} parent=1 // pred_region
      _
    $region5: #{snn_vgg9_forward.70} parent=1 // pred_fallthru
      _
    // Predicated region
    $region6: #{snn_vgg9_forward.70} parent=1 // pred_check
      _
    $region7: #{snn_vgg9_forward.70} parent=1 // pred_check_branch
      %13 = sbr.rel (0) target = $region9
    $region8: #{snn_vgg9_forward.70} parent=1 // pred_region
      %15 = vsyncadd [#allocation4], 0
      %s16 = sshll.u32 %s1, 4
      %s17 = int_to_ptr.hbm [resolvable:$true] %s16
      %s18 = sshll.u32 [#allocation3], 4
      %s19 = int_to_ptr.vmem [resolvable:$true] %s18
      %24 = dma.hbm_to_vmem [thread:$0]  %s17, 1024, %s19, [#allocation4], 64, 64, 4
    $region9: #{snn_vgg9_forward.70} parent=1 // pred_fallthru
      _
    // Predicated region
    $region10: #{snn_vgg9_forward.70} parent=1 // pred_check
      _
    $region11: #{snn_vgg9_forward.70} parent=1 // pred_check_branch
      %26 = sbr.rel (0) target = $region13
    $region12: #{snn_vgg9_forward.70} parent=1 // pred_region
      %28 = vsyncadd [#allocation6], 0
      %s30 = sshll.u32 %s2, 4
      %s31 = int_to_ptr.hbm [resolvable:$true] %s30
      %s32 = sshll.u32 [#allocation5], 4
      %s33 = int_to_ptr.vmem [resolvable:$true] %s32
      %35 = dma.hbm_to_vmem [thread:$0]  %s31, 16, %s33, [#allocation6]
    $region13: #{snn_vgg9_forward.70} parent=1 // pred_fallthru
      _
    // Predicated region
    $region14: #{snn_vgg9_forward.70} parent=1 // pred_check
      _
    $region15: #{snn_vgg9_forward.70} parent=1 // pred_check_branch
      %37 = sbr.rel (0) target = $region17
    $region16: #{snn_vgg9_forward.70} parent=1 // pred_region
      %39 = dma.done [#allocation4], 1024
    $region17: #{snn_vgg9_forward.70} parent=1 // pred_fallthru
      _
    // Predicated region
    $region18: #{snn_vgg9_forward.70} parent=1 // pred_check
      _
    $region19: #{snn_vgg9_forward.70} parent=1 // pred_check_branch
      %41 = sbr.rel (0) target = $region21
    $region20: #{snn_vgg9_forward.70} parent=1 // pred_region
      %43 = dma.done [#allocation6], 16
    $region21: #{snn_vgg9_forward.70} parent=1 // pred_fallthru
      _
    %p44 = scmp.eq.s32.totalorder 0, 0
    // Predicated region
    $region22: #{snn_vgg9_forward.70} parent=1 // pred_check
      %p45 = pneg %p44
    $region23: #{snn_vgg9_forward.70} parent=1 // pred_check_branch
      %47 = sbr.rel (%p45) target = $region25
    $region24: #{snn_vgg9_forward.70} parent=1 // pred_region
      %48 = vst [vmem:[#allocation2] sm:$0xff] 0.0
      %49 = vst [vmem:[#allocation2 + $0x8] sm:$0xff] 0.0
      %50 = vst [vmem:[#allocation2 + $0x10] sm:$0xff] 0.0
      %51 = vst [vmem:[#allocation2 + $0x18] sm:$0xff] 0.0
      %52 = vst [vmem:[#allocation2 + $0x20] sm:$0xff] 0.0
      %53 = vst [vmem:[#allocation2 + $0x28] sm:$0xff] 0.0
      %54 = vst [vmem:[#allocation2 + $0x30] sm:$0xff] 0.0
      %55 = vst [vmem:[#allocation2 + $0x38] sm:$0xff] 0.0
      %56 = vst [vmem:[#allocation2 + $0x40] sm:$0xff] 0.0
      %57 = vst [vmem:[#allocation2 + $0x48] sm:$0xff] 0.0
      %58 = vst [vmem:[#allocation2 + $0x50] sm:$0xff] 0.0
      %59 = vst [vmem:[#allocation2 + $0x58] sm:$0xff] 0.0
      %60 = vst [vmem:[#allocation2 + $0x60] sm:$0xff] 0.0
      %61 = vst [vmem:[#allocation2 + $0x68] sm:$0xff] 0.0
      %62 = vst [vmem:[#allocation2 + $0x70] sm:$0xff] 0.0
      %63 = vst [vmem:[#allocation2 + $0x78] sm:$0xff] 0.0
    $region25: #{snn_vgg9_forward.70} parent=1 // pred_fallthru
      _
    %v64 = vld [vmem:[#allocation2] sm:$0xff]
    %v65 = vld [vmem:[#allocation2 + $0x8] sm:$0xff]
    %v66 = vld [vmem:[#allocation2 + $0x10] sm:$0xff]
    %v67 = vld [vmem:[#allocation2 + $0x18] sm:$0xff]
    %v68 = vld [vmem:[#allocation2 + $0x20] sm:$0xff]
    %v69 = vld [vmem:[#allocation2 + $0x28] sm:$0xff]
    %v70 = vld [vmem:[#allocation2 + $0x30] sm:$0xff]
    %v71 = vld [vmem:[#allocation2 + $0x38] sm:$0xff]
    %v72 = vld [vmem:[#allocation2 + $0x40] sm:$0xff]
    %v73 = vld [vmem:[#allocation2 + $0x48] sm:$0xff]
    %v74 = vld [vmem:[#allocation2 + $0x50] sm:$0xff]
    %v75 = vld [vmem:[#allocation2 + $0x58] sm:$0xff]
    %v76 = vld [vmem:[#allocation2 + $0x60] sm:$0xff]
    %v77 = vld [vmem:[#allocation2 + $0x68] sm:$0xff]
    %v78 = vld [vmem:[#allocation2 + $0x70] sm:$0xff]
    %v79 = vld [vmem:[#allocation2 + $0x78] sm:$0xff]
    %v80 = vld [vmem:[%s0] sm:$0xf]
    %v81 = vld [vmem:[%s0 + $0x4] sm:$0xf]
    %v82 = vld [vmem:[%s0 + $0x8] sm:$0xf]
    %v83 = vld [vmem:[%s0 + $0xc] sm:$0xf]
    %v84 = vld [vmem:[%s0 + $0x10] sm:$0xf]
    %v85 = vld [vmem:[%s0 + $0x14] sm:$0xf]
    %v86 = vld [vmem:[%s0 + $0x18] sm:$0xf]
    %v87 = vld [vmem:[%s0 + $0x1c] sm:$0xf]
    %v88 = vld [vmem:[%s0 + $0x20] sm:$0xf]
    %v89 = vld [vmem:[%s0 + $0x24] sm:$0xf]
    %v90 = vld [vmem:[%s0 + $0x28] sm:$0xf]
    %v91 = vld [vmem:[%s0 + $0x2c] sm:$0xf]
    %v92 = vld [vmem:[%s0 + $0x30] sm:$0xf]
    %v93 = vld [vmem:[%s0 + $0x34] sm:$0xf]
    %v94 = vld [vmem:[%s0 + $0x38] sm:$0xf]
    %v95 = vld [vmem:[%s0 + $0x3c] sm:$0xf]
    %v96 = vld [vmem:[#allocation3] sm:$0xf]
    %v97 = vld [vmem:[#allocation3 + $0x4] sm:$0xf]
    %v98 = vld [vmem:[#allocation3 + $0x8] sm:$0xf]
    %v99 = vld [vmem:[#allocation3 + $0xc] sm:$0xf]
    %v100 = vld [vmem:[#allocation3 + $0x10] sm:$0xf]
    %v101 = vld [vmem:[#allocation3 + $0x14] sm:$0xf]
    %v102 = vld [vmem:[#allocation3 + $0x18] sm:$0xf]
    %v103 = vld [vmem:[#allocation3 + $0x1c] sm:$0xf]
    %v104 = vld [vmem:[#allocation3 + $0x20] sm:$0xf]
    %v105 = vld [vmem:[#allocation3 + $0x24] sm:$0xf]
    %v106 = vld [vmem:[#allocation3 + $0x28] sm:$0xf]
    %v107 = vld [vmem:[#allocation3 + $0x2c] sm:$0xf]
    %v108 = vld [vmem:[#allocation3 + $0x30] sm:$0xf]
    %v109 = vld [vmem:[#allocation3 + $0x34] sm:$0xf]
    %v110 = vld [vmem:[#allocation3 + $0x38] sm:$0xf]
    %v111 = vld [vmem:[#allocation3 + $0x3c] sm:$0xf]
    %v128 = vunpack.c.l.b16 %v80
    %v129 = vunpack.c.l.b16 %v81
    %v130 = vunpack.c.l.b16 %v82
    %v131 = vunpack.c.l.b16 %v83
    %v132 = vunpack.c.l.b16 %v84
    %v133 = vunpack.c.l.b16 %v85
    %v134 = vunpack.c.l.b16 %v86
    %v135 = vunpack.c.l.b16 %v87
    %v136 = vunpack.c.l.b16 %v88
    %v137 = vunpack.c.l.b16 %v89
    %v138 = vunpack.c.l.b16 %v90
    %v139 = vunpack.c.l.b16 %v91
    %v140 = vunpack.c.l.b16 %v92
    %v141 = vunpack.c.l.b16 %v93
    %v142 = vunpack.c.l.b16 %v94
    %v143 = vunpack.c.l.b16 %v95
    %v144 = vpack.c.b16 %v129, %v128
    %v145 = vpack.c.b16 %v131, %v130
    %v146 = vpack.c.b16 %v133, %v132
    %v147 = vpack.c.b16 %v135, %v134
    %v148 = vpack.c.b16 %v137, %v136
    %v149 = vpack.c.b16 %v139, %v138
    %v150 = vpack.c.b16 %v141, %v140
    %v151 = vpack.c.b16 %v143, %v142
    %v176 = vunpack.c.l.b16 %v96
    %v177 = vunpack.c.l.b16 %v97
    %v178 = vunpack.c.l.b16 %v98
    %v179 = vunpack.c.l.b16 %v99
    %v180 = vunpack.c.l.b16 %v100
    %v181 = vunpack.c.l.b16 %v101
    %v182 = vunpack.c.l.b16 %v102
    %v183 = vunpack.c.l.b16 %v103
    %v184 = vunpack.c.l.b16 %v104
    %v185 = vunpack.c.l.b16 %v105
    %v186 = vunpack.c.l.b16 %v106
    %v187 = vunpack.c.l.b16 %v107
    %v188 = vunpack.c.l.b16 %v108
    %v189 = vunpack.c.l.b16 %v109
    %v190 = vunpack.c.l.b16 %v110
    %v191 = vunpack.c.l.b16 %v111
    %v192 = vpack.c.b16 %v177, %v176
    %v193 = vpack.c.b16 %v179, %v178
    %v194 = vpack.c.b16 %v181, %v180
    %v195 = vpack.c.b16 %v183, %v182
    %v196 = vpack.c.b16 %v185, %v184
    %v197 = vpack.c.b16 %v187, %v186
    %v198 = vpack.c.b16 %v189, %v188
    %v199 = vpack.c.b16 %v191, %v190
    %208 = vmatpush.bf16.msra.mxu0 %v199
    %209 = vmatpush.bf16.msra.mxu0 %v198
    %210 = vmatpush.bf16.msra.mxu0 %v197
    %211 = vmatpush.bf16.msra.mxu0 %v196
    %212 = vmatpush.bf16.msra.mxu0 %v195
    %213 = vmatpush.bf16.msra.mxu0 %v194
    %214 = vmatpush.bf16.msra.mxu0 %v193
    %215 = vmatpush.bf16.msra.mxu0 %v192
    %216 = vmatmul.bf16.gmra.mxu0 %v144
    %v217 = vpop.f32.mrf.mxu0
    %v218 = vadd.f32 0.0, %v217
    %v219 = vpop.f32.mrf.mxu0
    %v220 = vadd.f32 0.0, %v219
    %221 = vmatmul.bf16.gmra.mxu0 %v145
    %v222 = vpop.f32.mrf.mxu0
    %v223 = vadd.f32 0.0, %v222
    %v224 = vpop.f32.mrf.mxu0
    %v225 = vadd.f32 0.0, %v224
    %226 = vmatmul.bf16.gmra.mxu0 %v146
    %v227 = vpop.f32.mrf.mxu0
    %v228 = vadd.f32 0.0, %v227
    %v229 = vpop.f32.mrf.mxu0
    %v230 = vadd.f32 0.0, %v229
    %231 = vmatmul.bf16.gmra.mxu0 %v147
    %v232 = vpop.f32.mrf.mxu0
    %v233 = vadd.f32 0.0, %v232
    %v234 = vpop.f32.mrf.mxu0
    %v235 = vadd.f32 0.0, %v234
    %236 = vmatmul.bf16.gmra.mxu0 %v148
    %v237 = vpop.f32.mrf.mxu0
    %v238 = vadd.f32 0.0, %v237
    %v239 = vpop.f32.mrf.mxu0
    %v240 = vadd.f32 0.0, %v239
    %241 = vmatmul.bf16.gmra.mxu0 %v149
    %v242 = vpop.f32.mrf.mxu0
    %v243 = vadd.f32 0.0, %v242
    %v244 = vpop.f32.mrf.mxu0
    %v245 = vadd.f32 0.0, %v244
    %246 = vmatmul.bf16.gmra.mxu0 %v150
    %v247 = vpop.f32.mrf.mxu0
    %v248 = vadd.f32 0.0, %v247
    %v249 = vpop.f32.mrf.mxu0
    %v250 = vadd.f32 0.0, %v249
    %251 = vmatmul.bf16.gmra.mxu0 %v151
    %v252 = vpop.f32.mrf.mxu0
    %v253 = vadd.f32 0.0, %v252
    %v254 = vpop.f32.mrf.mxu0
    %v255 = vadd.f32 0.0, %v254
    %256 = vdwg.mxu0
    %v257 = vadd.f32 %v64, %v218
    %v258 = vadd.f32 %v65, %v220
    %v259 = vadd.f32 %v66, %v223
    %v260 = vadd.f32 %v67, %v225
    %v261 = vadd.f32 %v68, %v228
    %v262 = vadd.f32 %v69, %v230
    %v263 = vadd.f32 %v70, %v233
    %v264 = vadd.f32 %v71, %v235
    %v265 = vadd.f32 %v72, %v238
    %v266 = vadd.f32 %v73, %v240
    %v267 = vadd.f32 %v74, %v243
    %v268 = vadd.f32 %v75, %v245
    %v269 = vadd.f32 %v76, %v248
    %v270 = vadd.f32 %v77, %v250
    %v271 = vadd.f32 %v78, %v253
    %v272 = vadd.f32 %v79, %v255
    %273 = vst [vmem:[#allocation2] sm:$0xff] %v257
    %274 = vst [vmem:[#allocation2 + $0x8] sm:$0xff] %v258
    %275 = vst [vmem:[#allocation2 + $0x10] sm:$0xff] %v259
    %276 = vst [vmem:[#allocation2 + $0x18] sm:$0xff] %v260
    %277 = vst [vmem:[#allocation2 + $0x20] sm:$0xff] %v261
    %278 = vst [vmem:[#allocation2 + $0x28] sm:$0xff] %v262
    %279 = vst [vmem:[#allocation2 + $0x30] sm:$0xff] %v263
    %280 = vst [vmem:[#allocation2 + $0x38] sm:$0xff] %v264
    %281 = vst [vmem:[#allocation2 + $0x40] sm:$0xff] %v265
    %282 = vst [vmem:[#allocation2 + $0x48] sm:$0xff] %v266
    %283 = vst [vmem:[#allocation2 + $0x50] sm:$0xff] %v267
    %284 = vst [vmem:[#allocation2 + $0x58] sm:$0xff] %v268
    %285 = vst [vmem:[#allocation2 + $0x60] sm:$0xff] %v269
    %286 = vst [vmem:[#allocation2 + $0x68] sm:$0xff] %v270
    %287 = vst [vmem:[#allocation2 + $0x70] sm:$0xff] %v271
    %288 = vst [vmem:[#allocation2 + $0x78] sm:$0xff] %v272
    // Predicated region
    $region26: #{snn_vgg9_forward.70} parent=1 // pred_check
      %p289 = pneg %p44
    $region27: #{snn_vgg9_forward.70} parent=1 // pred_check_branch
      %291 = sbr.rel (%p289) target = $region29
    $region28: #{snn_vgg9_forward.70} parent=1 // pred_region
      %v292 = vld [vmem:[#allocation2] sm:$0xff]
      %v293 = vld [vmem:[#allocation2 + $0x8] sm:$0xff]
      %v294 = vld [vmem:[#allocation2 + $0x10] sm:$0xff]
      %v295 = vld [vmem:[#allocation2 + $0x18] sm:$0xff]
      %v296 = vld [vmem:[#allocation2 + $0x20] sm:$0xff]
      %v297 = vld [vmem:[#allocation2 + $0x28] sm:$0xff]
      %v298 = vld [vmem:[#allocation2 + $0x30] sm:$0xff]
      %v299 = vld [vmem:[#allocation2 + $0x38] sm:$0xff]
      %v300 = vld [vmem:[#allocation2 + $0x40] sm:$0xff]
      %v301 = vld [vmem:[#allocation2 + $0x48] sm:$0xff]
      %v302 = vld [vmem:[#allocation2 + $0x50] sm:$0xff]
      %v303 = vld [vmem:[#allocation2 + $0x58] sm:$0xff]
      %v304 = vld [vmem:[#allocation2 + $0x60] sm:$0xff]
      %v305 = vld [vmem:[#allocation2 + $0x68] sm:$0xff]
      %v306 = vld [vmem:[#allocation2 + $0x70] sm:$0xff]
      %v307 = vld [vmem:[#allocation2 + $0x78] sm:$0xff]
      %v308 = vld [vmem:[#allocation5] sm:$0x1]
      %v310 = vperm.slane %v308, 0
      %v312 = vadd.f32 %v292, %v310
      %v313 = vadd.f32 %v293, %v310
      %v314 = vadd.f32 %v294, %v310
      %v315 = vadd.f32 %v295, %v310
      %v316 = vadd.f32 %v296, %v310
      %v317 = vadd.f32 %v297, %v310
      %v318 = vadd.f32 %v298, %v310
      %v319 = vadd.f32 %v299, %v310
      %v320 = vadd.f32 %v300, %v310
      %v321 = vadd.f32 %v301, %v310
      %v322 = vadd.f32 %v302, %v310
      %v323 = vadd.f32 %v303, %v310
      %v324 = vadd.f32 %v304, %v310
      %v325 = vadd.f32 %v305, %v310
      %v326 = vadd.f32 %v306, %v310
      %v327 = vadd.f32 %v307, %v310
      %328 = vst [vmem:[%s3] sm:$0xff] %v312
      %329 = vst [vmem:[%s3 + $0x8] sm:$0xff] %v313
      %330 = vst [vmem:[%s3 + $0x10] sm:$0xff] %v314
      %331 = vst [vmem:[%s3 + $0x18] sm:$0xff] %v315
      %332 = vst [vmem:[%s3 + $0x20] sm:$0xff] %v316
      %333 = vst [vmem:[%s3 + $0x28] sm:$0xff] %v317
      %334 = vst [vmem:[%s3 + $0x30] sm:$0xff] %v318
      %335 = vst [vmem:[%s3 + $0x38] sm:$0xff] %v319
      %336 = vst [vmem:[%s3 + $0x40] sm:$0xff] %v320
      %337 = vst [vmem:[%s3 + $0x48] sm:$0xff] %v321
      %338 = vst [vmem:[%s3 + $0x50] sm:$0xff] %v322
      %339 = vst [vmem:[%s3 + $0x58] sm:$0xff] %v323
      %340 = vst [vmem:[%s3 + $0x60] sm:$0xff] %v324
      %341 = vst [vmem:[%s3 + $0x68] sm:$0xff] %v325
      %342 = vst [vmem:[%s3 + $0x70] sm:$0xff] %v326
      %343 = vst [vmem:[%s3 + $0x78] sm:$0xff] %v327
    $region29: #{snn_vgg9_forward.70} parent=1 // pred_fallthru
      _
    // Predicated region
    $region30: #{snn_vgg9_forward.70} parent=1 // pred_check
      _
    $region31: #{snn_vgg9_forward.70} parent=1 // pred_check_branch
      %345 = sbr.rel (0) target = $region33
    $region32: #{snn_vgg9_forward.70} parent=1 // pred_region
      _
    $region33: #{snn_vgg9_forward.70} parent=1 // pred_fallthru
      _
    // Predicated region
    $region34: #{snn_vgg9_forward.70} parent=1 // pred_check
      _
    $region35: #{snn_vgg9_forward.70} parent=1 // pred_check_branch
      %347 = sbr.rel (0) target = $region37
    $region36: #{snn_vgg9_forward.70} parent=1 // pred_region
      _
    $region37: #{snn_vgg9_forward.70} parent=1 // pred_fallthru
      _
    %348 = vsyncpa [#allocation4], 1
    %349 = vsyncpa [#allocation6], 1

// kernel: snn_vgg9_forward.71
$region0: #{snn_vgg9_forward.71}
  #allocation0 [shape = 'u32[]', space=smem, size = 0x4, offset = 0x4, fixed_abs, tag = 'smem constant byte address 0x4 - core index']
  #allocation1 [shape = 'u32[72,128]{1,0:T(1,128)}', space=vmem, size = 0x9000, scoped, tag = 'internal scratch']
  %s0 = inlined_call_operand.vmem [shape: f32[128,128], index: 0, kind: input, shape index: {}]
  %s1 = inlined_call_operand.vmem [shape: f32[1,128], index: 1, kind: output, shape index: {0}]
  %s2 = inlined_call_operand.vmem [shape: f32[1,128], index: 2, kind: output, shape index: {1}]
  %3 = xla_tuple %s1, %s2
  %s4 = sld [smem:[#allocation0]]
  $region26: #{snn_vgg9_forward.71} parent=0
    _
  %s6 = ssub.s32 1, %s4
  %s7 = scalar_select 0, %s6, %s4
  // Predicated region
  $region2: #{snn_vgg9_forward.71} parent=0 // pred_check
    _
  $region3: #{snn_vgg9_forward.71} parent=0 // pred_check_branch
    %9 = sbr.rel (0) target = $region5
  $region4: #{snn_vgg9_forward.71} parent=0 // pred_region
    _
  $region5: #{snn_vgg9_forward.71} parent=0 // pred_fallthru
    _
  %p10 = scmp.eq.s32.totalorder 0, 0
  // Predicated region
  $region6: #{snn_vgg9_forward.71} parent=0 // pred_check
    %p11 = pneg %p10
  $region7: #{snn_vgg9_forward.71} parent=0 // pred_check_branch
    %13 = sbr.rel (%p11) target = $region9
  $region8: #{snn_vgg9_forward.71} parent=0 // pred_region
    %14 = vst [vmem:[%s1] sm:$0x1] 0.0
    %15 = vst [vmem:[%s2] sm:$0x1] 0.0
  $region9: #{snn_vgg9_forward.71} parent=0 // pred_fallthru
    _
  %v16 = vld [vmem:[%s0] sm:$0xff]
  %v17 = vld [vmem:[%s0 + $0x8] sm:$0xff]
  %v18 = vld [vmem:[%s0 + $0x10] sm:$0xff]
  %v19 = vld [vmem:[%s0 + $0x18] sm:$0xff]
  %v20 = vld [vmem:[%s0 + $0x20] sm:$0xff]
  %v21 = vld [vmem:[%s0 + $0x28] sm:$0xff]
  %v22 = vld [vmem:[%s0 + $0x30] sm:$0xff]
  %v23 = vld [vmem:[%s0 + $0x38] sm:$0xff]
  %v24 = vld [vmem:[%s0 + $0x40] sm:$0xff]
  %v25 = vld [vmem:[%s0 + $0x48] sm:$0xff]
  %v26 = vld [vmem:[%s0 + $0x50] sm:$0xff]
  %v27 = vld [vmem:[%s0 + $0x58] sm:$0xff]
  %v28 = vld [vmem:[%s0 + $0x60] sm:$0xff]
  %v29 = vld [vmem:[%s0 + $0x68] sm:$0xff]
  %v30 = vld [vmem:[%s0 + $0x70] sm:$0xff]
  %v31 = vld [vmem:[%s0 + $0x78] sm:$0xff]
  %v32 = vld [vmem:[%s1] sm:$0x1]
  %v33 = vadd.f32 %v16, %v17
  %v34 = vadd.f32 %v33, %v18
  %v35 = vadd.f32 %v34, %v19
  %v36 = vadd.f32 %v35, %v20
  %v37 = vadd.f32 %v36, %v21
  %v38 = vadd.f32 %v37, %v22
  %v39 = vadd.f32 %v38, %v23
  %v40 = vadd.f32 %v39, %v24
  %v41 = vadd.f32 %v40, %v25
  %v42 = vadd.f32 %v41, %v26
  %v43 = vadd.f32 %v42, %v27
  %v44 = vadd.f32 %v43, %v28
  %v45 = vadd.f32 %v44, %v29
  %v46 = vadd.f32 %v45, %v30
  %v47 = vadd.f32 %v46, %v31
  %v48 = vrot.slane %v47, 4
  %v49 = vadd.f32 %v47, %v48
  %v50 = vrot.slane %v49, 2
  %v51 = vadd.f32 %v49, %v50
  %v52 = vrot.slane %v51, 1
  %v53 = vadd.f32 %v51, %v52
  %v54 = vadd.f32 %v32, %v53
  %55 = vst [vmem:[%s1] sm:$0x1] %v54
  %v56 = vld [vmem:[%s2] sm:$0x1]
  %v57 = vmul.f32 %v16, %v16
  %v58 = vmul.f32 %v17, %v17
  %v59 = vmul.f32 %v18, %v18
  %v60 = vmul.f32 %v19, %v19
  %v61 = vmul.f32 %v20, %v20
  %v62 = vmul.f32 %v21, %v21
  %v63 = vmul.f32 %v22, %v22
  %v64 = vmul.f32 %v23, %v23
  %v65 = vmul.f32 %v24, %v24
  %v66 = vmul.f32 %v25, %v25
  %v67 = vmul.f32 %v26, %v26
  %v68 = vmul.f32 %v27, %v27
  %v69 = vmul.f32 %v28, %v28
  %v70 = vmul.f32 %v29, %v29
  %v71 = vmul.f32 %v30, %v30
  %v72 = vmul.f32 %v31, %v31
  %v73 = vadd.f32 %v57, %v58
  %v74 = vadd.f32 %v73, %v59
  %v75 = vadd.f32 %v74, %v60
  %v76 = vadd.f32 %v75, %v61
  %v77 = vadd.f32 %v76, %v62
  %v78 = vadd.f32 %v77, %v63
  %v79 = vadd.f32 %v78, %v64
  %v80 = vadd.f32 %v79, %v65
  %v81 = vadd.f32 %v80, %v66
  %v82 = vadd.f32 %v81, %v67
  %v83 = vadd.f32 %v82, %v68
  %v84 = vadd.f32 %v83, %v69
  %v85 = vadd.f32 %v84, %v70
  %v86 = vadd.f32 %v85, %v71
  %v87 = vadd.f32 %v86, %v72
  %v88 = vrot.slane %v87, 4
  %v89 = vadd.f32 %v87, %v88
  %v90 = vrot.slane %v89, 2
  %v91 = vadd.f32 %v89, %v90
  %v92 = vrot.slane %v91, 1
  %v93 = vadd.f32 %v91, %v92
  %v94 = vadd.f32 %v56, %v93
  %95 = vst [vmem:[%s2] sm:$0x1] %v94
  // Predicated region
  $region10: #{snn_vgg9_forward.71} parent=0 // pred_check
    _
  $region11: #{snn_vgg9_forward.71} parent=0 // pred_check_branch
    %97 = sbr.rel (0) target = $region13
  $region12: #{snn_vgg9_forward.71} parent=0 // pred_region
    _
  $region13: #{snn_vgg9_forward.71} parent=0 // pred_fallthru
    _
  // Predicated region
  $region14: #{snn_vgg9_forward.71} parent=0 // pred_check
    _
  $region15: #{snn_vgg9_forward.71} parent=0 // pred_check_branch
    %99 = sbr.rel (0) target = $region17
  $region16: #{snn_vgg9_forward.71} parent=0 // pred_region
    _
  $region17: #{snn_vgg9_forward.71} parent=0 // pred_fallthru
    _
  // Predicated region
  $region18: #{snn_vgg9_forward.71} parent=0 // pred_check
    _
  $region19: #{snn_vgg9_forward.71} parent=0 // pred_check_branch
    %101 = sbr.rel (0) target = $region21
  $region20: #{snn_vgg9_forward.71} parent=0 // pred_region
    _
  $region21: #{snn_vgg9_forward.71} parent=0 // pred_fallthru
    _
  // Predicated region
  $region22: #{snn_vgg9_forward.71} parent=0 // pred_check
    _
  $region23: #{snn_vgg9_forward.71} parent=0 // pred_check_branch
    %103 = sbr.rel (0) target = $region25
  $region24: #{snn_vgg9_forward.71} parent=0 // pred_region
    _
  $region25: #{snn_vgg9_forward.71} parent=0 // pred_fallthru
    _

// kernel: snn_vgg9_forward.48
$region0: #{snn_vgg9_forward.48}
  #allocation0 [shape = 'u32[]', space=smem, size = 0x4, offset = 0x4, fixed_abs, tag = 'smem constant byte address 0x4 - core index']
  #allocation1 [shape = 'u32[72,128]{1,0:T(1,128)}', space=vmem, size = 0x9000, scoped, tag = 'internal scratch']
  %s0 = inlined_call_operand.vmem [shape: f32[128,128], index: 0, kind: input, shape index: {}]
  %s1 = inlined_call_operand.vmem [shape: f32[1,128], index: 1, kind: input, shape index: {}]
  %s2 = inlined_call_operand.vmem [shape: f32[1,128], index: 2, kind: input, shape index: {}]
  %s3 = inlined_call_operand.hbm [shape: f32[1,128], index: 3, kind: input, shape index: {}]
  %s4 = inlined_call_operand.hbm [shape: f32[1,128], index: 4, kind: input, shape index: {}]
  %s5 = inlined_call_operand.vmem [shape: f32[128,128], index: 5, kind: input, shape index: {}, may-alias: {5,7}]
  %s6 = inlined_call_operand.vmem [shape: bf16[128,128], index: 6, kind: output, shape index: {0}]
  %s7 = inlined_call_operand.vmem [shape: f32[128,128], index: 7, kind: output, shape index: {1}, may-alias: {5,7}]
  %8 = xla_tuple %s6, %s7
  %s9 = sld [smem:[#allocation0]]
  $region50: #{snn_vgg9_forward.48} parent=0
    _
  %s11 = ssub.s32 1, %s9
  %s12 = scalar_select 0, %s11, %s9
  $region1: #{snn_vgg9_forward.48} parent=0
    #allocation2 [shape = 'u8[512]{0}', space=vmem, size = 0x400, scoped, tag = 'input window, operand 3, single buffered']
    #allocation3 [shape = 's32[1]{0}', space=sflag, size = 0x4, scoped, tag = 'scoped memory for snn_vgg9_forward.48']
    #allocation4 [shape = 'u8[512]{0}', space=vmem, size = 0x400, scoped, tag = 'input window, operand 4, single buffered']
    #allocation5 [shape = 's32[1]{0}', space=sflag, size = 0x4, scoped, tag = 'scoped memory for snn_vgg9_forward.48']
    %13 = vsyncpa [#allocation3], 0
    %14 = vsyncpa [#allocation5], 0
    // Predicated region
    $region2: #{snn_vgg9_forward.48} parent=1 // pred_check
      _
    $region3: #{snn_vgg9_forward.48} parent=1 // pred_check_branch
      %16 = sbr.rel (0) target = $region5
    $region4: #{snn_vgg9_forward.48} parent=1 // pred_region
      _
    $region5: #{snn_vgg9_forward.48} parent=1 // pred_fallthru
      _
    // Predicated region
    $region6: #{snn_vgg9_forward.48} parent=1 // pred_check
      _
    $region7: #{snn_vgg9_forward.48} parent=1 // pred_check_branch
      %18 = sbr.rel (0) target = $region9
    $region8: #{snn_vgg9_forward.48} parent=1 // pred_region
      _
    $region9: #{snn_vgg9_forward.48} parent=1 // pred_fallthru
      _
    // Predicated region
    $region10: #{snn_vgg9_forward.48} parent=1 // pred_check
      _
    $region11: #{snn_vgg9_forward.48} parent=1 // pred_check_branch
      %20 = sbr.rel (0) target = $region13
    $region12: #{snn_vgg9_forward.48} parent=1 // pred_region
      _
    $region13: #{snn_vgg9_forward.48} parent=1 // pred_fallthru
      _
    // Predicated region
    $region14: #{snn_vgg9_forward.48} parent=1 // pred_check
      _
    $region15: #{snn_vgg9_forward.48} parent=1 // pred_check_branch
      %22 = sbr.rel (0) target = $region17
    $region16: #{snn_vgg9_forward.48} parent=1 // pred_region
      %24 = vsyncadd [#allocation3], 0
      %s26 = sshll.u32 %s3, 4
      %s27 = int_to_ptr.hbm [resolvable:$true] %s26
      %s28 = sshll.u32 [#allocation2], 4
      %s29 = int_to_ptr.vmem [resolvable:$true] %s28
      %31 = dma.hbm_to_vmem [thread:$0]  %s27, 16, %s29, [#allocation3]
    $region17: #{snn_vgg9_forward.48} parent=1 // pred_fallthru
      _
    // Predicated region
    $region18: #{snn_vgg9_forward.48} parent=1 // pred_check
      _
    $region19: #{snn_vgg9_forward.48} parent=1 // pred_check_branch
      %33 = sbr.rel (0) target = $region21
    $region20: #{snn_vgg9_forward.48} parent=1 // pred_region
      %35 = vsyncadd [#allocation5], 0
      %s37 = sshll.u32 %s4, 4
      %s38 = int_to_ptr.hbm [resolvable:$true] %s37
      %s39 = sshll.u32 [#allocation4], 4
      %s40 = int_to_ptr.vmem [resolvable:$true] %s39
      %42 = dma.hbm_to_vmem [thread:$0]  %s38, 16, %s40, [#allocation5]
    $region21: #{snn_vgg9_forward.48} parent=1 // pred_fallthru
      _
    // Predicated region
    $region22: #{snn_vgg9_forward.48} parent=1 // pred_check
      _
    $region23: #{snn_vgg9_forward.48} parent=1 // pred_check_branch
      %44 = sbr.rel (0) target = $region25
    $region24: #{snn_vgg9_forward.48} parent=1 // pred_region
      _
    $region25: #{snn_vgg9_forward.48} parent=1 // pred_fallthru
      _
    // Predicated region
    $region26: #{snn_vgg9_forward.48} parent=1 // pred_check
      _
    $region27: #{snn_vgg9_forward.48} parent=1 // pred_check_branch
      %46 = sbr.rel (0) target = $region29
    $region28: #{snn_vgg9_forward.48} parent=1 // pred_region
      %48 = dma.done [#allocation3], 16
    $region29: #{snn_vgg9_forward.48} parent=1 // pred_fallthru
      _
    // Predicated region
    $region30: #{snn_vgg9_forward.48} parent=1 // pred_check
      _
    $region31: #{snn_vgg9_forward.48} parent=1 // pred_check_branch
      %50 = sbr.rel (0) target = $region33
    $region32: #{snn_vgg9_forward.48} parent=1 // pred_region
      %52 = dma.done [#allocation5], 16
    $region33: #{snn_vgg9_forward.48} parent=1 // pred_fallthru
      _
    %v53 = vld [vmem:[%s0] sm:$0xff]
    %v54 = vld [vmem:[%s0 + $0x8] sm:$0xff]
    %v55 = vld [vmem:[%s0 + $0x10] sm:$0xff]
    %v56 = vld [vmem:[%s0 + $0x18] sm:$0xff]
    %v57 = vld [vmem:[%s0 + $0x20] sm:$0xff]
    %v58 = vld [vmem:[%s0 + $0x28] sm:$0xff]
    %v59 = vld [vmem:[%s0 + $0x30] sm:$0xff]
    %v60 = vld [vmem:[%s0 + $0x38] sm:$0xff]
    %v61 = vld [vmem:[%s0 + $0x40] sm:$0xff]
    %v62 = vld [vmem:[%s0 + $0x48] sm:$0xff]
    %v63 = vld [vmem:[%s0 + $0x50] sm:$0xff]
    %v64 = vld [vmem:[%s0 + $0x58] sm:$0xff]
    %v65 = vld [vmem:[%s0 + $0x60] sm:$0xff]
    %v66 = vld [vmem:[%s0 + $0x68] sm:$0xff]
    %v67 = vld [vmem:[%s0 + $0x70] sm:$0xff]
    %v68 = vld [vmem:[%s0 + $0x78] sm:$0xff]
    %v69 = vld [vmem:[%s1] sm:$0x1]
    %v70 = vld [vmem:[%s2] sm:$0x1]
    %v71 = vld [vmem:[#allocation2] sm:$0x1]
    %v72 = vld [vmem:[#allocation4] sm:$0x1]
    %v73 = vld [vmem:[%s5] sm:$0xff]
    %v74 = vld [vmem:[%s5 + $0x8] sm:$0xff]
    %v75 = vld [vmem:[%s5 + $0x10] sm:$0xff]
    %v76 = vld [vmem:[%s5 + $0x18] sm:$0xff]
    %v77 = vld [vmem:[%s5 + $0x20] sm:$0xff]
    %v78 = vld [vmem:[%s5 + $0x28] sm:$0xff]
    %v79 = vld [vmem:[%s5 + $0x30] sm:$0xff]
    %v80 = vld [vmem:[%s5 + $0x38] sm:$0xff]
    %v81 = vld [vmem:[%s5 + $0x40] sm:$0xff]
    %v82 = vld [vmem:[%s5 + $0x48] sm:$0xff]
    %v83 = vld [vmem:[%s5 + $0x50] sm:$0xff]
    %v84 = vld [vmem:[%s5 + $0x58] sm:$0xff]
    %v85 = vld [vmem:[%s5 + $0x60] sm:$0xff]
    %v86 = vld [vmem:[%s5 + $0x68] sm:$0xff]
    %v87 = vld [vmem:[%s5 + $0x70] sm:$0xff]
    %v88 = vld [vmem:[%s5 + $0x78] sm:$0xff]
    %v89 = vmul.f32 %v69, 0.0078125
    %v90 = vmul.f32 %v70, 0.0078125
    %v91 = vmul.f32 %v89, %v89
    %v92 = vsub.f32 %v90, %v91
    %v93 = vmax.f32 %v92, 0.0
    %v94 = vadd.f32 %v93, 0.0001
    %v95 = vrsqrt.pop %v94
    %v96 = vmul.f32 %v95, %v94
    %v97 = vmul.f32 %v96, %v95
    %v98 = vmul.f32 0.5, %v97
    %v99 = vsub.f32 1.5, %v98
    %v100 = vmul.f32 %v95, %v99
    %vm101 = vweird.f32 %v94
    %vm102 = vweird.f32 %v95
    %vm103 = vmor %vm101, %vm102
    %v104 = vsel %vm103, %v95, %v100
    %v105 = vmul.f32 %v71, %v104
    %v106 = vmul.f32 %v89, %v105
    %v107 = vsub.f32 %v72, %v106
    %v109 = vperm.slane %v105, 0
    %v111 = vmul.f32 %v53, %v109
    %v112 = vmul.f32 %v54, %v109
    %v113 = vmul.f32 %v55, %v109
    %v114 = vmul.f32 %v56, %v109
    %v115 = vmul.f32 %v57, %v109
    %v116 = vmul.f32 %v58, %v109
    %v117 = vmul.f32 %v59, %v109
    %v118 = vmul.f32 %v60, %v109
    %v119 = vmul.f32 %v61, %v109
    %v120 = vmul.f32 %v62, %v109
    %v121 = vmul.f32 %v63, %v109
    %v122 = vmul.f32 %v64, %v109
    %v123 = vmul.f32 %v65, %v109
    %v124 = vmul.f32 %v66, %v109
    %v125 = vmul.f32 %v67, %v109
    %v126 = vmul.f32 %v68, %v109
    %v127 = vadd.f32 %v73, %v111
    %v128 = vadd.f32 %v74, %v112
    %v129 = vadd.f32 %v75, %v113
    %v130 = vadd.f32 %v76, %v114
    %v131 = vadd.f32 %v77, %v115
    %v132 = vadd.f32 %v78, %v116
    %v133 = vadd.f32 %v79, %v117
    %v134 = vadd.f32 %v80, %v118
    %v135 = vadd.f32 %v81, %v119
    %v136 = vadd.f32 %v82, %v120
    %v137 = vadd.f32 %v83, %v121
    %v138 = vadd.f32 %v84, %v122
    %v139 = vadd.f32 %v85, %v123
    %v140 = vadd.f32 %v86, %v124
    %v141 = vadd.f32 %v87, %v125
    %v142 = vadd.f32 %v88, %v126
    %v144 = vperm.slane %v107, 0
    %v146 = vadd.f32 %v127, %v144
    %v147 = vadd.f32 %v128, %v144
    %v148 = vadd.f32 %v129, %v144
    %v149 = vadd.f32 %v130, %v144
    %v150 = vadd.f32 %v131, %v144
    %v151 = vadd.f32 %v132, %v144
    %v152 = vadd.f32 %v133, %v144
    %v153 = vadd.f32 %v134, %v144
    %v154 = vadd.f32 %v135, %v144
    %v155 = vadd.f32 %v136, %v144
    %v156 = vadd.f32 %v137, %v144
    %v157 = vadd.f32 %v138, %v144
    %v158 = vadd.f32 %v139, %v144
    %v159 = vadd.f32 %v140, %v144
    %v160 = vadd.f32 %v141, %v144
    %v161 = vadd.f32 %v142, %v144
    %v162 = vsub.f32 %v146, 1.0
    %v163 = vsub.f32 %v147, 1.0
    %v164 = vsub.f32 %v148, 1.0
    %v165 = vsub.f32 %v149, 1.0
    %v166 = vsub.f32 %v150, 1.0
    %v167 = vsub.f32 %v151, 1.0
    %v168 = vsub.f32 %v152, 1.0
    %v169 = vsub.f32 %v153, 1.0
    %v170 = vsub.f32 %v154, 1.0
    %v171 = vsub.f32 %v155, 1.0
    %v172 = vsub.f32 %v156, 1.0
    %v173 = vsub.f32 %v157, 1.0
    %v174 = vsub.f32 %v158, 1.0
    %v175 = vsub.f32 %v159, 1.0
    %v176 = vsub.f32 %v160, 1.0
    %v177 = vsub.f32 %v161, 1.0
    %vm178 = vcmp.ge.f32.partialorder %v162, 0.0
    %vm179 = vcmp.ge.f32.partialorder %v163, 0.0
    %vm180 = vcmp.ge.f32.partialorder %v164, 0.0
    %vm181 = vcmp.ge.f32.partialorder %v165, 0.0
    %vm182 = vcmp.ge.f32.partialorder %v166, 0.0
    %vm183 = vcmp.ge.f32.partialorder %v167, 0.0
    %vm184 = vcmp.ge.f32.partialorder %v168, 0.0
    %vm185 = vcmp.ge.f32.partialorder %v169, 0.0
    %vm186 = vcmp.ge.f32.partialorder %v170, 0.0
    %vm187 = vcmp.ge.f32.partialorder %v171, 0.0
    %vm188 = vcmp.ge.f32.partialorder %v172, 0.0
    %vm189 = vcmp.ge.f32.partialorder %v173, 0.0
    %vm190 = vcmp.ge.f32.partialorder %v174, 0.0
    %vm191 = vcmp.ge.f32.partialorder %v175, 0.0
    %vm192 = vcmp.ge.f32.partialorder %v176, 0.0
    %vm193 = vcmp.ge.f32.partialorder %v177, 0.0
    %v194 = vsel %vm178, 1.0, 0.0
    %v195 = vsel %vm179, 1.0, 0.0
    %v196 = vsel %vm180, 1.0, 0.0
    %v197 = vsel %vm181, 1.0, 0.0
    %v198 = vsel %vm182, 1.0, 0.0
    %v199 = vsel %vm183, 1.0, 0.0
    %v200 = vsel %vm184, 1.0, 0.0
    %v201 = vsel %vm185, 1.0, 0.0
    %v202 = vsel %vm186, 1.0, 0.0
    %v203 = vsel %vm187, 1.0, 0.0
    %v204 = vsel %vm188, 1.0, 0.0
    %v205 = vsel %vm189, 1.0, 0.0
    %v206 = vsel %vm190, 1.0, 0.0
    %v207 = vsel %vm191, 1.0, 0.0
    %v208 = vsel %vm192, 1.0, 0.0
    %v209 = vsel %vm193, 1.0, 0.0
    %vm210 = vcmp.gt.f32.partialorder %v162, 0.0
    %vm211 = vcmp.gt.f32.partialorder %v163, 0.0
    %vm212 = vcmp.gt.f32.partialorder %v164, 0.0
    %vm213 = vcmp.gt.f32.partialorder %v165, 0.0
    %vm214 = vcmp.gt.f32.partialorder %v166, 0.0
    %vm215 = vcmp.gt.f32.partialorder %v167, 0.0
    %vm216 = vcmp.gt.f32.partialorder %v168, 0.0
    %vm217 = vcmp.gt.f32.partialorder %v169, 0.0
    %vm218 = vcmp.gt.f32.partialorder %v170, 0.0
    %vm219 = vcmp.gt.f32.partialorder %v171, 0.0
    %vm220 = vcmp.gt.f32.partialorder %v172, 0.0
    %vm221 = vcmp.gt.f32.partialorder %v173, 0.0
    %vm222 = vcmp.gt.f32.partialorder %v174, 0.0
    %vm223 = vcmp.gt.f32.partialorder %v175, 0.0
    %vm224 = vcmp.gt.f32.partialorder %v176, 0.0
    %vm225 = vcmp.gt.f32.partialorder %v177, 0.0
    %v226 = vsel %vm210, 1.0, 0.0
    %v227 = vsel %vm211, 1.0, 0.0
    %v228 = vsel %vm212, 1.0, 0.0
    %v229 = vsel %vm213, 1.0, 0.0
    %v230 = vsel %vm214, 1.0, 0.0
    %v231 = vsel %vm215, 1.0, 0.0
    %v232 = vsel %vm216, 1.0, 0.0
    %v233 = vsel %vm217, 1.0, 0.0
    %v234 = vsel %vm218, 1.0, 0.0
    %v235 = vsel %vm219, 1.0, 0.0
    %v236 = vsel %vm220, 1.0, 0.0
    %v237 = vsel %vm221, 1.0, 0.0
    %v238 = vsel %vm222, 1.0, 0.0
    %v239 = vsel %vm223, 1.0, 0.0
    %v240 = vsel %vm224, 1.0, 0.0
    %v241 = vsel %vm225, 1.0, 0.0
    %v242 = vsub.f32 %v146, %v226
    %v243 = vsub.f32 %v147, %v227
    %v244 = vsub.f32 %v148, %v228
    %v245 = vsub.f32 %v149, %v229
    %v246 = vsub.f32 %v150, %v230
    %v247 = vsub.f32 %v151, %v231
    %v248 = vsub.f32 %v152, %v232
    %v249 = vsub.f32 %v153, %v233
    %v250 = vsub.f32 %v154, %v234
    %v251 = vsub.f32 %v155, %v235
    %v252 = vsub.f32 %v156, %v236
    %v253 = vsub.f32 %v157, %v237
    %v254 = vsub.f32 %v158, %v238
    %v255 = vsub.f32 %v159, %v239
    %v256 = vsub.f32 %v160, %v240
    %v257 = vsub.f32 %v161, %v241
    %v258 = vpack.c.bf16 %v194, %v194
    %v259 = vpack.c.bf16 %v195, %v195
    %v260 = vpack.c.bf16 %v196, %v196
    %v261 = vpack.c.bf16 %v197, %v197
    %v262 = vpack.c.bf16 %v198, %v198
    %v263 = vpack.c.bf16 %v199, %v199
    %v264 = vpack.c.bf16 %v200, %v200
    %v265 = vpack.c.bf16 %v201, %v201
    %v266 = vpack.c.bf16 %v202, %v202
    %v267 = vpack.c.bf16 %v203, %v203
    %v268 = vpack.c.bf16 %v204, %v204
    %v269 = vpack.c.bf16 %v205, %v205
    %v270 = vpack.c.bf16 %v206, %v206
    %v271 = vpack.c.bf16 %v207, %v207
    %v272 = vpack.c.bf16 %v208, %v208
    %v273 = vpack.c.bf16 %v209, %v209
    %274 = vst [vmem:[%s6] sm:$0xf] %v258
    %275 = vst [vmem:[%s6 + $0x4] sm:$0xf] %v259
    %276 = vst [vmem:[%s6 + $0x8] sm:$0xf] %v260
    %277 = vst [vmem:[%s6 + $0xc] sm:$0xf] %v261
    %278 = vst [vmem:[%s6 + $0x10] sm:$0xf] %v262
    %279 = vst [vmem:[%s6 + $0x14] sm:$0xf] %v263
    %280 = vst [vmem:[%s6 + $0x18] sm:$0xf] %v264
    %281 = vst [vmem:[%s6 + $0x1c] sm:$0xf] %v265
    %282 = vst [vmem:[%s6 + $0x20] sm:$0xf] %v266
    %283 = vst [vmem:[%s6 + $0x24] sm:$0xf] %v267
    %284 = vst [vmem:[%s6 + $0x28] sm:$0xf] %v268
    %285 = vst [vmem:[%s6 + $0x2c] sm:$0xf] %v269
    %286 = vst [vmem:[%s6 + $0x30] sm:$0xf] %v270
    %287 = vst [vmem:[%s6 + $0x34] sm:$0xf] %v271
    %288 = vst [vmem:[%s6 + $0x38] sm:$0xf] %v272
    %289 = vst [vmem:[%s6 + $0x3c] sm:$0xf] %v273
    %290 = vst [vmem:[%s7] sm:$0xff] %v242
    %291 = vst [vmem:[%s7 + $0x8] sm:$0xff] %v243
    %292 = vst [vmem:[%s7 + $0x10] sm:$0xff] %v244
    %293 = vst [vmem:[%s7 + $0x18] sm:$0xff] %v245
    %294 = vst [vmem:[%s7 + $0x20] sm:$0xff] %v246
    %295 = vst [vmem:[%s7 + $0x28] sm:$0xff] %v247
    %296 = vst [vmem:[%s7 + $0x30] sm:$0xff] %v248
    %297 = vst [vmem:[%s7 + $0x38] sm:$0xff] %v249
    %298 = vst [vmem:[%s7 + $0x40] sm:$0xff] %v250
    %299 = vst [vmem:[%s7 + $0x48] sm:$0xff] %v251
    %300 = vst [vmem:[%s7 + $0x50] sm:$0xff] %v252
    %301 = vst [vmem:[%s7 + $0x58] sm:$0xff] %v253
    %302 = vst [vmem:[%s7 + $0x60] sm:$0xff] %v254
    %303 = vst [vmem:[%s7 + $0x68] sm:$0xff] %v255
    %304 = vst [vmem:[%s7 + $0x70] sm:$0xff] %v256
    %305 = vst [vmem:[%s7 + $0x78] sm:$0xff] %v257
    // Predicated region
    $region34: #{snn_vgg9_forward.48} parent=1 // pred_check
      _
    $region35: #{snn_vgg9_forward.48} parent=1 // pred_check_branch
      %307 = sbr.rel (0) target = $region37
    $region36: #{snn_vgg9_forward.48} parent=1 // pred_region
      _
    $region37: #{snn_vgg9_forward.48} parent=1 // pred_fallthru
      _
    // Predicated region
    $region38: #{snn_vgg9_forward.48} parent=1 // pred_check
      _
    $region39: #{snn_vgg9_forward.48} parent=1 // pred_check_branch
      %309 = sbr.rel (0) target = $region41
    $region40: #{snn_vgg9_forward.48} parent=1 // pred_region
      _
    $region41: #{snn_vgg9_forward.48} parent=1 // pred_fallthru
      _
    // Predicated region
    $region42: #{snn_vgg9_forward.48} parent=1 // pred_check
      _
    $region43: #{snn_vgg9_forward.48} parent=1 // pred_check_branch
      %311 = sbr.rel (0) target = $region45
    $region44: #{snn_vgg9_forward.48} parent=1 // pred_region
      _
    $region45: #{snn_vgg9_forward.48} parent=1 // pred_fallthru
      _
    // Predicated region
    $region46: #{snn_vgg9_forward.48} parent=1 // pred_check
      _
    $region47: #{snn_vgg9_forward.48} parent=1 // pred_check_branch
      %313 = sbr.rel (0) target = $region49
    $region48: #{snn_vgg9_forward.48} parent=1 // pred_region
      _
    $region49: #{snn_vgg9_forward.48} parent=1 // pred_fallthru
      _
    %314 = vsyncpa [#allocation3], 1
    %315 = vsyncpa [#allocation5], 1

// kernel: snn_vgg9_forward.54
$region0: #{snn_vgg9_forward.54}
  #allocation0 [shape = 'u32[]', space=smem, size = 0x4, offset = 0x4, fixed_abs, tag = 'smem constant byte address 0x4 - core index']
  #allocation1 [shape = 'u32[72,128]{1,0:T(1,128)}', space=vmem, size = 0x9000, scoped, tag = 'internal scratch']
  %s0 = inlined_call_operand.vmem [shape: f32[128,128], index: 0, kind: input, shape index: {}]
  %s1 = inlined_call_operand.vmem [shape: f32[1,128], index: 1, kind: input, shape index: {}]
  %s2 = inlined_call_operand.vmem [shape: f32[1,128], index: 2, kind: input, shape index: {}]
  %s3 = inlined_call_operand.hbm [shape: f32[1,128], index: 3, kind: input, shape index: {}]
  %s4 = inlined_call_operand.hbm [shape: f32[1,128], index: 4, kind: input, shape index: {}]
  %s5 = inlined_call_operand.vmem [shape: f32[128,128], index: 5, kind: input, shape index: {}, may-alias: {5,8}]
  %s6 = inlined_call_operand.vmem [shape: bf16[128,128], index: 6, kind: input, shape index: {}]
  %s7 = inlined_call_operand.vmem [shape: bf16[128,128], index: 7, kind: output, shape index: {0}]
  %s8 = inlined_call_operand.vmem [shape: f32[128,128], index: 8, kind: output, shape index: {1}, may-alias: {5,8}]
  %s9 = inlined_call_operand.vmem [shape: bf16[128,128], index: 9, kind: output, shape index: {2}]
  %10 = xla_tuple %s7, %s8, %s9
  %s11 = sld [smem:[#allocation0]]
  $region62: #{snn_vgg9_forward.54} parent=0
    _
  %s13 = ssub.s32 1, %s11
  %s14 = scalar_select 0, %s13, %s11
  $region1: #{snn_vgg9_forward.54} parent=0
    #allocation2 [shape = 'u8[512]{0}', space=vmem, size = 0x400, scoped, tag = 'input window, operand 3, single buffered']
    #allocation3 [shape = 's32[1]{0}', space=sflag, size = 0x4, scoped, tag = 'scoped memory for snn_vgg9_forward.54']
    #allocation4 [shape = 'u8[512]{0}', space=vmem, size = 0x400, scoped, tag = 'input window, operand 4, single buffered']
    #allocation5 [shape = 's32[1]{0}', space=sflag, size = 0x4, scoped, tag = 'scoped memory for snn_vgg9_forward.54']
    %15 = vsyncpa [#allocation3], 0
    %16 = vsyncpa [#allocation5], 0
    // Predicated region
    $region2: #{snn_vgg9_forward.54} parent=1 // pred_check
      _
    $region3: #{snn_vgg9_forward.54} parent=1 // pred_check_branch
      %18 = sbr.rel (0) target = $region5
    $region4: #{snn_vgg9_forward.54} parent=1 // pred_region
      _
    $region5: #{snn_vgg9_forward.54} parent=1 // pred_fallthru
      _
    // Predicated region
    $region6: #{snn_vgg9_forward.54} parent=1 // pred_check
      _
    $region7: #{snn_vgg9_forward.54} parent=1 // pred_check_branch
      %20 = sbr.rel (0) target = $region9
    $region8: #{snn_vgg9_forward.54} parent=1 // pred_region
      _
    $region9: #{snn_vgg9_forward.54} parent=1 // pred_fallthru
      _
    // Predicated region
    $region10: #{snn_vgg9_forward.54} parent=1 // pred_check
      _
    $region11: #{snn_vgg9_forward.54} parent=1 // pred_check_branch
      %22 = sbr.rel (0) target = $region13
    $region12: #{snn_vgg9_forward.54} parent=1 // pred_region
      _
    $region13: #{snn_vgg9_forward.54} parent=1 // pred_fallthru
      _
    // Predicated region
    $region14: #{snn_vgg9_forward.54} parent=1 // pred_check
      _
    $region15: #{snn_vgg9_forward.54} parent=1 // pred_check_branch
      %24 = sbr.rel (0) target = $region17
    $region16: #{snn_vgg9_forward.54} parent=1 // pred_region
      %26 = vsyncadd [#allocation3], 0
      %s28 = sshll.u32 %s3, 4
      %s29 = int_to_ptr.hbm [resolvable:$true] %s28
      %s30 = sshll.u32 [#allocation2], 4
      %s31 = int_to_ptr.vmem [resolvable:$true] %s30
      %33 = dma.hbm_to_vmem [thread:$0]  %s29, 16, %s31, [#allocation3]
    $region17: #{snn_vgg9_forward.54} parent=1 // pred_fallthru
      _
    // Predicated region
    $region18: #{snn_vgg9_forward.54} parent=1 // pred_check
      _
    $region19: #{snn_vgg9_forward.54} parent=1 // pred_check_branch
      %35 = sbr.rel (0) target = $region21
    $region20: #{snn_vgg9_forward.54} parent=1 // pred_region
      %37 = vsyncadd [#allocation5], 0
      %s39 = sshll.u32 %s4, 4
      %s40 = int_to_ptr.hbm [resolvable:$true] %s39
      %s41 = sshll.u32 [#allocation4], 4
      %s42 = int_to_ptr.vmem [resolvable:$true] %s41
      %44 = dma.hbm_to_vmem [thread:$0]  %s40, 16, %s42, [#allocation5]
    $region21: #{snn_vgg9_forward.54} parent=1 // pred_fallthru
      _
    // Predicated region
    $region22: #{snn_vgg9_forward.54} parent=1 // pred_check
      _
    $region23: #{snn_vgg9_forward.54} parent=1 // pred_check_branch
      %46 = sbr.rel (0) target = $region25
    $region24: #{snn_vgg9_forward.54} parent=1 // pred_region
      _
    $region25: #{snn_vgg9_forward.54} parent=1 // pred_fallthru
      _
    // Predicated region
    $region26: #{snn_vgg9_forward.54} parent=1 // pred_check
      _
    $region27: #{snn_vgg9_forward.54} parent=1 // pred_check_branch
      %48 = sbr.rel (0) target = $region29
    $region28: #{snn_vgg9_forward.54} parent=1 // pred_region
      _
    $region29: #{snn_vgg9_forward.54} parent=1 // pred_fallthru
      _
    // Predicated region
    $region30: #{snn_vgg9_forward.54} parent=1 // pred_check
      _
    $region31: #{snn_vgg9_forward.54} parent=1 // pred_check_branch
      %50 = sbr.rel (0) target = $region33
    $region32: #{snn_vgg9_forward.54} parent=1 // pred_region
      %52 = dma.done [#allocation3], 16
    $region33: #{snn_vgg9_forward.54} parent=1 // pred_fallthru
      _
    // Predicated region
    $region34: #{snn_vgg9_forward.54} parent=1 // pred_check
      _
    $region35: #{snn_vgg9_forward.54} parent=1 // pred_check_branch
      %54 = sbr.rel (0) target = $region37
    $region36: #{snn_vgg9_forward.54} parent=1 // pred_region
      %56 = dma.done [#allocation5], 16
    $region37: #{snn_vgg9_forward.54} parent=1 // pred_fallthru
      _
    %v57 = vld [vmem:[%s0] sm:$0xff]
    %v58 = vld [vmem:[%s0 + $0x8] sm:$0xff]
    %v59 = vld [vmem:[%s0 + $0x10] sm:$0xff]
    %v60 = vld [vmem:[%s0 + $0x18] sm:$0xff]
    %v61 = vld [vmem:[%s0 + $0x20] sm:$0xff]
    %v62 = vld [vmem:[%s0 + $0x28] sm:$0xff]
    %v63 = vld [vmem:[%s0 + $0x30] sm:$0xff]
    %v64 = vld [vmem:[%s0 + $0x38] sm:$0xff]
    %v65 = vld [vmem:[%s0 + $0x40] sm:$0xff]
    %v66 = vld [vmem:[%s0 + $0x48] sm:$0xff]
    %v67 = vld [vmem:[%s0 + $0x50] sm:$0xff]
    %v68 = vld [vmem:[%s0 + $0x58] sm:$0xff]
    %v69 = vld [vmem:[%s0 + $0x60] sm:$0xff]
    %v70 = vld [vmem:[%s0 + $0x68] sm:$0xff]
    %v71 = vld [vmem:[%s0 + $0x70] sm:$0xff]
    %v72 = vld [vmem:[%s0 + $0x78] sm:$0xff]
    %v73 = vld [vmem:[%s1] sm:$0x1]
    %v74 = vld [vmem:[%s2] sm:$0x1]
    %v75 = vld [vmem:[#allocation2] sm:$0x1]
    %v76 = vld [vmem:[#allocation4] sm:$0x1]
    %v77 = vld [vmem:[%s5] sm:$0xff]
    %v78 = vld [vmem:[%s5 + $0x8] sm:$0xff]
    %v79 = vld [vmem:[%s5 + $0x10] sm:$0xff]
    %v80 = vld [vmem:[%s5 + $0x18] sm:$0xff]
    %v81 = vld [vmem:[%s5 + $0x20] sm:$0xff]
    %v82 = vld [vmem:[%s5 + $0x28] sm:$0xff]
    %v83 = vld [vmem:[%s5 + $0x30] sm:$0xff]
    %v84 = vld [vmem:[%s5 + $0x38] sm:$0xff]
    %v85 = vld [vmem:[%s5 + $0x40] sm:$0xff]
    %v86 = vld [vmem:[%s5 + $0x48] sm:$0xff]
    %v87 = vld [vmem:[%s5 + $0x50] sm:$0xff]
    %v88 = vld [vmem:[%s5 + $0x58] sm:$0xff]
    %v89 = vld [vmem:[%s5 + $0x60] sm:$0xff]
    %v90 = vld [vmem:[%s5 + $0x68] sm:$0xff]
    %v91 = vld [vmem:[%s5 + $0x70] sm:$0xff]
    %v92 = vld [vmem:[%s5 + $0x78] sm:$0xff]
    %v93 = vmul.f32 %v73, 0.0078125
    %v94 = vmul.f32 %v74, 0.0078125
    %v95 = vmul.f32 %v93, %v93
    %v96 = vsub.f32 %v94, %v95
    %v97 = vmax.f32 %v96, 0.0
    %v98 = vadd.f32 %v97, 0.0001
    %v99 = vrsqrt.pop %v98
    %v100 = vmul.f32 %v99, %v98
    %v101 = vmul.f32 %v100, %v99
    %v102 = vmul.f32 0.5, %v101
    %v103 = vsub.f32 1.5, %v102
    %v104 = vmul.f32 %v99, %v103
    %vm105 = vweird.f32 %v98
    %vm106 = vweird.f32 %v99
    %vm107 = vmor %vm105, %vm106
    %v108 = vsel %vm107, %v99, %v104
    %v109 = vmul.f32 %v75, %v108
    %v110 = vmul.f32 %v93, %v109
    %v111 = vsub.f32 %v76, %v110
    %v113 = vperm.slane %v109, 0
    %v115 = vmul.f32 %v57, %v113
    %v116 = vmul.f32 %v58, %v113
    %v117 = vmul.f32 %v59, %v113
    %v118 = vmul.f32 %v60, %v113
    %v119 = vmul.f32 %v61, %v113
    %v120 = vmul.f32 %v62, %v113
    %v121 = vmul.f32 %v63, %v113
    %v122 = vmul.f32 %v64, %v113
    %v123 = vmul.f32 %v65, %v113
    %v124 = vmul.f32 %v66, %v113
    %v125 = vmul.f32 %v67, %v113
    %v126 = vmul.f32 %v68, %v113
    %v127 = vmul.f32 %v69, %v113
    %v128 = vmul.f32 %v70, %v113
    %v129 = vmul.f32 %v71, %v113
    %v130 = vmul.f32 %v72, %v113
    %v131 = vadd.f32 %v77, %v115
    %v132 = vadd.f32 %v78, %v116
    %v133 = vadd.f32 %v79, %v117
    %v134 = vadd.f32 %v80, %v118
    %v135 = vadd.f32 %v81, %v119
    %v136 = vadd.f32 %v82, %v120
    %v137 = vadd.f32 %v83, %v121
    %v138 = vadd.f32 %v84, %v122
    %v139 = vadd.f32 %v85, %v123
    %v140 = vadd.f32 %v86, %v124
    %v141 = vadd.f32 %v87, %v125
    %v142 = vadd.f32 %v88, %v126
    %v143 = vadd.f32 %v89, %v127
    %v144 = vadd.f32 %v90, %v128
    %v145 = vadd.f32 %v91, %v129
    %v146 = vadd.f32 %v92, %v130
    %v148 = vperm.slane %v111, 0
    %v150 = vadd.f32 %v131, %v148
    %v151 = vadd.f32 %v132, %v148
    %v152 = vadd.f32 %v133, %v148
    %v153 = vadd.f32 %v134, %v148
    %v154 = vadd.f32 %v135, %v148
    %v155 = vadd.f32 %v136, %v148
    %v156 = vadd.f32 %v137, %v148
    %v157 = vadd.f32 %v138, %v148
    %v158 = vadd.f32 %v139, %v148
    %v159 = vadd.f32 %v140, %v148
    %v160 = vadd.f32 %v141, %v148
    %v161 = vadd.f32 %v142, %v148
    %v162 = vadd.f32 %v143, %v148
    %v163 = vadd.f32 %v144, %v148
    %v164 = vadd.f32 %v145, %v148
    %v165 = vadd.f32 %v146, %v148
    %v166 = vsub.f32 %v150, 1.0
    %v167 = vsub.f32 %v151, 1.0
    %v168 = vsub.f32 %v152, 1.0
    %v169 = vsub.f32 %v153, 1.0
    %v170 = vsub.f32 %v154, 1.0
    %v171 = vsub.f32 %v155, 1.0
    %v172 = vsub.f32 %v156, 1.0
    %v173 = vsub.f32 %v157, 1.0
    %v174 = vsub.f32 %v158, 1.0
    %v175 = vsub.f32 %v159, 1.0
    %v176 = vsub.f32 %v160, 1.0
    %v177 = vsub.f32 %v161, 1.0
    %v178 = vsub.f32 %v162, 1.0
    %v179 = vsub.f32 %v163, 1.0
    %v180 = vsub.f32 %v164, 1.0
    %v181 = vsub.f32 %v165, 1.0
    %vm182 = vcmp.ge.f32.partialorder %v166, 0.0
    %vm183 = vcmp.ge.f32.partialorder %v167, 0.0
    %vm184 = vcmp.ge.f32.partialorder %v168, 0.0
    %vm185 = vcmp.ge.f32.partialorder %v169, 0.0
    %vm186 = vcmp.ge.f32.partialorder %v170, 0.0
    %vm187 = vcmp.ge.f32.partialorder %v171, 0.0
    %vm188 = vcmp.ge.f32.partialorder %v172, 0.0
    %vm189 = vcmp.ge.f32.partialorder %v173, 0.0
    %vm190 = vcmp.ge.f32.partialorder %v174, 0.0
    %vm191 = vcmp.ge.f32.partialorder %v175, 0.0
    %vm192 = vcmp.ge.f32.partialorder %v176, 0.0
    %vm193 = vcmp.ge.f32.partialorder %v177, 0.0
    %vm194 = vcmp.ge.f32.partialorder %v178, 0.0
    %vm195 = vcmp.ge.f32.partialorder %v179, 0.0
    %vm196 = vcmp.ge.f32.partialorder %v180, 0.0
    %vm197 = vcmp.ge.f32.partialorder %v181, 0.0
    %v198 = vsel %vm182, 1.0, 0.0
    %v199 = vsel %vm183, 1.0, 0.0
    %v200 = vsel %vm184, 1.0, 0.0
    %v201 = vsel %vm185, 1.0, 0.0
    %v202 = vsel %vm186, 1.0, 0.0
    %v203 = vsel %vm187, 1.0, 0.0
    %v204 = vsel %vm188, 1.0, 0.0
    %v205 = vsel %vm189, 1.0, 0.0
    %v206 = vsel %vm190, 1.0, 0.0
    %v207 = vsel %vm191, 1.0, 0.0
    %v208 = vsel %vm192, 1.0, 0.0
    %v209 = vsel %vm193, 1.0, 0.0
    %v210 = vsel %vm194, 1.0, 0.0
    %v211 = vsel %vm195, 1.0, 0.0
    %v212 = vsel %vm196, 1.0, 0.0
    %v213 = vsel %vm197, 1.0, 0.0
    %vm214 = vcmp.gt.f32.partialorder %v166, 0.0
    %vm215 = vcmp.gt.f32.partialorder %v167, 0.0
    %vm216 = vcmp.gt.f32.partialorder %v168, 0.0
    %vm217 = vcmp.gt.f32.partialorder %v169, 0.0
    %vm218 = vcmp.gt.f32.partialorder %v170, 0.0
    %vm219 = vcmp.gt.f32.partialorder %v171, 0.0
    %vm220 = vcmp.gt.f32.partialorder %v172, 0.0
    %vm221 = vcmp.gt.f32.partialorder %v173, 0.0
    %vm222 = vcmp.gt.f32.partialorder %v174, 0.0
    %vm223 = vcmp.gt.f32.partialorder %v175, 0.0
    %vm224 = vcmp.gt.f32.partialorder %v176, 0.0
    %vm225 = vcmp.gt.f32.partialorder %v177, 0.0
    %vm226 = vcmp.gt.f32.partialorder %v178, 0.0
    %vm227 = vcmp.gt.f32.partialorder %v179, 0.0
    %vm228 = vcmp.gt.f32.partialorder %v180, 0.0
    %vm229 = vcmp.gt.f32.partialorder %v181, 0.0
    %v230 = vsel %vm214, 1.0, 0.0
    %v231 = vsel %vm215, 1.0, 0.0
    %v232 = vsel %vm216, 1.0, 0.0
    %v233 = vsel %vm217, 1.0, 0.0
    %v234 = vsel %vm218, 1.0, 0.0
    %v235 = vsel %vm219, 1.0, 0.0
    %v236 = vsel %vm220, 1.0, 0.0
    %v237 = vsel %vm221, 1.0, 0.0
    %v238 = vsel %vm222, 1.0, 0.0
    %v239 = vsel %vm223, 1.0, 0.0
    %v240 = vsel %vm224, 1.0, 0.0
    %v241 = vsel %vm225, 1.0, 0.0
    %v242 = vsel %vm226, 1.0, 0.0
    %v243 = vsel %vm227, 1.0, 0.0
    %v244 = vsel %vm228, 1.0, 0.0
    %v245 = vsel %vm229, 1.0, 0.0
    %v246 = vsub.f32 %v150, %v230
    %v247 = vsub.f32 %v151, %v231
    %v248 = vsub.f32 %v152, %v232
    %v249 = vsub.f32 %v153, %v233
    %v250 = vsub.f32 %v154, %v234
    %v251 = vsub.f32 %v155, %v235
    %v252 = vsub.f32 %v156, %v236
    %v253 = vsub.f32 %v157, %v237
    %v254 = vsub.f32 %v158, %v238
    %v255 = vsub.f32 %v159, %v239
    %v256 = vsub.f32 %v160, %v240
    %v257 = vsub.f32 %v161, %v241
    %v258 = vsub.f32 %v162, %v242
    %v259 = vsub.f32 %v163, %v243
    %v260 = vsub.f32 %v164, %v244
    %v261 = vsub.f32 %v165, %v245
    %v262 = vpack.c.bf16 %v198, %v198
    %v263 = vpack.c.bf16 %v199, %v199
    %v264 = vpack.c.bf16 %v200, %v200
    %v265 = vpack.c.bf16 %v201, %v201
    %v266 = vpack.c.bf16 %v202, %v202
    %v267 = vpack.c.bf16 %v203, %v203
    %v268 = vpack.c.bf16 %v204, %v204
    %v269 = vpack.c.bf16 %v205, %v205
    %v270 = vpack.c.bf16 %v206, %v206
    %v271 = vpack.c.bf16 %v207, %v207
    %v272 = vpack.c.bf16 %v208, %v208
    %v273 = vpack.c.bf16 %v209, %v209
    %v274 = vpack.c.bf16 %v210, %v210
    %v275 = vpack.c.bf16 %v211, %v211
    %v276 = vpack.c.bf16 %v212, %v212
    %v277 = vpack.c.bf16 %v213, %v213
    %278 = vst [vmem:[%s7] sm:$0xf] %v262
    %279 = vst [vmem:[%s7 + $0x4] sm:$0xf] %v263
    %280 = vst [vmem:[%s7 + $0x8] sm:$0xf] %v264
    %281 = vst [vmem:[%s7 + $0xc] sm:$0xf] %v265
    %282 = vst [vmem:[%s7 + $0x10] sm:$0xf] %v266
    %283 = vst [vmem:[%s7 + $0x14] sm:$0xf] %v267
    %284 = vst [vmem:[%s7 + $0x18] sm:$0xf] %v268
    %285 = vst [vmem:[%s7 + $0x1c] sm:$0xf] %v269
    %286 = vst [vmem:[%s7 + $0x20] sm:$0xf] %v270
    %287 = vst [vmem:[%s7 + $0x24] sm:$0xf] %v271
    %288 = vst [vmem:[%s7 + $0x28] sm:$0xf] %v272
    %289 = vst [vmem:[%s7 + $0x2c] sm:$0xf] %v273
    %290 = vst [vmem:[%s7 + $0x30] sm:$0xf] %v274
    %291 = vst [vmem:[%s7 + $0x34] sm:$0xf] %v275
    %292 = vst [vmem:[%s7 + $0x38] sm:$0xf] %v276
    %293 = vst [vmem:[%s7 + $0x3c] sm:$0xf] %v277
    %294 = vst [vmem:[%s8] sm:$0xff] %v246
    %295 = vst [vmem:[%s8 + $0x8] sm:$0xff] %v247
    %296 = vst [vmem:[%s8 + $0x10] sm:$0xff] %v248
    %297 = vst [vmem:[%s8 + $0x18] sm:$0xff] %v249
    %298 = vst [vmem:[%s8 + $0x20] sm:$0xff] %v250
    %299 = vst [vmem:[%s8 + $0x28] sm:$0xff] %v251
    %300 = vst [vmem:[%s8 + $0x30] sm:$0xff] %v252
    %301 = vst [vmem:[%s8 + $0x38] sm:$0xff] %v253
    %302 = vst [vmem:[%s8 + $0x40] sm:$0xff] %v254
    %303 = vst [vmem:[%s8 + $0x48] sm:$0xff] %v255
    %304 = vst [vmem:[%s8 + $0x50] sm:$0xff] %v256
    %305 = vst [vmem:[%s8 + $0x58] sm:$0xff] %v257
    %306 = vst [vmem:[%s8 + $0x60] sm:$0xff] %v258
    %307 = vst [vmem:[%s8 + $0x68] sm:$0xff] %v259
    %308 = vst [vmem:[%s8 + $0x70] sm:$0xff] %v260
    %309 = vst [vmem:[%s8 + $0x78] sm:$0xff] %v261
    %v310 = vld [vmem:[%s6] sm:$0xf]
    %v311 = vld [vmem:[%s6 + $0x4] sm:$0xf]
    %v312 = vld [vmem:[%s6 + $0x8] sm:$0xf]
    %v313 = vld [vmem:[%s6 + $0xc] sm:$0xf]
    %v314 = vld [vmem:[%s6 + $0x10] sm:$0xf]
    %v315 = vld [vmem:[%s6 + $0x14] sm:$0xf]
    %v316 = vld [vmem:[%s6 + $0x18] sm:$0xf]
    %v317 = vld [vmem:[%s6 + $0x1c] sm:$0xf]
    %v318 = vld [vmem:[%s6 + $0x20] sm:$0xf]
    %v319 = vld [vmem:[%s6 + $0x24] sm:$0xf]
    %v320 = vld [vmem:[%s6 + $0x28] sm:$0xf]
    %v321 = vld [vmem:[%s6 + $0x2c] sm:$0xf]
    %v322 = vld [vmem:[%s6 + $0x30] sm:$0xf]
    %v323 = vld [vmem:[%s6 + $0x34] sm:$0xf]
    %v324 = vld [vmem:[%s6 + $0x38] sm:$0xf]
    %v325 = vld [vmem:[%s6 + $0x3c] sm:$0xf]
    %v326 = vunpack.c.l.bf16 %v310
    %v327 = vunpack.c.l.bf16 %v311
    %v328 = vunpack.c.l.bf16 %v312
    %v329 = vunpack.c.l.bf16 %v313
    %v330 = vunpack.c.l.bf16 %v314
    %v331 = vunpack.c.l.bf16 %v315
    %v332 = vunpack.c.l.bf16 %v316
    %v333 = vunpack.c.l.bf16 %v317
    %v334 = vunpack.c.l.bf16 %v318
    %v335 = vunpack.c.l.bf16 %v319
    %v336 = vunpack.c.l.bf16 %v320
    %v337 = vunpack.c.l.bf16 %v321
    %v338 = vunpack.c.l.bf16 %v322
    %v339 = vunpack.c.l.bf16 %v323
    %v340 = vunpack.c.l.bf16 %v324
    %v341 = vunpack.c.l.bf16 %v325
    %v342 = vadd.f32 %v198, %v326
    %v343 = vadd.f32 %v199, %v327
    %v344 = vadd.f32 %v200, %v328
    %v345 = vadd.f32 %v201, %v329
    %v346 = vadd.f32 %v202, %v330
    %v347 = vadd.f32 %v203, %v331
    %v348 = vadd.f32 %v204, %v332
    %v349 = vadd.f32 %v205, %v333
    %v350 = vadd.f32 %v206, %v334
    %v351 = vadd.f32 %v207, %v335
    %v352 = vadd.f32 %v208, %v336
    %v353 = vadd.f32 %v209, %v337
    %v354 = vadd.f32 %v210, %v338
    %v355 = vadd.f32 %v211, %v339
    %v356 = vadd.f32 %v212, %v340
    %v357 = vadd.f32 %v213, %v341
    %v358 = vpack.c.bf16 %v342, %v342
    %v359 = vpack.c.bf16 %v343, %v343
    %v360 = vpack.c.bf16 %v344, %v344
    %v361 = vpack.c.bf16 %v345, %v345
    %v362 = vpack.c.bf16 %v346, %v346
    %v363 = vpack.c.bf16 %v347, %v347
    %v364 = vpack.c.bf16 %v348, %v348
    %v365 = vpack.c.bf16 %v349, %v349
    %v366 = vpack.c.bf16 %v350, %v350
    %v367 = vpack.c.bf16 %v351, %v351
    %v368 = vpack.c.bf16 %v352, %v352
    %v369 = vpack.c.bf16 %v353, %v353
    %v370 = vpack.c.bf16 %v354, %v354
    %v371 = vpack.c.bf16 %v355, %v355
    %v372 = vpack.c.bf16 %v356, %v356
    %v373 = vpack.c.bf16 %v357, %v357
    %374 = vst [vmem:[%s9] sm:$0xf] %v358
    %375 = vst [vmem:[%s9 + $0x4] sm:$0xf] %v359
    %376 = vst [vmem:[%s9 + $0x8] sm:$0xf] %v360
    %377 = vst [vmem:[%s9 + $0xc] sm:$0xf] %v361
    %378 = vst [vmem:[%s9 + $0x10] sm:$0xf] %v362
    %379 = vst [vmem:[%s9 + $0x14] sm:$0xf] %v363
    %380 = vst [vmem:[%s9 + $0x18] sm:$0xf] %v364
    %381 = vst [vmem:[%s9 + $0x1c] sm:$0xf] %v365
    %382 = vst [vmem:[%s9 + $0x20] sm:$0xf] %v366
    %383 = vst [vmem:[%s9 + $0x24] sm:$0xf] %v367
    %384 = vst [vmem:[%s9 + $0x28] sm:$0xf] %v368
    %385 = vst [vmem:[%s9 + $0x2c] sm:$0xf] %v369
    %386 = vst [vmem:[%s9 + $0x30] sm:$0xf] %v370
    %387 = vst [vmem:[%s9 + $0x34] sm:$0xf] %v371
    %388 = vst [vmem:[%s9 + $0x38] sm:$0xf] %v372
    %389 = vst [vmem:[%s9 + $0x3c] sm:$0xf] %v373
    // Predicated region
    $region38: #{snn_vgg9_forward.54} parent=1 // pred_check
      _
    $region39: #{snn_vgg9_forward.54} parent=1 // pred_check_branch
      %391 = sbr.rel (0) target = $region41
    $region40: #{snn_vgg9_forward.54} parent=1 // pred_region
      _
    $region41: #{snn_vgg9_forward.54} parent=1 // pred_fallthru
      _
    // Predicated region
    $region42: #{snn_vgg9_forward.54} parent=1 // pred_check
      _
    $region43: #{snn_vgg9_forward.54} parent=1 // pred_check_branch
      %393 = sbr.rel (0) target = $region45
    $region44: #{snn_vgg9_forward.54} parent=1 // pred_region
      _
    $region45: #{snn_vgg9_forward.54} parent=1 // pred_fallthru
      _
    // Predicated region
    $region46: #{snn_vgg9_forward.54} parent=1 // pred_check
      _
    $region47: #{snn_vgg9_forward.54} parent=1 // pred_check_branch
      %395 = sbr.rel (0) target = $region49
    $region48: #{snn_vgg9_forward.54} parent=1 // pred_region
      _
    $region49: #{snn_vgg9_forward.54} parent=1 // pred_fallthru
      _
    // Predicated region
    $region50: #{snn_vgg9_forward.54} parent=1 // pred_check
      _
    $region51: #{snn_vgg9_forward.54} parent=1 // pred_check_branch
      %397 = sbr.rel (0) target = $region53
    $region52: #{snn_vgg9_forward.54} parent=1 // pred_region
      _
    $region53: #{snn_vgg9_forward.54} parent=1 // pred_fallthru
      _
    // Predicated region
    $region54: #{snn_vgg9_forward.54} parent=1 // pred_check
      _
    $region55: #{snn_vgg9_forward.54} parent=1 // pred_check_branch
      %399 = sbr.rel (0) target = $region57
    $region56: #{snn_vgg9_forward.54} parent=1 // pred_region
      _
    $region57: #{snn_vgg9_forward.54} parent=1 // pred_fallthru
      _
    // Predicated region
    $region58: #{snn_vgg9_forward.54} parent=1 // pred_check
      _
    $region59: #{snn_vgg9_forward.54} parent=1 // pred_check_branch
      %401 = sbr.rel (0) target = $region61
    $region60: #{snn_vgg9_forward.54} parent=1 // pred_region
      _
    $region61: #{snn_vgg9_forward.54} parent=1 // pred_fallthru
      _
    %402 = vsyncpa [#allocation3], 1
    %403 = vsyncpa [#allocation5], 1

// kernel: snn_vgg9_forward.88
$region0: #{snn_vgg9_forward.88}
  #allocation0 [shape = 'u32[]', space=smem, size = 0x4, offset = 0x4, fixed_abs, tag = 'smem constant byte address 0x4 - core index']
  #allocation1 [shape = 'u32[72,128]{1,0:T(1,128)}', space=vmem, size = 0x9000, scoped, tag = 'internal scratch']
  #allocation2 [shape = 'f32[128,256]{1,0:T(8,128)}', space=vmem, size = 0x20000, scoped, tag = 'scratch operand']
  %s0 = inlined_call_operand.vmem [shape: bf16[128,1152], index: 0, kind: input, shape index: {}]
  %s1 = inlined_call_operand.hbm [shape: bf16[1152,256], index: 1, kind: input, shape index: {}]
  %s2 = inlined_call_operand.hbm [shape: f32[1,256], index: 2, kind: input, shape index: {}]
  %s3 = inlined_call_operand.vmem [shape: f32[128,256], index: 3, kind: output, shape index: {}]
  %s4 = sld [smem:[#allocation0]]
  $region87: #{snn_vgg9_forward.88} parent=0
    _
  %s6 = ssub.s32 1, %s4
  %s7 = scalar_select 0, %s6, %s4
  $region1: #{snn_vgg9_forward.88} parent=0
    #allocation3 [shape = 'u8[196608]{0}', space=vmem, size = 0x30000, scoped, tag = 'input window, operand 0']
    #allocation4 [shape = 'u8[393216]{0}', space=vmem, size = 0x60000, scoped, tag = 'input window, operand 1']
    #allocation5 [shape = 's32[2]{0}', space=sflag, size = 0x8, scoped, tag = 'scoped memory for snn_vgg9_forward.88']
    #allocation6 [shape = 'u8[1024]{0}', space=vmem, size = 0x400, scoped, tag = 'input window, operand 2, single buffered']
    #allocation7 [shape = 's32[1]{0}', space=sflag, size = 0x4, scoped, tag = 'scoped memory for snn_vgg9_forward.88']
    %8 = vsyncpa [#allocation5], 0
    %s9 = scalar_lea.sflag [#allocation5], 1
    %10 = vsyncpa %s9, 0
    %11 = vsyncpa [#allocation7], 0
    loop: start=0, step=1, limit=5
    $region2: #{snn_vgg9_forward.88} parent=1 // loop_pre_header
      _
    $region3: #{snn_vgg9_forward.88} parent=1 // loop_header
      %s13 = sphi 0, %s17
      %p14 = scmp.ge.s32.totalorder %s13, 5
      %s20 = sphi 0, %s39
      %s21 = sphi 0, %s35
      %s22 = sphi 0, %s31
      %s23 = sphi 0, %s20
      %s24 = sphi 0, %s21
      %s25 = sphi 0, %s22
      %s26 = sphi 0, %s23
      %s27 = sphi 0, %s24
      %s28 = sphi 0, %s25
      %s44 = sphi 0, %s46
      %s47 = sphi 0, %s44
      %s48 = sphi 0, %s47
      %s64 = sphi 0, %s48
      %s72 = sphi 0, %s74
      %s75 = sphi 0, %s72
      %s76 = sphi 0, %s75
      %s92 = sphi 0, %s76
      %s98 = sphi 0, %s100
      %s101 = sphi 0, %s98
      %s102 = sphi 0, %s101
      %s118 = sphi 0, %s102
      %s126 = sphi 0, %s128
      %s129 = sphi 0, %s126
      %s130 = sphi 0, %s129
      %s146 = sphi 0, %s130
    $region4: #{snn_vgg9_forward.88} parent=1 // loop_header_branch
      %16 = sbr.rel (%p14) target = $region8
    $region5: #{snn_vgg9_forward.88} parent=1 // loop_body
      %s18 = ssub.s32 %s13, 1
      %s19 = ssub.s32 %s13, 2
      %s29 = sadd.s32 1, %s22
      %p30 = scmp.ge.s32.totalorder %s29, 3
      %s31 = scalar_select %p30, 0, %s29
      %s32 = sadd.s32 1, %s21
      %s33 = scalar_select %p30, %s32, %s21
      %p34 = scmp.ge.s32.totalorder %s33, 1
      %s35 = scalar_select %p34, 0, %s33
      %s36 = sadd.s32 1, %s20
      %s37 = scalar_select %p34, %s36, %s20
      %p38 = scmp.ge.s32.totalorder %s37, 1
      %s39 = scalar_select %p38, 0, %s37
      %s40 = ssub.s32 %s20, %s39
      %s41 = ssub.s32 %s22, %s31
      %s42 = sor.u32 %s40, %s41
      %p43 = scmp.eq.s32.totalorder %s42, 0
      %s45 = sadd.s32 %s44, 1
      %s46 = scalar_select %p43, %s44, %s45
      %p49 = pneg %p43
      %p50 = scmp.eq.s32.totalorder %s13, 2
      %p51 = por %p49, %p50
      %p52 = scmp.ne.s32.totalorder %s44, %s47
      %p53 = scmp.eq.s32.totalorder %s13, 0
      %p54 = por %p52, %p53
      %p55 = scmp.ne.s32.totalorder %s44, %s47
      %p56 = scmp.eq.s32.totalorder %s18, 2
      %p57 = por %p55, %p56
      %p58 = scmp.ne.s32.totalorder %s47, %s48
      %p59 = scmp.eq.s32.totalorder %s18, 0
      %p60 = por %p58, %p59
      %p61 = scmp.ne.s32.totalorder %s47, %s48
      %p62 = scmp.eq.s32.totalorder %s19, 2
      %p63 = por %p61, %p62
      %p65 = scmp.ne.s32.totalorder %s48, %s64
      %p66 = scmp.eq.s32.totalorder %s19, 0
      %p67 = por %p65, %p66
      %s68 = ssub.s32 %s22, %s31
      %s69 = ssub.s32 %s21, %s35
      %s70 = sor.u32 %s68, %s69
      %p71 = scmp.eq.s32.totalorder %s70, 0
      %s73 = sadd.s32 %s72, 1
      %s74 = scalar_select %p71, %s72, %s73
      %p77 = pneg %p71
      %p78 = scmp.eq.s32.totalorder %s13, 2
      %p79 = por %p77, %p78
      %p80 = scmp.ne.s32.totalorder %s72, %s75
      %p81 = scmp.eq.s32.totalorder %s13, 0
      %p82 = por %p80, %p81
      %p83 = scmp.ne.s32.totalorder %s72, %s75
      %p84 = scmp.eq.s32.totalorder %s18, 2
      %p85 = por %p83, %p84
      %p86 = scmp.ne.s32.totalorder %s75, %s76
      %p87 = scmp.eq.s32.totalorder %s18, 0
      %p88 = por %p86, %p87
      %p89 = scmp.ne.s32.totalorder %s75, %s76
      %p90 = scmp.eq.s32.totalorder %s19, 2
      %p91 = por %p89, %p90
      %p93 = scmp.ne.s32.totalorder %s76, %s92
      %p94 = scmp.eq.s32.totalorder %s19, 0
      %p95 = por %p93, %p94
      %s96 = ssub.s32 %s21, %s35
      %p97 = scmp.eq.s32.totalorder %s96, 0
      %s99 = sadd.s32 %s98, 1
      %s100 = scalar_select %p97, %s98, %s99
      %p103 = pneg %p97
      %p104 = scmp.eq.s32.totalorder %s13, 2
      %p105 = por %p103, %p104
      %p106 = scmp.ne.s32.totalorder %s98, %s101
      %p107 = scmp.eq.s32.totalorder %s13, 0
      %p108 = por %p106, %p107
      %p109 = scmp.ne.s32.totalorder %s98, %s101
      %p110 = scmp.eq.s32.totalorder %s18, 2
      %p111 = por %p109, %p110
      %p112 = scmp.ne.s32.totalorder %s101, %s102
      %p113 = scmp.eq.s32.totalorder %s18, 0
      %p114 = por %p112, %p113
      %p115 = scmp.ne.s32.totalorder %s101, %s102
      %p116 = scmp.eq.s32.totalorder %s19, 2
      %p117 = por %p115, %p116
      %p119 = scmp.ne.s32.totalorder %s102, %s118
      %p120 = scmp.eq.s32.totalorder %s19, 0
      %p121 = por %p119, %p120
      %s122 = ssub.s32 %s20, %s39
      %s123 = ssub.s32 %s21, %s35
      %s124 = sor.u32 %s122, %s123
      %p125 = scmp.eq.s32.totalorder %s124, 0
      %s127 = sadd.s32 %s126, 1
      %s128 = scalar_select %p125, %s126, %s127
      %p131 = pneg %p125
      %p132 = scmp.eq.s32.totalorder %s13, 2
      %p133 = por %p131, %p132
      %p134 = scmp.ne.s32.totalorder %s126, %s129
      %p135 = scmp.eq.s32.totalorder %s13, 0
      %p136 = por %p134, %p135
      %p137 = scmp.ne.s32.totalorder %s126, %s129
      %p138 = scmp.eq.s32.totalorder %s18, 2
      %p139 = por %p137, %p138
      %p140 = scmp.ne.s32.totalorder %s129, %s130
      %p141 = scmp.eq.s32.totalorder %s18, 0
      %p142 = por %p140, %p141
      %p143 = scmp.ne.s32.totalorder %s129, %s130
      %p144 = scmp.eq.s32.totalorder %s19, 2
      %p145 = por %p143, %p144
      %p147 = scmp.ne.s32.totalorder %s130, %s146
      %p148 = scmp.eq.s32.totalorder %s19, 0
      %p149 = por %p147, %p148
      %p150 = scmp.le.s32.totalorder 1, %s13
      %p151 = scmp.lt.s32.totalorder %s13, 4
      %p152 = pnand %p150, %p151
      %p153 = pneg %p152
      // Predicated region
      $region9: #{snn_vgg9_forward.88} parent=5 // pred_check
        _
      $region10: #{snn_vgg9_forward.88} parent=5 // pred_check_branch
        %155 = sbr.rel (%p152) target = $region12
      $region11: #{snn_vgg9_forward.88} parent=5 // pred_region
        %s156 = ssub.s32 %s13, 1
        // Predicated region
        $region13: #{snn_vgg9_forward.88} parent=11 // pred_check
          %p157 = pneg %p114
        $region14: #{snn_vgg9_forward.88} parent=11 // pred_check_branch
          %159 = sbr.rel (%p157) target = $region16
        $region15: #{snn_vgg9_forward.88} parent=11 // pred_region
          %s160 = smul.u32 2, %s24
          %162 = vsyncadd [#allocation7], 0
          %s163 = scalar_lea.hbm %s2, %s160
          %s165 = sshll.u32 %s163, 4
          %s166 = int_to_ptr.hbm [resolvable:$true] %s165
          %s167 = sshll.u32 [#allocation6], 4
          %s168 = int_to_ptr.vmem [resolvable:$true] %s167
          %170 = dma.hbm_to_vmem [thread:$0]  %s166, 32, %s168, [#allocation7]
        $region16: #{snn_vgg9_forward.88} parent=11 // pred_fallthru
          _
      $region12: #{snn_vgg9_forward.88} parent=5 // pred_fallthru
        _
      %p171 = scmp.lt.s32.totalorder %s13, 3
      // Predicated region
      $region17: #{snn_vgg9_forward.88} parent=5 // pred_check
        %p172 = pneg %p171
      $region18: #{snn_vgg9_forward.88} parent=5 // pred_check_branch
        %174 = sbr.rel (%p172) target = $region20
      $region19: #{snn_vgg9_forward.88} parent=5 // pred_region
        // Predicated region
        $region21: #{snn_vgg9_forward.88} parent=19 // pred_check
          %p175 = pneg %p54
        $region22: #{snn_vgg9_forward.88} parent=19 // pred_check_branch
          %177 = sbr.rel (%p175) target = $region24
        $region23: #{snn_vgg9_forward.88} parent=19 // pred_region
          %s178 = sand.u32 %s44, 1
          %s179 = sand.u32 %s44, 1
          %s180 = smul.addr %s179, 192
          %s181 = scalar_lea.vmem [#allocation3], %s180
          %s182 = smul.u32 16, %s20
          %s183 = smul.u32 3, %s22
          %s184 = smul.addr %s182, 9
          %s185 = sadd.s32 %s183, %s184
          %s186 = smul.addr %s185, 4
          %s187 = scalar_lea.vmem %s0, %s186
          // Predicated region
          $region25: #{snn_vgg9_forward.88} parent=23 // pred_check
            _
          $region26: #{snn_vgg9_forward.88} parent=23 // pred_check_branch
            %189 = sbr.rel (0) target = $region28
          $region27: #{snn_vgg9_forward.88} parent=23 // pred_region
            // Predicated region
            $region29: #{snn_vgg9_forward.88} parent=27 // pred_check
              _
            $region30: #{snn_vgg9_forward.88} parent=27 // pred_check_branch
              %191 = sbr.rel (0) target = $region32
            $region31: #{snn_vgg9_forward.88} parent=27 // pred_region
              %s192 = scalar_lea.vmem %s187, 8
              %s193 = scalar_lea.vmem %s181, 8 [#allocation3]
              loop: start=0, step=1, limit=1
              $region33: #{snn_vgg9_forward.88} parent=31 // loop_pre_header
                _
              $region34: #{snn_vgg9_forward.88} parent=31 // loop_header
                %s195 = sphi 0, %s199
                %p196 = scmp.ge.s32.totalorder %s195, 1
                %s200 = sphi %s187, %s187
                %s201 = sphi %s181, %s181
              $region35: #{snn_vgg9_forward.88} parent=31 // loop_header_branch
                %198 = sbr.rel (%p196) target = $region39
              $region36: #{snn_vgg9_forward.88} parent=31 // loop_body
                %v202 = vld [vmem:[%s200] sm:$0xff]
                %203 = vst [vmem:[%s201] sm:$0xff] %v202
                %v204 = vld [vmem:[%s200 + $0x24] sm:$0xff]
                %205 = vst [vmem:[%s201 + $0xc] sm:$0xff] %v204
                %v206 = vld [vmem:[%s200 + $0x48] sm:$0xff]
                %207 = vst [vmem:[%s201 + $0x18] sm:$0xff] %v206
                %v208 = vld [vmem:[%s200 + $0x6c] sm:$0xff]
                %209 = vst [vmem:[%s201 + $0x24] sm:$0xff] %v208
                %v210 = vld [vmem:[%s200 + $0x90] sm:$0xff]
                %211 = vst [vmem:[%s201 + $0x30] sm:$0xff] %v210
                %v212 = vld [vmem:[%s200 + $0xb4] sm:$0xff]
                %213 = vst [vmem:[%s201 + $0x3c] sm:$0xff] %v212
                %v214 = vld [vmem:[%s200 + $0xd8] sm:$0xff]
                %215 = vst [vmem:[%s201 + $0x48] sm:$0xff] %v214
                %v216 = vld [vmem:[%s200 + $0xfc] sm:$0xff]
                %217 = vst [vmem:[%s201 + $0x54] sm:$0xff] %v216
                %v218 = vld [vmem:[%s200 + $0x120] sm:$0xff]
                %219 = vst [vmem:[%s201 + $0x60] sm:$0xff] %v218
                %v220 = vld [vmem:[%s200 + $0x144] sm:$0xff]
                %221 = vst [vmem:[%s201 + $0x6c] sm:$0xff] %v220
                %v222 = vld [vmem:[%s200 + $0x168] sm:$0xff]
                %223 = vst [vmem:[%s201 + $0x78] sm:$0xff] %v222
                %v224 = vld [vmem:[%s200 + $0x18c] sm:$0xff]
                %225 = vst [vmem:[%s201 + $0x84] sm:$0xff] %v224
                %v226 = vld [vmem:[%s200 + $0x1b0] sm:$0xff]
                %227 = vst [vmem:[%s201 + $0x90] sm:$0xff] %v226
                %v228 = vld [vmem:[%s200 + $0x1d4] sm:$0xff]
                %229 = vst [vmem:[%s201 + $0x9c] sm:$0xff] %v228
                %v230 = vld [vmem:[%s200 + $0x1f8] sm:$0xff]
                %231 = vst [vmem:[%s201 + $0xa8] sm:$0xff] %v230
                %v232 = vld [vmem:[%s200 + $0x21c] sm:$0xff]
                %233 = vst [vmem:[%s201 + $0xb4] sm:$0xff] %v232
              $region37: #{snn_vgg9_forward.88} parent=31 // loop_footer
                %s199 = sadd.s32 1, %s195
              $region38: #{snn_vgg9_forward.88} parent=31 // loop_footer_branch
                %194 = sbr.rel target = $region34
              $region39: #{snn_vgg9_forward.88} parent=31 // loop_exit
                _
              %s235 = ssub.s32 16, 1
              loop: start=0, step=1, limit=1
              $region40: #{snn_vgg9_forward.88} parent=31 // loop_pre_header
                _
              $region41: #{snn_vgg9_forward.88} parent=31 // loop_header
                %s237 = sphi 0, %s241
                %p238 = scmp.ge.s32.totalorder %s237, 1
                %s242 = sphi %s192, %s192
                %s243 = sphi %s193, %s193
              $region42: #{snn_vgg9_forward.88} parent=31 // loop_header_branch
                %240 = sbr.rel (%p238) target = $region46
              $region43: #{snn_vgg9_forward.88} parent=31 // loop_body
                %v244 = vld [vmem:[%s242] sm:%s235]
                %245 = vst [vmem:[%s243] sm:%s235] %v244
                %v246 = vld [vmem:[%s242 + $0x24] sm:%s235]
                %247 = vst [vmem:[%s243 + $0xc] sm:%s235] %v246
                %v248 = vld [vmem:[%s242 + $0x48] sm:%s235]
                %249 = vst [vmem:[%s243 + $0x18] sm:%s235] %v248
                %v250 = vld [vmem:[%s242 + $0x6c] sm:%s235]
                %251 = vst [vmem:[%s243 + $0x24] sm:%s235] %v250
                %v252 = vld [vmem:[%s242 + $0x90] sm:%s235]
                %253 = vst [vmem:[%s243 + $0x30] sm:%s235] %v252
                %v254 = vld [vmem:[%s242 + $0xb4] sm:%s235]
                %255 = vst [vmem:[%s243 + $0x3c] sm:%s235] %v254
                %v256 = vld [vmem:[%s242 + $0xd8] sm:%s235]
                %257 = vst [vmem:[%s243 + $0x48] sm:%s235] %v256
                %v258 = vld [vmem:[%s242 + $0xfc] sm:%s235]
                %259 = vst [vmem:[%s243 + $0x54] sm:%s235] %v258
                %v260 = vld [vmem:[%s242 + $0x120] sm:%s235]
                %261 = vst [vmem:[%s243 + $0x60] sm:%s235] %v260
                %v262 = vld [vmem:[%s242 + $0x144] sm:%s235]
                %263 = vst [vmem:[%s243 + $0x6c] sm:%s235] %v262
                %v264 = vld [vmem:[%s242 + $0x168] sm:%s235]
                %265 = vst [vmem:[%s243 + $0x78] sm:%s235] %v264
                %v266 = vld [vmem:[%s242 + $0x18c] sm:%s235]
                %267 = vst [vmem:[%s243 + $0x84] sm:%s235] %v266
                %v268 = vld [vmem:[%s242 + $0x1b0] sm:%s235]
                %269 = vst [vmem:[%s243 + $0x90] sm:%s235] %v268
                %v270 = vld [vmem:[%s242 + $0x1d4] sm:%s235]
                %271 = vst [vmem:[%s243 + $0x9c] sm:%s235] %v270
                %v272 = vld [vmem:[%s242 + $0x1f8] sm:%s235]
                %273 = vst [vmem:[%s243 + $0xa8] sm:%s235] %v272
                %v274 = vld [vmem:[%s242 + $0x21c] sm:%s235]
                %275 = vst [vmem:[%s243 + $0xb4] sm:%s235] %v274
              $region44: #{snn_vgg9_forward.88} parent=31 // loop_footer
                %s241 = sadd.s32 1, %s237
              $region45: #{snn_vgg9_forward.88} parent=31 // loop_footer_branch
                %236 = sbr.rel target = $region41
              $region46: #{snn_vgg9_forward.88} parent=31 // loop_exit
                _
            $region32: #{snn_vgg9_forward.88} parent=27 // pred_fallthru
              _
          $region28: #{snn_vgg9_forward.88} parent=23 // pred_fallthru
            _
          %276 = vnop
        $region24: #{snn_vgg9_forward.88} parent=19 // pred_fallthru
          _
        // Predicated region
        $region47: #{snn_vgg9_forward.88} parent=19 // pred_check
          %p277 = pneg %p82
        $region48: #{snn_vgg9_forward.88} parent=19 // pred_check_branch
          %279 = sbr.rel (%p277) target = $region50
        $region49: #{snn_vgg9_forward.88} parent=19 // pred_region
          %s280 = sand.u32 %s72, 1
          %s281 = scalar_lea.sflag [#allocation5], %s280
          %s282 = sand.u32 %s72, 1
          %s283 = smul.addr %s282, 384
          %s284 = scalar_lea.vmem [#allocation4], %s283
          %s285 = smul.u32 48, %s22
          %s286 = smul.u32 2, %s21
          %288 = vsyncadd %s281, 0
          %s289 = smul.addr %s285, 2
          %s290 = sadd.s32 %s286, %s289
          %s291 = smul.addr %s290, 4
          %s292 = scalar_lea.hbm %s1, %s291
          %s293 = sshll.u32 %s292, 4
          %s294 = int_to_ptr.hbm [resolvable:$true] %s293
          %s295 = sshll.u32 %s284, 4
          %s296 = int_to_ptr.vmem [resolvable:$true] %s295
          %301 = dma.hbm_to_vmem [thread:$0]  %s294, 6144, %s296, %s281, 128, 128, 8
        $region50: #{snn_vgg9_forward.88} parent=19 // pred_fallthru
          _
      $region20: #{snn_vgg9_forward.88} parent=5 // pred_fallthru
        _
      %p302 = scmp.le.s32.totalorder 1, %s13
      %p303 = scmp.lt.s32.totalorder %s13, 4
      %p304 = pnand %p302, %p303
      %p305 = pneg %p304
      // Predicated region
      $region51: #{snn_vgg9_forward.88} parent=5 // pred_check
        _
      $region52: #{snn_vgg9_forward.88} parent=5 // pred_check_branch
        %307 = sbr.rel (%p304) target = $region54
      $region53: #{snn_vgg9_forward.88} parent=5 // pred_region
        %s308 = ssub.s32 %s13, 1
        %s309 = sand.u32 %s47, 1
        %s310 = sand.u32 %s47, 1
        %s311 = smul.addr %s310, 192
        %s312 = scalar_lea.vmem [#allocation3], %s311
        // Predicated region
        $region55: #{snn_vgg9_forward.88} parent=53 // pred_check
          %p313 = pneg %p60
        $region56: #{snn_vgg9_forward.88} parent=53 // pred_check_branch
          %315 = sbr.rel (%p313) target = $region58
        $region57: #{snn_vgg9_forward.88} parent=53 // pred_region
          _
        $region58: #{snn_vgg9_forward.88} parent=53 // pred_fallthru
          _
        %s316 = sand.u32 %s75, 1
        %s317 = scalar_lea.sflag [#allocation5], %s316
        %s318 = sand.u32 %s75, 1
        %s319 = smul.addr %s318, 384
        %s320 = scalar_lea.vmem [#allocation4], %s319
        // Predicated region
        $region59: #{snn_vgg9_forward.88} parent=53 // pred_check
          %p321 = pneg %p88
        $region60: #{snn_vgg9_forward.88} parent=53 // pred_check_branch
          %323 = sbr.rel (%p321) target = $region62
        $region61: #{snn_vgg9_forward.88} parent=53 // pred_region
          %325 = dma.done %s317, 6144
        $region62: #{snn_vgg9_forward.88} parent=53 // pred_fallthru
          _
        // Predicated region
        $region63: #{snn_vgg9_forward.88} parent=53 // pred_check
          %p326 = pneg %p114
        $region64: #{snn_vgg9_forward.88} parent=53 // pred_check_branch
          %328 = sbr.rel (%p326) target = $region66
        $region65: #{snn_vgg9_forward.88} parent=53 // pred_region
          %330 = dma.done [#allocation7], 32
        $region66: #{snn_vgg9_forward.88} parent=53 // pred_fallthru
          _
        %s331 = sand.u32 %s47, 1
        %s332 = sand.u32 %s47, 1
        %s333 = smul.addr %s332, 192
        %s334 = scalar_lea.vmem [#allocation3], %s333
        %p335 = pneg %p60
        %p336 = pneg %p57
        %s337 = sand.u32 %s75, 1
        %s338 = scalar_lea.sflag [#allocation5], %s337
        %s339 = sand.u32 %s75, 1
        %s340 = smul.addr %s339, 384
        %s341 = scalar_lea.vmem [#allocation4], %s340
        %p342 = pneg %p88
        %p343 = pneg %p85
        %p344 = pneg %p114
        %p345 = pneg %p111
        %p346 = pneg %p142
        %p347 = pneg %p139
        %s348 = smul.u32 16, %s23
        %s349 = smul.u32 2, %s24
        %p350 = scmp.lt.s32.totalorder %s348, 15
        %s351 = scalar_select %p350, %s348, 15
        %p352 = scmp.lt.s32.totalorder %s349, 1
        %s353 = scalar_select %p352, %s349, 1
        %s354 = smul.addr %s351, 2
        %s355 = sadd.s32 %s353, %s354
        %s356 = smul.addr %s355, 8
        %s357 = scalar_lea.vmem %s3, %s356
        %s358 = smul.u32 16, %s23
        %s359 = smul.u32 3, %s25
        %s360 = smul.u32 48, %s25
        %s361 = smul.u32 2, %s24
        %s362 = smul.u32 2, %s24
        %s363 = smul.u32 16, %s23
        %s364 = smul.u32 2, %s24
        %p365 = scmp.lt.s32.totalorder %s363, 15
        %s366 = scalar_select %p365, %s363, 15
        %p367 = scmp.lt.s32.totalorder %s364, 1
        %s368 = scalar_select %p367, %s364, 1
        %s369 = smul.addr %s366, 2
        %s370 = sadd.s32 %s368, %s369
        %s371 = smul.addr %s370, 8
        %s372 = scalar_lea.vmem %s3, %s371
        %s373 = smul.u32 16, %s23
        %s374 = smul.u32 2, %s24
        %p375 = scmp.eq.s32.totalorder %s25, 0
        // Predicated region
        $region67: #{snn_vgg9_forward.88} parent=53 // pred_check
          %p376 = pneg %p375
        $region68: #{snn_vgg9_forward.88} parent=53 // pred_check_branch
          %378 = sbr.rel (%p376) target = $region70
        $region69: #{snn_vgg9_forward.88} parent=53 // pred_region
          %379 = vst [vmem:[#allocation2] sm:$0xff] 0.0
          %380 = vst [vmem:[#allocation2 + $0x8] sm:$0xff] 0.0
          %381 = vst [vmem:[#allocation2 + $0x10] sm:$0xff] 0.0
          %382 = vst [vmem:[#allocation2 + $0x18] sm:$0xff] 0.0
          %383 = vst [vmem:[#allocation2 + $0x20] sm:$0xff] 0.0
          %384 = vst [vmem:[#allocation2 + $0x28] sm:$0xff] 0.0
          %385 = vst [vmem:[#allocation2 + $0x30] sm:$0xff] 0.0
          %386 = vst [vmem:[#allocation2 + $0x38] sm:$0xff] 0.0
          %387 = vst [vmem:[#allocation2 + $0x40] sm:$0xff] 0.0
          %388 = vst [vmem:[#allocation2 + $0x48] sm:$0xff] 0.0
          %389 = vst [vmem:[#allocation2 + $0x50] sm:$0xff] 0.0
          %390 = vst [vmem:[#allocation2 + $0x58] sm:$0xff] 0.0
          %391 = vst [vmem:[#allocation2 + $0x60] sm:$0xff] 0.0
          %392 = vst [vmem:[#allocation2 + $0x68] sm:$0xff] 0.0
          %393 = vst [vmem:[#allocation2 + $0x70] sm:$0xff] 0.0
          %394 = vst [vmem:[#allocation2 + $0x78] sm:$0xff] 0.0
          %395 = vst [vmem:[#allocation2 + $0x80] sm:$0xff] 0.0
          %396 = vst [vmem:[#allocation2 + $0x88] sm:$0xff] 0.0
          %397 = vst [vmem:[#allocation2 + $0x90] sm:$0xff] 0.0
          %398 = vst [vmem:[#allocation2 + $0x98] sm:$0xff] 0.0
          %399 = vst [vmem:[#allocation2 + $0xa0] sm:$0xff] 0.0
          %400 = vst [vmem:[#allocation2 + $0xa8] sm:$0xff] 0.0
          %401 = vst [vmem:[#allocation2 + $0xb0] sm:$0xff] 0.0
          %402 = vst [vmem:[#allocation2 + $0xb8] sm:$0xff] 0.0
          %403 = vst [vmem:[#allocation2 + $0xc0] sm:$0xff] 0.0
          %404 = vst [vmem:[#allocation2 + $0xc8] sm:$0xff] 0.0
          %405 = vst [vmem:[#allocation2 + $0xd0] sm:$0xff] 0.0
          %406 = vst [vmem:[#allocation2 + $0xd8] sm:$0xff] 0.0
          %407 = vst [vmem:[#allocation2 + $0xe0] sm:$0xff] 0.0
          %408 = vst [vmem:[#allocation2 + $0xe8] sm:$0xff] 0.0
          %409 = vst [vmem:[#allocation2 + $0xf0] sm:$0xff] 0.0
          %410 = vst [vmem:[#allocation2 + $0xf8] sm:$0xff] 0.0
        $region70: #{snn_vgg9_forward.88} parent=53 // pred_fallthru
          _
        %v411 = vld [vmem:[#allocation2] sm:$0xff]
        %v412 = vld [vmem:[#allocation2 + $0x8] sm:$0xff]
        %v413 = vld [vmem:[#allocation2 + $0x10] sm:$0xff]
        %v414 = vld [vmem:[#allocation2 + $0x18] sm:$0xff]
        %v415 = vld [vmem:[#allocation2 + $0x20] sm:$0xff]
        %v416 = vld [vmem:[#allocation2 + $0x28] sm:$0xff]
        %v417 = vld [vmem:[#allocation2 + $0x30] sm:$0xff]
        %v418 = vld [vmem:[#allocation2 + $0x38] sm:$0xff]
        %v419 = vld [vmem:[#allocation2 + $0x40] sm:$0xff]
        %v420 = vld [vmem:[#allocation2 + $0x48] sm:$0xff]
        %v421 = vld [vmem:[#allocation2 + $0x50] sm:$0xff]
        %v422 = vld [vmem:[#allocation2 + $0x58] sm:$0xff]
        %v423 = vld [vmem:[#allocation2 + $0x60] sm:$0xff]
        %v424 = vld [vmem:[#allocation2 + $0x68] sm:$0xff]
        %v425 = vld [vmem:[#allocation2 + $0x70] sm:$0xff]
        %v426 = vld [vmem:[#allocation2 + $0x78] sm:$0xff]
        %v427 = vld [vmem:[#allocation2 + $0x80] sm:$0xff]
        %v428 = vld [vmem:[#allocation2 + $0x88] sm:$0xff]
        %v429 = vld [vmem:[#allocation2 + $0x90] sm:$0xff]
        %v430 = vld [vmem:[#allocation2 + $0x98] sm:$0xff]
        %v431 = vld [vmem:[#allocation2 + $0xa0] sm:$0xff]
        %v432 = vld [vmem:[#allocation2 + $0xa8] sm:$0xff]
        %v433 = vld [vmem:[#allocation2 + $0xb0] sm:$0xff]
        %v434 = vld [vmem:[#allocation2 + $0xb8] sm:$0xff]
        %v435 = vld [vmem:[#allocation2 + $0xc0] sm:$0xff]
        %v436 = vld [vmem:[#allocation2 + $0xc8] sm:$0xff]
        %v437 = vld [vmem:[#allocation2 + $0xd0] sm:$0xff]
        %v438 = vld [vmem:[#allocation2 + $0xd8] sm:$0xff]
        %v439 = vld [vmem:[#allocation2 + $0xe0] sm:$0xff]
        %v440 = vld [vmem:[#allocation2 + $0xe8] sm:$0xff]
        %v441 = vld [vmem:[#allocation2 + $0xf0] sm:$0xff]
        %v442 = vld [vmem:[#allocation2 + $0xf8] sm:$0xff]
        %v443 = vld [vmem:[%s312] sm:$0xff]
        %v444 = vld [vmem:[%s312 + $0x8] sm:$0xf]
        %v445 = vld [vmem:[%s312 + $0xc] sm:$0xff]
        %v446 = vld [vmem:[%s312 + $0x14] sm:$0xf]
        %v447 = vld [vmem:[%s312 + $0x18] sm:$0xff]
        %v448 = vld [vmem:[%s312 + $0x20] sm:$0xf]
        %v449 = vld [vmem:[%s312 + $0x24] sm:$0xff]
        %v450 = vld [vmem:[%s312 + $0x2c] sm:$0xf]
        %v451 = vld [vmem:[%s312 + $0x30] sm:$0xff]
        %v452 = vld [vmem:[%s312 + $0x38] sm:$0xf]
        %v453 = vld [vmem:[%s312 + $0x3c] sm:$0xff]
        %v454 = vld [vmem:[%s312 + $0x44] sm:$0xf]
        %v455 = vld [vmem:[%s312 + $0x48] sm:$0xff]
        %v456 = vld [vmem:[%s312 + $0x50] sm:$0xf]
        %v457 = vld [vmem:[%s312 + $0x54] sm:$0xff]
        %v458 = vld [vmem:[%s312 + $0x5c] sm:$0xf]
        %v459 = vld [vmem:[%s312 + $0x60] sm:$0xff]
        %v460 = vld [vmem:[%s312 + $0x68] sm:$0xf]
        %v461 = vld [vmem:[%s312 + $0x6c] sm:$0xff]
        %v462 = vld [vmem:[%s312 + $0x74] sm:$0xf]
        %v463 = vld [vmem:[%s312 + $0x78] sm:$0xff]
        %v464 = vld [vmem:[%s312 + $0x80] sm:$0xf]
        %v465 = vld [vmem:[%s312 + $0x84] sm:$0xff]
        %v466 = vld [vmem:[%s312 + $0x8c] sm:$0xf]
        %v467 = vld [vmem:[%s312 + $0x90] sm:$0xff]
        %v468 = vld [vmem:[%s312 + $0x98] sm:$0xf]
        %v469 = vld [vmem:[%s312 + $0x9c] sm:$0xff]
        %v470 = vld [vmem:[%s312 + $0xa4] sm:$0xf]
        %v471 = vld [vmem:[%s312 + $0xa8] sm:$0xff]
        %v472 = vld [vmem:[%s312 + $0xb0] sm:$0xf]
        %v473 = vld [vmem:[%s312 + $0xb4] sm:$0xff]
        %v474 = vld [vmem:[%s312 + $0xbc] sm:$0xf]
        %v475 = vld [vmem:[%s320] sm:$0xff]
        %v476 = vld [vmem:[%s320 + $0x8] sm:$0xff]
        %v477 = vld [vmem:[%s320 + $0x10] sm:$0xff]
        %v478 = vld [vmem:[%s320 + $0x18] sm:$0xff]
        %v479 = vld [vmem:[%s320 + $0x20] sm:$0xff]
        %v480 = vld [vmem:[%s320 + $0x28] sm:$0xff]
        %v481 = vld [vmem:[%s320 + $0x30] sm:$0xff]
        %v482 = vld [vmem:[%s320 + $0x38] sm:$0xff]
        %v483 = vld [vmem:[%s320 + $0x40] sm:$0xff]
        %v484 = vld [vmem:[%s320 + $0x48] sm:$0xff]
        %v485 = vld [vmem:[%s320 + $0x50] sm:$0xff]
        %v486 = vld [vmem:[%s320 + $0x58] sm:$0xff]
        %v487 = vld [vmem:[%s320 + $0x60] sm:$0xff]
        %v488 = vld [vmem:[%s320 + $0x68] sm:$0xff]
        %v489 = vld [vmem:[%s320 + $0x70] sm:$0xff]
        %v490 = vld [vmem:[%s320 + $0x78] sm:$0xff]
        %v491 = vld [vmem:[%s320 + $0x80] sm:$0xff]
        %v492 = vld [vmem:[%s320 + $0x88] sm:$0xff]
        %v493 = vld [vmem:[%s320 + $0x90] sm:$0xff]
        %v494 = vld [vmem:[%s320 + $0x98] sm:$0xff]
        %v495 = vld [vmem:[%s320 + $0xa0] sm:$0xff]
        %v496 = vld [vmem:[%s320 + $0xa8] sm:$0xff]
        %v497 = vld [vmem:[%s320 + $0xb0] sm:$0xff]
        %v498 = vld [vmem:[%s320 + $0xb8] sm:$0xff]
        %v499 = vld [vmem:[%s320 + $0xc0] sm:$0xff]
        %v500 = vld [vmem:[%s320 + $0xc8] sm:$0xff]
        %v501 = vld [vmem:[%s320 + $0xd0] sm:$0xff]
        %v502 = vld [vmem:[%s320 + $0xd8] sm:$0xff]
        %v503 = vld [vmem:[%s320 + $0xe0] sm:$0xff]
        %v504 = vld [vmem:[%s320 + $0xe8] sm:$0xff]
        %v505 = vld [vmem:[%s320 + $0xf0] sm:$0xff]
        %v506 = vld [vmem:[%s320 + $0xf8] sm:$0xff]
        %v507 = vld [vmem:[%s320 + $0x100] sm:$0xff]
        %v508 = vld [vmem:[%s320 + $0x108] sm:$0xff]
        %v509 = vld [vmem:[%s320 + $0x110] sm:$0xff]
        %v510 = vld [vmem:[%s320 + $0x118] sm:$0xff]
        %v511 = vld [vmem:[%s320 + $0x120] sm:$0xff]
        %v512 = vld [vmem:[%s320 + $0x128] sm:$0xff]
        %v513 = vld [vmem:[%s320 + $0x130] sm:$0xff]
        %v514 = vld [vmem:[%s320 + $0x138] sm:$0xff]
        %v515 = vld [vmem:[%s320 + $0x140] sm:$0xff]
        %v516 = vld [vmem:[%s320 + $0x148] sm:$0xff]
        %v517 = vld [vmem:[%s320 + $0x150] sm:$0xff]
        %v518 = vld [vmem:[%s320 + $0x158] sm:$0xff]
        %v519 = vld [vmem:[%s320 + $0x160] sm:$0xff]
        %v520 = vld [vmem:[%s320 + $0x168] sm:$0xff]
        %v521 = vld [vmem:[%s320 + $0x170] sm:$0xff]
        %v522 = vld [vmem:[%s320 + $0x178] sm:$0xff]
        %v555 = vunpack.c.l.b16 %v443
        %v556 = vunpack.c.h.b16 %v443
        %v557 = vunpack.c.l.b16 %v444
        %v558 = vunpack.c.l.b16 %v445
        %v559 = vunpack.c.h.b16 %v445
        %v560 = vunpack.c.l.b16 %v446
        %v561 = vunpack.c.l.b16 %v447
        %v562 = vunpack.c.h.b16 %v447
        %v563 = vunpack.c.l.b16 %v448
        %v564 = vunpack.c.l.b16 %v449
        %v565 = vunpack.c.h.b16 %v449
        %v566 = vunpack.c.l.b16 %v450
        %v567 = vunpack.c.l.b16 %v451
        %v568 = vunpack.c.h.b16 %v451
        %v569 = vunpack.c.l.b16 %v452
        %v570 = vunpack.c.l.b16 %v453
        %v571 = vunpack.c.h.b16 %v453
        %v572 = vunpack.c.l.b16 %v454
        %v573 = vunpack.c.l.b16 %v455
        %v574 = vunpack.c.h.b16 %v455
        %v575 = vunpack.c.l.b16 %v456
        %v576 = vunpack.c.l.b16 %v457
        %v577 = vunpack.c.h.b16 %v457
        %v578 = vunpack.c.l.b16 %v458
        %v579 = vunpack.c.l.b16 %v459
        %v580 = vunpack.c.h.b16 %v459
        %v581 = vunpack.c.l.b16 %v460
        %v582 = vunpack.c.l.b16 %v461
        %v583 = vunpack.c.h.b16 %v461
        %v584 = vunpack.c.l.b16 %v462
        %v585 = vunpack.c.l.b16 %v463
        %v586 = vunpack.c.h.b16 %v463
        %v587 = vunpack.c.l.b16 %v464
        %v588 = vunpack.c.l.b16 %v465
        %v589 = vunpack.c.h.b16 %v465
        %v590 = vunpack.c.l.b16 %v466
        %v591 = vunpack.c.l.b16 %v467
        %v592 = vunpack.c.h.b16 %v467
        %v593 = vunpack.c.l.b16 %v468
        %v594 = vunpack.c.l.b16 %v469
        %v595 = vunpack.c.h.b16 %v469
        %v596 = vunpack.c.l.b16 %v470
        %v597 = vunpack.c.l.b16 %v471
        %v598 = vunpack.c.h.b16 %v471
        %v599 = vunpack.c.l.b16 %v472
        %v600 = vunpack.c.l.b16 %v473
        %v601 = vunpack.c.h.b16 %v473
        %v602 = vunpack.c.l.b16 %v474
        %v603 = vpack.c.b16 %v558, %v555
        %v604 = vpack.c.b16 %v559, %v556
        %v605 = vpack.c.b16 %v560, %v557
        %v606 = vpack.c.b16 %v564, %v561
        %v607 = vpack.c.b16 %v565, %v562
        %v608 = vpack.c.b16 %v566, %v563
        %v609 = vpack.c.b16 %v570, %v567
        %v610 = vpack.c.b16 %v571, %v568
        %v611 = vpack.c.b16 %v572, %v569
        %v612 = vpack.c.b16 %v576, %v573
        %v613 = vpack.c.b16 %v577, %v574
        %v614 = vpack.c.b16 %v578, %v575
        %v615 = vpack.c.b16 %v582, %v579
        %v616 = vpack.c.b16 %v583, %v580
        %v617 = vpack.c.b16 %v584, %v581
        %v618 = vpack.c.b16 %v588, %v585
        %v619 = vpack.c.b16 %v589, %v586
        %v620 = vpack.c.b16 %v590, %v587
        %v621 = vpack.c.b16 %v594, %v591
        %v622 = vpack.c.b16 %v595, %v592
        %v623 = vpack.c.b16 %v596, %v593
        %v624 = vpack.c.b16 %v600, %v597
        %v625 = vpack.c.b16 %v601, %v598
        %v626 = vpack.c.b16 %v602, %v599
        %v699 = vunpack.c.l.b16 %v475
        %v700 = vunpack.c.h.b16 %v475
        %v701 = vunpack.c.l.b16 %v476
        %v702 = vunpack.c.h.b16 %v476
        %v703 = vunpack.c.l.b16 %v477
        %v704 = vunpack.c.h.b16 %v477
        %v705 = vunpack.c.l.b16 %v478
        %v706 = vunpack.c.h.b16 %v478
        %v707 = vunpack.c.l.b16 %v479
        %v708 = vunpack.c.h.b16 %v479
        %v709 = vunpack.c.l.b16 %v480
        %v710 = vunpack.c.h.b16 %v480
        %v711 = vunpack.c.l.b16 %v481
        %v712 = vunpack.c.h.b16 %v481
        %v713 = vunpack.c.l.b16 %v482
        %v714 = vunpack.c.h.b16 %v482
        %v715 = vunpack.c.l.b16 %v483
        %v716 = vunpack.c.h.b16 %v483
        %v717 = vunpack.c.l.b16 %v484
        %v718 = vunpack.c.h.b16 %v484
        %v719 = vunpack.c.l.b16 %v485
        %v720 = vunpack.c.h.b16 %v485
        %v721 = vunpack.c.l.b16 %v486
        %v722 = vunpack.c.h.b16 %v486
        %v723 = vunpack.c.l.b16 %v487
        %v724 = vunpack.c.h.b16 %v487
        %v725 = vunpack.c.l.b16 %v488
        %v726 = vunpack.c.h.b16 %v488
        %v727 = vunpack.c.l.b16 %v489
        %v728 = vunpack.c.h.b16 %v489
        %v729 = vunpack.c.l.b16 %v490
        %v730 = vunpack.c.h.b16 %v490
        %v731 = vunpack.c.l.b16 %v491
        %v732 = vunpack.c.h.b16 %v491
        %v733 = vunpack.c.l.b16 %v492
        %v734 = vunpack.c.h.b16 %v492
        %v735 = vunpack.c.l.b16 %v493
        %v736 = vunpack.c.h.b16 %v493
        %v737 = vunpack.c.l.b16 %v494
        %v738 = vunpack.c.h.b16 %v494
        %v739 = vunpack.c.l.b16 %v495
        %v740 = vunpack.c.h.b16 %v495
        %v741 = vunpack.c.l.b16 %v496
        %v742 = vunpack.c.h.b16 %v496
        %v743 = vunpack.c.l.b16 %v497
        %v744 = vunpack.c.h.b16 %v497
        %v745 = vunpack.c.l.b16 %v498
        %v746 = vunpack.c.h.b16 %v498
        %v747 = vunpack.c.l.b16 %v499
        %v748 = vunpack.c.h.b16 %v499
        %v749 = vunpack.c.l.b16 %v500
        %v750 = vunpack.c.h.b16 %v500
        %v751 = vunpack.c.l.b16 %v501
        %v752 = vunpack.c.h.b16 %v501
        %v753 = vunpack.c.l.b16 %v502
        %v754 = vunpack.c.h.b16 %v502
        %v755 = vunpack.c.l.b16 %v503
        %v756 = vunpack.c.h.b16 %v503
        %v757 = vunpack.c.l.b16 %v504
        %v758 = vunpack.c.h.b16 %v504
        %v759 = vunpack.c.l.b16 %v505
        %v760 = vunpack.c.h.b16 %v505
        %v761 = vunpack.c.l.b16 %v506
        %v762 = vunpack.c.h.b16 %v506
        %v763 = vunpack.c.l.b16 %v507
        %v764 = vunpack.c.h.b16 %v507
        %v765 = vunpack.c.l.b16 %v508
        %v766 = vunpack.c.h.b16 %v508
        %v767 = vunpack.c.l.b16 %v509
        %v768 = vunpack.c.h.b16 %v509
        %v769 = vunpack.c.l.b16 %v510
        %v770 = vunpack.c.h.b16 %v510
        %v771 = vunpack.c.l.b16 %v511
        %v772 = vunpack.c.h.b16 %v511
        %v773 = vunpack.c.l.b16 %v512
        %v774 = vunpack.c.h.b16 %v512
        %v775 = vunpack.c.l.b16 %v513
        %v776 = vunpack.c.h.b16 %v513
        %v777 = vunpack.c.l.b16 %v514
        %v778 = vunpack.c.h.b16 %v514
        %v779 = vunpack.c.l.b16 %v515
        %v780 = vunpack.c.h.b16 %v515
        %v781 = vunpack.c.l.b16 %v516
        %v782 = vunpack.c.h.b16 %v516
        %v783 = vunpack.c.l.b16 %v517
        %v784 = vunpack.c.h.b16 %v517
        %v785 = vunpack.c.l.b16 %v518
        %v786 = vunpack.c.h.b16 %v518
        %v787 = vunpack.c.l.b16 %v519
        %v788 = vunpack.c.h.b16 %v519
        %v789 = vunpack.c.l.b16 %v520
        %v790 = vunpack.c.h.b16 %v520
        %v791 = vunpack.c.l.b16 %v521
        %v792 = vunpack.c.h.b16 %v521
        %v793 = vunpack.c.l.b16 %v522
        %v794 = vunpack.c.h.b16 %v522
        %v795 = vpack.c.b16 %v701, %v699
        %v796 = vpack.c.b16 %v702, %v700
        %v797 = vpack.c.b16 %v705, %v703
        %v798 = vpack.c.b16 %v706, %v704
        %v799 = vpack.c.b16 %v709, %v707
        %v800 = vpack.c.b16 %v710, %v708
        %v801 = vpack.c.b16 %v713, %v711
        %v802 = vpack.c.b16 %v714, %v712
        %v803 = vpack.c.b16 %v717, %v715
        %v804 = vpack.c.b16 %v718, %v716
        %v805 = vpack.c.b16 %v721, %v719
        %v806 = vpack.c.b16 %v722, %v720
        %v807 = vpack.c.b16 %v725, %v723
        %v808 = vpack.c.b16 %v726, %v724
        %v809 = vpack.c.b16 %v729, %v727
        %v810 = vpack.c.b16 %v730, %v728
        %v811 = vpack.c.b16 %v733, %v731
        %v812 = vpack.c.b16 %v734, %v732
        %v813 = vpack.c.b16 %v737, %v735
        %v814 = vpack.c.b16 %v738, %v736
        %v815 = vpack.c.b16 %v741, %v739
        %v816 = vpack.c.b16 %v742, %v740
        %v817 = vpack.c.b16 %v745, %v743
        %v818 = vpack.c.b16 %v746, %v744
        %v819 = vpack.c.b16 %v749, %v747
        %v820 = vpack.c.b16 %v750, %v748
        %v821 = vpack.c.b16 %v753, %v751
        %v822 = vpack.c.b16 %v754, %v752
        %v823 = vpack.c.b16 %v757, %v755
        %v824 = vpack.c.b16 %v758, %v756
        %v825 = vpack.c.b16 %v761, %v759
        %v826 = vpack.c.b16 %v762, %v760
        %v827 = vpack.c.b16 %v765, %v763
        %v828 = vpack.c.b16 %v766, %v764
        %v829 = vpack.c.b16 %v769, %v767
        %v830 = vpack.c.b16 %v770, %v768
        %v831 = vpack.c.b16 %v773, %v771
        %v832 = vpack.c.b16 %v774, %v772
        %v833 = vpack.c.b16 %v777, %v775
        %v834 = vpack.c.b16 %v778, %v776
        %v835 = vpack.c.b16 %v781, %v779
        %v836 = vpack.c.b16 %v782, %v780
        %v837 = vpack.c.b16 %v785, %v783
        %v838 = vpack.c.b16 %v786, %v784
        %v839 = vpack.c.b16 %v789, %v787
        %v840 = vpack.c.b16 %v790, %v788
        %v841 = vpack.c.b16 %v793, %v791
        %v842 = vpack.c.b16 %v794, %v792
        %891 = vmatpush.bf16.msra.mxu0 %v809
        %892 = vmatpush.bf16.msra.mxu0 %v807
        %893 = vmatpush.bf16.msra.mxu0 %v805
        %894 = vmatpush.bf16.msra.mxu0 %v803
        %895 = vmatpush.bf16.msra.mxu0 %v801
        %896 = vmatpush.bf16.msra.mxu0 %v799
        %897 = vmatpush.bf16.msra.mxu0 %v797
        %898 = vmatpush.bf16.msra.mxu0 %v795
        %899 = vmatmul.bf16.gmra.mxu0 %v603
        %v900 = vpop.f32.mrf.mxu0
        %v901 = vadd.f32 0.0, %v900
        %v902 = vpop.f32.mrf.mxu0
        %v903 = vadd.f32 0.0, %v902
        %904 = vmatmul.bf16.gmra.mxu0 %v606
        %v905 = vpop.f32.mrf.mxu0
        %v906 = vadd.f32 0.0, %v905
        %v907 = vpop.f32.mrf.mxu0
        %v908 = vadd.f32 0.0, %v907
        %909 = vmatmul.bf16.gmra.mxu0 %v609
        %v910 = vpop.f32.mrf.mxu0
        %v911 = vadd.f32 0.0, %v910
        %v912 = vpop.f32.mrf.mxu0
        %v913 = vadd.f32 0.0, %v912
        %914 = vmatmul.bf16.gmra.mxu0 %v612
        %v915 = vpop.f32.mrf.mxu0
        %v916 = vadd.f32 0.0, %v915
        %v917 = vpop.f32.mrf.mxu0
        %v918 = vadd.f32 0.0, %v917
        %919 = vmatmul.bf16.gmra.mxu0 %v615
        %v920 = vpop.f32.mrf.mxu0
        %v921 = vadd.f32 0.0, %v920
        %v922 = vpop.f32.mrf.mxu0
        %v923 = vadd.f32 0.0, %v922
        %924 = vmatmul.bf16.gmra.mxu0 %v618
        %v925 = vpop.f32.mrf.mxu0
        %v926 = vadd.f32 0.0, %v925
        %v927 = vpop.f32.mrf.mxu0
        %v928 = vadd.f32 0.0, %v927
        %929 = vmatmul.bf16.gmra.mxu0 %v621
        %v930 = vpop.f32.mrf.mxu0
        %v931 = vadd.f32 0.0, %v930
        %v932 = vpop.f32.mrf.mxu0
        %v933 = vadd.f32 0.0, %v932
        %934 = vmatmul.bf16.gmra.mxu0 %v624
        %v935 = vpop.f32.mrf.mxu0
        %v936 = vadd.f32 0.0, %v935
        %v937 = vpop.f32.mrf.mxu0
        %v938 = vadd.f32 0.0, %v937
        %939 = vdwg.mxu0
        %940 = vmatpush.bf16.msra.mxu0 %v825
        %941 = vmatpush.bf16.msra.mxu0 %v823
        %942 = vmatpush.bf16.msra.mxu0 %v821
        %943 = vmatpush.bf16.msra.mxu0 %v819
        %944 = vmatpush.bf16.msra.mxu0 %v817
        %945 = vmatpush.bf16.msra.mxu0 %v815
        %946 = vmatpush.bf16.msra.mxu0 %v813
        %947 = vmatpush.bf16.msra.mxu0 %v811
        %948 = vmatmul.bf16.gmra.mxu0 %v604
        %v949 = vpop.f32.mrf.mxu0
        %v950 = vadd.f32 %v901, %v949
        %v951 = vpop.f32.mrf.mxu0
        %v952 = vadd.f32 %v903, %v951
        %953 = vmatmul.bf16.gmra.mxu0 %v607
        %v954 = vpop.f32.mrf.mxu0
        %v955 = vadd.f32 %v906, %v954
        %v956 = vpop.f32.mrf.mxu0
        %v957 = vadd.f32 %v908, %v956
        %958 = vmatmul.bf16.gmra.mxu0 %v610
        %v959 = vpop.f32.mrf.mxu0
        %v960 = vadd.f32 %v911, %v959
        %v961 = vpop.f32.mrf.mxu0
        %v962 = vadd.f32 %v913, %v961
        %963 = vmatmul.bf16.gmra.mxu0 %v613
        %v964 = vpop.f32.mrf.mxu0
        %v965 = vadd.f32 %v916, %v964
        %v966 = vpop.f32.mrf.mxu0
        %v967 = vadd.f32 %v918, %v966
        %968 = vmatmul.bf16.gmra.mxu0 %v616
        %v969 = vpop.f32.mrf.mxu0
        %v970 = vadd.f32 %v921, %v969
        %v971 = vpop.f32.mrf.mxu0
        %v972 = vadd.f32 %v923, %v971
        %973 = vmatmul.bf16.gmra.mxu0 %v619
        %v974 = vpop.f32.mrf.mxu0
        %v975 = vadd.f32 %v926, %v974
        %v976 = vpop.f32.mrf.mxu0
        %v977 = vadd.f32 %v928, %v976
        %978 = vmatmul.bf16.gmra.mxu0 %v622
        %v979 = vpop.f32.mrf.mxu0
        %v980 = vadd.f32 %v931, %v979
        %v981 = vpop.f32.mrf.mxu0
        %v982 = vadd.f32 %v933, %v981
        %983 = vmatmul.bf16.gmra.mxu0 %v625
        %v984 = vpop.f32.mrf.mxu0
        %v985 = vadd.f32 %v936, %v984
        %v986 = vpop.f32.mrf.mxu0
        %v987 = vadd.f32 %v938, %v986
        %988 = vdwg.mxu0
        %989 = vmatpush.bf16.msra.mxu0 %v841
        %990 = vmatpush.bf16.msra.mxu0 %v839
        %991 = vmatpush.bf16.msra.mxu0 %v837
        %992 = vmatpush.bf16.msra.mxu0 %v835
        %993 = vmatpush.bf16.msra.mxu0 %v833
        %994 = vmatpush.bf16.msra.mxu0 %v831
        %995 = vmatpush.bf16.msra.mxu0 %v829
        %996 = vmatpush.bf16.msra.mxu0 %v827
        %997 = vmatmul.bf16.gmra.mxu0 %v605
        %v998 = vpop.f32.mrf.mxu0
        %v999 = vadd.f32 %v950, %v998
        %v1000 = vpop.f32.mrf.mxu0
        %v1001 = vadd.f32 %v952, %v1000
        %1002 = vmatmul.bf16.gmra.mxu0 %v608
        %v1003 = vpop.f32.mrf.mxu0
        %v1004 = vadd.f32 %v955, %v1003
        %v1005 = vpop.f32.mrf.mxu0
        %v1006 = vadd.f32 %v957, %v1005
        %1007 = vmatmul.bf16.gmra.mxu0 %v611
        %v1008 = vpop.f32.mrf.mxu0
        %v1009 = vadd.f32 %v960, %v1008
        %v1010 = vpop.f32.mrf.mxu0
        %v1011 = vadd.f32 %v962, %v1010
        %1012 = vmatmul.bf16.gmra.mxu0 %v614
        %v1013 = vpop.f32.mrf.mxu0
        %v1014 = vadd.f32 %v965, %v1013
        %v1015 = vpop.f32.mrf.mxu0
        %v1016 = vadd.f32 %v967, %v1015
        %1017 = vmatmul.bf16.gmra.mxu0 %v617
        %v1018 = vpop.f32.mrf.mxu0
        %v1019 = vadd.f32 %v970, %v1018
        %v1020 = vpop.f32.mrf.mxu0
        %v1021 = vadd.f32 %v972, %v1020
        %1022 = vmatmul.bf16.gmra.mxu0 %v620
        %v1023 = vpop.f32.mrf.mxu0
        %v1024 = vadd.f32 %v975, %v1023
        %v1025 = vpop.f32.mrf.mxu0
        %v1026 = vadd.f32 %v977, %v1025
        %1027 = vmatmul.bf16.gmra.mxu0 %v623
        %v1028 = vpop.f32.mrf.mxu0
        %v1029 = vadd.f32 %v980, %v1028
        %v1030 = vpop.f32.mrf.mxu0
        %v1031 = vadd.f32 %v982, %v1030
        %1032 = vmatmul.bf16.gmra.mxu0 %v626
        %v1033 = vpop.f32.mrf.mxu0
        %v1034 = vadd.f32 %v985, %v1033
        %v1035 = vpop.f32.mrf.mxu0
        %v1036 = vadd.f32 %v987, %v1035
        %1037 = vdwg.mxu0
        %1038 = vmatpush.bf16.msra.mxu0 %v810
        %1039 = vmatpush.bf16.msra.mxu0 %v808
        %1040 = vmatpush.bf16.msra.mxu0 %v806
        %1041 = vmatpush.bf16.msra.mxu0 %v804
        %1042 = vmatpush.bf16.msra.mxu0 %v802
        %1043 = vmatpush.bf16.msra.mxu0 %v800
        %1044 = vmatpush.bf16.msra.mxu0 %v798
        %1045 = vmatpush.bf16.msra.mxu0 %v796
        %1046 = vmatmul.bf16.gmra.mxu0 %v603
        %v1047 = vpop.f32.mrf.mxu0
        %v1048 = vadd.f32 0.0, %v1047
        %v1049 = vpop.f32.mrf.mxu0
        %v1050 = vadd.f32 0.0, %v1049
        %1051 = vmatmul.bf16.gmra.mxu0 %v606
        %v1052 = vpop.f32.mrf.mxu0
        %v1053 = vadd.f32 0.0, %v1052
        %v1054 = vpop.f32.mrf.mxu0
        %v1055 = vadd.f32 0.0, %v1054
        %1056 = vmatmul.bf16.gmra.mxu0 %v609
        %v1057 = vpop.f32.mrf.mxu0
        %v1058 = vadd.f32 0.0, %v1057
        %v1059 = vpop.f32.mrf.mxu0
        %v1060 = vadd.f32 0.0, %v1059
        %1061 = vmatmul.bf16.gmra.mxu0 %v612
        %v1062 = vpop.f32.mrf.mxu0
        %v1063 = vadd.f32 0.0, %v1062
        %v1064 = vpop.f32.mrf.mxu0
        %v1065 = vadd.f32 0.0, %v1064
        %1066 = vmatmul.bf16.gmra.mxu0 %v615
        %v1067 = vpop.f32.mrf.mxu0
        %v1068 = vadd.f32 0.0, %v1067
        %v1069 = vpop.f32.mrf.mxu0
        %v1070 = vadd.f32 0.0, %v1069
        %1071 = vmatmul.bf16.gmra.mxu0 %v618
        %v1072 = vpop.f32.mrf.mxu0
        %v1073 = vadd.f32 0.0, %v1072
        %v1074 = vpop.f32.mrf.mxu0
        %v1075 = vadd.f32 0.0, %v1074
        %1076 = vmatmul.bf16.gmra.mxu0 %v621
        %v1077 = vpop.f32.mrf.mxu0
        %v1078 = vadd.f32 0.0, %v1077
        %v1079 = vpop.f32.mrf.mxu0
        %v1080 = vadd.f32 0.0, %v1079
        %1081 = vmatmul.bf16.gmra.mxu0 %v624
        %v1082 = vpop.f32.mrf.mxu0
        %v1083 = vadd.f32 0.0, %v1082
        %v1084 = vpop.f32.mrf.mxu0
        %v1085 = vadd.f32 0.0, %v1084
        %1086 = vdwg.mxu0
        %1087 = vmatpush.bf16.msra.mxu0 %v826
        %1088 = vmatpush.bf16.msra.mxu0 %v824
        %1089 = vmatpush.bf16.msra.mxu0 %v822
        %1090 = vmatpush.bf16.msra.mxu0 %v820
        %1091 = vmatpush.bf16.msra.mxu0 %v818
        %1092 = vmatpush.bf16.msra.mxu0 %v816
        %1093 = vmatpush.bf16.msra.mxu0 %v814
        %1094 = vmatpush.bf16.msra.mxu0 %v812
        %1095 = vmatmul.bf16.gmra.mxu0 %v604
        %v1096 = vpop.f32.mrf.mxu0
        %v1097 = vadd.f32 %v1048, %v1096
        %v1098 = vpop.f32.mrf.mxu0
        %v1099 = vadd.f32 %v1050, %v1098
        %1100 = vmatmul.bf16.gmra.mxu0 %v607
        %v1101 = vpop.f32.mrf.mxu0
        %v1102 = vadd.f32 %v1053, %v1101
        %v1103 = vpop.f32.mrf.mxu0
        %v1104 = vadd.f32 %v1055, %v1103
        %1105 = vmatmul.bf16.gmra.mxu0 %v610
        %v1106 = vpop.f32.mrf.mxu0
        %v1107 = vadd.f32 %v1058, %v1106
        %v1108 = vpop.f32.mrf.mxu0
        %v1109 = vadd.f32 %v1060, %v1108
        %1110 = vmatmul.bf16.gmra.mxu0 %v613
        %v1111 = vpop.f32.mrf.mxu0
        %v1112 = vadd.f32 %v1063, %v1111
        %v1113 = vpop.f32.mrf.mxu0
        %v1114 = vadd.f32 %v1065, %v1113
        %1115 = vmatmul.bf16.gmra.mxu0 %v616
        %v1116 = vpop.f32.mrf.mxu0
        %v1117 = vadd.f32 %v1068, %v1116
        %v1118 = vpop.f32.mrf.mxu0
        %v1119 = vadd.f32 %v1070, %v1118
        %1120 = vmatmul.bf16.gmra.mxu0 %v619
        %v1121 = vpop.f32.mrf.mxu0
        %v1122 = vadd.f32 %v1073, %v1121
        %v1123 = vpop.f32.mrf.mxu0
        %v1124 = vadd.f32 %v1075, %v1123
        %1125 = vmatmul.bf16.gmra.mxu0 %v622
        %v1126 = vpop.f32.mrf.mxu0
        %v1127 = vadd.f32 %v1078, %v1126
        %v1128 = vpop.f32.mrf.mxu0
        %v1129 = vadd.f32 %v1080, %v1128
        %1130 = vmatmul.bf16.gmra.mxu0 %v625
        %v1131 = vpop.f32.mrf.mxu0
        %v1132 = vadd.f32 %v1083, %v1131
        %v1133 = vpop.f32.mrf.mxu0
        %v1134 = vadd.f32 %v1085, %v1133
        %1135 = vdwg.mxu0
        %1136 = vmatpush.bf16.msra.mxu0 %v842
        %1137 = vmatpush.bf16.msra.mxu0 %v840
        %1138 = vmatpush.bf16.msra.mxu0 %v838
        %1139 = vmatpush.bf16.msra.mxu0 %v836
        %1140 = vmatpush.bf16.msra.mxu0 %v834
        %1141 = vmatpush.bf16.msra.mxu0 %v832
        %1142 = vmatpush.bf16.msra.mxu0 %v830
        %1143 = vmatpush.bf16.msra.mxu0 %v828
        %1144 = vmatmul.bf16.gmra.mxu0 %v605
        %v1145 = vpop.f32.mrf.mxu0
        %v1146 = vadd.f32 %v1097, %v1145
        %v1147 = vpop.f32.mrf.mxu0
        %v1148 = vadd.f32 %v1099, %v1147
        %1149 = vmatmul.bf16.gmra.mxu0 %v608
        %v1150 = vpop.f32.mrf.mxu0
        %v1151 = vadd.f32 %v1102, %v1150
        %v1152 = vpop.f32.mrf.mxu0
        %v1153 = vadd.f32 %v1104, %v1152
        %1154 = vmatmul.bf16.gmra.mxu0 %v611
        %v1155 = vpop.f32.mrf.mxu0
        %v1156 = vadd.f32 %v1107, %v1155
        %v1157 = vpop.f32.mrf.mxu0
        %v1158 = vadd.f32 %v1109, %v1157
        %1159 = vmatmul.bf16.gmra.mxu0 %v614
        %v1160 = vpop.f32.mrf.mxu0
        %v1161 = vadd.f32 %v1112, %v1160
        %v1162 = vpop.f32.mrf.mxu0
        %v1163 = vadd.f32 %v1114, %v1162
        %1164 = vmatmul.bf16.gmra.mxu0 %v617
        %v1165 = vpop.f32.mrf.mxu0
        %v1166 = vadd.f32 %v1117, %v1165
        %v1167 = vpop.f32.mrf.mxu0
        %v1168 = vadd.f32 %v1119, %v1167
        %1169 = vmatmul.bf16.gmra.mxu0 %v620
        %v1170 = vpop.f32.mrf.mxu0
        %v1171 = vadd.f32 %v1122, %v1170
        %v1172 = vpop.f32.mrf.mxu0
        %v1173 = vadd.f32 %v1124, %v1172
        %1174 = vmatmul.bf16.gmra.mxu0 %v623
        %v1175 = vpop.f32.mrf.mxu0
        %v1176 = vadd.f32 %v1127, %v1175
        %v1177 = vpop.f32.mrf.mxu0
        %v1178 = vadd.f32 %v1129, %v1177
        %1179 = vmatmul.bf16.gmra.mxu0 %v626
        %v1180 = vpop.f32.mrf.mxu0
        %v1181 = vadd.f32 %v1132, %v1180
        %v1182 = vpop.f32.mrf.mxu0
        %v1183 = vadd.f32 %v1134, %v1182
        %1184 = vdwg.mxu0
        %v1185 = vadd.f32 %v411, %v999
        %v1186 = vadd.f32 %v412, %v1146
        %v1187 = vadd.f32 %v413, %v1001
        %v1188 = vadd.f32 %v414, %v1148
        %v1189 = vadd.f32 %v415, %v1004
        %v1190 = vadd.f32 %v416, %v1151
        %v1191 = vadd.f32 %v417, %v1006
        %v1192 = vadd.f32 %v418, %v1153
        %v1193 = vadd.f32 %v419, %v1009
        %v1194 = vadd.f32 %v420, %v1156
        %v1195 = vadd.f32 %v421, %v1011
        %v1196 = vadd.f32 %v422, %v1158
        %v1197 = vadd.f32 %v423, %v1014
        %v1198 = vadd.f32 %v424, %v1161
        %v1199 = vadd.f32 %v425, %v1016
        %v1200 = vadd.f32 %v426, %v1163
        %v1201 = vadd.f32 %v427, %v1019
        %v1202 = vadd.f32 %v428, %v1166
        %v1203 = vadd.f32 %v429, %v1021
        %v1204 = vadd.f32 %v430, %v1168
        %v1205 = vadd.f32 %v431, %v1024
        %v1206 = vadd.f32 %v432, %v1171
        %v1207 = vadd.f32 %v433, %v1026
        %v1208 = vadd.f32 %v434, %v1173
        %v1209 = vadd.f32 %v435, %v1029
        %v1210 = vadd.f32 %v436, %v1176
        %v1211 = vadd.f32 %v437, %v1031
        %v1212 = vadd.f32 %v438, %v1178
        %v1213 = vadd.f32 %v439, %v1034
        %v1214 = vadd.f32 %v440, %v1181
        %v1215 = vadd.f32 %v441, %v1036
        %v1216 = vadd.f32 %v442, %v1183
        %1217 = vst [vmem:[#allocation2] sm:$0xff] %v1185
        %1218 = vst [vmem:[#allocation2 + $0x8] sm:$0xff] %v1186
        %1219 = vst [vmem:[#allocation2 + $0x10] sm:$0xff] %v1187
        %1220 = vst [vmem:[#allocation2 + $0x18] sm:$0xff] %v1188
        %1221 = vst [vmem:[#allocation2 + $0x20] sm:$0xff] %v1189
        %1222 = vst [vmem:[#allocation2 + $0x28] sm:$0xff] %v1190
        %1223 = vst [vmem:[#allocation2 + $0x30] sm:$0xff] %v1191
        %1224 = vst [vmem:[#allocation2 + $0x38] sm:$0xff] %v1192
        %1225 = vst [vmem:[#allocation2 + $0x40] sm:$0xff] %v1193
        %1226 = vst [vmem:[#allocation2 + $0x48] sm:$0xff] %v1194
        %1227 = vst [vmem:[#allocation2 + $0x50] sm:$0xff] %v1195
        %1228 = vst [vmem:[#allocation2 + $0x58] sm:$0xff] %v1196
        %1229 = vst [vmem:[#allocation2 + $0x60] sm:$0xff] %v1197
        %1230 = vst [vmem:[#allocation2 + $0x68] sm:$0xff] %v1198
        %1231 = vst [vmem:[#allocation2 + $0x70] sm:$0xff] %v1199
        %1232 = vst [vmem:[#allocation2 + $0x78] sm:$0xff] %v1200
        %1233 = vst [vmem:[#allocation2 + $0x80] sm:$0xff] %v1201
        %1234 = vst [vmem:[#allocation2 + $0x88] sm:$0xff] %v1202
        %1235 = vst [vmem:[#allocation2 + $0x90] sm:$0xff] %v1203
        %1236 = vst [vmem:[#allocation2 + $0x98] sm:$0xff] %v1204
        %1237 = vst [vmem:[#allocation2 + $0xa0] sm:$0xff] %v1205
        %1238 = vst [vmem:[#allocation2 + $0xa8] sm:$0xff] %v1206
        %1239 = vst [vmem:[#allocation2 + $0xb0] sm:$0xff] %v1207
        %1240 = vst [vmem:[#allocation2 + $0xb8] sm:$0xff] %v1208
        %1241 = vst [vmem:[#allocation2 + $0xc0] sm:$0xff] %v1209
        %1242 = vst [vmem:[#allocation2 + $0xc8] sm:$0xff] %v1210
        %1243 = vst [vmem:[#allocation2 + $0xd0] sm:$0xff] %v1211
        %1244 = vst [vmem:[#allocation2 + $0xd8] sm:$0xff] %v1212
        %1245 = vst [vmem:[#allocation2 + $0xe0] sm:$0xff] %v1213
        %1246 = vst [vmem:[#allocation2 + $0xe8] sm:$0xff] %v1214
        %1247 = vst [vmem:[#allocation2 + $0xf0] sm:$0xff] %v1215
        %1248 = vst [vmem:[#allocation2 + $0xf8] sm:$0xff] %v1216
        %p1249 = scmp.eq.s32.totalorder %s25, 2
        // Predicated region
        $region71: #{snn_vgg9_forward.88} parent=53 // pred_check
          %p1250 = pneg %p1249
        $region72: #{snn_vgg9_forward.88} parent=53 // pred_check_branch
          %1252 = sbr.rel (%p1250) target = $region74
        $region73: #{snn_vgg9_forward.88} parent=53 // pred_region
          %v1253 = vld [vmem:[#allocation2] sm:$0xff]
          %v1254 = vld [vmem:[#allocation2 + $0x8] sm:$0xff]
          %v1255 = vld [vmem:[#allocation2 + $0x10] sm:$0xff]
          %v1256 = vld [vmem:[#allocation2 + $0x18] sm:$0xff]
          %v1257 = vld [vmem:[#allocation2 + $0x20] sm:$0xff]
          %v1258 = vld [vmem:[#allocation2 + $0x28] sm:$0xff]
          %v1259 = vld [vmem:[#allocation2 + $0x30] sm:$0xff]
          %v1260 = vld [vmem:[#allocation2 + $0x38] sm:$0xff]
          %v1261 = vld [vmem:[#allocation2 + $0x40] sm:$0xff]
          %v1262 = vld [vmem:[#allocation2 + $0x48] sm:$0xff]
          %v1263 = vld [vmem:[#allocation2 + $0x50] sm:$0xff]
          %v1264 = vld [vmem:[#allocation2 + $0x58] sm:$0xff]
          %v1265 = vld [vmem:[#allocation2 + $0x60] sm:$0xff]
          %v1266 = vld [vmem:[#allocation2 + $0x68] sm:$0xff]
          %v1267 = vld [vmem:[#allocation2 + $0x70] sm:$0xff]
          %v1268 = vld [vmem:[#allocation2 + $0x78] sm:$0xff]
          %v1269 = vld [vmem:[#allocation2 + $0x80] sm:$0xff]
          %v1270 = vld [vmem:[#allocation2 + $0x88] sm:$0xff]
          %v1271 = vld [vmem:[#allocation2 + $0x90] sm:$0xff]
          %v1272 = vld [vmem:[#allocation2 + $0x98] sm:$0xff]
          %v1273 = vld [vmem:[#allocation2 + $0xa0] sm:$0xff]
          %v1274 = vld [vmem:[#allocation2 + $0xa8] sm:$0xff]
          %v1275 = vld [vmem:[#allocation2 + $0xb0] sm:$0xff]
          %v1276 = vld [vmem:[#allocation2 + $0xb8] sm:$0xff]
          %v1277 = vld [vmem:[#allocation2 + $0xc0] sm:$0xff]
          %v1278 = vld [vmem:[#allocation2 + $0xc8] sm:$0xff]
          %v1279 = vld [vmem:[#allocation2 + $0xd0] sm:$0xff]
          %v1280 = vld [vmem:[#allocation2 + $0xd8] sm:$0xff]
          %v1281 = vld [vmem:[#allocation2 + $0xe0] sm:$0xff]
          %v1282 = vld [vmem:[#allocation2 + $0xe8] sm:$0xff]
          %v1283 = vld [vmem:[#allocation2 + $0xf0] sm:$0xff]
          %v1284 = vld [vmem:[#allocation2 + $0xf8] sm:$0xff]
          %v1285 = vld [vmem:[#allocation6] sm:$0x3]
          %v1287 = vperm.slane %v1285, 0
          %v1288 = vperm.slane %v1285, 1
          %v1291 = vadd.f32 %v1253, %v1287
          %v1292 = vadd.f32 %v1254, %v1288
          %v1293 = vadd.f32 %v1255, %v1287
          %v1294 = vadd.f32 %v1256, %v1288
          %v1295 = vadd.f32 %v1257, %v1287
          %v1296 = vadd.f32 %v1258, %v1288
          %v1297 = vadd.f32 %v1259, %v1287
          %v1298 = vadd.f32 %v1260, %v1288
          %v1299 = vadd.f32 %v1261, %v1287
          %v1300 = vadd.f32 %v1262, %v1288
          %v1301 = vadd.f32 %v1263, %v1287
          %v1302 = vadd.f32 %v1264, %v1288
          %v1303 = vadd.f32 %v1265, %v1287
          %v1304 = vadd.f32 %v1266, %v1288
          %v1305 = vadd.f32 %v1267, %v1287
          %v1306 = vadd.f32 %v1268, %v1288
          %v1307 = vadd.f32 %v1269, %v1287
          %v1308 = vadd.f32 %v1270, %v1288
          %v1309 = vadd.f32 %v1271, %v1287
          %v1310 = vadd.f32 %v1272, %v1288
          %v1311 = vadd.f32 %v1273, %v1287
          %v1312 = vadd.f32 %v1274, %v1288
          %v1313 = vadd.f32 %v1275, %v1287
          %v1314 = vadd.f32 %v1276, %v1288
          %v1315 = vadd.f32 %v1277, %v1287
          %v1316 = vadd.f32 %v1278, %v1288
          %v1317 = vadd.f32 %v1279, %v1287
          %v1318 = vadd.f32 %v1280, %v1288
          %v1319 = vadd.f32 %v1281, %v1287
          %v1320 = vadd.f32 %v1282, %v1288
          %v1321 = vadd.f32 %v1283, %v1287
          %v1322 = vadd.f32 %v1284, %v1288
          %1323 = vst [vmem:[%s372] sm:$0xff] %v1291
          %1324 = vst [vmem:[%s372 + $0x8] sm:$0xff] %v1292
          %1325 = vst [vmem:[%s372 + $0x10] sm:$0xff] %v1293
          %1326 = vst [vmem:[%s372 + $0x18] sm:$0xff] %v1294
          %1327 = vst [vmem:[%s372 + $0x20] sm:$0xff] %v1295
          %1328 = vst [vmem:[%s372 + $0x28] sm:$0xff] %v1296
          %1329 = vst [vmem:[%s372 + $0x30] sm:$0xff] %v1297
          %1330 = vst [vmem:[%s372 + $0x38] sm:$0xff] %v1298
          %1331 = vst [vmem:[%s372 + $0x40] sm:$0xff] %v1299
          %1332 = vst [vmem:[%s372 + $0x48] sm:$0xff] %v1300
          %1333 = vst [vmem:[%s372 + $0x50] sm:$0xff] %v1301
          %1334 = vst [vmem:[%s372 + $0x58] sm:$0xff] %v1302
          %1335 = vst [vmem:[%s372 + $0x60] sm:$0xff] %v1303
          %1336 = vst [vmem:[%s372 + $0x68] sm:$0xff] %v1304
          %1337 = vst [vmem:[%s372 + $0x70] sm:$0xff] %v1305
          %1338 = vst [vmem:[%s372 + $0x78] sm:$0xff] %v1306
          %1339 = vst [vmem:[%s372 + $0x80] sm:$0xff] %v1307
          %1340 = vst [vmem:[%s372 + $0x88] sm:$0xff] %v1308
          %1341 = vst [vmem:[%s372 + $0x90] sm:$0xff] %v1309
          %1342 = vst [vmem:[%s372 + $0x98] sm:$0xff] %v1310
          %1343 = vst [vmem:[%s372 + $0xa0] sm:$0xff] %v1311
          %1344 = vst [vmem:[%s372 + $0xa8] sm:$0xff] %v1312
          %1345 = vst [vmem:[%s372 + $0xb0] sm:$0xff] %v1313
          %1346 = vst [vmem:[%s372 + $0xb8] sm:$0xff] %v1314
          %1347 = vst [vmem:[%s372 + $0xc0] sm:$0xff] %v1315
          %1348 = vst [vmem:[%s372 + $0xc8] sm:$0xff] %v1316
          %1349 = vst [vmem:[%s372 + $0xd0] sm:$0xff] %v1317
          %1350 = vst [vmem:[%s372 + $0xd8] sm:$0xff] %v1318
          %1351 = vst [vmem:[%s372 + $0xe0] sm:$0xff] %v1319
          %1352 = vst [vmem:[%s372 + $0xe8] sm:$0xff] %v1320
          %1353 = vst [vmem:[%s372 + $0xf0] sm:$0xff] %v1321
          %1354 = vst [vmem:[%s372 + $0xf8] sm:$0xff] %v1322
        $region74: #{snn_vgg9_forward.88} parent=53 // pred_fallthru
          _
        %s1355 = smul.u32 16, %s23
        %s1356 = smul.u32 2, %s24
        %p1357 = scmp.lt.s32.totalorder %s1355, 15
        %s1358 = scalar_select %p1357, %s1355, 15
        %p1359 = scmp.lt.s32.totalorder %s1356, 1
        %s1360 = scalar_select %p1359, %s1356, 1
        %s1361 = smul.addr %s1358, 2
        %s1362 = sadd.s32 %s1360, %s1361
        %s1363 = smul.addr %s1362, 8
        %s1364 = scalar_lea.vmem %s3, %s1363
        // Predicated region
        $region75: #{snn_vgg9_forward.88} parent=53 // pred_check
          %p1365 = pneg %p139
        $region76: #{snn_vgg9_forward.88} parent=53 // pred_check_branch
          %1367 = sbr.rel (%p1365) target = $region78
        $region77: #{snn_vgg9_forward.88} parent=53 // pred_region
          %s1368 = smul.u32 16, %s23
          %s1369 = smul.u32 2, %s24
        $region78: #{snn_vgg9_forward.88} parent=53 // pred_fallthru
          _
        // Predicated region
        $region79: #{snn_vgg9_forward.88} parent=53 // pred_check
          %p1370 = pneg %p139
        $region80: #{snn_vgg9_forward.88} parent=53 // pred_check_branch
          %1372 = sbr.rel (%p1370) target = $region82
        $region81: #{snn_vgg9_forward.88} parent=53 // pred_region
          %s1373 = smul.u32 16, %s23
          %s1374 = smul.u32 2, %s24
          %p1375 = scmp.lt.s32.totalorder %s1373, 15
          %s1376 = scalar_select %p1375, %s1373, 15
          %p1377 = scmp.lt.s32.totalorder %s1374, 1
          %s1378 = scalar_select %p1377, %s1374, 1
          %s1379 = smul.addr %s1376, 2
          %s1380 = sadd.s32 %s1378, %s1379
          %s1381 = smul.addr %s1380, 8
          %s1382 = scalar_lea.vmem %s3, %s1381
        $region82: #{snn_vgg9_forward.88} parent=53 // pred_fallthru
          _
      $region54: #{snn_vgg9_forward.88} parent=5 // pred_fallthru
        _
      %p1383 = scmp.le.s32.totalorder 2, %s13
      // Predicated region
      $region83: #{snn_vgg9_forward.88} parent=5 // pred_check
        %p1384 = pneg %p1383
      $region84: #{snn_vgg9_forward.88} parent=5 // pred_check_branch
        %1386 = sbr.rel (%p1384) target = $region86
      $region85: #{snn_vgg9_forward.88} parent=5 // pred_region
        %s1387 = ssub.s32 %s13, 2
      $region86: #{snn_vgg9_forward.88} parent=5 // pred_fallthru
        _
    $region6: #{snn_vgg9_forward.88} parent=1 // loop_footer
      %s17 = sadd.s32 1, %s13
    $region7: #{snn_vgg9_forward.88} parent=1 // loop_footer_branch
      %12 = sbr.rel target = $region3
    $region8: #{snn_vgg9_forward.88} parent=1 // loop_exit
      _
    %1388 = vsyncpa [#allocation5], 1
    %s1389 = scalar_lea.sflag [#allocation5], 1
    %1390 = vsyncpa %s1389, 1
    %1391 = vsyncpa [#allocation7], 1

// kernel: snn_vgg9_forward.73
$region0: #{snn_vgg9_forward.73}
  #allocation0 [shape = 'u32[]', space=smem, size = 0x4, offset = 0x4, fixed_abs, tag = 'smem constant byte address 0x4 - core index']
  #allocation1 [shape = 'u32[72,128]{1,0:T(1,128)}', space=vmem, size = 0x9000, scoped, tag = 'internal scratch']
  #allocation2 [shape = 'f32[128,128]{1,0:T(8,128)}', space=vmem, size = 0x10000, scoped, tag = 'scratch operand']
  %s0 = inlined_call_operand.vmem [shape: bf16[128,1152], index: 0, kind: input, shape index: {}]
  %s1 = inlined_call_operand.hbm [shape: bf16[1152,128], index: 1, kind: input, shape index: {}]
  %s2 = inlined_call_operand.hbm [shape: f32[1,128], index: 2, kind: input, shape index: {}]
  %s3 = inlined_call_operand.vmem [shape: f32[128,128], index: 3, kind: output, shape index: {}]
  %s4 = sld [smem:[#allocation0]]
  $region87: #{snn_vgg9_forward.73} parent=0
    _
  %s6 = ssub.s32 1, %s4
  %s7 = scalar_select 0, %s6, %s4
  $region1: #{snn_vgg9_forward.73} parent=0
    #allocation3 [shape = 'u8[196608]{0}', space=vmem, size = 0x30000, scoped, tag = 'input window, operand 0']
    #allocation4 [shape = 'u8[196608]{0}', space=vmem, size = 0x30000, scoped, tag = 'input window, operand 1']
    #allocation5 [shape = 's32[2]{0}', space=sflag, size = 0x8, scoped, tag = 'scoped memory for snn_vgg9_forward.73']
    #allocation6 [shape = 'u8[512]{0}', space=vmem, size = 0x400, scoped, tag = 'input window, operand 2, single buffered']
    #allocation7 [shape = 's32[1]{0}', space=sflag, size = 0x4, scoped, tag = 'scoped memory for snn_vgg9_forward.73']
    %8 = vsyncpa [#allocation5], 0
    %s9 = scalar_lea.sflag [#allocation5], 1
    %10 = vsyncpa %s9, 0
    %11 = vsyncpa [#allocation7], 0
    loop: start=0, step=1, limit=5
    $region2: #{snn_vgg9_forward.73} parent=1 // loop_pre_header
      _
    $region3: #{snn_vgg9_forward.73} parent=1 // loop_header
      %s13 = sphi 0, %s17
      %p14 = scmp.ge.s32.totalorder %s13, 5
      %s20 = sphi 0, %s39
      %s21 = sphi 0, %s35
      %s22 = sphi 0, %s31
      %s23 = sphi 0, %s20
      %s24 = sphi 0, %s21
      %s25 = sphi 0, %s22
      %s26 = sphi 0, %s23
      %s27 = sphi 0, %s24
      %s28 = sphi 0, %s25
      %s44 = sphi 0, %s46
      %s47 = sphi 0, %s44
      %s48 = sphi 0, %s47
      %s64 = sphi 0, %s48
      %s72 = sphi 0, %s74
      %s75 = sphi 0, %s72
      %s76 = sphi 0, %s75
      %s92 = sphi 0, %s76
      %s98 = sphi 0, %s100
      %s101 = sphi 0, %s98
      %s102 = sphi 0, %s101
      %s118 = sphi 0, %s102
      %s126 = sphi 0, %s128
      %s129 = sphi 0, %s126
      %s130 = sphi 0, %s129
      %s146 = sphi 0, %s130
    $region4: #{snn_vgg9_forward.73} parent=1 // loop_header_branch
      %16 = sbr.rel (%p14) target = $region8
    $region5: #{snn_vgg9_forward.73} parent=1 // loop_body
      %s18 = ssub.s32 %s13, 1
      %s19 = ssub.s32 %s13, 2
      %s29 = sadd.s32 1, %s22
      %p30 = scmp.ge.s32.totalorder %s29, 3
      %s31 = scalar_select %p30, 0, %s29
      %s32 = sadd.s32 1, %s21
      %s33 = scalar_select %p30, %s32, %s21
      %p34 = scmp.ge.s32.totalorder %s33, 1
      %s35 = scalar_select %p34, 0, %s33
      %s36 = sadd.s32 1, %s20
      %s37 = scalar_select %p34, %s36, %s20
      %p38 = scmp.ge.s32.totalorder %s37, 1
      %s39 = scalar_select %p38, 0, %s37
      %s40 = ssub.s32 %s20, %s39
      %s41 = ssub.s32 %s22, %s31
      %s42 = sor.u32 %s40, %s41
      %p43 = scmp.eq.s32.totalorder %s42, 0
      %s45 = sadd.s32 %s44, 1
      %s46 = scalar_select %p43, %s44, %s45
      %p49 = pneg %p43
      %p50 = scmp.eq.s32.totalorder %s13, 2
      %p51 = por %p49, %p50
      %p52 = scmp.ne.s32.totalorder %s44, %s47
      %p53 = scmp.eq.s32.totalorder %s13, 0
      %p54 = por %p52, %p53
      %p55 = scmp.ne.s32.totalorder %s44, %s47
      %p56 = scmp.eq.s32.totalorder %s18, 2
      %p57 = por %p55, %p56
      %p58 = scmp.ne.s32.totalorder %s47, %s48
      %p59 = scmp.eq.s32.totalorder %s18, 0
      %p60 = por %p58, %p59
      %p61 = scmp.ne.s32.totalorder %s47, %s48
      %p62 = scmp.eq.s32.totalorder %s19, 2
      %p63 = por %p61, %p62
      %p65 = scmp.ne.s32.totalorder %s48, %s64
      %p66 = scmp.eq.s32.totalorder %s19, 0
      %p67 = por %p65, %p66
      %s68 = ssub.s32 %s22, %s31
      %s69 = ssub.s32 %s21, %s35
      %s70 = sor.u32 %s68, %s69
      %p71 = scmp.eq.s32.totalorder %s70, 0
      %s73 = sadd.s32 %s72, 1
      %s74 = scalar_select %p71, %s72, %s73
      %p77 = pneg %p71
      %p78 = scmp.eq.s32.totalorder %s13, 2
      %p79 = por %p77, %p78
      %p80 = scmp.ne.s32.totalorder %s72, %s75
      %p81 = scmp.eq.s32.totalorder %s13, 0
      %p82 = por %p80, %p81
      %p83 = scmp.ne.s32.totalorder %s72, %s75
      %p84 = scmp.eq.s32.totalorder %s18, 2
      %p85 = por %p83, %p84
      %p86 = scmp.ne.s32.totalorder %s75, %s76
      %p87 = scmp.eq.s32.totalorder %s18, 0
      %p88 = por %p86, %p87
      %p89 = scmp.ne.s32.totalorder %s75, %s76
      %p90 = scmp.eq.s32.totalorder %s19, 2
      %p91 = por %p89, %p90
      %p93 = scmp.ne.s32.totalorder %s76, %s92
      %p94 = scmp.eq.s32.totalorder %s19, 0
      %p95 = por %p93, %p94
      %s96 = ssub.s32 %s21, %s35
      %p97 = scmp.eq.s32.totalorder %s96, 0
      %s99 = sadd.s32 %s98, 1
      %s100 = scalar_select %p97, %s98, %s99
      %p103 = pneg %p97
      %p104 = scmp.eq.s32.totalorder %s13, 2
      %p105 = por %p103, %p104
      %p106 = scmp.ne.s32.totalorder %s98, %s101
      %p107 = scmp.eq.s32.totalorder %s13, 0
      %p108 = por %p106, %p107
      %p109 = scmp.ne.s32.totalorder %s98, %s101
      %p110 = scmp.eq.s32.totalorder %s18, 2
      %p111 = por %p109, %p110
      %p112 = scmp.ne.s32.totalorder %s101, %s102
      %p113 = scmp.eq.s32.totalorder %s18, 0
      %p114 = por %p112, %p113
      %p115 = scmp.ne.s32.totalorder %s101, %s102
      %p116 = scmp.eq.s32.totalorder %s19, 2
      %p117 = por %p115, %p116
      %p119 = scmp.ne.s32.totalorder %s102, %s118
      %p120 = scmp.eq.s32.totalorder %s19, 0
      %p121 = por %p119, %p120
      %s122 = ssub.s32 %s20, %s39
      %s123 = ssub.s32 %s21, %s35
      %s124 = sor.u32 %s122, %s123
      %p125 = scmp.eq.s32.totalorder %s124, 0
      %s127 = sadd.s32 %s126, 1
      %s128 = scalar_select %p125, %s126, %s127
      %p131 = pneg %p125
      %p132 = scmp.eq.s32.totalorder %s13, 2
      %p133 = por %p131, %p132
      %p134 = scmp.ne.s32.totalorder %s126, %s129
      %p135 = scmp.eq.s32.totalorder %s13, 0
      %p136 = por %p134, %p135
      %p137 = scmp.ne.s32.totalorder %s126, %s129
      %p138 = scmp.eq.s32.totalorder %s18, 2
      %p139 = por %p137, %p138
      %p140 = scmp.ne.s32.totalorder %s129, %s130
      %p141 = scmp.eq.s32.totalorder %s18, 0
      %p142 = por %p140, %p141
      %p143 = scmp.ne.s32.totalorder %s129, %s130
      %p144 = scmp.eq.s32.totalorder %s19, 2
      %p145 = por %p143, %p144
      %p147 = scmp.ne.s32.totalorder %s130, %s146
      %p148 = scmp.eq.s32.totalorder %s19, 0
      %p149 = por %p147, %p148
      %p150 = scmp.le.s32.totalorder 1, %s13
      %p151 = scmp.lt.s32.totalorder %s13, 4
      %p152 = pnand %p150, %p151
      %p153 = pneg %p152
      // Predicated region
      $region9: #{snn_vgg9_forward.73} parent=5 // pred_check
        _
      $region10: #{snn_vgg9_forward.73} parent=5 // pred_check_branch
        %155 = sbr.rel (%p152) target = $region12
      $region11: #{snn_vgg9_forward.73} parent=5 // pred_region
        %s156 = ssub.s32 %s13, 1
        // Predicated region
        $region13: #{snn_vgg9_forward.73} parent=11 // pred_check
          %p157 = pneg %p114
        $region14: #{snn_vgg9_forward.73} parent=11 // pred_check_branch
          %159 = sbr.rel (%p157) target = $region16
        $region15: #{snn_vgg9_forward.73} parent=11 // pred_region
          %161 = vsyncadd [#allocation7], 0
          %s162 = scalar_lea.hbm %s2, %s24
          %s164 = sshll.u32 %s162, 4
          %s165 = int_to_ptr.hbm [resolvable:$true] %s164
          %s166 = sshll.u32 [#allocation6], 4
          %s167 = int_to_ptr.vmem [resolvable:$true] %s166
          %169 = dma.hbm_to_vmem [thread:$0]  %s165, 16, %s167, [#allocation7]
        $region16: #{snn_vgg9_forward.73} parent=11 // pred_fallthru
          _
      $region12: #{snn_vgg9_forward.73} parent=5 // pred_fallthru
        _
      %p170 = scmp.lt.s32.totalorder %s13, 3
      // Predicated region
      $region17: #{snn_vgg9_forward.73} parent=5 // pred_check
        %p171 = pneg %p170
      $region18: #{snn_vgg9_forward.73} parent=5 // pred_check_branch
        %173 = sbr.rel (%p171) target = $region20
      $region19: #{snn_vgg9_forward.73} parent=5 // pred_region
        // Predicated region
        $region21: #{snn_vgg9_forward.73} parent=19 // pred_check
          %p174 = pneg %p54
        $region22: #{snn_vgg9_forward.73} parent=19 // pred_check_branch
          %176 = sbr.rel (%p174) target = $region24
        $region23: #{snn_vgg9_forward.73} parent=19 // pred_region
          %s177 = sand.u32 %s44, 1
          %s178 = sand.u32 %s44, 1
          %s179 = smul.addr %s178, 192
          %s180 = scalar_lea.vmem [#allocation3], %s179
          %s181 = smul.u32 16, %s20
          %s182 = smul.u32 3, %s22
          %s183 = smul.addr %s181, 9
          %s184 = sadd.s32 %s182, %s183
          %s185 = smul.addr %s184, 4
          %s186 = scalar_lea.vmem %s0, %s185
          // Predicated region
          $region25: #{snn_vgg9_forward.73} parent=23 // pred_check
            _
          $region26: #{snn_vgg9_forward.73} parent=23 // pred_check_branch
            %188 = sbr.rel (0) target = $region28
          $region27: #{snn_vgg9_forward.73} parent=23 // pred_region
            // Predicated region
            $region29: #{snn_vgg9_forward.73} parent=27 // pred_check
              _
            $region30: #{snn_vgg9_forward.73} parent=27 // pred_check_branch
              %190 = sbr.rel (0) target = $region32
            $region31: #{snn_vgg9_forward.73} parent=27 // pred_region
              %s191 = scalar_lea.vmem %s186, 8
              %s192 = scalar_lea.vmem %s180, 8 [#allocation3]
              loop: start=0, step=1, limit=1
              $region33: #{snn_vgg9_forward.73} parent=31 // loop_pre_header
                _
              $region34: #{snn_vgg9_forward.73} parent=31 // loop_header
                %s194 = sphi 0, %s198
                %p195 = scmp.ge.s32.totalorder %s194, 1
                %s199 = sphi %s186, %s186
                %s200 = sphi %s180, %s180
              $region35: #{snn_vgg9_forward.73} parent=31 // loop_header_branch
                %197 = sbr.rel (%p195) target = $region39
              $region36: #{snn_vgg9_forward.73} parent=31 // loop_body
                %v201 = vld [vmem:[%s199] sm:$0xff]
                %202 = vst [vmem:[%s200] sm:$0xff] %v201
                %v203 = vld [vmem:[%s199 + $0x24] sm:$0xff]
                %204 = vst [vmem:[%s200 + $0xc] sm:$0xff] %v203
                %v205 = vld [vmem:[%s199 + $0x48] sm:$0xff]
                %206 = vst [vmem:[%s200 + $0x18] sm:$0xff] %v205
                %v207 = vld [vmem:[%s199 + $0x6c] sm:$0xff]
                %208 = vst [vmem:[%s200 + $0x24] sm:$0xff] %v207
                %v209 = vld [vmem:[%s199 + $0x90] sm:$0xff]
                %210 = vst [vmem:[%s200 + $0x30] sm:$0xff] %v209
                %v211 = vld [vmem:[%s199 + $0xb4] sm:$0xff]
                %212 = vst [vmem:[%s200 + $0x3c] sm:$0xff] %v211
                %v213 = vld [vmem:[%s199 + $0xd8] sm:$0xff]
                %214 = vst [vmem:[%s200 + $0x48] sm:$0xff] %v213
                %v215 = vld [vmem:[%s199 + $0xfc] sm:$0xff]
                %216 = vst [vmem:[%s200 + $0x54] sm:$0xff] %v215
                %v217 = vld [vmem:[%s199 + $0x120] sm:$0xff]
                %218 = vst [vmem:[%s200 + $0x60] sm:$0xff] %v217
                %v219 = vld [vmem:[%s199 + $0x144] sm:$0xff]
                %220 = vst [vmem:[%s200 + $0x6c] sm:$0xff] %v219
                %v221 = vld [vmem:[%s199 + $0x168] sm:$0xff]
                %222 = vst [vmem:[%s200 + $0x78] sm:$0xff] %v221
                %v223 = vld [vmem:[%s199 + $0x18c] sm:$0xff]
                %224 = vst [vmem:[%s200 + $0x84] sm:$0xff] %v223
                %v225 = vld [vmem:[%s199 + $0x1b0] sm:$0xff]
                %226 = vst [vmem:[%s200 + $0x90] sm:$0xff] %v225
                %v227 = vld [vmem:[%s199 + $0x1d4] sm:$0xff]
                %228 = vst [vmem:[%s200 + $0x9c] sm:$0xff] %v227
                %v229 = vld [vmem:[%s199 + $0x1f8] sm:$0xff]
                %230 = vst [vmem:[%s200 + $0xa8] sm:$0xff] %v229
                %v231 = vld [vmem:[%s199 + $0x21c] sm:$0xff]
                %232 = vst [vmem:[%s200 + $0xb4] sm:$0xff] %v231
              $region37: #{snn_vgg9_forward.73} parent=31 // loop_footer
                %s198 = sadd.s32 1, %s194
              $region38: #{snn_vgg9_forward.73} parent=31 // loop_footer_branch
                %193 = sbr.rel target = $region34
              $region39: #{snn_vgg9_forward.73} parent=31 // loop_exit
                _
              %s234 = ssub.s32 16, 1
              loop: start=0, step=1, limit=1
              $region40: #{snn_vgg9_forward.73} parent=31 // loop_pre_header
                _
              $region41: #{snn_vgg9_forward.73} parent=31 // loop_header
                %s236 = sphi 0, %s240
                %p237 = scmp.ge.s32.totalorder %s236, 1
                %s241 = sphi %s191, %s191
                %s242 = sphi %s192, %s192
              $region42: #{snn_vgg9_forward.73} parent=31 // loop_header_branch
                %239 = sbr.rel (%p237) target = $region46
              $region43: #{snn_vgg9_forward.73} parent=31 // loop_body
                %v243 = vld [vmem:[%s241] sm:%s234]
                %244 = vst [vmem:[%s242] sm:%s234] %v243
                %v245 = vld [vmem:[%s241 + $0x24] sm:%s234]
                %246 = vst [vmem:[%s242 + $0xc] sm:%s234] %v245
                %v247 = vld [vmem:[%s241 + $0x48] sm:%s234]
                %248 = vst [vmem:[%s242 + $0x18] sm:%s234] %v247
                %v249 = vld [vmem:[%s241 + $0x6c] sm:%s234]
                %250 = vst [vmem:[%s242 + $0x24] sm:%s234] %v249
                %v251 = vld [vmem:[%s241 + $0x90] sm:%s234]
                %252 = vst [vmem:[%s242 + $0x30] sm:%s234] %v251
                %v253 = vld [vmem:[%s241 + $0xb4] sm:%s234]
                %254 = vst [vmem:[%s242 + $0x3c] sm:%s234] %v253
                %v255 = vld [vmem:[%s241 + $0xd8] sm:%s234]
                %256 = vst [vmem:[%s242 + $0x48] sm:%s234] %v255
                %v257 = vld [vmem:[%s241 + $0xfc] sm:%s234]
                %258 = vst [vmem:[%s242 + $0x54] sm:%s234] %v257
                %v259 = vld [vmem:[%s241 + $0x120] sm:%s234]
                %260 = vst [vmem:[%s242 + $0x60] sm:%s234] %v259
                %v261 = vld [vmem:[%s241 + $0x144] sm:%s234]
                %262 = vst [vmem:[%s242 + $0x6c] sm:%s234] %v261
                %v263 = vld [vmem:[%s241 + $0x168] sm:%s234]
                %264 = vst [vmem:[%s242 + $0x78] sm:%s234] %v263
                %v265 = vld [vmem:[%s241 + $0x18c] sm:%s234]
                %266 = vst [vmem:[%s242 + $0x84] sm:%s234] %v265
                %v267 = vld [vmem:[%s241 + $0x1b0] sm:%s234]
                %268 = vst [vmem:[%s242 + $0x90] sm:%s234] %v267
                %v269 = vld [vmem:[%s241 + $0x1d4] sm:%s234]
                %270 = vst [vmem:[%s242 + $0x9c] sm:%s234] %v269
                %v271 = vld [vmem:[%s241 + $0x1f8] sm:%s234]
                %272 = vst [vmem:[%s242 + $0xa8] sm:%s234] %v271
                %v273 = vld [vmem:[%s241 + $0x21c] sm:%s234]
                %274 = vst [vmem:[%s242 + $0xb4] sm:%s234] %v273
              $region44: #{snn_vgg9_forward.73} parent=31 // loop_footer
                %s240 = sadd.s32 1, %s236
              $region45: #{snn_vgg9_forward.73} parent=31 // loop_footer_branch
                %235 = sbr.rel target = $region41
              $region46: #{snn_vgg9_forward.73} parent=31 // loop_exit
                _
            $region32: #{snn_vgg9_forward.73} parent=27 // pred_fallthru
              _
          $region28: #{snn_vgg9_forward.73} parent=23 // pred_fallthru
            _
          %275 = vnop
        $region24: #{snn_vgg9_forward.73} parent=19 // pred_fallthru
          _
        // Predicated region
        $region47: #{snn_vgg9_forward.73} parent=19 // pred_check
          %p276 = pneg %p82
        $region48: #{snn_vgg9_forward.73} parent=19 // pred_check_branch
          %278 = sbr.rel (%p276) target = $region50
        $region49: #{snn_vgg9_forward.73} parent=19 // pred_region
          %s279 = sand.u32 %s72, 1
          %s280 = scalar_lea.sflag [#allocation5], %s279
          %s281 = sand.u32 %s72, 1
          %s282 = smul.addr %s281, 192
          %s283 = scalar_lea.vmem [#allocation4], %s282
          %s284 = smul.u32 48, %s22
          %286 = vsyncadd %s280, 0
          %s287 = sadd.s32 %s21, %s284
          %s288 = smul.addr %s287, 4
          %s289 = scalar_lea.hbm %s1, %s288
          %s290 = sshll.u32 %s289, 4
          %s291 = int_to_ptr.hbm [resolvable:$true] %s290
          %s292 = sshll.u32 %s283, 4
          %s293 = int_to_ptr.vmem [resolvable:$true] %s292
          %298 = dma.hbm_to_vmem [thread:$0]  %s291, 3072, %s293, %s280, 64, 64, 4
        $region50: #{snn_vgg9_forward.73} parent=19 // pred_fallthru
          _
      $region20: #{snn_vgg9_forward.73} parent=5 // pred_fallthru
        _
      %p299 = scmp.le.s32.totalorder 1, %s13
      %p300 = scmp.lt.s32.totalorder %s13, 4
      %p301 = pnand %p299, %p300
      %p302 = pneg %p301
      // Predicated region
      $region51: #{snn_vgg9_forward.73} parent=5 // pred_check
        _
      $region52: #{snn_vgg9_forward.73} parent=5 // pred_check_branch
        %304 = sbr.rel (%p301) target = $region54
      $region53: #{snn_vgg9_forward.73} parent=5 // pred_region
        %s305 = ssub.s32 %s13, 1
        %s306 = sand.u32 %s47, 1
        %s307 = sand.u32 %s47, 1
        %s308 = smul.addr %s307, 192
        %s309 = scalar_lea.vmem [#allocation3], %s308
        // Predicated region
        $region55: #{snn_vgg9_forward.73} parent=53 // pred_check
          %p310 = pneg %p60
        $region56: #{snn_vgg9_forward.73} parent=53 // pred_check_branch
          %312 = sbr.rel (%p310) target = $region58
        $region57: #{snn_vgg9_forward.73} parent=53 // pred_region
          _
        $region58: #{snn_vgg9_forward.73} parent=53 // pred_fallthru
          _
        %s313 = sand.u32 %s75, 1
        %s314 = scalar_lea.sflag [#allocation5], %s313
        %s315 = sand.u32 %s75, 1
        %s316 = smul.addr %s315, 192
        %s317 = scalar_lea.vmem [#allocation4], %s316
        // Predicated region
        $region59: #{snn_vgg9_forward.73} parent=53 // pred_check
          %p318 = pneg %p88
        $region60: #{snn_vgg9_forward.73} parent=53 // pred_check_branch
          %320 = sbr.rel (%p318) target = $region62
        $region61: #{snn_vgg9_forward.73} parent=53 // pred_region
          %322 = dma.done %s314, 3072
        $region62: #{snn_vgg9_forward.73} parent=53 // pred_fallthru
          _
        // Predicated region
        $region63: #{snn_vgg9_forward.73} parent=53 // pred_check
          %p323 = pneg %p114
        $region64: #{snn_vgg9_forward.73} parent=53 // pred_check_branch
          %325 = sbr.rel (%p323) target = $region66
        $region65: #{snn_vgg9_forward.73} parent=53 // pred_region
          %327 = dma.done [#allocation7], 16
        $region66: #{snn_vgg9_forward.73} parent=53 // pred_fallthru
          _
        %s328 = sand.u32 %s47, 1
        %s329 = sand.u32 %s47, 1
        %s330 = smul.addr %s329, 192
        %s331 = scalar_lea.vmem [#allocation3], %s330
        %p332 = pneg %p60
        %p333 = pneg %p57
        %s334 = sand.u32 %s75, 1
        %s335 = scalar_lea.sflag [#allocation5], %s334
        %s336 = sand.u32 %s75, 1
        %s337 = smul.addr %s336, 192
        %s338 = scalar_lea.vmem [#allocation4], %s337
        %p339 = pneg %p88
        %p340 = pneg %p85
        %p341 = pneg %p114
        %p342 = pneg %p111
        %p343 = pneg %p142
        %p344 = pneg %p139
        %s345 = smul.u32 16, %s23
        %p346 = scmp.lt.s32.totalorder %s345, 15
        %s347 = scalar_select %p346, %s345, 15
        %p348 = scmp.lt.s32.totalorder %s24, 0
        %s349 = scalar_select %p348, %s24, 0
        %s350 = sadd.s32 %s349, %s347
        %s351 = smul.addr %s350, 8
        %s352 = scalar_lea.vmem %s3, %s351
        %s353 = smul.u32 16, %s23
        %s354 = smul.u32 3, %s25
        %s355 = smul.u32 48, %s25
        %s356 = smul.u32 16, %s23
        %p357 = scmp.lt.s32.totalorder %s356, 15
        %s358 = scalar_select %p357, %s356, 15
        %p359 = scmp.lt.s32.totalorder %s24, 0
        %s360 = scalar_select %p359, %s24, 0
        %s361 = sadd.s32 %s360, %s358
        %s362 = smul.addr %s361, 8
        %s363 = scalar_lea.vmem %s3, %s362
        %s364 = smul.u32 16, %s23
        %p365 = scmp.eq.s32.totalorder %s25, 0
        // Predicated region
        $region67: #{snn_vgg9_forward.73} parent=53 // pred_check
          %p366 = pneg %p365
        $region68: #{snn_vgg9_forward.73} parent=53 // pred_check_branch
          %368 = sbr.rel (%p366) target = $region70
        $region69: #{snn_vgg9_forward.73} parent=53 // pred_region
          %369 = vst [vmem:[#allocation2] sm:$0xff] 0.0
          %370 = vst [vmem:[#allocation2 + $0x8] sm:$0xff] 0.0
          %371 = vst [vmem:[#allocation2 + $0x10] sm:$0xff] 0.0
          %372 = vst [vmem:[#allocation2 + $0x18] sm:$0xff] 0.0
          %373 = vst [vmem:[#allocation2 + $0x20] sm:$0xff] 0.0
          %374 = vst [vmem:[#allocation2 + $0x28] sm:$0xff] 0.0
          %375 = vst [vmem:[#allocation2 + $0x30] sm:$0xff] 0.0
          %376 = vst [vmem:[#allocation2 + $0x38] sm:$0xff] 0.0
          %377 = vst [vmem:[#allocation2 + $0x40] sm:$0xff] 0.0
          %378 = vst [vmem:[#allocation2 + $0x48] sm:$0xff] 0.0
          %379 = vst [vmem:[#allocation2 + $0x50] sm:$0xff] 0.0
          %380 = vst [vmem:[#allocation2 + $0x58] sm:$0xff] 0.0
          %381 = vst [vmem:[#allocation2 + $0x60] sm:$0xff] 0.0
          %382 = vst [vmem:[#allocation2 + $0x68] sm:$0xff] 0.0
          %383 = vst [vmem:[#allocation2 + $0x70] sm:$0xff] 0.0
          %384 = vst [vmem:[#allocation2 + $0x78] sm:$0xff] 0.0
        $region70: #{snn_vgg9_forward.73} parent=53 // pred_fallthru
          _
        %v385 = vld [vmem:[#allocation2] sm:$0xff]
        %v386 = vld [vmem:[#allocation2 + $0x8] sm:$0xff]
        %v387 = vld [vmem:[#allocation2 + $0x10] sm:$0xff]
        %v388 = vld [vmem:[#allocation2 + $0x18] sm:$0xff]
        %v389 = vld [vmem:[#allocation2 + $0x20] sm:$0xff]
        %v390 = vld [vmem:[#allocation2 + $0x28] sm:$0xff]
        %v391 = vld [vmem:[#allocation2 + $0x30] sm:$0xff]
        %v392 = vld [vmem:[#allocation2 + $0x38] sm:$0xff]
        %v393 = vld [vmem:[#allocation2 + $0x40] sm:$0xff]
        %v394 = vld [vmem:[#allocation2 + $0x48] sm:$0xff]
        %v395 = vld [vmem:[#allocation2 + $0x50] sm:$0xff]
        %v396 = vld [vmem:[#allocation2 + $0x58] sm:$0xff]
        %v397 = vld [vmem:[#allocation2 + $0x60] sm:$0xff]
        %v398 = vld [vmem:[#allocation2 + $0x68] sm:$0xff]
        %v399 = vld [vmem:[#allocation2 + $0x70] sm:$0xff]
        %v400 = vld [vmem:[#allocation2 + $0x78] sm:$0xff]
        %v401 = vld [vmem:[%s309] sm:$0xff]
        %v402 = vld [vmem:[%s309 + $0x8] sm:$0xf]
        %v403 = vld [vmem:[%s309 + $0xc] sm:$0xff]
        %v404 = vld [vmem:[%s309 + $0x14] sm:$0xf]
        %v405 = vld [vmem:[%s309 + $0x18] sm:$0xff]
        %v406 = vld [vmem:[%s309 + $0x20] sm:$0xf]
        %v407 = vld [vmem:[%s309 + $0x24] sm:$0xff]
        %v408 = vld [vmem:[%s309 + $0x2c] sm:$0xf]
        %v409 = vld [vmem:[%s309 + $0x30] sm:$0xff]
        %v410 = vld [vmem:[%s309 + $0x38] sm:$0xf]
        %v411 = vld [vmem:[%s309 + $0x3c] sm:$0xff]
        %v412 = vld [vmem:[%s309 + $0x44] sm:$0xf]
        %v413 = vld [vmem:[%s309 + $0x48] sm:$0xff]
        %v414 = vld [vmem:[%s309 + $0x50] sm:$0xf]
        %v415 = vld [vmem:[%s309 + $0x54] sm:$0xff]
        %v416 = vld [vmem:[%s309 + $0x5c] sm:$0xf]
        %v417 = vld [vmem:[%s309 + $0x60] sm:$0xff]
        %v418 = vld [vmem:[%s309 + $0x68] sm:$0xf]
        %v419 = vld [vmem:[%s309 + $0x6c] sm:$0xff]
        %v420 = vld [vmem:[%s309 + $0x74] sm:$0xf]
        %v421 = vld [vmem:[%s309 + $0x78] sm:$0xff]
        %v422 = vld [vmem:[%s309 + $0x80] sm:$0xf]
        %v423 = vld [vmem:[%s309 + $0x84] sm:$0xff]
        %v424 = vld [vmem:[%s309 + $0x8c] sm:$0xf]
        %v425 = vld [vmem:[%s309 + $0x90] sm:$0xff]
        %v426 = vld [vmem:[%s309 + $0x98] sm:$0xf]
        %v427 = vld [vmem:[%s309 + $0x9c] sm:$0xff]
        %v428 = vld [vmem:[%s309 + $0xa4] sm:$0xf]
        %v429 = vld [vmem:[%s309 + $0xa8] sm:$0xff]
        %v430 = vld [vmem:[%s309 + $0xb0] sm:$0xf]
        %v431 = vld [vmem:[%s309 + $0xb4] sm:$0xff]
        %v432 = vld [vmem:[%s309 + $0xbc] sm:$0xf]
        %v433 = vld [vmem:[%s317] sm:$0xf]
        %v434 = vld [vmem:[%s317 + $0x4] sm:$0xf]
        %v435 = vld [vmem:[%s317 + $0x8] sm:$0xf]
        %v436 = vld [vmem:[%s317 + $0xc] sm:$0xf]
        %v437 = vld [vmem:[%s317 + $0x10] sm:$0xf]
        %v438 = vld [vmem:[%s317 + $0x14] sm:$0xf]
        %v439 = vld [vmem:[%s317 + $0x18] sm:$0xf]
        %v440 = vld [vmem:[%s317 + $0x1c] sm:$0xf]
        %v441 = vld [vmem:[%s317 + $0x20] sm:$0xf]
        %v442 = vld [vmem:[%s317 + $0x24] sm:$0xf]
        %v443 = vld [vmem:[%s317 + $0x28] sm:$0xf]
        %v444 = vld [vmem:[%s317 + $0x2c] sm:$0xf]
        %v445 = vld [vmem:[%s317 + $0x30] sm:$0xf]
        %v446 = vld [vmem:[%s317 + $0x34] sm:$0xf]
        %v447 = vld [vmem:[%s317 + $0x38] sm:$0xf]
        %v448 = vld [vmem:[%s317 + $0x3c] sm:$0xf]
        %v449 = vld [vmem:[%s317 + $0x40] sm:$0xf]
        %v450 = vld [vmem:[%s317 + $0x44] sm:$0xf]
        %v451 = vld [vmem:[%s317 + $0x48] sm:$0xf]
        %v452 = vld [vmem:[%s317 + $0x4c] sm:$0xf]
        %v453 = vld [vmem:[%s317 + $0x50] sm:$0xf]
        %v454 = vld [vmem:[%s317 + $0x54] sm:$0xf]
        %v455 = vld [vmem:[%s317 + $0x58] sm:$0xf]
        %v456 = vld [vmem:[%s317 + $0x5c] sm:$0xf]
        %v457 = vld [vmem:[%s317 + $0x60] sm:$0xf]
        %v458 = vld [vmem:[%s317 + $0x64] sm:$0xf]
        %v459 = vld [vmem:[%s317 + $0x68] sm:$0xf]
        %v460 = vld [vmem:[%s317 + $0x6c] sm:$0xf]
        %v461 = vld [vmem:[%s317 + $0x70] sm:$0xf]
        %v462 = vld [vmem:[%s317 + $0x74] sm:$0xf]
        %v463 = vld [vmem:[%s317 + $0x78] sm:$0xf]
        %v464 = vld [vmem:[%s317 + $0x7c] sm:$0xf]
        %v465 = vld [vmem:[%s317 + $0x80] sm:$0xf]
        %v466 = vld [vmem:[%s317 + $0x84] sm:$0xf]
        %v467 = vld [vmem:[%s317 + $0x88] sm:$0xf]
        %v468 = vld [vmem:[%s317 + $0x8c] sm:$0xf]
        %v469 = vld [vmem:[%s317 + $0x90] sm:$0xf]
        %v470 = vld [vmem:[%s317 + $0x94] sm:$0xf]
        %v471 = vld [vmem:[%s317 + $0x98] sm:$0xf]
        %v472 = vld [vmem:[%s317 + $0x9c] sm:$0xf]
        %v473 = vld [vmem:[%s317 + $0xa0] sm:$0xf]
        %v474 = vld [vmem:[%s317 + $0xa4] sm:$0xf]
        %v475 = vld [vmem:[%s317 + $0xa8] sm:$0xf]
        %v476 = vld [vmem:[%s317 + $0xac] sm:$0xf]
        %v477 = vld [vmem:[%s317 + $0xb0] sm:$0xf]
        %v478 = vld [vmem:[%s317 + $0xb4] sm:$0xf]
        %v479 = vld [vmem:[%s317 + $0xb8] sm:$0xf]
        %v480 = vld [vmem:[%s317 + $0xbc] sm:$0xf]
        %v513 = vunpack.c.l.b16 %v401
        %v514 = vunpack.c.h.b16 %v401
        %v515 = vunpack.c.l.b16 %v402
        %v516 = vunpack.c.l.b16 %v403
        %v517 = vunpack.c.h.b16 %v403
        %v518 = vunpack.c.l.b16 %v404
        %v519 = vunpack.c.l.b16 %v405
        %v520 = vunpack.c.h.b16 %v405
        %v521 = vunpack.c.l.b16 %v406
        %v522 = vunpack.c.l.b16 %v407
        %v523 = vunpack.c.h.b16 %v407
        %v524 = vunpack.c.l.b16 %v408
        %v525 = vunpack.c.l.b16 %v409
        %v526 = vunpack.c.h.b16 %v409
        %v527 = vunpack.c.l.b16 %v410
        %v528 = vunpack.c.l.b16 %v411
        %v529 = vunpack.c.h.b16 %v411
        %v530 = vunpack.c.l.b16 %v412
        %v531 = vunpack.c.l.b16 %v413
        %v532 = vunpack.c.h.b16 %v413
        %v533 = vunpack.c.l.b16 %v414
        %v534 = vunpack.c.l.b16 %v415
        %v535 = vunpack.c.h.b16 %v415
        %v536 = vunpack.c.l.b16 %v416
        %v537 = vunpack.c.l.b16 %v417
        %v538 = vunpack.c.h.b16 %v417
        %v539 = vunpack.c.l.b16 %v418
        %v540 = vunpack.c.l.b16 %v419
        %v541 = vunpack.c.h.b16 %v419
        %v542 = vunpack.c.l.b16 %v420
        %v543 = vunpack.c.l.b16 %v421
        %v544 = vunpack.c.h.b16 %v421
        %v545 = vunpack.c.l.b16 %v422
        %v546 = vunpack.c.l.b16 %v423
        %v547 = vunpack.c.h.b16 %v423
        %v548 = vunpack.c.l.b16 %v424
        %v549 = vunpack.c.l.b16 %v425
        %v550 = vunpack.c.h.b16 %v425
        %v551 = vunpack.c.l.b16 %v426
        %v552 = vunpack.c.l.b16 %v427
        %v553 = vunpack.c.h.b16 %v427
        %v554 = vunpack.c.l.b16 %v428
        %v555 = vunpack.c.l.b16 %v429
        %v556 = vunpack.c.h.b16 %v429
        %v557 = vunpack.c.l.b16 %v430
        %v558 = vunpack.c.l.b16 %v431
        %v559 = vunpack.c.h.b16 %v431
        %v560 = vunpack.c.l.b16 %v432
        %v561 = vpack.c.b16 %v516, %v513
        %v562 = vpack.c.b16 %v517, %v514
        %v563 = vpack.c.b16 %v518, %v515
        %v564 = vpack.c.b16 %v522, %v519
        %v565 = vpack.c.b16 %v523, %v520
        %v566 = vpack.c.b16 %v524, %v521
        %v567 = vpack.c.b16 %v528, %v525
        %v568 = vpack.c.b16 %v529, %v526
        %v569 = vpack.c.b16 %v530, %v527
        %v570 = vpack.c.b16 %v534, %v531
        %v571 = vpack.c.b16 %v535, %v532
        %v572 = vpack.c.b16 %v536, %v533
        %v573 = vpack.c.b16 %v540, %v537
        %v574 = vpack.c.b16 %v541, %v538
        %v575 = vpack.c.b16 %v542, %v539
        %v576 = vpack.c.b16 %v546, %v543
        %v577 = vpack.c.b16 %v547, %v544
        %v578 = vpack.c.b16 %v548, %v545
        %v579 = vpack.c.b16 %v552, %v549
        %v580 = vpack.c.b16 %v553, %v550
        %v581 = vpack.c.b16 %v554, %v551
        %v582 = vpack.c.b16 %v558, %v555
        %v583 = vpack.c.b16 %v559, %v556
        %v584 = vpack.c.b16 %v560, %v557
        %v657 = vunpack.c.l.b16 %v433
        %v658 = vunpack.c.l.b16 %v434
        %v659 = vunpack.c.l.b16 %v435
        %v660 = vunpack.c.l.b16 %v436
        %v661 = vunpack.c.l.b16 %v437
        %v662 = vunpack.c.l.b16 %v438
        %v663 = vunpack.c.l.b16 %v439
        %v664 = vunpack.c.l.b16 %v440
        %v665 = vunpack.c.l.b16 %v441
        %v666 = vunpack.c.l.b16 %v442
        %v667 = vunpack.c.l.b16 %v443
        %v668 = vunpack.c.l.b16 %v444
        %v669 = vunpack.c.l.b16 %v445
        %v670 = vunpack.c.l.b16 %v446
        %v671 = vunpack.c.l.b16 %v447
        %v672 = vunpack.c.l.b16 %v448
        %v673 = vunpack.c.l.b16 %v449
        %v674 = vunpack.c.l.b16 %v450
        %v675 = vunpack.c.l.b16 %v451
        %v676 = vunpack.c.l.b16 %v452
        %v677 = vunpack.c.l.b16 %v453
        %v678 = vunpack.c.l.b16 %v454
        %v679 = vunpack.c.l.b16 %v455
        %v680 = vunpack.c.l.b16 %v456
        %v681 = vunpack.c.l.b16 %v457
        %v682 = vunpack.c.l.b16 %v458
        %v683 = vunpack.c.l.b16 %v459
        %v684 = vunpack.c.l.b16 %v460
        %v685 = vunpack.c.l.b16 %v461
        %v686 = vunpack.c.l.b16 %v462
        %v687 = vunpack.c.l.b16 %v463
        %v688 = vunpack.c.l.b16 %v464
        %v689 = vunpack.c.l.b16 %v465
        %v690 = vunpack.c.l.b16 %v466
        %v691 = vunpack.c.l.b16 %v467
        %v692 = vunpack.c.l.b16 %v468
        %v693 = vunpack.c.l.b16 %v469
        %v694 = vunpack.c.l.b16 %v470
        %v695 = vunpack.c.l.b16 %v471
        %v696 = vunpack.c.l.b16 %v472
        %v697 = vunpack.c.l.b16 %v473
        %v698 = vunpack.c.l.b16 %v474
        %v699 = vunpack.c.l.b16 %v475
        %v700 = vunpack.c.l.b16 %v476
        %v701 = vunpack.c.l.b16 %v477
        %v702 = vunpack.c.l.b16 %v478
        %v703 = vunpack.c.l.b16 %v479
        %v704 = vunpack.c.l.b16 %v480
        %v705 = vpack.c.b16 %v658, %v657
        %v706 = vpack.c.b16 %v660, %v659
        %v707 = vpack.c.b16 %v662, %v661
        %v708 = vpack.c.b16 %v664, %v663
        %v709 = vpack.c.b16 %v666, %v665
        %v710 = vpack.c.b16 %v668, %v667
        %v711 = vpack.c.b16 %v670, %v669
        %v712 = vpack.c.b16 %v672, %v671
        %v713 = vpack.c.b16 %v674, %v673
        %v714 = vpack.c.b16 %v676, %v675
        %v715 = vpack.c.b16 %v678, %v677
        %v716 = vpack.c.b16 %v680, %v679
        %v717 = vpack.c.b16 %v682, %v681
        %v718 = vpack.c.b16 %v684, %v683
        %v719 = vpack.c.b16 %v686, %v685
        %v720 = vpack.c.b16 %v688, %v687
        %v721 = vpack.c.b16 %v690, %v689
        %v722 = vpack.c.b16 %v692, %v691
        %v723 = vpack.c.b16 %v694, %v693
        %v724 = vpack.c.b16 %v696, %v695
        %v725 = vpack.c.b16 %v698, %v697
        %v726 = vpack.c.b16 %v700, %v699
        %v727 = vpack.c.b16 %v702, %v701
        %v728 = vpack.c.b16 %v704, %v703
        %753 = vmatpush.bf16.msra.mxu0 %v712
        %754 = vmatpush.bf16.msra.mxu0 %v711
        %755 = vmatpush.bf16.msra.mxu0 %v710
        %756 = vmatpush.bf16.msra.mxu0 %v709
        %757 = vmatpush.bf16.msra.mxu0 %v708
        %758 = vmatpush.bf16.msra.mxu0 %v707
        %759 = vmatpush.bf16.msra.mxu0 %v706
        %760 = vmatpush.bf16.msra.mxu0 %v705
        %761 = vmatmul.bf16.gmra.mxu0 %v561
        %v762 = vpop.f32.mrf.mxu0
        %v763 = vadd.f32 0.0, %v762
        %v764 = vpop.f32.mrf.mxu0
        %v765 = vadd.f32 0.0, %v764
        %766 = vmatmul.bf16.gmra.mxu0 %v564
        %v767 = vpop.f32.mrf.mxu0
        %v768 = vadd.f32 0.0, %v767
        %v769 = vpop.f32.mrf.mxu0
        %v770 = vadd.f32 0.0, %v769
        %771 = vmatmul.bf16.gmra.mxu0 %v567
        %v772 = vpop.f32.mrf.mxu0
        %v773 = vadd.f32 0.0, %v772
        %v774 = vpop.f32.mrf.mxu0
        %v775 = vadd.f32 0.0, %v774
        %776 = vmatmul.bf16.gmra.mxu0 %v570
        %v777 = vpop.f32.mrf.mxu0
        %v778 = vadd.f32 0.0, %v777
        %v779 = vpop.f32.mrf.mxu0
        %v780 = vadd.f32 0.0, %v779
        %781 = vmatmul.bf16.gmra.mxu0 %v573
        %v782 = vpop.f32.mrf.mxu0
        %v783 = vadd.f32 0.0, %v782
        %v784 = vpop.f32.mrf.mxu0
        %v785 = vadd.f32 0.0, %v784
        %786 = vmatmul.bf16.gmra.mxu0 %v576
        %v787 = vpop.f32.mrf.mxu0
        %v788 = vadd.f32 0.0, %v787
        %v789 = vpop.f32.mrf.mxu0
        %v790 = vadd.f32 0.0, %v789
        %791 = vmatmul.bf16.gmra.mxu0 %v579
        %v792 = vpop.f32.mrf.mxu0
        %v793 = vadd.f32 0.0, %v792
        %v794 = vpop.f32.mrf.mxu0
        %v795 = vadd.f32 0.0, %v794
        %796 = vmatmul.bf16.gmra.mxu0 %v582
        %v797 = vpop.f32.mrf.mxu0
        %v798 = vadd.f32 0.0, %v797
        %v799 = vpop.f32.mrf.mxu0
        %v800 = vadd.f32 0.0, %v799
        %801 = vdwg.mxu0
        %802 = vmatpush.bf16.msra.mxu0 %v720
        %803 = vmatpush.bf16.msra.mxu0 %v719
        %804 = vmatpush.bf16.msra.mxu0 %v718
        %805 = vmatpush.bf16.msra.mxu0 %v717
        %806 = vmatpush.bf16.msra.mxu0 %v716
        %807 = vmatpush.bf16.msra.mxu0 %v715
        %808 = vmatpush.bf16.msra.mxu0 %v714
        %809 = vmatpush.bf16.msra.mxu0 %v713
        %810 = vmatmul.bf16.gmra.mxu0 %v562
        %v811 = vpop.f32.mrf.mxu0
        %v812 = vadd.f32 %v763, %v811
        %v813 = vpop.f32.mrf.mxu0
        %v814 = vadd.f32 %v765, %v813
        %815 = vmatmul.bf16.gmra.mxu0 %v565
        %v816 = vpop.f32.mrf.mxu0
        %v817 = vadd.f32 %v768, %v816
        %v818 = vpop.f32.mrf.mxu0
        %v819 = vadd.f32 %v770, %v818
        %820 = vmatmul.bf16.gmra.mxu0 %v568
        %v821 = vpop.f32.mrf.mxu0
        %v822 = vadd.f32 %v773, %v821
        %v823 = vpop.f32.mrf.mxu0
        %v824 = vadd.f32 %v775, %v823
        %825 = vmatmul.bf16.gmra.mxu0 %v571
        %v826 = vpop.f32.mrf.mxu0
        %v827 = vadd.f32 %v778, %v826
        %v828 = vpop.f32.mrf.mxu0
        %v829 = vadd.f32 %v780, %v828
        %830 = vmatmul.bf16.gmra.mxu0 %v574
        %v831 = vpop.f32.mrf.mxu0
        %v832 = vadd.f32 %v783, %v831
        %v833 = vpop.f32.mrf.mxu0
        %v834 = vadd.f32 %v785, %v833
        %835 = vmatmul.bf16.gmra.mxu0 %v577
        %v836 = vpop.f32.mrf.mxu0
        %v837 = vadd.f32 %v788, %v836
        %v838 = vpop.f32.mrf.mxu0
        %v839 = vadd.f32 %v790, %v838
        %840 = vmatmul.bf16.gmra.mxu0 %v580
        %v841 = vpop.f32.mrf.mxu0
        %v842 = vadd.f32 %v793, %v841
        %v843 = vpop.f32.mrf.mxu0
        %v844 = vadd.f32 %v795, %v843
        %845 = vmatmul.bf16.gmra.mxu0 %v583
        %v846 = vpop.f32.mrf.mxu0
        %v847 = vadd.f32 %v798, %v846
        %v848 = vpop.f32.mrf.mxu0
        %v849 = vadd.f32 %v800, %v848
        %850 = vdwg.mxu0
        %851 = vmatpush.bf16.msra.mxu0 %v728
        %852 = vmatpush.bf16.msra.mxu0 %v727
        %853 = vmatpush.bf16.msra.mxu0 %v726
        %854 = vmatpush.bf16.msra.mxu0 %v725
        %855 = vmatpush.bf16.msra.mxu0 %v724
        %856 = vmatpush.bf16.msra.mxu0 %v723
        %857 = vmatpush.bf16.msra.mxu0 %v722
        %858 = vmatpush.bf16.msra.mxu0 %v721
        %859 = vmatmul.bf16.gmra.mxu0 %v563
        %v860 = vpop.f32.mrf.mxu0
        %v861 = vadd.f32 %v812, %v860
        %v862 = vpop.f32.mrf.mxu0
        %v863 = vadd.f32 %v814, %v862
        %864 = vmatmul.bf16.gmra.mxu0 %v566
        %v865 = vpop.f32.mrf.mxu0
        %v866 = vadd.f32 %v817, %v865
        %v867 = vpop.f32.mrf.mxu0
        %v868 = vadd.f32 %v819, %v867
        %869 = vmatmul.bf16.gmra.mxu0 %v569
        %v870 = vpop.f32.mrf.mxu0
        %v871 = vadd.f32 %v822, %v870
        %v872 = vpop.f32.mrf.mxu0
        %v873 = vadd.f32 %v824, %v872
        %874 = vmatmul.bf16.gmra.mxu0 %v572
        %v875 = vpop.f32.mrf.mxu0
        %v876 = vadd.f32 %v827, %v875
        %v877 = vpop.f32.mrf.mxu0
        %v878 = vadd.f32 %v829, %v877
        %879 = vmatmul.bf16.gmra.mxu0 %v575
        %v880 = vpop.f32.mrf.mxu0
        %v881 = vadd.f32 %v832, %v880
        %v882 = vpop.f32.mrf.mxu0
        %v883 = vadd.f32 %v834, %v882
        %884 = vmatmul.bf16.gmra.mxu0 %v578
        %v885 = vpop.f32.mrf.mxu0
        %v886 = vadd.f32 %v837, %v885
        %v887 = vpop.f32.mrf.mxu0
        %v888 = vadd.f32 %v839, %v887
        %889 = vmatmul.bf16.gmra.mxu0 %v581
        %v890 = vpop.f32.mrf.mxu0
        %v891 = vadd.f32 %v842, %v890
        %v892 = vpop.f32.mrf.mxu0
        %v893 = vadd.f32 %v844, %v892
        %894 = vmatmul.bf16.gmra.mxu0 %v584
        %v895 = vpop.f32.mrf.mxu0
        %v896 = vadd.f32 %v847, %v895
        %v897 = vpop.f32.mrf.mxu0
        %v898 = vadd.f32 %v849, %v897
        %899 = vdwg.mxu0
        %v900 = vadd.f32 %v385, %v861
        %v901 = vadd.f32 %v386, %v863
        %v902 = vadd.f32 %v387, %v866
        %v903 = vadd.f32 %v388, %v868
        %v904 = vadd.f32 %v389, %v871
        %v905 = vadd.f32 %v390, %v873
        %v906 = vadd.f32 %v391, %v876
        %v907 = vadd.f32 %v392, %v878
        %v908 = vadd.f32 %v393, %v881
        %v909 = vadd.f32 %v394, %v883
        %v910 = vadd.f32 %v395, %v886
        %v911 = vadd.f32 %v396, %v888
        %v912 = vadd.f32 %v397, %v891
        %v913 = vadd.f32 %v398, %v893
        %v914 = vadd.f32 %v399, %v896
        %v915 = vadd.f32 %v400, %v898
        %916 = vst [vmem:[#allocation2] sm:$0xff] %v900
        %917 = vst [vmem:[#allocation2 + $0x8] sm:$0xff] %v901
        %918 = vst [vmem:[#allocation2 + $0x10] sm:$0xff] %v902
        %919 = vst [vmem:[#allocation2 + $0x18] sm:$0xff] %v903
        %920 = vst [vmem:[#allocation2 + $0x20] sm:$0xff] %v904
        %921 = vst [vmem:[#allocation2 + $0x28] sm:$0xff] %v905
        %922 = vst [vmem:[#allocation2 + $0x30] sm:$0xff] %v906
        %923 = vst [vmem:[#allocation2 + $0x38] sm:$0xff] %v907
        %924 = vst [vmem:[#allocation2 + $0x40] sm:$0xff] %v908
        %925 = vst [vmem:[#allocation2 + $0x48] sm:$0xff] %v909
        %926 = vst [vmem:[#allocation2 + $0x50] sm:$0xff] %v910
        %927 = vst [vmem:[#allocation2 + $0x58] sm:$0xff] %v911
        %928 = vst [vmem:[#allocation2 + $0x60] sm:$0xff] %v912
        %929 = vst [vmem:[#allocation2 + $0x68] sm:$0xff] %v913
        %930 = vst [vmem:[#allocation2 + $0x70] sm:$0xff] %v914
        %931 = vst [vmem:[#allocation2 + $0x78] sm:$0xff] %v915
        %p932 = scmp.eq.s32.totalorder %s25, 2
        // Predicated region
        $region71: #{snn_vgg9_forward.73} parent=53 // pred_check
          %p933 = pneg %p932
        $region72: #{snn_vgg9_forward.73} parent=53 // pred_check_branch
          %935 = sbr.rel (%p933) target = $region74
        $region73: #{snn_vgg9_forward.73} parent=53 // pred_region
          %v936 = vld [vmem:[#allocation2] sm:$0xff]
          %v937 = vld [vmem:[#allocation2 + $0x8] sm:$0xff]
          %v938 = vld [vmem:[#allocation2 + $0x10] sm:$0xff]
          %v939 = vld [vmem:[#allocation2 + $0x18] sm:$0xff]
          %v940 = vld [vmem:[#allocation2 + $0x20] sm:$0xff]
          %v941 = vld [vmem:[#allocation2 + $0x28] sm:$0xff]
          %v942 = vld [vmem:[#allocation2 + $0x30] sm:$0xff]
          %v943 = vld [vmem:[#allocation2 + $0x38] sm:$0xff]
          %v944 = vld [vmem:[#allocation2 + $0x40] sm:$0xff]
          %v945 = vld [vmem:[#allocation2 + $0x48] sm:$0xff]
          %v946 = vld [vmem:[#allocation2 + $0x50] sm:$0xff]
          %v947 = vld [vmem:[#allocation2 + $0x58] sm:$0xff]
          %v948 = vld [vmem:[#allocation2 + $0x60] sm:$0xff]
          %v949 = vld [vmem:[#allocation2 + $0x68] sm:$0xff]
          %v950 = vld [vmem:[#allocation2 + $0x70] sm:$0xff]
          %v951 = vld [vmem:[#allocation2 + $0x78] sm:$0xff]
          %v952 = vld [vmem:[#allocation6] sm:$0x1]
          %v954 = vperm.slane %v952, 0
          %v956 = vadd.f32 %v936, %v954
          %v957 = vadd.f32 %v937, %v954
          %v958 = vadd.f32 %v938, %v954
          %v959 = vadd.f32 %v939, %v954
          %v960 = vadd.f32 %v940, %v954
          %v961 = vadd.f32 %v941, %v954
          %v962 = vadd.f32 %v942, %v954
          %v963 = vadd.f32 %v943, %v954
          %v964 = vadd.f32 %v944, %v954
          %v965 = vadd.f32 %v945, %v954
          %v966 = vadd.f32 %v946, %v954
          %v967 = vadd.f32 %v947, %v954
          %v968 = vadd.f32 %v948, %v954
          %v969 = vadd.f32 %v949, %v954
          %v970 = vadd.f32 %v950, %v954
          %v971 = vadd.f32 %v951, %v954
          %972 = vst [vmem:[%s363] sm:$0xff] %v956
          %973 = vst [vmem:[%s363 + $0x8] sm:$0xff] %v957
          %974 = vst [vmem:[%s363 + $0x10] sm:$0xff] %v958
          %975 = vst [vmem:[%s363 + $0x18] sm:$0xff] %v959
          %976 = vst [vmem:[%s363 + $0x20] sm:$0xff] %v960
          %977 = vst [vmem:[%s363 + $0x28] sm:$0xff] %v961
          %978 = vst [vmem:[%s363 + $0x30] sm:$0xff] %v962
          %979 = vst [vmem:[%s363 + $0x38] sm:$0xff] %v963
          %980 = vst [vmem:[%s363 + $0x40] sm:$0xff] %v964
          %981 = vst [vmem:[%s363 + $0x48] sm:$0xff] %v965
          %982 = vst [vmem:[%s363 + $0x50] sm:$0xff] %v966
          %983 = vst [vmem:[%s363 + $0x58] sm:$0xff] %v967
          %984 = vst [vmem:[%s363 + $0x60] sm:$0xff] %v968
          %985 = vst [vmem:[%s363 + $0x68] sm:$0xff] %v969
          %986 = vst [vmem:[%s363 + $0x70] sm:$0xff] %v970
          %987 = vst [vmem:[%s363 + $0x78] sm:$0xff] %v971
        $region74: #{snn_vgg9_forward.73} parent=53 // pred_fallthru
          _
        %s988 = smul.u32 16, %s23
        %p989 = scmp.lt.s32.totalorder %s988, 15
        %s990 = scalar_select %p989, %s988, 15
        %p991 = scmp.lt.s32.totalorder %s24, 0
        %s992 = scalar_select %p991, %s24, 0
        %s993 = sadd.s32 %s992, %s990
        %s994 = smul.addr %s993, 8
        %s995 = scalar_lea.vmem %s3, %s994
        // Predicated region
        $region75: #{snn_vgg9_forward.73} parent=53 // pred_check
          %p996 = pneg %p139
        $region76: #{snn_vgg9_forward.73} parent=53 // pred_check_branch
          %998 = sbr.rel (%p996) target = $region78
        $region77: #{snn_vgg9_forward.73} parent=53 // pred_region
          %s999 = smul.u32 16, %s23
        $region78: #{snn_vgg9_forward.73} parent=53 // pred_fallthru
          _
        // Predicated region
        $region79: #{snn_vgg9_forward.73} parent=53 // pred_check
          %p1000 = pneg %p139
        $region80: #{snn_vgg9_forward.73} parent=53 // pred_check_branch
          %1002 = sbr.rel (%p1000) target = $region82
        $region81: #{snn_vgg9_forward.73} parent=53 // pred_region
          %s1003 = smul.u32 16, %s23
          %p1004 = scmp.lt.s32.totalorder %s1003, 15
          %s1005 = scalar_select %p1004, %s1003, 15
          %p1006 = scmp.lt.s32.totalorder %s24, 0
          %s1007 = scalar_select %p1006, %s24, 0
          %s1008 = sadd.s32 %s1007, %s1005
          %s1009 = smul.addr %s1008, 8
          %s1010 = scalar_lea.vmem %s3, %s1009
        $region82: #{snn_vgg9_forward.73} parent=53 // pred_fallthru
          _
      $region54: #{snn_vgg9_forward.73} parent=5 // pred_fallthru
        _
      %p1011 = scmp.le.s32.totalorder 2, %s13
      // Predicated region
      $region83: #{snn_vgg9_forward.73} parent=5 // pred_check
        %p1012 = pneg %p1011
      $region84: #{snn_vgg9_forward.73} parent=5 // pred_check_branch
        %1014 = sbr.rel (%p1012) target = $region86
      $region85: #{snn_vgg9_forward.73} parent=5 // pred_region
        %s1015 = ssub.s32 %s13, 2
      $region86: #{snn_vgg9_forward.73} parent=5 // pred_fallthru
        _
    $region6: #{snn_vgg9_forward.73} parent=1 // loop_footer
      %s17 = sadd.s32 1, %s13
    $region7: #{snn_vgg9_forward.73} parent=1 // loop_footer_branch
      %12 = sbr.rel target = $region3
    $region8: #{snn_vgg9_forward.73} parent=1 // loop_exit
      _
    %1016 = vsyncpa [#allocation5], 1
    %s1017 = scalar_lea.sflag [#allocation5], 1
    %1018 = vsyncpa %s1017, 1
    %1019 = vsyncpa [#allocation7], 1

// kernel: snn_vgg9_forward.51
$region0: #{snn_vgg9_forward.51}
  #allocation0 [shape = 'u32[]', space=smem, size = 0x4, offset = 0x4, fixed_abs, tag = 'smem constant byte address 0x4 - core index']
  #allocation1 [shape = 'u32[72,128]{1,0:T(1,128)}', space=vmem, size = 0x9000, scoped, tag = 'internal scratch']
  %s0 = inlined_call_operand.vmem [shape: f32[128,128], index: 0, kind: input, shape index: {}]
  %s1 = inlined_call_operand.vmem [shape: f32[1,128], index: 1, kind: input, shape index: {}]
  %s2 = inlined_call_operand.vmem [shape: f32[1,128], index: 2, kind: input, shape index: {}]
  %s3 = inlined_call_operand.hbm [shape: f32[1,128], index: 3, kind: input, shape index: {}]
  %s4 = inlined_call_operand.hbm [shape: f32[1,128], index: 4, kind: input, shape index: {}]
  %s5 = inlined_call_operand.vmem [shape: f32[128,128], index: 5, kind: input, shape index: {}, may-alias: {5,8}]
  %s6 = inlined_call_operand.vmem [shape: bf16[128,128], index: 6, kind: input, shape index: {}]
  %s7 = inlined_call_operand.hbm [shape: bf16[128,128], index: 7, kind: output, shape index: {0}]
  %s8 = inlined_call_operand.vmem [shape: f32[128,128], index: 8, kind: output, shape index: {1}, may-alias: {5,8}]
  %s9 = inlined_call_operand.vmem [shape: bf16[128,128], index: 9, kind: output, shape index: {2}]
  %10 = xla_tuple %s7, %s8, %s9
  %s11 = sld [smem:[#allocation0]]
  $region62: #{snn_vgg9_forward.51} parent=0
    _
  %s13 = ssub.s32 1, %s11
  %s14 = scalar_select 0, %s13, %s11
  $region1: #{snn_vgg9_forward.51} parent=0
    #allocation2 [shape = 'u8[512]{0}', space=vmem, size = 0x400, scoped, tag = 'input window, operand 3, single buffered']
    #allocation3 [shape = 's32[1]{0}', space=sflag, size = 0x4, scoped, tag = 'scoped memory for snn_vgg9_forward.51']
    #allocation4 [shape = 's32[1]{0}', space=sflag, size = 0x4, scoped, tag = 'scoped memory for snn_vgg9_forward.51']
    #allocation5 [shape = 'u8[512]{0}', space=vmem, size = 0x400, scoped, tag = 'input window, operand 4, single buffered']
    #allocation6 [shape = 's32[1]{0}', space=sflag, size = 0x4, scoped, tag = 'scoped memory for snn_vgg9_forward.51']
    #allocation7 [shape = 'u8[32768]{0}', space=vmem, size = 0x8000, scoped, tag = 'output window, operand 0, single buffered']
    %15 = vsyncpa [#allocation3], 0
    %16 = vsyncpa [#allocation6], 0
    %17 = vsyncpa [#allocation4], 0
    // Predicated region
    $region2: #{snn_vgg9_forward.51} parent=1 // pred_check
      _
    $region3: #{snn_vgg9_forward.51} parent=1 // pred_check_branch
      %19 = sbr.rel (0) target = $region5
    $region4: #{snn_vgg9_forward.51} parent=1 // pred_region
      _
    $region5: #{snn_vgg9_forward.51} parent=1 // pred_fallthru
      _
    // Predicated region
    $region6: #{snn_vgg9_forward.51} parent=1 // pred_check
      _
    $region7: #{snn_vgg9_forward.51} parent=1 // pred_check_branch
      %21 = sbr.rel (0) target = $region9
    $region8: #{snn_vgg9_forward.51} parent=1 // pred_region
      _
    $region9: #{snn_vgg9_forward.51} parent=1 // pred_fallthru
      _
    // Predicated region
    $region10: #{snn_vgg9_forward.51} parent=1 // pred_check
      _
    $region11: #{snn_vgg9_forward.51} parent=1 // pred_check_branch
      %23 = sbr.rel (0) target = $region13
    $region12: #{snn_vgg9_forward.51} parent=1 // pred_region
      _
    $region13: #{snn_vgg9_forward.51} parent=1 // pred_fallthru
      _
    // Predicated region
    $region14: #{snn_vgg9_forward.51} parent=1 // pred_check
      _
    $region15: #{snn_vgg9_forward.51} parent=1 // pred_check_branch
      %25 = sbr.rel (0) target = $region17
    $region16: #{snn_vgg9_forward.51} parent=1 // pred_region
      %27 = vsyncadd [#allocation3], 0
      %s29 = sshll.u32 %s3, 4
      %s30 = int_to_ptr.hbm [resolvable:$true] %s29
      %s31 = sshll.u32 [#allocation2], 4
      %s32 = int_to_ptr.vmem [resolvable:$true] %s31
      %34 = dma.hbm_to_vmem [thread:$0]  %s30, 16, %s32, [#allocation3]
    $region17: #{snn_vgg9_forward.51} parent=1 // pred_fallthru
      _
    // Predicated region
    $region18: #{snn_vgg9_forward.51} parent=1 // pred_check
      _
    $region19: #{snn_vgg9_forward.51} parent=1 // pred_check_branch
      %36 = sbr.rel (0) target = $region21
    $region20: #{snn_vgg9_forward.51} parent=1 // pred_region
      %38 = vsyncadd [#allocation6], 0
      %s40 = sshll.u32 %s4, 4
      %s41 = int_to_ptr.hbm [resolvable:$true] %s40
      %s42 = sshll.u32 [#allocation5], 4
      %s43 = int_to_ptr.vmem [resolvable:$true] %s42
      %45 = dma.hbm_to_vmem [thread:$0]  %s41, 16, %s43, [#allocation6]
    $region21: #{snn_vgg9_forward.51} parent=1 // pred_fallthru
      _
    // Predicated region
    $region22: #{snn_vgg9_forward.51} parent=1 // pred_check
      _
    $region23: #{snn_vgg9_forward.51} parent=1 // pred_check_branch
      %47 = sbr.rel (0) target = $region25
    $region24: #{snn_vgg9_forward.51} parent=1 // pred_region
      _
    $region25: #{snn_vgg9_forward.51} parent=1 // pred_fallthru
      _
    // Predicated region
    $region26: #{snn_vgg9_forward.51} parent=1 // pred_check
      _
    $region27: #{snn_vgg9_forward.51} parent=1 // pred_check_branch
      %49 = sbr.rel (0) target = $region29
    $region28: #{snn_vgg9_forward.51} parent=1 // pred_region
      _
    $region29: #{snn_vgg9_forward.51} parent=1 // pred_fallthru
      _
    // Predicated region
    $region30: #{snn_vgg9_forward.51} parent=1 // pred_check
      _
    $region31: #{snn_vgg9_forward.51} parent=1 // pred_check_branch
      %51 = sbr.rel (0) target = $region33
    $region32: #{snn_vgg9_forward.51} parent=1 // pred_region
      %53 = dma.done [#allocation3], 16
    $region33: #{snn_vgg9_forward.51} parent=1 // pred_fallthru
      _
    // Predicated region
    $region34: #{snn_vgg9_forward.51} parent=1 // pred_check
      _
    $region35: #{snn_vgg9_forward.51} parent=1 // pred_check_branch
      %55 = sbr.rel (0) target = $region37
    $region36: #{snn_vgg9_forward.51} parent=1 // pred_region
      %57 = dma.done [#allocation6], 16
    $region37: #{snn_vgg9_forward.51} parent=1 // pred_fallthru
      _
    %v58 = vld [vmem:[%s0] sm:$0xff]
    %v59 = vld [vmem:[%s0 + $0x8] sm:$0xff]
    %v60 = vld [vmem:[%s0 + $0x10] sm:$0xff]
    %v61 = vld [vmem:[%s0 + $0x18] sm:$0xff]
    %v62 = vld [vmem:[%s0 + $0x20] sm:$0xff]
    %v63 = vld [vmem:[%s0 + $0x28] sm:$0xff]
    %v64 = vld [vmem:[%s0 + $0x30] sm:$0xff]
    %v65 = vld [vmem:[%s0 + $0x38] sm:$0xff]
    %v66 = vld [vmem:[%s0 + $0x40] sm:$0xff]
    %v67 = vld [vmem:[%s0 + $0x48] sm:$0xff]
    %v68 = vld [vmem:[%s0 + $0x50] sm:$0xff]
    %v69 = vld [vmem:[%s0 + $0x58] sm:$0xff]
    %v70 = vld [vmem:[%s0 + $0x60] sm:$0xff]
    %v71 = vld [vmem:[%s0 + $0x68] sm:$0xff]
    %v72 = vld [vmem:[%s0 + $0x70] sm:$0xff]
    %v73 = vld [vmem:[%s0 + $0x78] sm:$0xff]
    %v74 = vld [vmem:[%s1] sm:$0x1]
    %v75 = vld [vmem:[%s2] sm:$0x1]
    %v76 = vld [vmem:[#allocation2] sm:$0x1]
    %v77 = vld [vmem:[#allocation5] sm:$0x1]
    %v78 = vld [vmem:[%s5] sm:$0xff]
    %v79 = vld [vmem:[%s5 + $0x8] sm:$0xff]
    %v80 = vld [vmem:[%s5 + $0x10] sm:$0xff]
    %v81 = vld [vmem:[%s5 + $0x18] sm:$0xff]
    %v82 = vld [vmem:[%s5 + $0x20] sm:$0xff]
    %v83 = vld [vmem:[%s5 + $0x28] sm:$0xff]
    %v84 = vld [vmem:[%s5 + $0x30] sm:$0xff]
    %v85 = vld [vmem:[%s5 + $0x38] sm:$0xff]
    %v86 = vld [vmem:[%s5 + $0x40] sm:$0xff]
    %v87 = vld [vmem:[%s5 + $0x48] sm:$0xff]
    %v88 = vld [vmem:[%s5 + $0x50] sm:$0xff]
    %v89 = vld [vmem:[%s5 + $0x58] sm:$0xff]
    %v90 = vld [vmem:[%s5 + $0x60] sm:$0xff]
    %v91 = vld [vmem:[%s5 + $0x68] sm:$0xff]
    %v92 = vld [vmem:[%s5 + $0x70] sm:$0xff]
    %v93 = vld [vmem:[%s5 + $0x78] sm:$0xff]
    %v94 = vmul.f32 %v74, 0.0078125
    %v95 = vmul.f32 %v75, 0.0078125
    %v96 = vmul.f32 %v94, %v94
    %v97 = vsub.f32 %v95, %v96
    %v98 = vmax.f32 %v97, 0.0
    %v99 = vadd.f32 %v98, 0.0001
    %v100 = vrsqrt.pop %v99
    %v101 = vmul.f32 %v100, %v99
    %v102 = vmul.f32 %v101, %v100
    %v103 = vmul.f32 0.5, %v102
    %v104 = vsub.f32 1.5, %v103
    %v105 = vmul.f32 %v100, %v104
    %vm106 = vweird.f32 %v99
    %vm107 = vweird.f32 %v100
    %vm108 = vmor %vm106, %vm107
    %v109 = vsel %vm108, %v100, %v105
    %v110 = vmul.f32 %v76, %v109
    %v111 = vmul.f32 %v94, %v110
    %v112 = vsub.f32 %v77, %v111
    %v114 = vperm.slane %v110, 0
    %v116 = vmul.f32 %v58, %v114
    %v117 = vmul.f32 %v59, %v114
    %v118 = vmul.f32 %v60, %v114
    %v119 = vmul.f32 %v61, %v114
    %v120 = vmul.f32 %v62, %v114
    %v121 = vmul.f32 %v63, %v114
    %v122 = vmul.f32 %v64, %v114
    %v123 = vmul.f32 %v65, %v114
    %v124 = vmul.f32 %v66, %v114
    %v125 = vmul.f32 %v67, %v114
    %v126 = vmul.f32 %v68, %v114
    %v127 = vmul.f32 %v69, %v114
    %v128 = vmul.f32 %v70, %v114
    %v129 = vmul.f32 %v71, %v114
    %v130 = vmul.f32 %v72, %v114
    %v131 = vmul.f32 %v73, %v114
    %v132 = vadd.f32 %v78, %v116
    %v133 = vadd.f32 %v79, %v117
    %v134 = vadd.f32 %v80, %v118
    %v135 = vadd.f32 %v81, %v119
    %v136 = vadd.f32 %v82, %v120
    %v137 = vadd.f32 %v83, %v121
    %v138 = vadd.f32 %v84, %v122
    %v139 = vadd.f32 %v85, %v123
    %v140 = vadd.f32 %v86, %v124
    %v141 = vadd.f32 %v87, %v125
    %v142 = vadd.f32 %v88, %v126
    %v143 = vadd.f32 %v89, %v127
    %v144 = vadd.f32 %v90, %v128
    %v145 = vadd.f32 %v91, %v129
    %v146 = vadd.f32 %v92, %v130
    %v147 = vadd.f32 %v93, %v131
    %v149 = vperm.slane %v112, 0
    %v151 = vadd.f32 %v132, %v149
    %v152 = vadd.f32 %v133, %v149
    %v153 = vadd.f32 %v134, %v149
    %v154 = vadd.f32 %v135, %v149
    %v155 = vadd.f32 %v136, %v149
    %v156 = vadd.f32 %v137, %v149
    %v157 = vadd.f32 %v138, %v149
    %v158 = vadd.f32 %v139, %v149
    %v159 = vadd.f32 %v140, %v149
    %v160 = vadd.f32 %v141, %v149
    %v161 = vadd.f32 %v142, %v149
    %v162 = vadd.f32 %v143, %v149
    %v163 = vadd.f32 %v144, %v149
    %v164 = vadd.f32 %v145, %v149
    %v165 = vadd.f32 %v146, %v149
    %v166 = vadd.f32 %v147, %v149
    %v167 = vsub.f32 %v151, 1.0
    %v168 = vsub.f32 %v152, 1.0
    %v169 = vsub.f32 %v153, 1.0
    %v170 = vsub.f32 %v154, 1.0
    %v171 = vsub.f32 %v155, 1.0
    %v172 = vsub.f32 %v156, 1.0
    %v173 = vsub.f32 %v157, 1.0
    %v174 = vsub.f32 %v158, 1.0
    %v175 = vsub.f32 %v159, 1.0
    %v176 = vsub.f32 %v160, 1.0
    %v177 = vsub.f32 %v161, 1.0
    %v178 = vsub.f32 %v162, 1.0
    %v179 = vsub.f32 %v163, 1.0
    %v180 = vsub.f32 %v164, 1.0
    %v181 = vsub.f32 %v165, 1.0
    %v182 = vsub.f32 %v166, 1.0
    %vm183 = vcmp.ge.f32.partialorder %v167, 0.0
    %vm184 = vcmp.ge.f32.partialorder %v168, 0.0
    %vm185 = vcmp.ge.f32.partialorder %v169, 0.0
    %vm186 = vcmp.ge.f32.partialorder %v170, 0.0
    %vm187 = vcmp.ge.f32.partialorder %v171, 0.0
    %vm188 = vcmp.ge.f32.partialorder %v172, 0.0
    %vm189 = vcmp.ge.f32.partialorder %v173, 0.0
    %vm190 = vcmp.ge.f32.partialorder %v174, 0.0
    %vm191 = vcmp.ge.f32.partialorder %v175, 0.0
    %vm192 = vcmp.ge.f32.partialorder %v176, 0.0
    %vm193 = vcmp.ge.f32.partialorder %v177, 0.0
    %vm194 = vcmp.ge.f32.partialorder %v178, 0.0
    %vm195 = vcmp.ge.f32.partialorder %v179, 0.0
    %vm196 = vcmp.ge.f32.partialorder %v180, 0.0
    %vm197 = vcmp.ge.f32.partialorder %v181, 0.0
    %vm198 = vcmp.ge.f32.partialorder %v182, 0.0
    %v199 = vsel %vm183, 1.0, 0.0
    %v200 = vsel %vm184, 1.0, 0.0
    %v201 = vsel %vm185, 1.0, 0.0
    %v202 = vsel %vm186, 1.0, 0.0
    %v203 = vsel %vm187, 1.0, 0.0
    %v204 = vsel %vm188, 1.0, 0.0
    %v205 = vsel %vm189, 1.0, 0.0
    %v206 = vsel %vm190, 1.0, 0.0
    %v207 = vsel %vm191, 1.0, 0.0
    %v208 = vsel %vm192, 1.0, 0.0
    %v209 = vsel %vm193, 1.0, 0.0
    %v210 = vsel %vm194, 1.0, 0.0
    %v211 = vsel %vm195, 1.0, 0.0
    %v212 = vsel %vm196, 1.0, 0.0
    %v213 = vsel %vm197, 1.0, 0.0
    %v214 = vsel %vm198, 1.0, 0.0
    %vm215 = vcmp.gt.f32.partialorder %v167, 0.0
    %vm216 = vcmp.gt.f32.partialorder %v168, 0.0
    %vm217 = vcmp.gt.f32.partialorder %v169, 0.0
    %vm218 = vcmp.gt.f32.partialorder %v170, 0.0
    %vm219 = vcmp.gt.f32.partialorder %v171, 0.0
    %vm220 = vcmp.gt.f32.partialorder %v172, 0.0
    %vm221 = vcmp.gt.f32.partialorder %v173, 0.0
    %vm222 = vcmp.gt.f32.partialorder %v174, 0.0
    %vm223 = vcmp.gt.f32.partialorder %v175, 0.0
    %vm224 = vcmp.gt.f32.partialorder %v176, 0.0
    %vm225 = vcmp.gt.f32.partialorder %v177, 0.0
    %vm226 = vcmp.gt.f32.partialorder %v178, 0.0
    %vm227 = vcmp.gt.f32.partialorder %v179, 0.0
    %vm228 = vcmp.gt.f32.partialorder %v180, 0.0
    %vm229 = vcmp.gt.f32.partialorder %v181, 0.0
    %vm230 = vcmp.gt.f32.partialorder %v182, 0.0
    %v231 = vsel %vm215, 1.0, 0.0
    %v232 = vsel %vm216, 1.0, 0.0
    %v233 = vsel %vm217, 1.0, 0.0
    %v234 = vsel %vm218, 1.0, 0.0
    %v235 = vsel %vm219, 1.0, 0.0
    %v236 = vsel %vm220, 1.0, 0.0
    %v237 = vsel %vm221, 1.0, 0.0
    %v238 = vsel %vm222, 1.0, 0.0
    %v239 = vsel %vm223, 1.0, 0.0
    %v240 = vsel %vm224, 1.0, 0.0
    %v241 = vsel %vm225, 1.0, 0.0
    %v242 = vsel %vm226, 1.0, 0.0
    %v243 = vsel %vm227, 1.0, 0.0
    %v244 = vsel %vm228, 1.0, 0.0
    %v245 = vsel %vm229, 1.0, 0.0
    %v246 = vsel %vm230, 1.0, 0.0
    %v247 = vsub.f32 %v151, %v231
    %v248 = vsub.f32 %v152, %v232
    %v249 = vsub.f32 %v153, %v233
    %v250 = vsub.f32 %v154, %v234
    %v251 = vsub.f32 %v155, %v235
    %v252 = vsub.f32 %v156, %v236
    %v253 = vsub.f32 %v157, %v237
    %v254 = vsub.f32 %v158, %v238
    %v255 = vsub.f32 %v159, %v239
    %v256 = vsub.f32 %v160, %v240
    %v257 = vsub.f32 %v161, %v241
    %v258 = vsub.f32 %v162, %v242
    %v259 = vsub.f32 %v163, %v243
    %v260 = vsub.f32 %v164, %v244
    %v261 = vsub.f32 %v165, %v245
    %v262 = vsub.f32 %v166, %v246
    %v263 = vpack.c.bf16 %v199, %v199
    %v264 = vpack.c.bf16 %v200, %v200
    %v265 = vpack.c.bf16 %v201, %v201
    %v266 = vpack.c.bf16 %v202, %v202
    %v267 = vpack.c.bf16 %v203, %v203
    %v268 = vpack.c.bf16 %v204, %v204
    %v269 = vpack.c.bf16 %v205, %v205
    %v270 = vpack.c.bf16 %v206, %v206
    %v271 = vpack.c.bf16 %v207, %v207
    %v272 = vpack.c.bf16 %v208, %v208
    %v273 = vpack.c.bf16 %v209, %v209
    %v274 = vpack.c.bf16 %v210, %v210
    %v275 = vpack.c.bf16 %v211, %v211
    %v276 = vpack.c.bf16 %v212, %v212
    %v277 = vpack.c.bf16 %v213, %v213
    %v278 = vpack.c.bf16 %v214, %v214
    %279 = vst [vmem:[#allocation7] sm:$0xf] %v263
    %280 = vst [vmem:[#allocation7 + $0x4] sm:$0xf] %v264
    %281 = vst [vmem:[#allocation7 + $0x8] sm:$0xf] %v265
    %282 = vst [vmem:[#allocation7 + $0xc] sm:$0xf] %v266
    %283 = vst [vmem:[#allocation7 + $0x10] sm:$0xf] %v267
    %284 = vst [vmem:[#allocation7 + $0x14] sm:$0xf] %v268
    %285 = vst [vmem:[#allocation7 + $0x18] sm:$0xf] %v269
    %286 = vst [vmem:[#allocation7 + $0x1c] sm:$0xf] %v270
    %287 = vst [vmem:[#allocation7 + $0x20] sm:$0xf] %v271
    %288 = vst [vmem:[#allocation7 + $0x24] sm:$0xf] %v272
    %289 = vst [vmem:[#allocation7 + $0x28] sm:$0xf] %v273
    %290 = vst [vmem:[#allocation7 + $0x2c] sm:$0xf] %v274
    %291 = vst [vmem:[#allocation7 + $0x30] sm:$0xf] %v275
    %292 = vst [vmem:[#allocation7 + $0x34] sm:$0xf] %v276
    %293 = vst [vmem:[#allocation7 + $0x38] sm:$0xf] %v277
    %294 = vst [vmem:[#allocation7 + $0x3c] sm:$0xf] %v278
    %295 = vst [vmem:[%s8] sm:$0xff] %v247
    %296 = vst [vmem:[%s8 + $0x8] sm:$0xff] %v248
    %297 = vst [vmem:[%s8 + $0x10] sm:$0xff] %v249
    %298 = vst [vmem:[%s8 + $0x18] sm:$0xff] %v250
    %299 = vst [vmem:[%s8 + $0x20] sm:$0xff] %v251
    %300 = vst [vmem:[%s8 + $0x28] sm:$0xff] %v252
    %301 = vst [vmem:[%s8 + $0x30] sm:$0xff] %v253
    %302 = vst [vmem:[%s8 + $0x38] sm:$0xff] %v254
    %303 = vst [vmem:[%s8 + $0x40] sm:$0xff] %v255
    %304 = vst [vmem:[%s8 + $0x48] sm:$0xff] %v256
    %305 = vst [vmem:[%s8 + $0x50] sm:$0xff] %v257
    %306 = vst [vmem:[%s8 + $0x58] sm:$0xff] %v258
    %307 = vst [vmem:[%s8 + $0x60] sm:$0xff] %v259
    %308 = vst [vmem:[%s8 + $0x68] sm:$0xff] %v260
    %309 = vst [vmem:[%s8 + $0x70] sm:$0xff] %v261
    %310 = vst [vmem:[%s8 + $0x78] sm:$0xff] %v262
    %v311 = vld [vmem:[%s6] sm:$0xf]
    %v312 = vld [vmem:[%s6 + $0x4] sm:$0xf]
    %v313 = vld [vmem:[%s6 + $0x8] sm:$0xf]
    %v314 = vld [vmem:[%s6 + $0xc] sm:$0xf]
    %v315 = vld [vmem:[%s6 + $0x10] sm:$0xf]
    %v316 = vld [vmem:[%s6 + $0x14] sm:$0xf]
    %v317 = vld [vmem:[%s6 + $0x18] sm:$0xf]
    %v318 = vld [vmem:[%s6 + $0x1c] sm:$0xf]
    %v319 = vld [vmem:[%s6 + $0x20] sm:$0xf]
    %v320 = vld [vmem:[%s6 + $0x24] sm:$0xf]
    %v321 = vld [vmem:[%s6 + $0x28] sm:$0xf]
    %v322 = vld [vmem:[%s6 + $0x2c] sm:$0xf]
    %v323 = vld [vmem:[%s6 + $0x30] sm:$0xf]
    %v324 = vld [vmem:[%s6 + $0x34] sm:$0xf]
    %v325 = vld [vmem:[%s6 + $0x38] sm:$0xf]
    %v326 = vld [vmem:[%s6 + $0x3c] sm:$0xf]
    %v327 = vunpack.c.l.bf16 %v311
    %v328 = vunpack.c.l.bf16 %v312
    %v329 = vunpack.c.l.bf16 %v313
    %v330 = vunpack.c.l.bf16 %v314
    %v331 = vunpack.c.l.bf16 %v315
    %v332 = vunpack.c.l.bf16 %v316
    %v333 = vunpack.c.l.bf16 %v317
    %v334 = vunpack.c.l.bf16 %v318
    %v335 = vunpack.c.l.bf16 %v319
    %v336 = vunpack.c.l.bf16 %v320
    %v337 = vunpack.c.l.bf16 %v321
    %v338 = vunpack.c.l.bf16 %v322
    %v339 = vunpack.c.l.bf16 %v323
    %v340 = vunpack.c.l.bf16 %v324
    %v341 = vunpack.c.l.bf16 %v325
    %v342 = vunpack.c.l.bf16 %v326
    %v343 = vadd.f32 %v199, %v327
    %v344 = vadd.f32 %v200, %v328
    %v345 = vadd.f32 %v201, %v329
    %v346 = vadd.f32 %v202, %v330
    %v347 = vadd.f32 %v203, %v331
    %v348 = vadd.f32 %v204, %v332
    %v349 = vadd.f32 %v205, %v333
    %v350 = vadd.f32 %v206, %v334
    %v351 = vadd.f32 %v207, %v335
    %v352 = vadd.f32 %v208, %v336
    %v353 = vadd.f32 %v209, %v337
    %v354 = vadd.f32 %v210, %v338
    %v355 = vadd.f32 %v211, %v339
    %v356 = vadd.f32 %v212, %v340
    %v357 = vadd.f32 %v213, %v341
    %v358 = vadd.f32 %v214, %v342
    %v359 = vpack.c.bf16 %v343, %v343
    %v360 = vpack.c.bf16 %v344, %v344
    %v361 = vpack.c.bf16 %v345, %v345
    %v362 = vpack.c.bf16 %v346, %v346
    %v363 = vpack.c.bf16 %v347, %v347
    %v364 = vpack.c.bf16 %v348, %v348
    %v365 = vpack.c.bf16 %v349, %v349
    %v366 = vpack.c.bf16 %v350, %v350
    %v367 = vpack.c.bf16 %v351, %v351
    %v368 = vpack.c.bf16 %v352, %v352
    %v369 = vpack.c.bf16 %v353, %v353
    %v370 = vpack.c.bf16 %v354, %v354
    %v371 = vpack.c.bf16 %v355, %v355
    %v372 = vpack.c.bf16 %v356, %v356
    %v373 = vpack.c.bf16 %v357, %v357
    %v374 = vpack.c.bf16 %v358, %v358
    %375 = vst [vmem:[%s9] sm:$0xf] %v359
    %376 = vst [vmem:[%s9 + $0x4] sm:$0xf] %v360
    %377 = vst [vmem:[%s9 + $0x8] sm:$0xf] %v361
    %378 = vst [vmem:[%s9 + $0xc] sm:$0xf] %v362
    %379 = vst [vmem:[%s9 + $0x10] sm:$0xf] %v363
    %380 = vst [vmem:[%s9 + $0x14] sm:$0xf] %v364
    %381 = vst [vmem:[%s9 + $0x18] sm:$0xf] %v365
    %382 = vst [vmem:[%s9 + $0x1c] sm:$0xf] %v366
    %383 = vst [vmem:[%s9 + $0x20] sm:$0xf] %v367
    %384 = vst [vmem:[%s9 + $0x24] sm:$0xf] %v368
    %385 = vst [vmem:[%s9 + $0x28] sm:$0xf] %v369
    %386 = vst [vmem:[%s9 + $0x2c] sm:$0xf] %v370
    %387 = vst [vmem:[%s9 + $0x30] sm:$0xf] %v371
    %388 = vst [vmem:[%s9 + $0x34] sm:$0xf] %v372
    %389 = vst [vmem:[%s9 + $0x38] sm:$0xf] %v373
    %390 = vst [vmem:[%s9 + $0x3c] sm:$0xf] %v374
    // Predicated region
    $region38: #{snn_vgg9_forward.51} parent=1 // pred_check
      _
    $region39: #{snn_vgg9_forward.51} parent=1 // pred_check_branch
      %392 = sbr.rel (0) target = $region41
    $region40: #{snn_vgg9_forward.51} parent=1 // pred_region
      %394 = vsyncadd [#allocation4], 0
      %s395 = sshll.u32 [#allocation7], 4
      %s396 = int_to_ptr.vmem [resolvable:$true] %s395
      %s397 = sshll.u32 %s7, 4
      %s398 = int_to_ptr.hbm [resolvable:$true] %s397
      %403 = dma.vmem_to_hbm [thread:$0]  %s396, 1024, %s398, [#allocation4], 64, 64, 4
    $region41: #{snn_vgg9_forward.51} parent=1 // pred_fallthru
      _
    // Predicated region
    $region42: #{snn_vgg9_forward.51} parent=1 // pred_check
      _
    $region43: #{snn_vgg9_forward.51} parent=1 // pred_check_branch
      %405 = sbr.rel (0) target = $region45
    $region44: #{snn_vgg9_forward.51} parent=1 // pred_region
      _
    $region45: #{snn_vgg9_forward.51} parent=1 // pred_fallthru
      _
    // Predicated region
    $region46: #{snn_vgg9_forward.51} parent=1 // pred_check
      _
    $region47: #{snn_vgg9_forward.51} parent=1 // pred_check_branch
      %407 = sbr.rel (0) target = $region49
    $region48: #{snn_vgg9_forward.51} parent=1 // pred_region
      _
    $region49: #{snn_vgg9_forward.51} parent=1 // pred_fallthru
      _
    // Predicated region
    $region50: #{snn_vgg9_forward.51} parent=1 // pred_check
      _
    $region51: #{snn_vgg9_forward.51} parent=1 // pred_check_branch
      %409 = sbr.rel (0) target = $region53
    $region52: #{snn_vgg9_forward.51} parent=1 // pred_region
      %411 = dma.done [#allocation4], 1024
    $region53: #{snn_vgg9_forward.51} parent=1 // pred_fallthru
      _
    // Predicated region
    $region54: #{snn_vgg9_forward.51} parent=1 // pred_check
      _
    $region55: #{snn_vgg9_forward.51} parent=1 // pred_check_branch
      %413 = sbr.rel (0) target = $region57
    $region56: #{snn_vgg9_forward.51} parent=1 // pred_region
      _
    $region57: #{snn_vgg9_forward.51} parent=1 // pred_fallthru
      _
    // Predicated region
    $region58: #{snn_vgg9_forward.51} parent=1 // pred_check
      _
    $region59: #{snn_vgg9_forward.51} parent=1 // pred_check_branch
      %415 = sbr.rel (0) target = $region61
    $region60: #{snn_vgg9_forward.51} parent=1 // pred_region
      _
    $region61: #{snn_vgg9_forward.51} parent=1 // pred_fallthru
      _
    %416 = vsyncpa [#allocation3], 1
    %417 = vsyncpa [#allocation6], 1
    %418 = vsyncpa [#allocation4], 1

// kernel: snn_vgg9_forward.89
$region0: #{snn_vgg9_forward.89}
  #allocation0 [shape = 'u32[]', space=smem, size = 0x4, offset = 0x4, fixed_abs, tag = 'smem constant byte address 0x4 - core index']
  #allocation1 [shape = 'u32[72,128]{1,0:T(1,128)}', space=vmem, size = 0x9000, scoped, tag = 'internal scratch']
  %s0 = inlined_call_operand.vmem [shape: f32[128,256], index: 0, kind: input, shape index: {}]
  %s1 = inlined_call_operand.vmem [shape: f32[1,256], index: 1, kind: output, shape index: {0}]
  %s2 = inlined_call_operand.vmem [shape: f32[1,256], index: 2, kind: output, shape index: {1}]
  %3 = xla_tuple %s1, %s2
  %s4 = sld [smem:[#allocation0]]
  $region26: #{snn_vgg9_forward.89} parent=0
    _
  %s6 = ssub.s32 1, %s4
  %s7 = scalar_select 0, %s6, %s4
  // Predicated region
  $region2: #{snn_vgg9_forward.89} parent=0 // pred_check
    _
  $region3: #{snn_vgg9_forward.89} parent=0 // pred_check_branch
    %9 = sbr.rel (0) target = $region5
  $region4: #{snn_vgg9_forward.89} parent=0 // pred_region
    _
  $region5: #{snn_vgg9_forward.89} parent=0 // pred_fallthru
    _
  %p10 = scmp.eq.s32.totalorder 0, 0
  // Predicated region
  $region6: #{snn_vgg9_forward.89} parent=0 // pred_check
    %p11 = pneg %p10
  $region7: #{snn_vgg9_forward.89} parent=0 // pred_check_branch
    %13 = sbr.rel (%p11) target = $region9
  $region8: #{snn_vgg9_forward.89} parent=0 // pred_region
    %v14 = vlaneseq
    %vm15 = vcmp.ge.s32.totalorder %v14, 0
    %vm16 = vcmp.lt.s32.totalorder %v14, 256
    %vm17 = vmand %vm15, %vm16
    %18 = vst.msk [vmem:[%s1] sm:$0x3] %vm17, 0.0
    %19 = vst.msk [vmem:[%s2] sm:$0x3] %vm17, 0.0
  $region9: #{snn_vgg9_forward.89} parent=0 // pred_fallthru
    _
  %v20 = vld [vmem:[%s0] sm:$0xff]
  %v21 = vld [vmem:[%s0 + $0x8] sm:$0xff]
  %v22 = vld [vmem:[%s0 + $0x10] sm:$0xff]
  %v23 = vld [vmem:[%s0 + $0x18] sm:$0xff]
  %v24 = vld [vmem:[%s0 + $0x20] sm:$0xff]
  %v25 = vld [vmem:[%s0 + $0x28] sm:$0xff]
  %v26 = vld [vmem:[%s0 + $0x30] sm:$0xff]
  %v27 = vld [vmem:[%s0 + $0x38] sm:$0xff]
  %v28 = vld [vmem:[%s0 + $0x40] sm:$0xff]
  %v29 = vld [vmem:[%s0 + $0x48] sm:$0xff]
  %v30 = vld [vmem:[%s0 + $0x50] sm:$0xff]
  %v31 = vld [vmem:[%s0 + $0x58] sm:$0xff]
  %v32 = vld [vmem:[%s0 + $0x60] sm:$0xff]
  %v33 = vld [vmem:[%s0 + $0x68] sm:$0xff]
  %v34 = vld [vmem:[%s0 + $0x70] sm:$0xff]
  %v35 = vld [vmem:[%s0 + $0x78] sm:$0xff]
  %v36 = vld [vmem:[%s0 + $0x80] sm:$0xff]
  %v37 = vld [vmem:[%s0 + $0x88] sm:$0xff]
  %v38 = vld [vmem:[%s0 + $0x90] sm:$0xff]
  %v39 = vld [vmem:[%s0 + $0x98] sm:$0xff]
  %v40 = vld [vmem:[%s0 + $0xa0] sm:$0xff]
  %v41 = vld [vmem:[%s0 + $0xa8] sm:$0xff]
  %v42 = vld [vmem:[%s0 + $0xb0] sm:$0xff]
  %v43 = vld [vmem:[%s0 + $0xb8] sm:$0xff]
  %v44 = vld [vmem:[%s0 + $0xc0] sm:$0xff]
  %v45 = vld [vmem:[%s0 + $0xc8] sm:$0xff]
  %v46 = vld [vmem:[%s0 + $0xd0] sm:$0xff]
  %v47 = vld [vmem:[%s0 + $0xd8] sm:$0xff]
  %v48 = vld [vmem:[%s0 + $0xe0] sm:$0xff]
  %v49 = vld [vmem:[%s0 + $0xe8] sm:$0xff]
  %v50 = vld [vmem:[%s0 + $0xf0] sm:$0xff]
  %v51 = vld [vmem:[%s0 + $0xf8] sm:$0xff]
  %v52 = vld [vmem:[%s1] sm:$0x3]
  %v53 = vadd.f32 %v20, %v22
  %v54 = vadd.f32 %v53, %v24
  %v55 = vadd.f32 %v54, %v26
  %v56 = vadd.f32 %v55, %v28
  %v57 = vadd.f32 %v56, %v30
  %v58 = vadd.f32 %v57, %v32
  %v59 = vadd.f32 %v58, %v34
  %v60 = vadd.f32 %v59, %v36
  %v61 = vadd.f32 %v60, %v38
  %v62 = vadd.f32 %v61, %v40
  %v63 = vadd.f32 %v62, %v42
  %v64 = vadd.f32 %v63, %v44
  %v65 = vadd.f32 %v64, %v46
  %v66 = vadd.f32 %v65, %v48
  %v67 = vadd.f32 %v66, %v50
  %v68 = vrot.slane %v67, 4
  %v69 = vadd.f32 %v67, %v68
  %v70 = vrot.slane %v69, 2
  %v71 = vadd.f32 %v69, %v70
  %v72 = vrot.slane %v71, 1
  %v73 = vadd.f32 %v71, %v72
  %v74 = vadd.f32 %v21, %v23
  %v75 = vadd.f32 %v74, %v25
  %v76 = vadd.f32 %v75, %v27
  %v77 = vadd.f32 %v76, %v29
  %v78 = vadd.f32 %v77, %v31
  %v79 = vadd.f32 %v78, %v33
  %v80 = vadd.f32 %v79, %v35
  %v81 = vadd.f32 %v80, %v37
  %v82 = vadd.f32 %v81, %v39
  %v83 = vadd.f32 %v82, %v41
  %v84 = vadd.f32 %v83, %v43
  %v85 = vadd.f32 %v84, %v45
  %v86 = vadd.f32 %v85, %v47
  %v87 = vadd.f32 %v86, %v49
  %v88 = vadd.f32 %v87, %v51
  %v89 = vrot.slane %v88, 4
  %v90 = vadd.f32 %v88, %v89
  %v91 = vrot.slane %v90, 2
  %v92 = vadd.f32 %v90, %v91
  %v93 = vrot.slane %v92, 1
  %v94 = vadd.f32 %v92, %v93
  %v97 = vrot.slane %v94, 7
  %vm98 = vcmask 1040384
  %v99 = vsel %vm98, %v73, %v97
  %v101 = vadd.f32 %v52, %v99
  %v102 = vlaneseq
  %vm103 = vcmp.ge.s32.totalorder %v102, 0
  %vm104 = vcmp.lt.s32.totalorder %v102, 256
  %vm105 = vmand %vm103, %vm104
  %106 = vst.msk [vmem:[%s1] sm:$0x3] %vm105, %v101
  %v107 = vld [vmem:[%s2] sm:$0x3]
  %v108 = vmul.f32 %v20, %v20
  %v109 = vmul.f32 %v21, %v21
  %v110 = vmul.f32 %v22, %v22
  %v111 = vmul.f32 %v23, %v23
  %v112 = vmul.f32 %v24, %v24
  %v113 = vmul.f32 %v25, %v25
  %v114 = vmul.f32 %v26, %v26
  %v115 = vmul.f32 %v27, %v27
  %v116 = vmul.f32 %v28, %v28
  %v117 = vmul.f32 %v29, %v29
  %v118 = vmul.f32 %v30, %v30
  %v119 = vmul.f32 %v31, %v31
  %v120 = vmul.f32 %v32, %v32
  %v121 = vmul.f32 %v33, %v33
  %v122 = vmul.f32 %v34, %v34
  %v123 = vmul.f32 %v35, %v35
  %v124 = vmul.f32 %v36, %v36
  %v125 = vmul.f32 %v37, %v37
  %v126 = vmul.f32 %v38, %v38
  %v127 = vmul.f32 %v39, %v39
  %v128 = vmul.f32 %v40, %v40
  %v129 = vmul.f32 %v41, %v41
  %v130 = vmul.f32 %v42, %v42
  %v131 = vmul.f32 %v43, %v43
  %v132 = vmul.f32 %v44, %v44
  %v133 = vmul.f32 %v45, %v45
  %v134 = vmul.f32 %v46, %v46
  %v135 = vmul.f32 %v47, %v47
  %v136 = vmul.f32 %v48, %v48
  %v137 = vmul.f32 %v49, %v49
  %v138 = vmul.f32 %v50, %v50
  %v139 = vmul.f32 %v51, %v51
  %v140 = vadd.f32 %v108, %v110
  %v141 = vadd.f32 %v140, %v112
  %v142 = vadd.f32 %v141, %v114
  %v143 = vadd.f32 %v142, %v116
  %v144 = vadd.f32 %v143, %v118
  %v145 = vadd.f32 %v144, %v120
  %v146 = vadd.f32 %v145, %v122
  %v147 = vadd.f32 %v146, %v124
  %v148 = vadd.f32 %v147, %v126
  %v149 = vadd.f32 %v148, %v128
  %v150 = vadd.f32 %v149, %v130
  %v151 = vadd.f32 %v150, %v132
  %v152 = vadd.f32 %v151, %v134
  %v153 = vadd.f32 %v152, %v136
  %v154 = vadd.f32 %v153, %v138
  %v155 = vrot.slane %v154, 4
  %v156 = vadd.f32 %v154, %v155
  %v157 = vrot.slane %v156, 2
  %v158 = vadd.f32 %v156, %v157
  %v159 = vrot.slane %v158, 1
  %v160 = vadd.f32 %v158, %v159
  %v161 = vadd.f32 %v109, %v111
  %v162 = vadd.f32 %v161, %v113
  %v163 = vadd.f32 %v162, %v115
  %v164 = vadd.f32 %v163, %v117
  %v165 = vadd.f32 %v164, %v119
  %v166 = vadd.f32 %v165, %v121
  %v167 = vadd.f32 %v166, %v123
  %v168 = vadd.f32 %v167, %v125
  %v169 = vadd.f32 %v168, %v127
  %v170 = vadd.f32 %v169, %v129
  %v171 = vadd.f32 %v170, %v131
  %v172 = vadd.f32 %v171, %v133
  %v173 = vadd.f32 %v172, %v135
  %v174 = vadd.f32 %v173, %v137
  %v175 = vadd.f32 %v174, %v139
  %v176 = vrot.slane %v175, 4
  %v177 = vadd.f32 %v175, %v176
  %v178 = vrot.slane %v177, 2
  %v179 = vadd.f32 %v177, %v178
  %v180 = vrot.slane %v179, 1
  %v181 = vadd.f32 %v179, %v180
  %v184 = vrot.slane %v181, 7
  %v185 = vsel %vm98, %v160, %v184
  %v187 = vadd.f32 %v107, %v185
  %188 = vst.msk [vmem:[%s2] sm:$0x3] %vm105, %v187
  // Predicated region
  $region10: #{snn_vgg9_forward.89} parent=0 // pred_check
    _
  $region11: #{snn_vgg9_forward.89} parent=0 // pred_check_branch
    %190 = sbr.rel (0) target = $region13
  $region12: #{snn_vgg9_forward.89} parent=0 // pred_region
    _
  $region13: #{snn_vgg9_forward.89} parent=0 // pred_fallthru
    _
  // Predicated region
  $region14: #{snn_vgg9_forward.89} parent=0 // pred_check
    _
  $region15: #{snn_vgg9_forward.89} parent=0 // pred_check_branch
    %192 = sbr.rel (0) target = $region17
  $region16: #{snn_vgg9_forward.89} parent=0 // pred_region
    _
  $region17: #{snn_vgg9_forward.89} parent=0 // pred_fallthru
    _
  // Predicated region
  $region18: #{snn_vgg9_forward.89} parent=0 // pred_check
    _
  $region19: #{snn_vgg9_forward.89} parent=0 // pred_check_branch
    %194 = sbr.rel (0) target = $region21
  $region20: #{snn_vgg9_forward.89} parent=0 // pred_region
    _
  $region21: #{snn_vgg9_forward.89} parent=0 // pred_fallthru
    _
  // Predicated region
  $region22: #{snn_vgg9_forward.89} parent=0 // pred_check
    _
  $region23: #{snn_vgg9_forward.89} parent=0 // pred_check_branch
    %196 = sbr.rel (0) target = $region25
  $region24: #{snn_vgg9_forward.89} parent=0 // pred_region
    _
  $region25: #{snn_vgg9_forward.89} parent=0 // pred_fallthru
    _

// kernel: snn_vgg9_forward.66
$region0: #{snn_vgg9_forward.66}
  #allocation0 [shape = 'u32[]', space=smem, size = 0x4, offset = 0x4, fixed_abs, tag = 'smem constant byte address 0x4 - core index']
  #allocation1 [shape = 'u32[72,128]{1,0:T(1,128)}', space=vmem, size = 0x9000, scoped, tag = 'internal scratch']
  %s0 = inlined_call_operand.vmem [shape: f32[128,256], index: 0, kind: input, shape index: {}]
  %s1 = inlined_call_operand.vmem [shape: f32[1,256], index: 1, kind: input, shape index: {}]
  %s2 = inlined_call_operand.vmem [shape: f32[1,256], index: 2, kind: input, shape index: {}]
  %s3 = inlined_call_operand.vmem [shape: f32[1,256], index: 3, kind: input, shape index: {}]
  %s4 = inlined_call_operand.vmem [shape: f32[1,256], index: 4, kind: input, shape index: {}]
  %s5 = inlined_call_operand.vmem [shape: f32[128,256], index: 5, kind: input, shape index: {}, may-alias: {5,7}]
  %s6 = inlined_call_operand.vmem [shape: bf16[128,256], index: 6, kind: output, shape index: {0}]
  %s7 = inlined_call_operand.vmem [shape: f32[128,256], index: 7, kind: output, shape index: {1}, may-alias: {5,7}]
  %8 = xla_tuple %s6, %s7
  %s9 = sld [smem:[#allocation0]]
  $region42: #{snn_vgg9_forward.66} parent=0
    _
  %s11 = ssub.s32 1, %s9
  %s12 = scalar_select 0, %s11, %s9
  // Predicated region
  $region2: #{snn_vgg9_forward.66} parent=0 // pred_check
    _
  $region3: #{snn_vgg9_forward.66} parent=0 // pred_check_branch
    %14 = sbr.rel (0) target = $region5
  $region4: #{snn_vgg9_forward.66} parent=0 // pred_region
    _
  $region5: #{snn_vgg9_forward.66} parent=0 // pred_fallthru
    _
  // Predicated region
  $region6: #{snn_vgg9_forward.66} parent=0 // pred_check
    _
  $region7: #{snn_vgg9_forward.66} parent=0 // pred_check_branch
    %16 = sbr.rel (0) target = $region9
  $region8: #{snn_vgg9_forward.66} parent=0 // pred_region
    _
  $region9: #{snn_vgg9_forward.66} parent=0 // pred_fallthru
    _
  // Predicated region
  $region10: #{snn_vgg9_forward.66} parent=0 // pred_check
    _
  $region11: #{snn_vgg9_forward.66} parent=0 // pred_check_branch
    %18 = sbr.rel (0) target = $region13
  $region12: #{snn_vgg9_forward.66} parent=0 // pred_region
    _
  $region13: #{snn_vgg9_forward.66} parent=0 // pred_fallthru
    _
  // Predicated region
  $region14: #{snn_vgg9_forward.66} parent=0 // pred_check
    _
  $region15: #{snn_vgg9_forward.66} parent=0 // pred_check_branch
    %20 = sbr.rel (0) target = $region17
  $region16: #{snn_vgg9_forward.66} parent=0 // pred_region
    _
  $region17: #{snn_vgg9_forward.66} parent=0 // pred_fallthru
    _
  // Predicated region
  $region18: #{snn_vgg9_forward.66} parent=0 // pred_check
    _
  $region19: #{snn_vgg9_forward.66} parent=0 // pred_check_branch
    %22 = sbr.rel (0) target = $region21
  $region20: #{snn_vgg9_forward.66} parent=0 // pred_region
    _
  $region21: #{snn_vgg9_forward.66} parent=0 // pred_fallthru
    _
  // Predicated region
  $region22: #{snn_vgg9_forward.66} parent=0 // pred_check
    _
  $region23: #{snn_vgg9_forward.66} parent=0 // pred_check_branch
    %24 = sbr.rel (0) target = $region25
  $region24: #{snn_vgg9_forward.66} parent=0 // pred_region
    _
  $region25: #{snn_vgg9_forward.66} parent=0 // pred_fallthru
    _
  %v25 = vld [vmem:[%s0] sm:$0xff]
  %v26 = vld [vmem:[%s0 + $0x8] sm:$0xff]
  %v27 = vld [vmem:[%s0 + $0x10] sm:$0xff]
  %v28 = vld [vmem:[%s0 + $0x18] sm:$0xff]
  %v29 = vld [vmem:[%s0 + $0x20] sm:$0xff]
  %v30 = vld [vmem:[%s0 + $0x28] sm:$0xff]
  %v31 = vld [vmem:[%s0 + $0x30] sm:$0xff]
  %v32 = vld [vmem:[%s0 + $0x38] sm:$0xff]
  %v33 = vld [vmem:[%s0 + $0x40] sm:$0xff]
  %v34 = vld [vmem:[%s0 + $0x48] sm:$0xff]
  %v35 = vld [vmem:[%s0 + $0x50] sm:$0xff]
  %v36 = vld [vmem:[%s0 + $0x58] sm:$0xff]
  %v37 = vld [vmem:[%s0 + $0x60] sm:$0xff]
  %v38 = vld [vmem:[%s0 + $0x68] sm:$0xff]
  %v39 = vld [vmem:[%s0 + $0x70] sm:$0xff]
  %v40 = vld [vmem:[%s0 + $0x78] sm:$0xff]
  %v41 = vld [vmem:[%s0 + $0x80] sm:$0xff]
  %v42 = vld [vmem:[%s0 + $0x88] sm:$0xff]
  %v43 = vld [vmem:[%s0 + $0x90] sm:$0xff]
  %v44 = vld [vmem:[%s0 + $0x98] sm:$0xff]
  %v45 = vld [vmem:[%s0 + $0xa0] sm:$0xff]
  %v46 = vld [vmem:[%s0 + $0xa8] sm:$0xff]
  %v47 = vld [vmem:[%s0 + $0xb0] sm:$0xff]
  %v48 = vld [vmem:[%s0 + $0xb8] sm:$0xff]
  %v49 = vld [vmem:[%s0 + $0xc0] sm:$0xff]
  %v50 = vld [vmem:[%s0 + $0xc8] sm:$0xff]
  %v51 = vld [vmem:[%s0 + $0xd0] sm:$0xff]
  %v52 = vld [vmem:[%s0 + $0xd8] sm:$0xff]
  %v53 = vld [vmem:[%s0 + $0xe0] sm:$0xff]
  %v54 = vld [vmem:[%s0 + $0xe8] sm:$0xff]
  %v55 = vld [vmem:[%s0 + $0xf0] sm:$0xff]
  %v56 = vld [vmem:[%s0 + $0xf8] sm:$0xff]
  %v57 = vld [vmem:[%s1] sm:$0x3]
  %v58 = vld [vmem:[%s2] sm:$0x3]
  %v59 = vld [vmem:[%s3] sm:$0x3]
  %v60 = vld [vmem:[%s4] sm:$0x3]
  %v61 = vld [vmem:[%s5] sm:$0xff]
  %v62 = vld [vmem:[%s5 + $0x8] sm:$0xff]
  %v63 = vld [vmem:[%s5 + $0x10] sm:$0xff]
  %v64 = vld [vmem:[%s5 + $0x18] sm:$0xff]
  %v65 = vld [vmem:[%s5 + $0x20] sm:$0xff]
  %v66 = vld [vmem:[%s5 + $0x28] sm:$0xff]
  %v67 = vld [vmem:[%s5 + $0x30] sm:$0xff]
  %v68 = vld [vmem:[%s5 + $0x38] sm:$0xff]
  %v69 = vld [vmem:[%s5 + $0x40] sm:$0xff]
  %v70 = vld [vmem:[%s5 + $0x48] sm:$0xff]
  %v71 = vld [vmem:[%s5 + $0x50] sm:$0xff]
  %v72 = vld [vmem:[%s5 + $0x58] sm:$0xff]
  %v73 = vld [vmem:[%s5 + $0x60] sm:$0xff]
  %v74 = vld [vmem:[%s5 + $0x68] sm:$0xff]
  %v75 = vld [vmem:[%s5 + $0x70] sm:$0xff]
  %v76 = vld [vmem:[%s5 + $0x78] sm:$0xff]
  %v77 = vld [vmem:[%s5 + $0x80] sm:$0xff]
  %v78 = vld [vmem:[%s5 + $0x88] sm:$0xff]
  %v79 = vld [vmem:[%s5 + $0x90] sm:$0xff]
  %v80 = vld [vmem:[%s5 + $0x98] sm:$0xff]
  %v81 = vld [vmem:[%s5 + $0xa0] sm:$0xff]
  %v82 = vld [vmem:[%s5 + $0xa8] sm:$0xff]
  %v83 = vld [vmem:[%s5 + $0xb0] sm:$0xff]
  %v84 = vld [vmem:[%s5 + $0xb8] sm:$0xff]
  %v85 = vld [vmem:[%s5 + $0xc0] sm:$0xff]
  %v86 = vld [vmem:[%s5 + $0xc8] sm:$0xff]
  %v87 = vld [vmem:[%s5 + $0xd0] sm:$0xff]
  %v88 = vld [vmem:[%s5 + $0xd8] sm:$0xff]
  %v89 = vld [vmem:[%s5 + $0xe0] sm:$0xff]
  %v90 = vld [vmem:[%s5 + $0xe8] sm:$0xff]
  %v91 = vld [vmem:[%s5 + $0xf0] sm:$0xff]
  %v92 = vld [vmem:[%s5 + $0xf8] sm:$0xff]
  %v93 = vmul.f32 %v57, 0.0078125
  %v94 = vmul.f32 %v58, 0.0078125
  %v95 = vmul.f32 %v93, %v93
  %v96 = vsub.f32 %v94, %v95
  %v97 = vmax.f32 %v96, 0.0
  %v98 = vadd.f32 %v97, 0.0001
  %v99 = vrsqrt.pop %v98
  %v100 = vmul.f32 %v99, %v98
  %v101 = vmul.f32 %v100, %v99
  %v102 = vmul.f32 0.5, %v101
  %v103 = vsub.f32 1.5, %v102
  %v104 = vmul.f32 %v99, %v103
  %vm105 = vweird.f32 %v98
  %vm106 = vweird.f32 %v99
  %vm107 = vmor %vm105, %vm106
  %v108 = vsel %vm107, %v99, %v104
  %v109 = vmul.f32 %v59, %v108
  %v110 = vmul.f32 %v93, %v109
  %v111 = vsub.f32 %v60, %v110
  %v113 = vperm.slane %v109, 0
  %v114 = vperm.slane %v109, 1
  %v117 = vmul.f32 %v25, %v113
  %v118 = vmul.f32 %v26, %v114
  %v119 = vmul.f32 %v27, %v113
  %v120 = vmul.f32 %v28, %v114
  %v121 = vmul.f32 %v29, %v113
  %v122 = vmul.f32 %v30, %v114
  %v123 = vmul.f32 %v31, %v113
  %v124 = vmul.f32 %v32, %v114
  %v125 = vmul.f32 %v33, %v113
  %v126 = vmul.f32 %v34, %v114
  %v127 = vmul.f32 %v35, %v113
  %v128 = vmul.f32 %v36, %v114
  %v129 = vmul.f32 %v37, %v113
  %v130 = vmul.f32 %v38, %v114
  %v131 = vmul.f32 %v39, %v113
  %v132 = vmul.f32 %v40, %v114
  %v133 = vmul.f32 %v41, %v113
  %v134 = vmul.f32 %v42, %v114
  %v135 = vmul.f32 %v43, %v113
  %v136 = vmul.f32 %v44, %v114
  %v137 = vmul.f32 %v45, %v113
  %v138 = vmul.f32 %v46, %v114
  %v139 = vmul.f32 %v47, %v113
  %v140 = vmul.f32 %v48, %v114
  %v141 = vmul.f32 %v49, %v113
  %v142 = vmul.f32 %v50, %v114
  %v143 = vmul.f32 %v51, %v113
  %v144 = vmul.f32 %v52, %v114
  %v145 = vmul.f32 %v53, %v113
  %v146 = vmul.f32 %v54, %v114
  %v147 = vmul.f32 %v55, %v113
  %v148 = vmul.f32 %v56, %v114
  %v149 = vadd.f32 %v61, %v117
  %v150 = vadd.f32 %v62, %v118
  %v151 = vadd.f32 %v63, %v119
  %v152 = vadd.f32 %v64, %v120
  %v153 = vadd.f32 %v65, %v121
  %v154 = vadd.f32 %v66, %v122
  %v155 = vadd.f32 %v67, %v123
  %v156 = vadd.f32 %v68, %v124
  %v157 = vadd.f32 %v69, %v125
  %v158 = vadd.f32 %v70, %v126
  %v159 = vadd.f32 %v71, %v127
  %v160 = vadd.f32 %v72, %v128
  %v161 = vadd.f32 %v73, %v129
  %v162 = vadd.f32 %v74, %v130
  %v163 = vadd.f32 %v75, %v131
  %v164 = vadd.f32 %v76, %v132
  %v165 = vadd.f32 %v77, %v133
  %v166 = vadd.f32 %v78, %v134
  %v167 = vadd.f32 %v79, %v135
  %v168 = vadd.f32 %v80, %v136
  %v169 = vadd.f32 %v81, %v137
  %v170 = vadd.f32 %v82, %v138
  %v171 = vadd.f32 %v83, %v139
  %v172 = vadd.f32 %v84, %v140
  %v173 = vadd.f32 %v85, %v141
  %v174 = vadd.f32 %v86, %v142
  %v175 = vadd.f32 %v87, %v143
  %v176 = vadd.f32 %v88, %v144
  %v177 = vadd.f32 %v89, %v145
  %v178 = vadd.f32 %v90, %v146
  %v179 = vadd.f32 %v91, %v147
  %v180 = vadd.f32 %v92, %v148
  %v182 = vperm.slane %v111, 0
  %v183 = vperm.slane %v111, 1
  %v186 = vadd.f32 %v149, %v182
  %v187 = vadd.f32 %v150, %v183
  %v188 = vadd.f32 %v151, %v182
  %v189 = vadd.f32 %v152, %v183
  %v190 = vadd.f32 %v153, %v182
  %v191 = vadd.f32 %v154, %v183
  %v192 = vadd.f32 %v155, %v182
  %v193 = vadd.f32 %v156, %v183
  %v194 = vadd.f32 %v157, %v182
  %v195 = vadd.f32 %v158, %v183
  %v196 = vadd.f32 %v159, %v182
  %v197 = vadd.f32 %v160, %v183
  %v198 = vadd.f32 %v161, %v182
  %v199 = vadd.f32 %v162, %v183
  %v200 = vadd.f32 %v163, %v182
  %v201 = vadd.f32 %v164, %v183
  %v202 = vadd.f32 %v165, %v182
  %v203 = vadd.f32 %v166, %v183
  %v204 = vadd.f32 %v167, %v182
  %v205 = vadd.f32 %v168, %v183
  %v206 = vadd.f32 %v169, %v182
  %v207 = vadd.f32 %v170, %v183
  %v208 = vadd.f32 %v171, %v182
  %v209 = vadd.f32 %v172, %v183
  %v210 = vadd.f32 %v173, %v182
  %v211 = vadd.f32 %v174, %v183
  %v212 = vadd.f32 %v175, %v182
  %v213 = vadd.f32 %v176, %v183
  %v214 = vadd.f32 %v177, %v182
  %v215 = vadd.f32 %v178, %v183
  %v216 = vadd.f32 %v179, %v182
  %v217 = vadd.f32 %v180, %v183
  %v218 = vsub.f32 %v186, 1.0
  %v219 = vsub.f32 %v187, 1.0
  %v220 = vsub.f32 %v188, 1.0
  %v221 = vsub.f32 %v189, 1.0
  %v222 = vsub.f32 %v190, 1.0
  %v223 = vsub.f32 %v191, 1.0
  %v224 = vsub.f32 %v192, 1.0
  %v225 = vsub.f32 %v193, 1.0
  %v226 = vsub.f32 %v194, 1.0
  %v227 = vsub.f32 %v195, 1.0
  %v228 = vsub.f32 %v196, 1.0
  %v229 = vsub.f32 %v197, 1.0
  %v230 = vsub.f32 %v198, 1.0
  %v231 = vsub.f32 %v199, 1.0
  %v232 = vsub.f32 %v200, 1.0
  %v233 = vsub.f32 %v201, 1.0
  %v234 = vsub.f32 %v202, 1.0
  %v235 = vsub.f32 %v203, 1.0
  %v236 = vsub.f32 %v204, 1.0
  %v237 = vsub.f32 %v205, 1.0
  %v238 = vsub.f32 %v206, 1.0
  %v239 = vsub.f32 %v207, 1.0
  %v240 = vsub.f32 %v208, 1.0
  %v241 = vsub.f32 %v209, 1.0
  %v242 = vsub.f32 %v210, 1.0
  %v243 = vsub.f32 %v211, 1.0
  %v244 = vsub.f32 %v212, 1.0
  %v245 = vsub.f32 %v213, 1.0
  %v246 = vsub.f32 %v214, 1.0
  %v247 = vsub.f32 %v215, 1.0
  %v248 = vsub.f32 %v216, 1.0
  %v249 = vsub.f32 %v217, 1.0
  %vm250 = vcmp.ge.f32.partialorder %v218, 0.0
  %vm251 = vcmp.ge.f32.partialorder %v219, 0.0
  %vm252 = vcmp.ge.f32.partialorder %v220, 0.0
  %vm253 = vcmp.ge.f32.partialorder %v221, 0.0
  %vm254 = vcmp.ge.f32.partialorder %v222, 0.0
  %vm255 = vcmp.ge.f32.partialorder %v223, 0.0
  %vm256 = vcmp.ge.f32.partialorder %v224, 0.0
  %vm257 = vcmp.ge.f32.partialorder %v225, 0.0
  %vm258 = vcmp.ge.f32.partialorder %v226, 0.0
  %vm259 = vcmp.ge.f32.partialorder %v227, 0.0
  %vm260 = vcmp.ge.f32.partialorder %v228, 0.0
  %vm261 = vcmp.ge.f32.partialorder %v229, 0.0
  %vm262 = vcmp.ge.f32.partialorder %v230, 0.0
  %vm263 = vcmp.ge.f32.partialorder %v231, 0.0
  %vm264 = vcmp.ge.f32.partialorder %v232, 0.0
  %vm265 = vcmp.ge.f32.partialorder %v233, 0.0
  %vm266 = vcmp.ge.f32.partialorder %v234, 0.0
  %vm267 = vcmp.ge.f32.partialorder %v235, 0.0
  %vm268 = vcmp.ge.f32.partialorder %v236, 0.0
  %vm269 = vcmp.ge.f32.partialorder %v237, 0.0
  %vm270 = vcmp.ge.f32.partialorder %v238, 0.0
  %vm271 = vcmp.ge.f32.partialorder %v239, 0.0
  %vm272 = vcmp.ge.f32.partialorder %v240, 0.0
  %vm273 = vcmp.ge.f32.partialorder %v241, 0.0
  %vm274 = vcmp.ge.f32.partialorder %v242, 0.0
  %vm275 = vcmp.ge.f32.partialorder %v243, 0.0
  %vm276 = vcmp.ge.f32.partialorder %v244, 0.0
  %vm277 = vcmp.ge.f32.partialorder %v245, 0.0
  %vm278 = vcmp.ge.f32.partialorder %v246, 0.0
  %vm279 = vcmp.ge.f32.partialorder %v247, 0.0
  %vm280 = vcmp.ge.f32.partialorder %v248, 0.0
  %vm281 = vcmp.ge.f32.partialorder %v249, 0.0
  %v282 = vsel %vm250, 1.0, 0.0
  %v283 = vsel %vm251, 1.0, 0.0
  %v284 = vsel %vm252, 1.0, 0.0
  %v285 = vsel %vm253, 1.0, 0.0
  %v286 = vsel %vm254, 1.0, 0.0
  %v287 = vsel %vm255, 1.0, 0.0
  %v288 = vsel %vm256, 1.0, 0.0
  %v289 = vsel %vm257, 1.0, 0.0
  %v290 = vsel %vm258, 1.0, 0.0
  %v291 = vsel %vm259, 1.0, 0.0
  %v292 = vsel %vm260, 1.0, 0.0
  %v293 = vsel %vm261, 1.0, 0.0
  %v294 = vsel %vm262, 1.0, 0.0
  %v295 = vsel %vm263, 1.0, 0.0
  %v296 = vsel %vm264, 1.0, 0.0
  %v297 = vsel %vm265, 1.0, 0.0
  %v298 = vsel %vm266, 1.0, 0.0
  %v299 = vsel %vm267, 1.0, 0.0
  %v300 = vsel %vm268, 1.0, 0.0
  %v301 = vsel %vm269, 1.0, 0.0
  %v302 = vsel %vm270, 1.0, 0.0
  %v303 = vsel %vm271, 1.0, 0.0
  %v304 = vsel %vm272, 1.0, 0.0
  %v305 = vsel %vm273, 1.0, 0.0
  %v306 = vsel %vm274, 1.0, 0.0
  %v307 = vsel %vm275, 1.0, 0.0
  %v308 = vsel %vm276, 1.0, 0.0
  %v309 = vsel %vm277, 1.0, 0.0
  %v310 = vsel %vm278, 1.0, 0.0
  %v311 = vsel %vm279, 1.0, 0.0
  %v312 = vsel %vm280, 1.0, 0.0
  %v313 = vsel %vm281, 1.0, 0.0
  %vm314 = vcmp.gt.f32.partialorder %v218, 0.0
  %vm315 = vcmp.gt.f32.partialorder %v219, 0.0
  %vm316 = vcmp.gt.f32.partialorder %v220, 0.0
  %vm317 = vcmp.gt.f32.partialorder %v221, 0.0
  %vm318 = vcmp.gt.f32.partialorder %v222, 0.0
  %vm319 = vcmp.gt.f32.partialorder %v223, 0.0
  %vm320 = vcmp.gt.f32.partialorder %v224, 0.0
  %vm321 = vcmp.gt.f32.partialorder %v225, 0.0
  %vm322 = vcmp.gt.f32.partialorder %v226, 0.0
  %vm323 = vcmp.gt.f32.partialorder %v227, 0.0
  %vm324 = vcmp.gt.f32.partialorder %v228, 0.0
  %vm325 = vcmp.gt.f32.partialorder %v229, 0.0
  %vm326 = vcmp.gt.f32.partialorder %v230, 0.0
  %vm327 = vcmp.gt.f32.partialorder %v231, 0.0
  %vm328 = vcmp.gt.f32.partialorder %v232, 0.0
  %vm329 = vcmp.gt.f32.partialorder %v233, 0.0
  %vm330 = vcmp.gt.f32.partialorder %v234, 0.0
  %vm331 = vcmp.gt.f32.partialorder %v235, 0.0
  %vm332 = vcmp.gt.f32.partialorder %v236, 0.0
  %vm333 = vcmp.gt.f32.partialorder %v237, 0.0
  %vm334 = vcmp.gt.f32.partialorder %v238, 0.0
  %vm335 = vcmp.gt.f32.partialorder %v239, 0.0
  %vm336 = vcmp.gt.f32.partialorder %v240, 0.0
  %vm337 = vcmp.gt.f32.partialorder %v241, 0.0
  %vm338 = vcmp.gt.f32.partialorder %v242, 0.0
  %vm339 = vcmp.gt.f32.partialorder %v243, 0.0
  %vm340 = vcmp.gt.f32.partialorder %v244, 0.0
  %vm341 = vcmp.gt.f32.partialorder %v245, 0.0
  %vm342 = vcmp.gt.f32.partialorder %v246, 0.0
  %vm343 = vcmp.gt.f32.partialorder %v247, 0.0
  %vm344 = vcmp.gt.f32.partialorder %v248, 0.0
  %vm345 = vcmp.gt.f32.partialorder %v249, 0.0
  %v346 = vsel %vm314, 1.0, 0.0
  %v347 = vsel %vm315, 1.0, 0.0
  %v348 = vsel %vm316, 1.0, 0.0
  %v349 = vsel %vm317, 1.0, 0.0
  %v350 = vsel %vm318, 1.0, 0.0
  %v351 = vsel %vm319, 1.0, 0.0
  %v352 = vsel %vm320, 1.0, 0.0
  %v353 = vsel %vm321, 1.0, 0.0
  %v354 = vsel %vm322, 1.0, 0.0
  %v355 = vsel %vm323, 1.0, 0.0
  %v356 = vsel %vm324, 1.0, 0.0
  %v357 = vsel %vm325, 1.0, 0.0
  %v358 = vsel %vm326, 1.0, 0.0
  %v359 = vsel %vm327, 1.0, 0.0
  %v360 = vsel %vm328, 1.0, 0.0
  %v361 = vsel %vm329, 1.0, 0.0
  %v362 = vsel %vm330, 1.0, 0.0
  %v363 = vsel %vm331, 1.0, 0.0
  %v364 = vsel %vm332, 1.0, 0.0
  %v365 = vsel %vm333, 1.0, 0.0
  %v366 = vsel %vm334, 1.0, 0.0
  %v367 = vsel %vm335, 1.0, 0.0
  %v368 = vsel %vm336, 1.0, 0.0
  %v369 = vsel %vm337, 1.0, 0.0
  %v370 = vsel %vm338, 1.0, 0.0
  %v371 = vsel %vm339, 1.0, 0.0
  %v372 = vsel %vm340, 1.0, 0.0
  %v373 = vsel %vm341, 1.0, 0.0
  %v374 = vsel %vm342, 1.0, 0.0
  %v375 = vsel %vm343, 1.0, 0.0
  %v376 = vsel %vm344, 1.0, 0.0
  %v377 = vsel %vm345, 1.0, 0.0
  %v378 = vsub.f32 %v186, %v346
  %v379 = vsub.f32 %v187, %v347
  %v380 = vsub.f32 %v188, %v348
  %v381 = vsub.f32 %v189, %v349
  %v382 = vsub.f32 %v190, %v350
  %v383 = vsub.f32 %v191, %v351
  %v384 = vsub.f32 %v192, %v352
  %v385 = vsub.f32 %v193, %v353
  %v386 = vsub.f32 %v194, %v354
  %v387 = vsub.f32 %v195, %v355
  %v388 = vsub.f32 %v196, %v356
  %v389 = vsub.f32 %v197, %v357
  %v390 = vsub.f32 %v198, %v358
  %v391 = vsub.f32 %v199, %v359
  %v392 = vsub.f32 %v200, %v360
  %v393 = vsub.f32 %v201, %v361
  %v394 = vsub.f32 %v202, %v362
  %v395 = vsub.f32 %v203, %v363
  %v396 = vsub.f32 %v204, %v364
  %v397 = vsub.f32 %v205, %v365
  %v398 = vsub.f32 %v206, %v366
  %v399 = vsub.f32 %v207, %v367
  %v400 = vsub.f32 %v208, %v368
  %v401 = vsub.f32 %v209, %v369
  %v402 = vsub.f32 %v210, %v370
  %v403 = vsub.f32 %v211, %v371
  %v404 = vsub.f32 %v212, %v372
  %v405 = vsub.f32 %v213, %v373
  %v406 = vsub.f32 %v214, %v374
  %v407 = vsub.f32 %v215, %v375
  %v408 = vsub.f32 %v216, %v376
  %v409 = vsub.f32 %v217, %v377
  %v410 = vpack.c.bf16 %v283, %v282
  %v411 = vpack.c.bf16 %v285, %v284
  %v412 = vpack.c.bf16 %v287, %v286
  %v413 = vpack.c.bf16 %v289, %v288
  %v414 = vpack.c.bf16 %v291, %v290
  %v415 = vpack.c.bf16 %v293, %v292
  %v416 = vpack.c.bf16 %v295, %v294
  %v417 = vpack.c.bf16 %v297, %v296
  %v418 = vpack.c.bf16 %v299, %v298
  %v419 = vpack.c.bf16 %v301, %v300
  %v420 = vpack.c.bf16 %v303, %v302
  %v421 = vpack.c.bf16 %v305, %v304
  %v422 = vpack.c.bf16 %v307, %v306
  %v423 = vpack.c.bf16 %v309, %v308
  %v424 = vpack.c.bf16 %v311, %v310
  %v425 = vpack.c.bf16 %v313, %v312
  %426 = vst [vmem:[%s6] sm:$0xff] %v410
  %427 = vst [vmem:[%s6 + $0x8] sm:$0xff] %v411
  %428 = vst [vmem:[%s6 + $0x10] sm:$0xff] %v412
  %429 = vst [vmem:[%s6 + $0x18] sm:$0xff] %v413
  %430 = vst [vmem:[%s6 + $0x20] sm:$0xff] %v414
  %431 = vst [vmem:[%s6 + $0x28] sm:$0xff] %v415
  %432 = vst [vmem:[%s6 + $0x30] sm:$0xff] %v416
  %433 = vst [vmem:[%s6 + $0x38] sm:$0xff] %v417
  %434 = vst [vmem:[%s6 + $0x40] sm:$0xff] %v418
  %435 = vst [vmem:[%s6 + $0x48] sm:$0xff] %v419
  %436 = vst [vmem:[%s6 + $0x50] sm:$0xff] %v420
  %437 = vst [vmem:[%s6 + $0x58] sm:$0xff] %v421
  %438 = vst [vmem:[%s6 + $0x60] sm:$0xff] %v422
  %439 = vst [vmem:[%s6 + $0x68] sm:$0xff] %v423
  %440 = vst [vmem:[%s6 + $0x70] sm:$0xff] %v424
  %441 = vst [vmem:[%s6 + $0x78] sm:$0xff] %v425
  %442 = vst [vmem:[%s7] sm:$0xff] %v378
  %443 = vst [vmem:[%s7 + $0x8] sm:$0xff] %v379
  %444 = vst [vmem:[%s7 + $0x10] sm:$0xff] %v380
  %445 = vst [vmem:[%s7 + $0x18] sm:$0xff] %v381
  %446 = vst [vmem:[%s7 + $0x20] sm:$0xff] %v382
  %447 = vst [vmem:[%s7 + $0x28] sm:$0xff] %v383
  %448 = vst [vmem:[%s7 + $0x30] sm:$0xff] %v384
  %449 = vst [vmem:[%s7 + $0x38] sm:$0xff] %v385
  %450 = vst [vmem:[%s7 + $0x40] sm:$0xff] %v386
  %451 = vst [vmem:[%s7 + $0x48] sm:$0xff] %v387
  %452 = vst [vmem:[%s7 + $0x50] sm:$0xff] %v388
  %453 = vst [vmem:[%s7 + $0x58] sm:$0xff] %v389
  %454 = vst [vmem:[%s7 + $0x60] sm:$0xff] %v390
  %455 = vst [vmem:[%s7 + $0x68] sm:$0xff] %v391
  %456 = vst [vmem:[%s7 + $0x70] sm:$0xff] %v392
  %457 = vst [vmem:[%s7 + $0x78] sm:$0xff] %v393
  %458 = vst [vmem:[%s7 + $0x80] sm:$0xff] %v394
  %459 = vst [vmem:[%s7 + $0x88] sm:$0xff] %v395
  %460 = vst [vmem:[%s7 + $0x90] sm:$0xff] %v396
  %461 = vst [vmem:[%s7 + $0x98] sm:$0xff] %v397
  %462 = vst [vmem:[%s7 + $0xa0] sm:$0xff] %v398
  %463 = vst [vmem:[%s7 + $0xa8] sm:$0xff] %v399
  %464 = vst [vmem:[%s7 + $0xb0] sm:$0xff] %v400
  %465 = vst [vmem:[%s7 + $0xb8] sm:$0xff] %v401
  %466 = vst [vmem:[%s7 + $0xc0] sm:$0xff] %v402
  %467 = vst [vmem:[%s7 + $0xc8] sm:$0xff] %v403
  %468 = vst [vmem:[%s7 + $0xd0] sm:$0xff] %v404
  %469 = vst [vmem:[%s7 + $0xd8] sm:$0xff] %v405
  %470 = vst [vmem:[%s7 + $0xe0] sm:$0xff] %v406
  %471 = vst [vmem:[%s7 + $0xe8] sm:$0xff] %v407
  %472 = vst [vmem:[%s7 + $0xf0] sm:$0xff] %v408
  %473 = vst [vmem:[%s7 + $0xf8] sm:$0xff] %v409
  // Predicated region
  $region26: #{snn_vgg9_forward.66} parent=0 // pred_check
    _
  $region27: #{snn_vgg9_forward.66} parent=0 // pred_check_branch
    %475 = sbr.rel (0) target = $region29
  $region28: #{snn_vgg9_forward.66} parent=0 // pred_region
    _
  $region29: #{snn_vgg9_forward.66} parent=0 // pred_fallthru
    _
  // Predicated region
  $region30: #{snn_vgg9_forward.66} parent=0 // pred_check
    _
  $region31: #{snn_vgg9_forward.66} parent=0 // pred_check_branch
    %477 = sbr.rel (0) target = $region33
  $region32: #{snn_vgg9_forward.66} parent=0 // pred_region
    _
  $region33: #{snn_vgg9_forward.66} parent=0 // pred_fallthru
    _
  // Predicated region
  $region34: #{snn_vgg9_forward.66} parent=0 // pred_check
    _
  $region35: #{snn_vgg9_forward.66} parent=0 // pred_check_branch
    %479 = sbr.rel (0) target = $region37
  $region36: #{snn_vgg9_forward.66} parent=0 // pred_region
    _
  $region37: #{snn_vgg9_forward.66} parent=0 // pred_fallthru
    _
  // Predicated region
  $region38: #{snn_vgg9_forward.66} parent=0 // pred_check
    _
  $region39: #{snn_vgg9_forward.66} parent=0 // pred_check_branch
    %481 = sbr.rel (0) target = $region41
  $region40: #{snn_vgg9_forward.66} parent=0 // pred_region
    _
  $region41: #{snn_vgg9_forward.66} parent=0 // pred_fallthru
    _

// kernel: snn_vgg9_forward.92
$region0: #{snn_vgg9_forward.92}
  #allocation0 [shape = 'u32[]', space=smem, size = 0x4, offset = 0x4, fixed_abs, tag = 'smem constant byte address 0x4 - core index']
  #allocation1 [shape = 'u32[72,128]{1,0:T(1,128)}', space=vmem, size = 0x9000, scoped, tag = 'internal scratch']
  %s0 = inlined_call_operand.vmem [shape: f32[2,1024], index: 0, kind: input, shape index: {}]
  %s1 = inlined_call_operand.vmem [shape: f32[1,1024], index: 1, kind: output, shape index: {0}]
  %s2 = inlined_call_operand.vmem [shape: f32[1,1024], index: 2, kind: output, shape index: {1}]
  %3 = xla_tuple %s1, %s2
  %s4 = sld [smem:[#allocation0]]
  $region26: #{snn_vgg9_forward.92} parent=0
    _
  %s6 = ssub.s32 1, %s4
  %s7 = scalar_select 0, %s6, %s4
  // Predicated region
  $region2: #{snn_vgg9_forward.92} parent=0 // pred_check
    _
  $region3: #{snn_vgg9_forward.92} parent=0 // pred_check_branch
    %9 = sbr.rel (0) target = $region5
  $region4: #{snn_vgg9_forward.92} parent=0 // pred_region
    _
  $region5: #{snn_vgg9_forward.92} parent=0 // pred_fallthru
    _
  %p10 = scmp.eq.s32.totalorder 0, 0
  // Predicated region
  $region6: #{snn_vgg9_forward.92} parent=0 // pred_check
    %p11 = pneg %p10
  $region7: #{snn_vgg9_forward.92} parent=0 // pred_check_branch
    %13 = sbr.rel (%p11) target = $region9
  $region8: #{snn_vgg9_forward.92} parent=0 // pred_region
    %14 = vst [vmem:[%s1] sm:$0xff] 0.0
    %15 = vst [vmem:[%s2] sm:$0xff] 0.0
  $region9: #{snn_vgg9_forward.92} parent=0 // pred_fallthru
    _
  %v16 = vld [vmem:[%s0] sm:$0xff]
  %v17 = vld [vmem:[%s0 + $0x8] sm:$0xff]
  %v18 = vld [vmem:[%s1] sm:$0xff]
  %21 = vst [vmem:[#allocation1] ss:$4 sm:$0xff] %v16
  %s22 = scalar_lea.vmem [#allocation1], 32
  %23 = vst [vmem:[%s22] ss:$4 sm:$0xff] %v17
  %v24 = vld.sshfl [vmem:[#allocation1] sm:$0xff pattern:$0x73625140]
  %v25 = vld.sshfl [vmem:[#allocation1 + $0x8] sm:$0xff pattern:$0x73625140]
  %v26 = vld.sshfl [vmem:[#allocation1 + $0x10] sm:$0xff pattern:$0x73625140]
  %v27 = vld.sshfl [vmem:[#allocation1 + $0x18] sm:$0xff pattern:$0x73625140]
  %v28 = vld.sshfl [vmem:[#allocation1 + $0x20] sm:$0xff pattern:$0x73625140]
  %v29 = vld.sshfl [vmem:[#allocation1 + $0x28] sm:$0xff pattern:$0x73625140]
  %v30 = vld.sshfl [vmem:[#allocation1 + $0x30] sm:$0xff pattern:$0x73625140]
  %v31 = vld.sshfl [vmem:[#allocation1 + $0x38] sm:$0xff pattern:$0x73625140]
  %vm40 = vcmask 1041408
  %v41 = vsel %vm40, %v24, 0.0
  %v42 = vrot.slane %v41, 4
  %v43 = vadd.f32 %v41, %v42
  %v44 = vrot.slane %v43, 2
  %v45 = vadd.f32 %v43, %v44
  %v46 = vrot.slane %v45, 1
  %v47 = vadd.f32 %v45, %v46
  %v48 = vsel %vm40, %v25, 0.0
  %v49 = vrot.slane %v48, 4
  %v50 = vadd.f32 %v48, %v49
  %v51 = vrot.slane %v50, 2
  %v52 = vadd.f32 %v50, %v51
  %v53 = vrot.slane %v52, 1
  %v54 = vadd.f32 %v52, %v53
  %v55 = vsel %vm40, %v26, 0.0
  %v56 = vrot.slane %v55, 4
  %v57 = vadd.f32 %v55, %v56
  %v58 = vrot.slane %v57, 2
  %v59 = vadd.f32 %v57, %v58
  %v60 = vrot.slane %v59, 1
  %v61 = vadd.f32 %v59, %v60
  %v62 = vsel %vm40, %v27, 0.0
  %v63 = vrot.slane %v62, 4
  %v64 = vadd.f32 %v62, %v63
  %v65 = vrot.slane %v64, 2
  %v66 = vadd.f32 %v64, %v65
  %v67 = vrot.slane %v66, 1
  %v68 = vadd.f32 %v66, %v67
  %v69 = vsel %vm40, %v28, 0.0
  %v70 = vrot.slane %v69, 4
  %v71 = vadd.f32 %v69, %v70
  %v72 = vrot.slane %v71, 2
  %v73 = vadd.f32 %v71, %v72
  %v74 = vrot.slane %v73, 1
  %v75 = vadd.f32 %v73, %v74
  %v76 = vsel %vm40, %v29, 0.0
  %v77 = vrot.slane %v76, 4
  %v78 = vadd.f32 %v76, %v77
  %v79 = vrot.slane %v78, 2
  %v80 = vadd.f32 %v78, %v79
  %v81 = vrot.slane %v80, 1
  %v82 = vadd.f32 %v80, %v81
  %v83 = vsel %vm40, %v30, 0.0
  %v84 = vrot.slane %v83, 4
  %v85 = vadd.f32 %v83, %v84
  %v86 = vrot.slane %v85, 2
  %v87 = vadd.f32 %v85, %v86
  %v88 = vrot.slane %v87, 1
  %v89 = vadd.f32 %v87, %v88
  %v90 = vsel %vm40, %v31, 0.0
  %v91 = vrot.slane %v90, 4
  %v92 = vadd.f32 %v90, %v91
  %v93 = vrot.slane %v92, 2
  %v94 = vadd.f32 %v92, %v93
  %v95 = vrot.slane %v94, 1
  %v96 = vadd.f32 %v94, %v95
  %v105 = vrot.slane %v54, 7
  %v106 = vrot.slane %v61, 6
  %v107 = vrot.slane %v68, 5
  %v108 = vrot.slane %v75, 4
  %v109 = vrot.slane %v82, 3
  %v110 = vrot.slane %v89, 2
  %v111 = vrot.slane %v96, 1
  %vm112 = vcmask 1040384
  %v113 = vsel %vm112, %v47, %v105
  %vm114 = vcmask 1042434
  %v115 = vsel %vm114, %v106, %v107
  %v116 = vsel %vm40, %v113, %v115
  %vm117 = vcmask 1044484
  %v118 = vsel %vm117, %v108, %v109
  %vm119 = vcmask 1046534
  %v120 = vsel %vm119, %v110, %v111
  %vm121 = vcmask 1045508
  %v122 = vsel %vm121, %v118, %v120
  %vm123 = vcmask 1043456
  %v124 = vsel %vm123, %v116, %v122
  %v126 = vadd.f32 %v18, %v124
  %127 = vst [vmem:[%s1] sm:$0xff] %v126
  %v128 = vld [vmem:[%s2] sm:$0xff]
  %v129 = vmul.f32 %v16, %v16
  %v130 = vmul.f32 %v17, %v17
  %133 = vst [vmem:[#allocation1] ss:$4 sm:$0xff] %v129
  %s134 = scalar_lea.vmem [#allocation1], 32
  %135 = vst [vmem:[%s134] ss:$4 sm:$0xff] %v130
  %v136 = vld.sshfl [vmem:[#allocation1] sm:$0xff pattern:$0x73625140]
  %v137 = vld.sshfl [vmem:[#allocation1 + $0x8] sm:$0xff pattern:$0x73625140]
  %v138 = vld.sshfl [vmem:[#allocation1 + $0x10] sm:$0xff pattern:$0x73625140]
  %v139 = vld.sshfl [vmem:[#allocation1 + $0x18] sm:$0xff pattern:$0x73625140]
  %v140 = vld.sshfl [vmem:[#allocation1 + $0x20] sm:$0xff pattern:$0x73625140]
  %v141 = vld.sshfl [vmem:[#allocation1 + $0x28] sm:$0xff pattern:$0x73625140]
  %v142 = vld.sshfl [vmem:[#allocation1 + $0x30] sm:$0xff pattern:$0x73625140]
  %v143 = vld.sshfl [vmem:[#allocation1 + $0x38] sm:$0xff pattern:$0x73625140]
  %v152 = vsel %vm40, %v136, 0.0
  %v153 = vrot.slane %v152, 4
  %v154 = vadd.f32 %v152, %v153
  %v155 = vrot.slane %v154, 2
  %v156 = vadd.f32 %v154, %v155
  %v157 = vrot.slane %v156, 1
  %v158 = vadd.f32 %v156, %v157
  %v159 = vsel %vm40, %v137, 0.0
  %v160 = vrot.slane %v159, 4
  %v161 = vadd.f32 %v159, %v160
  %v162 = vrot.slane %v161, 2
  %v163 = vadd.f32 %v161, %v162
  %v164 = vrot.slane %v163, 1
  %v165 = vadd.f32 %v163, %v164
  %v166 = vsel %vm40, %v138, 0.0
  %v167 = vrot.slane %v166, 4
  %v168 = vadd.f32 %v166, %v167
  %v169 = vrot.slane %v168, 2
  %v170 = vadd.f32 %v168, %v169
  %v171 = vrot.slane %v170, 1
  %v172 = vadd.f32 %v170, %v171
  %v173 = vsel %vm40, %v139, 0.0
  %v174 = vrot.slane %v173, 4
  %v175 = vadd.f32 %v173, %v174
  %v176 = vrot.slane %v175, 2
  %v177 = vadd.f32 %v175, %v176
  %v178 = vrot.slane %v177, 1
  %v179 = vadd.f32 %v177, %v178
  %v180 = vsel %vm40, %v140, 0.0
  %v181 = vrot.slane %v180, 4
  %v182 = vadd.f32 %v180, %v181
  %v183 = vrot.slane %v182, 2
  %v184 = vadd.f32 %v182, %v183
  %v185 = vrot.slane %v184, 1
  %v186 = vadd.f32 %v184, %v185
  %v187 = vsel %vm40, %v141, 0.0
  %v188 = vrot.slane %v187, 4
  %v189 = vadd.f32 %v187, %v188
  %v190 = vrot.slane %v189, 2
  %v191 = vadd.f32 %v189, %v190
  %v192 = vrot.slane %v191, 1
  %v193 = vadd.f32 %v191, %v192
  %v194 = vsel %vm40, %v142, 0.0
  %v195 = vrot.slane %v194, 4
  %v196 = vadd.f32 %v194, %v195
  %v197 = vrot.slane %v196, 2
  %v198 = vadd.f32 %v196, %v197
  %v199 = vrot.slane %v198, 1
  %v200 = vadd.f32 %v198, %v199
  %v201 = vsel %vm40, %v143, 0.0
  %v202 = vrot.slane %v201, 4
  %v203 = vadd.f32 %v201, %v202
  %v204 = vrot.slane %v203, 2
  %v205 = vadd.f32 %v203, %v204
  %v206 = vrot.slane %v205, 1
  %v207 = vadd.f32 %v205, %v206
  %v216 = vrot.slane %v165, 7
  %v217 = vrot.slane %v172, 6
  %v218 = vrot.slane %v179, 5
  %v219 = vrot.slane %v186, 4
  %v220 = vrot.slane %v193, 3
  %v221 = vrot.slane %v200, 2
  %v222 = vrot.slane %v207, 1
  %v223 = vsel %vm112, %v158, %v216
  %v224 = vsel %vm114, %v217, %v218
  %v225 = vsel %vm40, %v223, %v224
  %v226 = vsel %vm117, %v219, %v220
  %v227 = vsel %vm119, %v221, %v222
  %v228 = vsel %vm121, %v226, %v227
  %v229 = vsel %vm123, %v225, %v228
  %v231 = vadd.f32 %v128, %v229
  %232 = vst [vmem:[%s2] sm:$0xff] %v231
  // Predicated region
  $region10: #{snn_vgg9_forward.92} parent=0 // pred_check
    _
  $region11: #{snn_vgg9_forward.92} parent=0 // pred_check_branch
    %234 = sbr.rel (0) target = $region13
  $region12: #{snn_vgg9_forward.92} parent=0 // pred_region
    _
  $region13: #{snn_vgg9_forward.92} parent=0 // pred_fallthru
    _
  // Predicated region
  $region14: #{snn_vgg9_forward.92} parent=0 // pred_check
    _
  $region15: #{snn_vgg9_forward.92} parent=0 // pred_check_branch
    %236 = sbr.rel (0) target = $region17
  $region16: #{snn_vgg9_forward.92} parent=0 // pred_region
    _
  $region17: #{snn_vgg9_forward.92} parent=0 // pred_fallthru
    _
  // Predicated region
  $region18: #{snn_vgg9_forward.92} parent=0 // pred_check
    _
  $region19: #{snn_vgg9_forward.92} parent=0 // pred_check_branch
    %238 = sbr.rel (0) target = $region21
  $region20: #{snn_vgg9_forward.92} parent=0 // pred_region
    _
  $region21: #{snn_vgg9_forward.92} parent=0 // pred_fallthru
    _
  // Predicated region
  $region22: #{snn_vgg9_forward.92} parent=0 // pred_check
    _
  $region23: #{snn_vgg9_forward.92} parent=0 // pred_check_branch
    %240 = sbr.rel (0) target = $region25
  $region24: #{snn_vgg9_forward.92} parent=0 // pred_region
    _
  $region25: #{snn_vgg9_forward.92} parent=0 // pred_fallthru
    _

// kernel: snn_vgg9_forward.91
$region0: #{snn_vgg9_forward.91}
  #allocation0 [shape = 'u32[]', space=smem, size = 0x4, offset = 0x4, fixed_abs, tag = 'smem constant byte address 0x4 - core index']
  #allocation1 [shape = 'u32[72,128]{1,0:T(1,128)}', space=vmem, size = 0x9000, scoped, tag = 'internal scratch']
  #allocation2 [shape = 'f32[2,256]{1,0:T(2,128)}', space=vmem, size = 0x800, scoped, tag = 'scratch operand']
  %s0 = inlined_call_operand.vmem [shape: bf16[2,4096], index: 0, kind: input, shape index: {}]
  %s1 = inlined_call_operand.vmem [shape: bf16[4096,1024], index: 1, kind: input, shape index: {}]
  %s2 = inlined_call_operand.vmem [shape: f32[1,1024], index: 2, kind: input, shape index: {}]
  %s3 = inlined_call_operand.vmem [shape: f32[2,1024], index: 3, kind: output, shape index: {}]
  %s4 = sld [smem:[#allocation0]]
  $region91: #{snn_vgg9_forward.91} parent=0
    _
  %s6 = ssub.s32 1, %s4
  %s7 = scalar_select 0, %s6, %s4
  $region1: #{snn_vgg9_forward.91} parent=0
    #allocation3 [shape = 'u8[524288]{0}', space=vmem, size = 0x80000, scoped, tag = 'input window, operand 1']
    loop: start=0, step=1, limit=34
    $region2: #{snn_vgg9_forward.91} parent=1 // loop_pre_header
      _
    $region3: #{snn_vgg9_forward.91} parent=1 // loop_header
      %s9 = sphi 0, %s13
      %p10 = scmp.ge.s32.totalorder %s9, 34
      %s16 = sphi 0, %s35
      %s17 = sphi 0, %s31
      %s18 = sphi 0, %s27
      %s19 = sphi 0, %s16
      %s20 = sphi 0, %s17
      %s21 = sphi 0, %s18
      %s22 = sphi 0, %s19
      %s23 = sphi 0, %s20
      %s24 = sphi 0, %s21
      %s40 = sphi 0, %s42
      %s43 = sphi 0, %s40
      %s44 = sphi 0, %s43
      %s60 = sphi 0, %s44
      %s68 = sphi 0, %s70
      %s71 = sphi 0, %s68
      %s72 = sphi 0, %s71
      %s88 = sphi 0, %s72
      %s94 = sphi 0, %s96
      %s97 = sphi 0, %s94
      %s98 = sphi 0, %s97
      %s114 = sphi 0, %s98
      %s122 = sphi 0, %s124
      %s125 = sphi 0, %s122
      %s126 = sphi 0, %s125
      %s142 = sphi 0, %s126
    $region4: #{snn_vgg9_forward.91} parent=1 // loop_header_branch
      %12 = sbr.rel (%p10) target = $region8
    $region5: #{snn_vgg9_forward.91} parent=1 // loop_body
      %s14 = ssub.s32 %s9, 1
      %s15 = ssub.s32 %s9, 2
      %s25 = sadd.s32 1, %s18
      %p26 = scmp.ge.s32.totalorder %s25, 8
      %s27 = scalar_select %p26, 0, %s25
      %s28 = sadd.s32 1, %s17
      %s29 = scalar_select %p26, %s28, %s17
      %p30 = scmp.ge.s32.totalorder %s29, 4
      %s31 = scalar_select %p30, 0, %s29
      %s32 = sadd.s32 1, %s16
      %s33 = scalar_select %p30, %s32, %s16
      %p34 = scmp.ge.s32.totalorder %s33, 1
      %s35 = scalar_select %p34, 0, %s33
      %s36 = ssub.s32 %s16, %s35
      %s37 = ssub.s32 %s18, %s27
      %s38 = sor.u32 %s36, %s37
      %p39 = scmp.eq.s32.totalorder %s38, 0
      %s41 = sadd.s32 %s40, 1
      %s42 = scalar_select %p39, %s40, %s41
      %p45 = pneg %p39
      %p46 = scmp.eq.s32.totalorder %s9, 31
      %p47 = por %p45, %p46
      %p48 = scmp.ne.s32.totalorder %s40, %s43
      %p49 = scmp.eq.s32.totalorder %s9, 0
      %p50 = por %p48, %p49
      %p51 = scmp.ne.s32.totalorder %s40, %s43
      %p52 = scmp.eq.s32.totalorder %s14, 31
      %p53 = por %p51, %p52
      %p54 = scmp.ne.s32.totalorder %s43, %s44
      %p55 = scmp.eq.s32.totalorder %s14, 0
      %p56 = por %p54, %p55
      %p57 = scmp.ne.s32.totalorder %s43, %s44
      %p58 = scmp.eq.s32.totalorder %s15, 31
      %p59 = por %p57, %p58
      %p61 = scmp.ne.s32.totalorder %s44, %s60
      %p62 = scmp.eq.s32.totalorder %s15, 0
      %p63 = por %p61, %p62
      %s64 = ssub.s32 %s18, %s27
      %s65 = ssub.s32 %s17, %s31
      %s66 = sor.u32 %s64, %s65
      %p67 = scmp.eq.s32.totalorder %s66, 0
      %s69 = sadd.s32 %s68, 1
      %s70 = scalar_select %p67, %s68, %s69
      %p73 = pneg %p67
      %p74 = scmp.eq.s32.totalorder %s9, 31
      %p75 = por %p73, %p74
      %p76 = scmp.ne.s32.totalorder %s68, %s71
      %p77 = scmp.eq.s32.totalorder %s9, 0
      %p78 = por %p76, %p77
      %p79 = scmp.ne.s32.totalorder %s68, %s71
      %p80 = scmp.eq.s32.totalorder %s14, 31
      %p81 = por %p79, %p80
      %p82 = scmp.ne.s32.totalorder %s71, %s72
      %p83 = scmp.eq.s32.totalorder %s14, 0
      %p84 = por %p82, %p83
      %p85 = scmp.ne.s32.totalorder %s71, %s72
      %p86 = scmp.eq.s32.totalorder %s15, 31
      %p87 = por %p85, %p86
      %p89 = scmp.ne.s32.totalorder %s72, %s88
      %p90 = scmp.eq.s32.totalorder %s15, 0
      %p91 = por %p89, %p90
      %s92 = ssub.s32 %s17, %s31
      %p93 = scmp.eq.s32.totalorder %s92, 0
      %s95 = sadd.s32 %s94, 1
      %s96 = scalar_select %p93, %s94, %s95
      %p99 = pneg %p93
      %p100 = scmp.eq.s32.totalorder %s9, 31
      %p101 = por %p99, %p100
      %p102 = scmp.ne.s32.totalorder %s94, %s97
      %p103 = scmp.eq.s32.totalorder %s9, 0
      %p104 = por %p102, %p103
      %p105 = scmp.ne.s32.totalorder %s94, %s97
      %p106 = scmp.eq.s32.totalorder %s14, 31
      %p107 = por %p105, %p106
      %p108 = scmp.ne.s32.totalorder %s97, %s98
      %p109 = scmp.eq.s32.totalorder %s14, 0
      %p110 = por %p108, %p109
      %p111 = scmp.ne.s32.totalorder %s97, %s98
      %p112 = scmp.eq.s32.totalorder %s15, 31
      %p113 = por %p111, %p112
      %p115 = scmp.ne.s32.totalorder %s98, %s114
      %p116 = scmp.eq.s32.totalorder %s15, 0
      %p117 = por %p115, %p116
      %s118 = ssub.s32 %s16, %s35
      %s119 = ssub.s32 %s17, %s31
      %s120 = sor.u32 %s118, %s119
      %p121 = scmp.eq.s32.totalorder %s120, 0
      %s123 = sadd.s32 %s122, 1
      %s124 = scalar_select %p121, %s122, %s123
      %p127 = pneg %p121
      %p128 = scmp.eq.s32.totalorder %s9, 31
      %p129 = por %p127, %p128
      %p130 = scmp.ne.s32.totalorder %s122, %s125
      %p131 = scmp.eq.s32.totalorder %s9, 0
      %p132 = por %p130, %p131
      %p133 = scmp.ne.s32.totalorder %s122, %s125
      %p134 = scmp.eq.s32.totalorder %s14, 31
      %p135 = por %p133, %p134
      %p136 = scmp.ne.s32.totalorder %s125, %s126
      %p137 = scmp.eq.s32.totalorder %s14, 0
      %p138 = por %p136, %p137
      %p139 = scmp.ne.s32.totalorder %s125, %s126
      %p140 = scmp.eq.s32.totalorder %s15, 31
      %p141 = por %p139, %p140
      %p143 = scmp.ne.s32.totalorder %s126, %s142
      %p144 = scmp.eq.s32.totalorder %s15, 0
      %p145 = por %p143, %p144
      %p146 = scmp.le.s32.totalorder 1, %s9
      %p147 = scmp.lt.s32.totalorder %s9, 33
      %p148 = pnand %p146, %p147
      %p149 = pneg %p148
      // Predicated region
      $region9: #{snn_vgg9_forward.91} parent=5 // pred_check
        _
      $region10: #{snn_vgg9_forward.91} parent=5 // pred_check_branch
        %151 = sbr.rel (%p148) target = $region12
      $region11: #{snn_vgg9_forward.91} parent=5 // pred_region
        %s152 = ssub.s32 %s9, 1
      $region12: #{snn_vgg9_forward.91} parent=5 // pred_fallthru
        _
      %p153 = scmp.lt.s32.totalorder %s9, 32
      // Predicated region
      $region13: #{snn_vgg9_forward.91} parent=5 // pred_check
        %p154 = pneg %p153
      $region14: #{snn_vgg9_forward.91} parent=5 // pred_check_branch
        %156 = sbr.rel (%p154) target = $region16
      $region15: #{snn_vgg9_forward.91} parent=5 // pred_region
        // Predicated region
        $region17: #{snn_vgg9_forward.91} parent=15 // pred_check
          %p157 = pneg %p50
        $region18: #{snn_vgg9_forward.91} parent=15 // pred_check_branch
          %159 = sbr.rel (%p157) target = $region20
        $region19: #{snn_vgg9_forward.91} parent=15 // pred_region
          %s160 = smul.u32 4, %s18
          %p161 = scmp.lt.s32.totalorder %s16, 0
          %s162 = scalar_select %p161, %s16, 0
          %p163 = scmp.lt.s32.totalorder %s160, 31
          %s164 = scalar_select %p163, %s160, 31
          %s165 = smul.addr %s162, 32
          %s166 = sadd.s32 %s164, %s165
          %s167 = scalar_lea.vmem %s0, %s166
          %s168 = smul.u32 4, %s18
        $region20: #{snn_vgg9_forward.91} parent=15 // pred_fallthru
          _
        // Predicated region
        $region21: #{snn_vgg9_forward.91} parent=15 // pred_check
          %p169 = pneg %p78
        $region22: #{snn_vgg9_forward.91} parent=15 // pred_check_branch
          %171 = sbr.rel (%p169) target = $region24
        $region23: #{snn_vgg9_forward.91} parent=15 // pred_region
          %s172 = sand.u32 %s68, 1
          %s173 = sand.u32 %s68, 1
          %s174 = smul.addr %s173, 512
          %s175 = scalar_lea.vmem [#allocation3], %s174
          %s176 = smul.u32 64, %s18
          %s177 = smul.u32 2, %s17
          %s178 = smul.addr %s176, 8
          %s179 = sadd.s32 %s177, %s178
          %s180 = smul.addr %s179, 4
          %s181 = scalar_lea.vmem %s1, %s180
          // Predicated region
          $region25: #{snn_vgg9_forward.91} parent=23 // pred_check
            _
          $region26: #{snn_vgg9_forward.91} parent=23 // pred_check_branch
            %183 = sbr.rel (0) target = $region28
          $region27: #{snn_vgg9_forward.91} parent=23 // pred_region
            // Predicated region
            $region29: #{snn_vgg9_forward.91} parent=27 // pred_check
              _
            $region30: #{snn_vgg9_forward.91} parent=27 // pred_check_branch
              %185 = sbr.rel (0) target = $region32
            $region31: #{snn_vgg9_forward.91} parent=27 // pred_region
              // Predicated region
              $region44: #{snn_vgg9_forward.91} parent=31 // pred_check
                _
              $region45: #{snn_vgg9_forward.91} parent=31 // pred_check_branch
                %327 = sbr.rel (0) target = $region47
              $region46: #{snn_vgg9_forward.91} parent=31 // pred_region
                loop: start=0, step=1, limit=1
                $region48: #{snn_vgg9_forward.91} parent=46 // loop_pre_header
                  _
                $region49: #{snn_vgg9_forward.91} parent=46 // loop_header
                  %s329 = sphi 0, %s333
                  %p330 = scmp.ge.s32.totalorder %s329, 1
                  %s334 = sphi %s181, %s181
                  %s335 = sphi %s175, %s175
                $region50: #{snn_vgg9_forward.91} parent=46 // loop_header_branch
                  %332 = sbr.rel (%p330) target = $region54
                $region51: #{snn_vgg9_forward.91} parent=46 // loop_body
                  %v336 = vld [vmem:[%s334] sm:$0xff]
                  %337 = vst [vmem:[%s335] sm:$0xff] %v336
                  %v338 = vld [vmem:[%s334 + $0x20] sm:$0xff]
                  %339 = vst [vmem:[%s335 + $0x8] sm:$0xff] %v338
                  %v340 = vld [vmem:[%s334 + $0x40] sm:$0xff]
                  %341 = vst [vmem:[%s335 + $0x10] sm:$0xff] %v340
                  %v342 = vld [vmem:[%s334 + $0x60] sm:$0xff]
                  %343 = vst [vmem:[%s335 + $0x18] sm:$0xff] %v342
                  %v344 = vld [vmem:[%s334 + $0x80] sm:$0xff]
                  %345 = vst [vmem:[%s335 + $0x20] sm:$0xff] %v344
                  %v346 = vld [vmem:[%s334 + $0xa0] sm:$0xff]
                  %347 = vst [vmem:[%s335 + $0x28] sm:$0xff] %v346
                  %v348 = vld [vmem:[%s334 + $0xc0] sm:$0xff]
                  %349 = vst [vmem:[%s335 + $0x30] sm:$0xff] %v348
                  %v350 = vld [vmem:[%s334 + $0xe0] sm:$0xff]
                  %351 = vst [vmem:[%s335 + $0x38] sm:$0xff] %v350
                  %v352 = vld [vmem:[%s334 + $0x100] sm:$0xff]
                  %353 = vst [vmem:[%s335 + $0x40] sm:$0xff] %v352
                  %v354 = vld [vmem:[%s334 + $0x120] sm:$0xff]
                  %355 = vst [vmem:[%s335 + $0x48] sm:$0xff] %v354
                  %v356 = vld [vmem:[%s334 + $0x140] sm:$0xff]
                  %357 = vst [vmem:[%s335 + $0x50] sm:$0xff] %v356
                  %v358 = vld [vmem:[%s334 + $0x160] sm:$0xff]
                  %359 = vst [vmem:[%s335 + $0x58] sm:$0xff] %v358
                  %v360 = vld [vmem:[%s334 + $0x180] sm:$0xff]
                  %361 = vst [vmem:[%s335 + $0x60] sm:$0xff] %v360
                  %v362 = vld [vmem:[%s334 + $0x1a0] sm:$0xff]
                  %363 = vst [vmem:[%s335 + $0x68] sm:$0xff] %v362
                  %v364 = vld [vmem:[%s334 + $0x1c0] sm:$0xff]
                  %365 = vst [vmem:[%s335 + $0x70] sm:$0xff] %v364
                  %v366 = vld [vmem:[%s334 + $0x1e0] sm:$0xff]
                  %367 = vst [vmem:[%s335 + $0x78] sm:$0xff] %v366
                  %v368 = vld [vmem:[%s334 + $0x200] sm:$0xff]
                  %369 = vst [vmem:[%s335 + $0x80] sm:$0xff] %v368
                  %v370 = vld [vmem:[%s334 + $0x220] sm:$0xff]
                  %371 = vst [vmem:[%s335 + $0x88] sm:$0xff] %v370
                  %v372 = vld [vmem:[%s334 + $0x240] sm:$0xff]
                  %373 = vst [vmem:[%s335 + $0x90] sm:$0xff] %v372
                  %v374 = vld [vmem:[%s334 + $0x260] sm:$0xff]
                  %375 = vst [vmem:[%s335 + $0x98] sm:$0xff] %v374
                  %v376 = vld [vmem:[%s334 + $0x280] sm:$0xff]
                  %377 = vst [vmem:[%s335 + $0xa0] sm:$0xff] %v376
                  %v378 = vld [vmem:[%s334 + $0x2a0] sm:$0xff]
                  %379 = vst [vmem:[%s335 + $0xa8] sm:$0xff] %v378
                  %v380 = vld [vmem:[%s334 + $0x2c0] sm:$0xff]
                  %381 = vst [vmem:[%s335 + $0xb0] sm:$0xff] %v380
                  %v382 = vld [vmem:[%s334 + $0x2e0] sm:$0xff]
                  %383 = vst [vmem:[%s335 + $0xb8] sm:$0xff] %v382
                  %v384 = vld [vmem:[%s334 + $0x300] sm:$0xff]
                  %385 = vst [vmem:[%s335 + $0xc0] sm:$0xff] %v384
                  %v386 = vld [vmem:[%s334 + $0x320] sm:$0xff]
                  %387 = vst [vmem:[%s335 + $0xc8] sm:$0xff] %v386
                  %v388 = vld [vmem:[%s334 + $0x340] sm:$0xff]
                  %389 = vst [vmem:[%s335 + $0xd0] sm:$0xff] %v388
                  %v390 = vld [vmem:[%s334 + $0x360] sm:$0xff]
                  %391 = vst [vmem:[%s335 + $0xd8] sm:$0xff] %v390
                  %v392 = vld [vmem:[%s334 + $0x380] sm:$0xff]
                  %393 = vst [vmem:[%s335 + $0xe0] sm:$0xff] %v392
                  %v394 = vld [vmem:[%s334 + $0x3a0] sm:$0xff]
                  %395 = vst [vmem:[%s335 + $0xe8] sm:$0xff] %v394
                  %v396 = vld [vmem:[%s334 + $0x3c0] sm:$0xff]
                  %397 = vst [vmem:[%s335 + $0xf0] sm:$0xff] %v396
                  %v398 = vld [vmem:[%s334 + $0x3e0] sm:$0xff]
                  %399 = vst [vmem:[%s335 + $0xf8] sm:$0xff] %v398
                  %v400 = vld [vmem:[%s334 + $0x400] sm:$0xff]
                  %401 = vst [vmem:[%s335 + $0x100] sm:$0xff] %v400
                  %v402 = vld [vmem:[%s334 + $0x420] sm:$0xff]
                  %403 = vst [vmem:[%s335 + $0x108] sm:$0xff] %v402
                  %v404 = vld [vmem:[%s334 + $0x440] sm:$0xff]
                  %405 = vst [vmem:[%s335 + $0x110] sm:$0xff] %v404
                  %v406 = vld [vmem:[%s334 + $0x460] sm:$0xff]
                  %407 = vst [vmem:[%s335 + $0x118] sm:$0xff] %v406
                  %v408 = vld [vmem:[%s334 + $0x480] sm:$0xff]
                  %409 = vst [vmem:[%s335 + $0x120] sm:$0xff] %v408
                  %v410 = vld [vmem:[%s334 + $0x4a0] sm:$0xff]
                  %411 = vst [vmem:[%s335 + $0x128] sm:$0xff] %v410
                  %v412 = vld [vmem:[%s334 + $0x4c0] sm:$0xff]
                  %413 = vst [vmem:[%s335 + $0x130] sm:$0xff] %v412
                  %v414 = vld [vmem:[%s334 + $0x4e0] sm:$0xff]
                  %415 = vst [vmem:[%s335 + $0x138] sm:$0xff] %v414
                  %v416 = vld [vmem:[%s334 + $0x500] sm:$0xff]
                  %417 = vst [vmem:[%s335 + $0x140] sm:$0xff] %v416
                  %v418 = vld [vmem:[%s334 + $0x520] sm:$0xff]
                  %419 = vst [vmem:[%s335 + $0x148] sm:$0xff] %v418
                  %v420 = vld [vmem:[%s334 + $0x540] sm:$0xff]
                  %421 = vst [vmem:[%s335 + $0x150] sm:$0xff] %v420
                  %v422 = vld [vmem:[%s334 + $0x560] sm:$0xff]
                  %423 = vst [vmem:[%s335 + $0x158] sm:$0xff] %v422
                  %v424 = vld [vmem:[%s334 + $0x580] sm:$0xff]
                  %425 = vst [vmem:[%s335 + $0x160] sm:$0xff] %v424
                  %v426 = vld [vmem:[%s334 + $0x5a0] sm:$0xff]
                  %427 = vst [vmem:[%s335 + $0x168] sm:$0xff] %v426
                  %v428 = vld [vmem:[%s334 + $0x5c0] sm:$0xff]
                  %429 = vst [vmem:[%s335 + $0x170] sm:$0xff] %v428
                  %v430 = vld [vmem:[%s334 + $0x5e0] sm:$0xff]
                  %431 = vst [vmem:[%s335 + $0x178] sm:$0xff] %v430
                  %v432 = vld [vmem:[%s334 + $0x600] sm:$0xff]
                  %433 = vst [vmem:[%s335 + $0x180] sm:$0xff] %v432
                  %v434 = vld [vmem:[%s334 + $0x620] sm:$0xff]
                  %435 = vst [vmem:[%s335 + $0x188] sm:$0xff] %v434
                  %v436 = vld [vmem:[%s334 + $0x640] sm:$0xff]
                  %437 = vst [vmem:[%s335 + $0x190] sm:$0xff] %v436
                  %v438 = vld [vmem:[%s334 + $0x660] sm:$0xff]
                  %439 = vst [vmem:[%s335 + $0x198] sm:$0xff] %v438
                  %v440 = vld [vmem:[%s334 + $0x680] sm:$0xff]
                  %441 = vst [vmem:[%s335 + $0x1a0] sm:$0xff] %v440
                  %v442 = vld [vmem:[%s334 + $0x6a0] sm:$0xff]
                  %443 = vst [vmem:[%s335 + $0x1a8] sm:$0xff] %v442
                  %v444 = vld [vmem:[%s334 + $0x6c0] sm:$0xff]
                  %445 = vst [vmem:[%s335 + $0x1b0] sm:$0xff] %v444
                  %v446 = vld [vmem:[%s334 + $0x6e0] sm:$0xff]
                  %447 = vst [vmem:[%s335 + $0x1b8] sm:$0xff] %v446
                  %v448 = vld [vmem:[%s334 + $0x700] sm:$0xff]
                  %449 = vst [vmem:[%s335 + $0x1c0] sm:$0xff] %v448
                  %v450 = vld [vmem:[%s334 + $0x720] sm:$0xff]
                  %451 = vst [vmem:[%s335 + $0x1c8] sm:$0xff] %v450
                  %v452 = vld [vmem:[%s334 + $0x740] sm:$0xff]
                  %453 = vst [vmem:[%s335 + $0x1d0] sm:$0xff] %v452
                  %v454 = vld [vmem:[%s334 + $0x760] sm:$0xff]
                  %455 = vst [vmem:[%s335 + $0x1d8] sm:$0xff] %v454
                  %v456 = vld [vmem:[%s334 + $0x780] sm:$0xff]
                  %457 = vst [vmem:[%s335 + $0x1e0] sm:$0xff] %v456
                  %v458 = vld [vmem:[%s334 + $0x7a0] sm:$0xff]
                  %459 = vst [vmem:[%s335 + $0x1e8] sm:$0xff] %v458
                  %v460 = vld [vmem:[%s334 + $0x7c0] sm:$0xff]
                  %461 = vst [vmem:[%s335 + $0x1f0] sm:$0xff] %v460
                  %v462 = vld [vmem:[%s334 + $0x7e0] sm:$0xff]
                  %463 = vst [vmem:[%s335 + $0x1f8] sm:$0xff] %v462
                $region52: #{snn_vgg9_forward.91} parent=46 // loop_footer
                  %s333 = sadd.s32 1, %s329
                $region53: #{snn_vgg9_forward.91} parent=46 // loop_footer_branch
                  %328 = sbr.rel target = $region49
                $region54: #{snn_vgg9_forward.91} parent=46 // loop_exit
                  _
              $region47: #{snn_vgg9_forward.91} parent=31 // pred_fallthru
                _
              // Predicated region
              $region55: #{snn_vgg9_forward.91} parent=31 // pred_check
                _
              $region56: #{snn_vgg9_forward.91} parent=31 // pred_check_branch
                %465 = sbr.rel target = $region58
              $region57: #{snn_vgg9_forward.91} parent=31 // pred_region
                _
              $region58: #{snn_vgg9_forward.91} parent=31 // pred_fallthru
                _
            $region32: #{snn_vgg9_forward.91} parent=27 // pred_fallthru
              _
            // Predicated region
            $region33: #{snn_vgg9_forward.91} parent=27 // pred_check
              _
            $region34: #{snn_vgg9_forward.91} parent=27 // pred_check_branch
              %187 = sbr.rel target = $region36
            $region35: #{snn_vgg9_forward.91} parent=27 // pred_region
              %s189 = ssub.s32 256, 1
              loop: start=0, step=1, limit=1
              $region37: #{snn_vgg9_forward.91} parent=35 // loop_pre_header
                _
              $region38: #{snn_vgg9_forward.91} parent=35 // loop_header
                %s191 = sphi 0, %s195
                %p192 = scmp.ge.s32.totalorder %s191, 1
                %s196 = sphi %s181, %s181
                %s197 = sphi %s175, %s175
              $region39: #{snn_vgg9_forward.91} parent=35 // loop_header_branch
                %194 = sbr.rel (%p192) target = $region43
              $region40: #{snn_vgg9_forward.91} parent=35 // loop_body
                %v198 = vld [vmem:[%s196] sm:%s189]
                %199 = vst [vmem:[%s197] sm:%s189] %v198
                %v200 = vld [vmem:[%s196 + $0x20] sm:%s189]
                %201 = vst [vmem:[%s197 + $0x8] sm:%s189] %v200
                %v202 = vld [vmem:[%s196 + $0x40] sm:%s189]
                %203 = vst [vmem:[%s197 + $0x10] sm:%s189] %v202
                %v204 = vld [vmem:[%s196 + $0x60] sm:%s189]
                %205 = vst [vmem:[%s197 + $0x18] sm:%s189] %v204
                %v206 = vld [vmem:[%s196 + $0x80] sm:%s189]
                %207 = vst [vmem:[%s197 + $0x20] sm:%s189] %v206
                %v208 = vld [vmem:[%s196 + $0xa0] sm:%s189]
                %209 = vst [vmem:[%s197 + $0x28] sm:%s189] %v208
                %v210 = vld [vmem:[%s196 + $0xc0] sm:%s189]
                %211 = vst [vmem:[%s197 + $0x30] sm:%s189] %v210
                %v212 = vld [vmem:[%s196 + $0xe0] sm:%s189]
                %213 = vst [vmem:[%s197 + $0x38] sm:%s189] %v212
                %v214 = vld [vmem:[%s196 + $0x100] sm:%s189]
                %215 = vst [vmem:[%s197 + $0x40] sm:%s189] %v214
                %v216 = vld [vmem:[%s196 + $0x120] sm:%s189]
                %217 = vst [vmem:[%s197 + $0x48] sm:%s189] %v216
                %v218 = vld [vmem:[%s196 + $0x140] sm:%s189]
                %219 = vst [vmem:[%s197 + $0x50] sm:%s189] %v218
                %v220 = vld [vmem:[%s196 + $0x160] sm:%s189]
                %221 = vst [vmem:[%s197 + $0x58] sm:%s189] %v220
                %v222 = vld [vmem:[%s196 + $0x180] sm:%s189]
                %223 = vst [vmem:[%s197 + $0x60] sm:%s189] %v222
                %v224 = vld [vmem:[%s196 + $0x1a0] sm:%s189]
                %225 = vst [vmem:[%s197 + $0x68] sm:%s189] %v224
                %v226 = vld [vmem:[%s196 + $0x1c0] sm:%s189]
                %227 = vst [vmem:[%s197 + $0x70] sm:%s189] %v226
                %v228 = vld [vmem:[%s196 + $0x1e0] sm:%s189]
                %229 = vst [vmem:[%s197 + $0x78] sm:%s189] %v228
                %v230 = vld [vmem:[%s196 + $0x200] sm:%s189]
                %231 = vst [vmem:[%s197 + $0x80] sm:%s189] %v230
                %v232 = vld [vmem:[%s196 + $0x220] sm:%s189]
                %233 = vst [vmem:[%s197 + $0x88] sm:%s189] %v232
                %v234 = vld [vmem:[%s196 + $0x240] sm:%s189]
                %235 = vst [vmem:[%s197 + $0x90] sm:%s189] %v234
                %v236 = vld [vmem:[%s196 + $0x260] sm:%s189]
                %237 = vst [vmem:[%s197 + $0x98] sm:%s189] %v236
                %v238 = vld [vmem:[%s196 + $0x280] sm:%s189]
                %239 = vst [vmem:[%s197 + $0xa0] sm:%s189] %v238
                %v240 = vld [vmem:[%s196 + $0x2a0] sm:%s189]
                %241 = vst [vmem:[%s197 + $0xa8] sm:%s189] %v240
                %v242 = vld [vmem:[%s196 + $0x2c0] sm:%s189]
                %243 = vst [vmem:[%s197 + $0xb0] sm:%s189] %v242
                %v244 = vld [vmem:[%s196 + $0x2e0] sm:%s189]
                %245 = vst [vmem:[%s197 + $0xb8] sm:%s189] %v244
                %v246 = vld [vmem:[%s196 + $0x300] sm:%s189]
                %247 = vst [vmem:[%s197 + $0xc0] sm:%s189] %v246
                %v248 = vld [vmem:[%s196 + $0x320] sm:%s189]
                %249 = vst [vmem:[%s197 + $0xc8] sm:%s189] %v248
                %v250 = vld [vmem:[%s196 + $0x340] sm:%s189]
                %251 = vst [vmem:[%s197 + $0xd0] sm:%s189] %v250
                %v252 = vld [vmem:[%s196 + $0x360] sm:%s189]
                %253 = vst [vmem:[%s197 + $0xd8] sm:%s189] %v252
                %v254 = vld [vmem:[%s196 + $0x380] sm:%s189]
                %255 = vst [vmem:[%s197 + $0xe0] sm:%s189] %v254
                %v256 = vld [vmem:[%s196 + $0x3a0] sm:%s189]
                %257 = vst [vmem:[%s197 + $0xe8] sm:%s189] %v256
                %v258 = vld [vmem:[%s196 + $0x3c0] sm:%s189]
                %259 = vst [vmem:[%s197 + $0xf0] sm:%s189] %v258
                %v260 = vld [vmem:[%s196 + $0x3e0] sm:%s189]
                %261 = vst [vmem:[%s197 + $0xf8] sm:%s189] %v260
                %v262 = vld [vmem:[%s196 + $0x400] sm:%s189]
                %263 = vst [vmem:[%s197 + $0x100] sm:%s189] %v262
                %v264 = vld [vmem:[%s196 + $0x420] sm:%s189]
                %265 = vst [vmem:[%s197 + $0x108] sm:%s189] %v264
                %v266 = vld [vmem:[%s196 + $0x440] sm:%s189]
                %267 = vst [vmem:[%s197 + $0x110] sm:%s189] %v266
                %v268 = vld [vmem:[%s196 + $0x460] sm:%s189]
                %269 = vst [vmem:[%s197 + $0x118] sm:%s189] %v268
                %v270 = vld [vmem:[%s196 + $0x480] sm:%s189]
                %271 = vst [vmem:[%s197 + $0x120] sm:%s189] %v270
                %v272 = vld [vmem:[%s196 + $0x4a0] sm:%s189]
                %273 = vst [vmem:[%s197 + $0x128] sm:%s189] %v272
                %v274 = vld [vmem:[%s196 + $0x4c0] sm:%s189]
                %275 = vst [vmem:[%s197 + $0x130] sm:%s189] %v274
                %v276 = vld [vmem:[%s196 + $0x4e0] sm:%s189]
                %277 = vst [vmem:[%s197 + $0x138] sm:%s189] %v276
                %v278 = vld [vmem:[%s196 + $0x500] sm:%s189]
                %279 = vst [vmem:[%s197 + $0x140] sm:%s189] %v278
                %v280 = vld [vmem:[%s196 + $0x520] sm:%s189]
                %281 = vst [vmem:[%s197 + $0x148] sm:%s189] %v280
                %v282 = vld [vmem:[%s196 + $0x540] sm:%s189]
                %283 = vst [vmem:[%s197 + $0x150] sm:%s189] %v282
                %v284 = vld [vmem:[%s196 + $0x560] sm:%s189]
                %285 = vst [vmem:[%s197 + $0x158] sm:%s189] %v284
                %v286 = vld [vmem:[%s196 + $0x580] sm:%s189]
                %287 = vst [vmem:[%s197 + $0x160] sm:%s189] %v286
                %v288 = vld [vmem:[%s196 + $0x5a0] sm:%s189]
                %289 = vst [vmem:[%s197 + $0x168] sm:%s189] %v288
                %v290 = vld [vmem:[%s196 + $0x5c0] sm:%s189]
                %291 = vst [vmem:[%s197 + $0x170] sm:%s189] %v290
                %v292 = vld [vmem:[%s196 + $0x5e0] sm:%s189]
                %293 = vst [vmem:[%s197 + $0x178] sm:%s189] %v292
                %v294 = vld [vmem:[%s196 + $0x600] sm:%s189]
                %295 = vst [vmem:[%s197 + $0x180] sm:%s189] %v294
                %v296 = vld [vmem:[%s196 + $0x620] sm:%s189]
                %297 = vst [vmem:[%s197 + $0x188] sm:%s189] %v296
                %v298 = vld [vmem:[%s196 + $0x640] sm:%s189]
                %299 = vst [vmem:[%s197 + $0x190] sm:%s189] %v298
                %v300 = vld [vmem:[%s196 + $0x660] sm:%s189]
                %301 = vst [vmem:[%s197 + $0x198] sm:%s189] %v300
                %v302 = vld [vmem:[%s196 + $0x680] sm:%s189]
                %303 = vst [vmem:[%s197 + $0x1a0] sm:%s189] %v302
                %v304 = vld [vmem:[%s196 + $0x6a0] sm:%s189]
                %305 = vst [vmem:[%s197 + $0x1a8] sm:%s189] %v304
                %v306 = vld [vmem:[%s196 + $0x6c0] sm:%s189]
                %307 = vst [vmem:[%s197 + $0x1b0] sm:%s189] %v306
                %v308 = vld [vmem:[%s196 + $0x6e0] sm:%s189]
                %309 = vst [vmem:[%s197 + $0x1b8] sm:%s189] %v308
                %v310 = vld [vmem:[%s196 + $0x700] sm:%s189]
                %311 = vst [vmem:[%s197 + $0x1c0] sm:%s189] %v310
                %v312 = vld [vmem:[%s196 + $0x720] sm:%s189]
                %313 = vst [vmem:[%s197 + $0x1c8] sm:%s189] %v312
                %v314 = vld [vmem:[%s196 + $0x740] sm:%s189]
                %315 = vst [vmem:[%s197 + $0x1d0] sm:%s189] %v314
                %v316 = vld [vmem:[%s196 + $0x760] sm:%s189]
                %317 = vst [vmem:[%s197 + $0x1d8] sm:%s189] %v316
                %v318 = vld [vmem:[%s196 + $0x780] sm:%s189]
                %319 = vst [vmem:[%s197 + $0x1e0] sm:%s189] %v318
                %v320 = vld [vmem:[%s196 + $0x7a0] sm:%s189]
                %321 = vst [vmem:[%s197 + $0x1e8] sm:%s189] %v320
                %v322 = vld [vmem:[%s196 + $0x7c0] sm:%s189]
                %323 = vst [vmem:[%s197 + $0x1f0] sm:%s189] %v322
                %v324 = vld [vmem:[%s196 + $0x7e0] sm:%s189]
                %325 = vst [vmem:[%s197 + $0x1f8] sm:%s189] %v324
              $region41: #{snn_vgg9_forward.91} parent=35 // loop_footer
                %s195 = sadd.s32 1, %s191
              $region42: #{snn_vgg9_forward.91} parent=35 // loop_footer_branch
                %190 = sbr.rel target = $region38
              $region43: #{snn_vgg9_forward.91} parent=35 // loop_exit
                _
            $region36: #{snn_vgg9_forward.91} parent=27 // pred_fallthru
              _
          $region28: #{snn_vgg9_forward.91} parent=23 // pred_fallthru
            _
          %466 = vnop
        $region24: #{snn_vgg9_forward.91} parent=15 // pred_fallthru
          _
        // Predicated region
        $region59: #{snn_vgg9_forward.91} parent=15 // pred_check
          %p467 = pneg %p104
        $region60: #{snn_vgg9_forward.91} parent=15 // pred_check_branch
          %469 = sbr.rel (%p467) target = $region62
        $region61: #{snn_vgg9_forward.91} parent=15 // pred_region
          %s470 = smul.u32 2, %s17
          %p471 = scmp.lt.s32.totalorder %s470, 7
          %s472 = scalar_select %p471, %s470, 7
          %s473 = scalar_lea.vmem %s2, %s472
          %s474 = smul.u32 2, %s17
        $region62: #{snn_vgg9_forward.91} parent=15 // pred_fallthru
          _
      $region16: #{snn_vgg9_forward.91} parent=5 // pred_fallthru
        _
      %p475 = scmp.le.s32.totalorder 1, %s9
      %p476 = scmp.lt.s32.totalorder %s9, 33
      %p477 = pnand %p475, %p476
      %p478 = pneg %p477
      // Predicated region
      $region63: #{snn_vgg9_forward.91} parent=5 // pred_check
        _
      $region64: #{snn_vgg9_forward.91} parent=5 // pred_check_branch
        %480 = sbr.rel (%p477) target = $region66
      $region65: #{snn_vgg9_forward.91} parent=5 // pred_region
        %s481 = ssub.s32 %s9, 1
        %s482 = sand.u32 %s71, 1
        %s483 = sand.u32 %s71, 1
        %s484 = smul.addr %s483, 512
        %s485 = scalar_lea.vmem [#allocation3], %s484
        // Predicated region
        $region67: #{snn_vgg9_forward.91} parent=65 // pred_check
          %p486 = pneg %p84
        $region68: #{snn_vgg9_forward.91} parent=65 // pred_check_branch
          %488 = sbr.rel (%p486) target = $region70
        $region69: #{snn_vgg9_forward.91} parent=65 // pred_region
          _
        $region70: #{snn_vgg9_forward.91} parent=65 // pred_fallthru
          _
        %s489 = smul.u32 4, %s21
        %p490 = scmp.lt.s32.totalorder %s19, 0
        %s491 = scalar_select %p490, %s19, 0
        %p492 = scmp.lt.s32.totalorder %s489, 31
        %s493 = scalar_select %p492, %s489, 31
        %s494 = smul.addr %s491, 32
        %s495 = sadd.s32 %s493, %s494
        %s496 = scalar_lea.vmem %s0, %s495
        %p497 = pneg %p56
        %p498 = pneg %p53
        %s499 = sand.u32 %s71, 1
        %s500 = sand.u32 %s71, 1
        %s501 = smul.addr %s500, 512
        %s502 = scalar_lea.vmem [#allocation3], %s501
        %p503 = pneg %p84
        %p504 = pneg %p81
        %s505 = smul.u32 2, %s20
        %p506 = scmp.lt.s32.totalorder %s505, 7
        %s507 = scalar_select %p506, %s505, 7
        %s508 = scalar_lea.vmem %s2, %s507
        %p509 = pneg %p110
        %p510 = pneg %p107
        %p511 = pneg %p138
        %p512 = pneg %p135
        %s513 = smul.u32 2, %s20
        %p514 = scmp.lt.s32.totalorder %s19, 0
        %s515 = scalar_select %p514, %s19, 0
        %p516 = scmp.lt.s32.totalorder %s513, 7
        %s517 = scalar_select %p516, %s513, 7
        %s518 = smul.addr %s515, 8
        %s519 = sadd.s32 %s517, %s518
        %s520 = smul.addr %s519, 2
        %s521 = scalar_lea.vmem %s3, %s520
        %s522 = smul.u32 4, %s21
        %p523 = scmp.lt.s32.totalorder %s19, 0
        %s524 = scalar_select %p523, %s19, 0
        %p525 = scmp.lt.s32.totalorder %s522, 31
        %s526 = scalar_select %p525, %s522, 31
        %s527 = smul.addr %s524, 32
        %s528 = sadd.s32 %s526, %s527
        %s529 = scalar_lea.vmem %s0, %s528
        %s530 = smul.u32 4, %s21
        %s531 = smul.u32 64, %s21
        %s532 = smul.u32 2, %s20
        %s533 = smul.u32 2, %s20
        %p534 = scmp.lt.s32.totalorder %s533, 7
        %s535 = scalar_select %p534, %s533, 7
        %s536 = scalar_lea.vmem %s2, %s535
        %s537 = smul.u32 2, %s20
        %s538 = smul.u32 2, %s20
        %p539 = scmp.lt.s32.totalorder %s19, 0
        %s540 = scalar_select %p539, %s19, 0
        %p541 = scmp.lt.s32.totalorder %s538, 7
        %s542 = scalar_select %p541, %s538, 7
        %s543 = smul.addr %s540, 8
        %s544 = sadd.s32 %s542, %s543
        %s545 = smul.addr %s544, 2
        %s546 = scalar_lea.vmem %s3, %s545
        %s547 = smul.u32 2, %s20
        %p548 = scmp.eq.s32.totalorder %s21, 0
        // Predicated region
        $region71: #{snn_vgg9_forward.91} parent=65 // pred_check
          %p549 = pneg %p548
        $region72: #{snn_vgg9_forward.91} parent=65 // pred_check_branch
          %551 = sbr.rel (%p549) target = $region74
        $region73: #{snn_vgg9_forward.91} parent=65 // pred_region
          %552 = vst [vmem:[#allocation2] sm:$0xf] 0.0
        $region74: #{snn_vgg9_forward.91} parent=65 // pred_fallthru
          _
        %v553 = vld [vmem:[#allocation2] sm:$0xf]
        %v554 = vld [vmem:[%s529] sm:$0xf]
        %v555 = vld [vmem:[%s485] sm:$0xff]
        %v556 = vld [vmem:[%s485 + $0x8] sm:$0xff]
        %v557 = vld [vmem:[%s485 + $0x10] sm:$0xff]
        %v558 = vld [vmem:[%s485 + $0x18] sm:$0xff]
        %v559 = vld [vmem:[%s485 + $0x20] sm:$0xff]
        %v560 = vld [vmem:[%s485 + $0x28] sm:$0xff]
        %v561 = vld [vmem:[%s485 + $0x30] sm:$0xff]
        %v562 = vld [vmem:[%s485 + $0x38] sm:$0xff]
        %v563 = vld [vmem:[%s485 + $0x40] sm:$0xff]
        %v564 = vld [vmem:[%s485 + $0x48] sm:$0xff]
        %v565 = vld [vmem:[%s485 + $0x50] sm:$0xff]
        %v566 = vld [vmem:[%s485 + $0x58] sm:$0xff]
        %v567 = vld [vmem:[%s485 + $0x60] sm:$0xff]
        %v568 = vld [vmem:[%s485 + $0x68] sm:$0xff]
        %v569 = vld [vmem:[%s485 + $0x70] sm:$0xff]
        %v570 = vld [vmem:[%s485 + $0x78] sm:$0xff]
        %v571 = vld [vmem:[%s485 + $0x80] sm:$0xff]
        %v572 = vld [vmem:[%s485 + $0x88] sm:$0xff]
        %v573 = vld [vmem:[%s485 + $0x90] sm:$0xff]
        %v574 = vld [vmem:[%s485 + $0x98] sm:$0xff]
        %v575 = vld [vmem:[%s485 + $0xa0] sm:$0xff]
        %v576 = vld [vmem:[%s485 + $0xa8] sm:$0xff]
        %v577 = vld [vmem:[%s485 + $0xb0] sm:$0xff]
        %v578 = vld [vmem:[%s485 + $0xb8] sm:$0xff]
        %v579 = vld [vmem:[%s485 + $0xc0] sm:$0xff]
        %v580 = vld [vmem:[%s485 + $0xc8] sm:$0xff]
        %v581 = vld [vmem:[%s485 + $0xd0] sm:$0xff]
        %v582 = vld [vmem:[%s485 + $0xd8] sm:$0xff]
        %v583 = vld [vmem:[%s485 + $0xe0] sm:$0xff]
        %v584 = vld [vmem:[%s485 + $0xe8] sm:$0xff]
        %v585 = vld [vmem:[%s485 + $0xf0] sm:$0xff]
        %v586 = vld [vmem:[%s485 + $0xf8] sm:$0xff]
        %v587 = vld [vmem:[%s485 + $0x100] sm:$0xff]
        %v588 = vld [vmem:[%s485 + $0x108] sm:$0xff]
        %v589 = vld [vmem:[%s485 + $0x110] sm:$0xff]
        %v590 = vld [vmem:[%s485 + $0x118] sm:$0xff]
        %v591 = vld [vmem:[%s485 + $0x120] sm:$0xff]
        %v592 = vld [vmem:[%s485 + $0x128] sm:$0xff]
        %v593 = vld [vmem:[%s485 + $0x130] sm:$0xff]
        %v594 = vld [vmem:[%s485 + $0x138] sm:$0xff]
        %v595 = vld [vmem:[%s485 + $0x140] sm:$0xff]
        %v596 = vld [vmem:[%s485 + $0x148] sm:$0xff]
        %v597 = vld [vmem:[%s485 + $0x150] sm:$0xff]
        %v598 = vld [vmem:[%s485 + $0x158] sm:$0xff]
        %v599 = vld [vmem:[%s485 + $0x160] sm:$0xff]
        %v600 = vld [vmem:[%s485 + $0x168] sm:$0xff]
        %v601 = vld [vmem:[%s485 + $0x170] sm:$0xff]
        %v602 = vld [vmem:[%s485 + $0x178] sm:$0xff]
        %v603 = vld [vmem:[%s485 + $0x180] sm:$0xff]
        %v604 = vld [vmem:[%s485 + $0x188] sm:$0xff]
        %v605 = vld [vmem:[%s485 + $0x190] sm:$0xff]
        %v606 = vld [vmem:[%s485 + $0x198] sm:$0xff]
        %v607 = vld [vmem:[%s485 + $0x1a0] sm:$0xff]
        %v608 = vld [vmem:[%s485 + $0x1a8] sm:$0xff]
        %v609 = vld [vmem:[%s485 + $0x1b0] sm:$0xff]
        %v610 = vld [vmem:[%s485 + $0x1b8] sm:$0xff]
        %v611 = vld [vmem:[%s485 + $0x1c0] sm:$0xff]
        %v612 = vld [vmem:[%s485 + $0x1c8] sm:$0xff]
        %v613 = vld [vmem:[%s485 + $0x1d0] sm:$0xff]
        %v614 = vld [vmem:[%s485 + $0x1d8] sm:$0xff]
        %v615 = vld [vmem:[%s485 + $0x1e0] sm:$0xff]
        %v616 = vld [vmem:[%s485 + $0x1e8] sm:$0xff]
        %v617 = vld [vmem:[%s485 + $0x1f0] sm:$0xff]
        %v618 = vld [vmem:[%s485 + $0x1f8] sm:$0xff]
        %620 = vst [vmem:[#allocation1] ss:$9 sm:$0xff] %v554
        %v621 = vld [vmem:[#allocation1] sm:$0xff]
        %v622 = vld [vmem:[#allocation1 + $0x9] sm:$0xff]
        %v623 = vld [vmem:[#allocation1 + $0x12] sm:$0xff]
        %v624 = vld [vmem:[#allocation1 + $0x1b] sm:$0xff]
        %v693 = vunpack.c.l.b16 %v555
        %v694 = vunpack.c.h.b16 %v555
        %v695 = vunpack.c.l.b16 %v556
        %v696 = vunpack.c.h.b16 %v556
        %v697 = vunpack.c.l.b16 %v557
        %v698 = vunpack.c.h.b16 %v557
        %v699 = vunpack.c.l.b16 %v558
        %v700 = vunpack.c.h.b16 %v558
        %v701 = vunpack.c.l.b16 %v559
        %v702 = vunpack.c.h.b16 %v559
        %v703 = vunpack.c.l.b16 %v560
        %v704 = vunpack.c.h.b16 %v560
        %v705 = vunpack.c.l.b16 %v561
        %v706 = vunpack.c.h.b16 %v561
        %v707 = vunpack.c.l.b16 %v562
        %v708 = vunpack.c.h.b16 %v562
        %v709 = vunpack.c.l.b16 %v563
        %v710 = vunpack.c.h.b16 %v563
        %v711 = vunpack.c.l.b16 %v564
        %v712 = vunpack.c.h.b16 %v564
        %v713 = vunpack.c.l.b16 %v565
        %v714 = vunpack.c.h.b16 %v565
        %v715 = vunpack.c.l.b16 %v566
        %v716 = vunpack.c.h.b16 %v566
        %v717 = vunpack.c.l.b16 %v567
        %v718 = vunpack.c.h.b16 %v567
        %v719 = vunpack.c.l.b16 %v568
        %v720 = vunpack.c.h.b16 %v568
        %v721 = vunpack.c.l.b16 %v569
        %v722 = vunpack.c.h.b16 %v569
        %v723 = vunpack.c.l.b16 %v570
        %v724 = vunpack.c.h.b16 %v570
        %v725 = vunpack.c.l.b16 %v571
        %v726 = vunpack.c.h.b16 %v571
        %v727 = vunpack.c.l.b16 %v572
        %v728 = vunpack.c.h.b16 %v572
        %v729 = vunpack.c.l.b16 %v573
        %v730 = vunpack.c.h.b16 %v573
        %v731 = vunpack.c.l.b16 %v574
        %v732 = vunpack.c.h.b16 %v574
        %v733 = vunpack.c.l.b16 %v575
        %v734 = vunpack.c.h.b16 %v575
        %v735 = vunpack.c.l.b16 %v576
        %v736 = vunpack.c.h.b16 %v576
        %v737 = vunpack.c.l.b16 %v577
        %v738 = vunpack.c.h.b16 %v577
        %v739 = vunpack.c.l.b16 %v578
        %v740 = vunpack.c.h.b16 %v578
        %v741 = vunpack.c.l.b16 %v579
        %v742 = vunpack.c.h.b16 %v579
        %v743 = vunpack.c.l.b16 %v580
        %v744 = vunpack.c.h.b16 %v580
        %v745 = vunpack.c.l.b16 %v581
        %v746 = vunpack.c.h.b16 %v581
        %v747 = vunpack.c.l.b16 %v582
        %v748 = vunpack.c.h.b16 %v582
        %v749 = vunpack.c.l.b16 %v583
        %v750 = vunpack.c.h.b16 %v583
        %v751 = vunpack.c.l.b16 %v584
        %v752 = vunpack.c.h.b16 %v584
        %v753 = vunpack.c.l.b16 %v585
        %v754 = vunpack.c.h.b16 %v585
        %v755 = vunpack.c.l.b16 %v586
        %v756 = vunpack.c.h.b16 %v586
        %v757 = vunpack.c.l.b16 %v587
        %v758 = vunpack.c.h.b16 %v587
        %v759 = vunpack.c.l.b16 %v588
        %v760 = vunpack.c.h.b16 %v588
        %v761 = vunpack.c.l.b16 %v589
        %v762 = vunpack.c.h.b16 %v589
        %v763 = vunpack.c.l.b16 %v590
        %v764 = vunpack.c.h.b16 %v590
        %v765 = vunpack.c.l.b16 %v591
        %v766 = vunpack.c.h.b16 %v591
        %v767 = vunpack.c.l.b16 %v592
        %v768 = vunpack.c.h.b16 %v592
        %v769 = vunpack.c.l.b16 %v593
        %v770 = vunpack.c.h.b16 %v593
        %v771 = vunpack.c.l.b16 %v594
        %v772 = vunpack.c.h.b16 %v594
        %v773 = vunpack.c.l.b16 %v595
        %v774 = vunpack.c.h.b16 %v595
        %v775 = vunpack.c.l.b16 %v596
        %v776 = vunpack.c.h.b16 %v596
        %v777 = vunpack.c.l.b16 %v597
        %v778 = vunpack.c.h.b16 %v597
        %v779 = vunpack.c.l.b16 %v598
        %v780 = vunpack.c.h.b16 %v598
        %v781 = vunpack.c.l.b16 %v599
        %v782 = vunpack.c.h.b16 %v599
        %v783 = vunpack.c.l.b16 %v600
        %v784 = vunpack.c.h.b16 %v600
        %v785 = vunpack.c.l.b16 %v601
        %v786 = vunpack.c.h.b16 %v601
        %v787 = vunpack.c.l.b16 %v602
        %v788 = vunpack.c.h.b16 %v602
        %v789 = vunpack.c.l.b16 %v603
        %v790 = vunpack.c.h.b16 %v603
        %v791 = vunpack.c.l.b16 %v604
        %v792 = vunpack.c.h.b16 %v604
        %v793 = vunpack.c.l.b16 %v605
        %v794 = vunpack.c.h.b16 %v605
        %v795 = vunpack.c.l.b16 %v606
        %v796 = vunpack.c.h.b16 %v606
        %v797 = vunpack.c.l.b16 %v607
        %v798 = vunpack.c.h.b16 %v607
        %v799 = vunpack.c.l.b16 %v608
        %v800 = vunpack.c.h.b16 %v608
        %v801 = vunpack.c.l.b16 %v609
        %v802 = vunpack.c.h.b16 %v609
        %v803 = vunpack.c.l.b16 %v610
        %v804 = vunpack.c.h.b16 %v610
        %v805 = vunpack.c.l.b16 %v611
        %v806 = vunpack.c.h.b16 %v611
        %v807 = vunpack.c.l.b16 %v612
        %v808 = vunpack.c.h.b16 %v612
        %v809 = vunpack.c.l.b16 %v613
        %v810 = vunpack.c.h.b16 %v613
        %v811 = vunpack.c.l.b16 %v614
        %v812 = vunpack.c.h.b16 %v614
        %v813 = vunpack.c.l.b16 %v615
        %v814 = vunpack.c.h.b16 %v615
        %v815 = vunpack.c.l.b16 %v616
        %v816 = vunpack.c.h.b16 %v616
        %v817 = vunpack.c.l.b16 %v617
        %v818 = vunpack.c.h.b16 %v617
        %v819 = vunpack.c.l.b16 %v618
        %v820 = vunpack.c.h.b16 %v618
        %v821 = vpack.c.b16 %v695, %v693
        %v822 = vpack.c.b16 %v696, %v694
        %v823 = vpack.c.b16 %v699, %v697
        %v824 = vpack.c.b16 %v700, %v698
        %v825 = vpack.c.b16 %v703, %v701
        %v826 = vpack.c.b16 %v704, %v702
        %v827 = vpack.c.b16 %v707, %v705
        %v828 = vpack.c.b16 %v708, %v706
        %v829 = vpack.c.b16 %v711, %v709
        %v830 = vpack.c.b16 %v712, %v710
        %v831 = vpack.c.b16 %v715, %v713
        %v832 = vpack.c.b16 %v716, %v714
        %v833 = vpack.c.b16 %v719, %v717
        %v834 = vpack.c.b16 %v720, %v718
        %v835 = vpack.c.b16 %v723, %v721
        %v836 = vpack.c.b16 %v724, %v722
        %v837 = vpack.c.b16 %v727, %v725
        %v838 = vpack.c.b16 %v728, %v726
        %v839 = vpack.c.b16 %v731, %v729
        %v840 = vpack.c.b16 %v732, %v730
        %v841 = vpack.c.b16 %v735, %v733
        %v842 = vpack.c.b16 %v736, %v734
        %v843 = vpack.c.b16 %v739, %v737
        %v844 = vpack.c.b16 %v740, %v738
        %v845 = vpack.c.b16 %v743, %v741
        %v846 = vpack.c.b16 %v744, %v742
        %v847 = vpack.c.b16 %v747, %v745
        %v848 = vpack.c.b16 %v748, %v746
        %v849 = vpack.c.b16 %v751, %v749
        %v850 = vpack.c.b16 %v752, %v750
        %v851 = vpack.c.b16 %v755, %v753
        %v852 = vpack.c.b16 %v756, %v754
        %v853 = vpack.c.b16 %v759, %v757
        %v854 = vpack.c.b16 %v760, %v758
        %v855 = vpack.c.b16 %v763, %v761
        %v856 = vpack.c.b16 %v764, %v762
        %v857 = vpack.c.b16 %v767, %v765
        %v858 = vpack.c.b16 %v768, %v766
        %v859 = vpack.c.b16 %v771, %v769
        %v860 = vpack.c.b16 %v772, %v770
        %v861 = vpack.c.b16 %v775, %v773
        %v862 = vpack.c.b16 %v776, %v774
        %v863 = vpack.c.b16 %v779, %v777
        %v864 = vpack.c.b16 %v780, %v778
        %v865 = vpack.c.b16 %v783, %v781
        %v866 = vpack.c.b16 %v784, %v782
        %v867 = vpack.c.b16 %v787, %v785
        %v868 = vpack.c.b16 %v788, %v786
        %v869 = vpack.c.b16 %v791, %v789
        %v870 = vpack.c.b16 %v792, %v790
        %v871 = vpack.c.b16 %v795, %v793
        %v872 = vpack.c.b16 %v796, %v794
        %v873 = vpack.c.b16 %v799, %v797
        %v874 = vpack.c.b16 %v800, %v798
        %v875 = vpack.c.b16 %v803, %v801
        %v876 = vpack.c.b16 %v804, %v802
        %v877 = vpack.c.b16 %v807, %v805
        %v878 = vpack.c.b16 %v808, %v806
        %v879 = vpack.c.b16 %v811, %v809
        %v880 = vpack.c.b16 %v812, %v810
        %v881 = vpack.c.b16 %v815, %v813
        %v882 = vpack.c.b16 %v816, %v814
        %v883 = vpack.c.b16 %v819, %v817
        %v884 = vpack.c.b16 %v820, %v818
        %949 = vmatpush.bf16.msra.mxu0 %v835
        %950 = vmatpush.bf16.msra.mxu0 %v833
        %951 = vmatpush.bf16.msra.mxu0 %v831
        %952 = vmatpush.bf16.msra.mxu0 %v829
        %953 = vmatpush.bf16.msra.mxu0 %v827
        %954 = vmatpush.bf16.msra.mxu0 %v825
        %955 = vmatpush.bf16.msra.mxu0 %v823
        %956 = vmatpush.bf16.msra.mxu0 %v821
        %957 = vmatmul.bf16.gmra.mxu0 %v621
        %v958 = vpop.f32.mrf.mxu0
        %v959 = vadd.f32 0.0, %v958
        %v960 = vpop.f32.mrf.mxu0
        %961 = vdwg.mxu0
        %962 = vmatpush.bf16.msra.mxu0 %v851
        %963 = vmatpush.bf16.msra.mxu0 %v849
        %964 = vmatpush.bf16.msra.mxu0 %v847
        %965 = vmatpush.bf16.msra.mxu0 %v845
        %966 = vmatpush.bf16.msra.mxu0 %v843
        %967 = vmatpush.bf16.msra.mxu0 %v841
        %968 = vmatpush.bf16.msra.mxu0 %v839
        %969 = vmatpush.bf16.msra.mxu0 %v837
        %970 = vmatmul.bf16.gmra.mxu0 %v622
        %v971 = vpop.f32.mrf.mxu0
        %v972 = vadd.f32 %v959, %v971
        %v973 = vpop.f32.mrf.mxu0
        %974 = vdwg.mxu0
        %975 = vmatpush.bf16.msra.mxu0 %v867
        %976 = vmatpush.bf16.msra.mxu0 %v865
        %977 = vmatpush.bf16.msra.mxu0 %v863
        %978 = vmatpush.bf16.msra.mxu0 %v861
        %979 = vmatpush.bf16.msra.mxu0 %v859
        %980 = vmatpush.bf16.msra.mxu0 %v857
        %981 = vmatpush.bf16.msra.mxu0 %v855
        %982 = vmatpush.bf16.msra.mxu0 %v853
        %983 = vmatmul.bf16.gmra.mxu0 %v623
        %v984 = vpop.f32.mrf.mxu0
        %v985 = vadd.f32 %v972, %v984
        %v986 = vpop.f32.mrf.mxu0
        %987 = vdwg.mxu0
        %988 = vmatpush.bf16.msra.mxu0 %v883
        %989 = vmatpush.bf16.msra.mxu0 %v881
        %990 = vmatpush.bf16.msra.mxu0 %v879
        %991 = vmatpush.bf16.msra.mxu0 %v877
        %992 = vmatpush.bf16.msra.mxu0 %v875
        %993 = vmatpush.bf16.msra.mxu0 %v873
        %994 = vmatpush.bf16.msra.mxu0 %v871
        %995 = vmatpush.bf16.msra.mxu0 %v869
        %996 = vmatmul.bf16.gmra.mxu0 %v624
        %v997 = vpop.f32.mrf.mxu0
        %v998 = vadd.f32 %v985, %v997
        %v999 = vpop.f32.mrf.mxu0
        %1000 = vdwg.mxu0
        %1001 = vmatpush.bf16.msra.mxu0 %v836
        %1002 = vmatpush.bf16.msra.mxu0 %v834
        %1003 = vmatpush.bf16.msra.mxu0 %v832
        %1004 = vmatpush.bf16.msra.mxu0 %v830
        %1005 = vmatpush.bf16.msra.mxu0 %v828
        %1006 = vmatpush.bf16.msra.mxu0 %v826
        %1007 = vmatpush.bf16.msra.mxu0 %v824
        %1008 = vmatpush.bf16.msra.mxu0 %v822
        %1009 = vmatmul.bf16.gmra.mxu0 %v621
        %v1010 = vpop.f32.mrf.mxu0
        %v1011 = vadd.f32 0.0, %v1010
        %v1012 = vpop.f32.mrf.mxu0
        %1013 = vdwg.mxu0
        %1014 = vmatpush.bf16.msra.mxu0 %v852
        %1015 = vmatpush.bf16.msra.mxu0 %v850
        %1016 = vmatpush.bf16.msra.mxu0 %v848
        %1017 = vmatpush.bf16.msra.mxu0 %v846
        %1018 = vmatpush.bf16.msra.mxu0 %v844
        %1019 = vmatpush.bf16.msra.mxu0 %v842
        %1020 = vmatpush.bf16.msra.mxu0 %v840
        %1021 = vmatpush.bf16.msra.mxu0 %v838
        %1022 = vmatmul.bf16.gmra.mxu0 %v622
        %v1023 = vpop.f32.mrf.mxu0
        %v1024 = vadd.f32 %v1011, %v1023
        %v1025 = vpop.f32.mrf.mxu0
        %1026 = vdwg.mxu0
        %1027 = vmatpush.bf16.msra.mxu0 %v868
        %1028 = vmatpush.bf16.msra.mxu0 %v866
        %1029 = vmatpush.bf16.msra.mxu0 %v864
        %1030 = vmatpush.bf16.msra.mxu0 %v862
        %1031 = vmatpush.bf16.msra.mxu0 %v860
        %1032 = vmatpush.bf16.msra.mxu0 %v858
        %1033 = vmatpush.bf16.msra.mxu0 %v856
        %1034 = vmatpush.bf16.msra.mxu0 %v854
        %1035 = vmatmul.bf16.gmra.mxu0 %v623
        %v1036 = vpop.f32.mrf.mxu0
        %v1037 = vadd.f32 %v1024, %v1036
        %v1038 = vpop.f32.mrf.mxu0
        %1039 = vdwg.mxu0
        %1040 = vmatpush.bf16.msra.mxu0 %v884
        %1041 = vmatpush.bf16.msra.mxu0 %v882
        %1042 = vmatpush.bf16.msra.mxu0 %v880
        %1043 = vmatpush.bf16.msra.mxu0 %v878
        %1044 = vmatpush.bf16.msra.mxu0 %v876
        %1045 = vmatpush.bf16.msra.mxu0 %v874
        %1046 = vmatpush.bf16.msra.mxu0 %v872
        %1047 = vmatpush.bf16.msra.mxu0 %v870
        %1048 = vmatmul.bf16.gmra.mxu0 %v624
        %v1049 = vpop.f32.mrf.mxu0
        %v1050 = vadd.f32 %v1037, %v1049
        %v1051 = vpop.f32.mrf.mxu0
        %1052 = vdwg.mxu0
        %v1055 = vrot.slane %v1050, 6
        %vm1056 = vcmask 1041408
        %v1057 = vsel %vm1056, %v998, %v1055
        %v1059 = vadd.f32 %v553, %v1057
        %1060 = vst [vmem:[#allocation2] sm:$0xf] %v1059
        %p1061 = scmp.eq.s32.totalorder %s21, 7
        // Predicated region
        $region75: #{snn_vgg9_forward.91} parent=65 // pred_check
          %p1062 = pneg %p1061
        $region76: #{snn_vgg9_forward.91} parent=65 // pred_check_branch
          %1064 = sbr.rel (%p1062) target = $region78
        $region77: #{snn_vgg9_forward.91} parent=65 // pred_region
          %v1065 = vld [vmem:[#allocation2] sm:$0xf]
          %v1066 = vld [vmem:[%s536] sm:$0x3]
          %v1068 = vperm.slane %v1066, 0
          %v1069 = vperm.slane %v1066, 1
          %v1070 = vrot.slane %v1069, 6
          %v1071 = vsel %vm1056, %v1068, %v1070
          %v1073 = vadd.f32 %v1065, %v1071
          %1074 = vst [vmem:[%s546] sm:$0xf] %v1073
        $region78: #{snn_vgg9_forward.91} parent=65 // pred_fallthru
          _
        %s1075 = smul.u32 2, %s20
        %p1076 = scmp.lt.s32.totalorder %s19, 0
        %s1077 = scalar_select %p1076, %s19, 0
        %p1078 = scmp.lt.s32.totalorder %s1075, 7
        %s1079 = scalar_select %p1078, %s1075, 7
        %s1080 = smul.addr %s1077, 8
        %s1081 = sadd.s32 %s1079, %s1080
        %s1082 = smul.addr %s1081, 2
        %s1083 = scalar_lea.vmem %s3, %s1082
        // Predicated region
        $region79: #{snn_vgg9_forward.91} parent=65 // pred_check
          %p1084 = pneg %p135
        $region80: #{snn_vgg9_forward.91} parent=65 // pred_check_branch
          %1086 = sbr.rel (%p1084) target = $region82
        $region81: #{snn_vgg9_forward.91} parent=65 // pred_region
          %s1087 = smul.u32 2, %s20
        $region82: #{snn_vgg9_forward.91} parent=65 // pred_fallthru
          _
      $region66: #{snn_vgg9_forward.91} parent=5 // pred_fallthru
        _
      %p1088 = scmp.le.s32.totalorder 2, %s9
      // Predicated region
      $region83: #{snn_vgg9_forward.91} parent=5 // pred_check
        %p1089 = pneg %p1088
      $region84: #{snn_vgg9_forward.91} parent=5 // pred_check_branch
        %1091 = sbr.rel (%p1089) target = $region86
      $region85: #{snn_vgg9_forward.91} parent=5 // pred_region
        %s1092 = ssub.s32 %s9, 2
        // Predicated region
        $region87: #{snn_vgg9_forward.91} parent=85 // pred_check
          %p1093 = pneg %p141
        $region88: #{snn_vgg9_forward.91} parent=85 // pred_check_branch
          %1095 = sbr.rel (%p1093) target = $region90
        $region89: #{snn_vgg9_forward.91} parent=85 // pred_region
          %s1096 = smul.u32 2, %s23
          %p1097 = scmp.lt.s32.totalorder %s22, 0
          %s1098 = scalar_select %p1097, %s22, 0
          %p1099 = scmp.lt.s32.totalorder %s1096, 7
          %s1100 = scalar_select %p1099, %s1096, 7
          %s1101 = smul.addr %s1098, 8
          %s1102 = sadd.s32 %s1100, %s1101
          %s1103 = smul.addr %s1102, 2
          %s1104 = scalar_lea.vmem %s3, %s1103
        $region90: #{snn_vgg9_forward.91} parent=85 // pred_fallthru
          _
      $region86: #{snn_vgg9_forward.91} parent=5 // pred_fallthru
        _
    $region6: #{snn_vgg9_forward.91} parent=1 // loop_footer
      %s13 = sadd.s32 1, %s9
    $region7: #{snn_vgg9_forward.91} parent=1 // loop_footer_branch
      %8 = sbr.rel target = $region3
    $region8: #{snn_vgg9_forward.91} parent=1 // loop_exit
      _

// kernel: snn_vgg9_forward.69
$region0: #{snn_vgg9_forward.69}
  #allocation0 [shape = 'u32[]', space=smem, size = 0x4, offset = 0x4, fixed_abs, tag = 'smem constant byte address 0x4 - core index']
  #allocation1 [shape = 'u32[72,128]{1,0:T(1,128)}', space=vmem, size = 0x9000, scoped, tag = 'internal scratch']
  %s0 = inlined_call_operand.vmem [shape: f32[2,1024], index: 0, kind: input, shape index: {}]
  %s1 = inlined_call_operand.vmem [shape: f32[1,1024], index: 1, kind: input, shape index: {}]
  %s2 = inlined_call_operand.vmem [shape: f32[1,1024], index: 2, kind: input, shape index: {}]
  %s3 = inlined_call_operand.vmem [shape: f32[1,1024], index: 3, kind: input, shape index: {}]
  %s4 = inlined_call_operand.vmem [shape: f32[1,1024], index: 4, kind: input, shape index: {}]
  %s5 = inlined_call_operand.vmem [shape: f32[2,1024], index: 5, kind: input, shape index: {}, may-alias: {5,9}]
  %s6 = inlined_call_operand.vmem [shape: bf16[1024,128], index: 6, kind: input, shape index: {}]
  %s7 = inlined_call_operand.vmem [shape: f32[1,128], index: 7, kind: input, shape index: {}]
  %s8 = inlined_call_operand.vmem [shape: f32[2,128], index: 8, kind: input, shape index: {}, may-alias: {8,10}]
  %s9 = inlined_call_operand.vmem [shape: f32[2,1024], index: 9, kind: output, shape index: {0}, may-alias: {5,9}]
  %s10 = inlined_call_operand.vmem [shape: f32[2,128], index: 10, kind: output, shape index: {1}, may-alias: {8,10}]
  %11 = xla_tuple %s9, %s10
  %s12 = sld [smem:[#allocation0]]
  $region54: #{snn_vgg9_forward.69} parent=0
    _
  %s14 = ssub.s32 1, %s12
  %s15 = scalar_select 0, %s14, %s12
  // Predicated region
  $region2: #{snn_vgg9_forward.69} parent=0 // pred_check
    _
  $region3: #{snn_vgg9_forward.69} parent=0 // pred_check_branch
    %17 = sbr.rel (0) target = $region5
  $region4: #{snn_vgg9_forward.69} parent=0 // pred_region
    _
  $region5: #{snn_vgg9_forward.69} parent=0 // pred_fallthru
    _
  // Predicated region
  $region6: #{snn_vgg9_forward.69} parent=0 // pred_check
    _
  $region7: #{snn_vgg9_forward.69} parent=0 // pred_check_branch
    %19 = sbr.rel (0) target = $region9
  $region8: #{snn_vgg9_forward.69} parent=0 // pred_region
    _
  $region9: #{snn_vgg9_forward.69} parent=0 // pred_fallthru
    _
  // Predicated region
  $region10: #{snn_vgg9_forward.69} parent=0 // pred_check
    _
  $region11: #{snn_vgg9_forward.69} parent=0 // pred_check_branch
    %21 = sbr.rel (0) target = $region13
  $region12: #{snn_vgg9_forward.69} parent=0 // pred_region
    _
  $region13: #{snn_vgg9_forward.69} parent=0 // pred_fallthru
    _
  // Predicated region
  $region14: #{snn_vgg9_forward.69} parent=0 // pred_check
    _
  $region15: #{snn_vgg9_forward.69} parent=0 // pred_check_branch
    %23 = sbr.rel (0) target = $region17
  $region16: #{snn_vgg9_forward.69} parent=0 // pred_region
    _
  $region17: #{snn_vgg9_forward.69} parent=0 // pred_fallthru
    _
  // Predicated region
  $region18: #{snn_vgg9_forward.69} parent=0 // pred_check
    _
  $region19: #{snn_vgg9_forward.69} parent=0 // pred_check_branch
    %25 = sbr.rel (0) target = $region21
  $region20: #{snn_vgg9_forward.69} parent=0 // pred_region
    _
  $region21: #{snn_vgg9_forward.69} parent=0 // pred_fallthru
    _
  // Predicated region
  $region22: #{snn_vgg9_forward.69} parent=0 // pred_check
    _
  $region23: #{snn_vgg9_forward.69} parent=0 // pred_check_branch
    %27 = sbr.rel (0) target = $region25
  $region24: #{snn_vgg9_forward.69} parent=0 // pred_region
    _
  $region25: #{snn_vgg9_forward.69} parent=0 // pred_fallthru
    _
  // Predicated region
  $region26: #{snn_vgg9_forward.69} parent=0 // pred_check
    _
  $region27: #{snn_vgg9_forward.69} parent=0 // pred_check_branch
    %29 = sbr.rel (0) target = $region29
  $region28: #{snn_vgg9_forward.69} parent=0 // pred_region
    _
  $region29: #{snn_vgg9_forward.69} parent=0 // pred_fallthru
    _
  // Predicated region
  $region30: #{snn_vgg9_forward.69} parent=0 // pred_check
    _
  $region31: #{snn_vgg9_forward.69} parent=0 // pred_check_branch
    %31 = sbr.rel (0) target = $region33
  $region32: #{snn_vgg9_forward.69} parent=0 // pred_region
    _
  $region33: #{snn_vgg9_forward.69} parent=0 // pred_fallthru
    _
  // Predicated region
  $region34: #{snn_vgg9_forward.69} parent=0 // pred_check
    _
  $region35: #{snn_vgg9_forward.69} parent=0 // pred_check_branch
    %33 = sbr.rel (0) target = $region37
  $region36: #{snn_vgg9_forward.69} parent=0 // pred_region
    _
  $region37: #{snn_vgg9_forward.69} parent=0 // pred_fallthru
    _
  %v34 = vld [vmem:[%s0] sm:$0xff]
  %v35 = vld [vmem:[%s0 + $0x8] sm:$0xff]
  %v36 = vld [vmem:[%s1] sm:$0xff]
  %v37 = vld [vmem:[%s2] sm:$0xff]
  %v38 = vld [vmem:[%s3] sm:$0xff]
  %v39 = vld [vmem:[%s4] sm:$0xff]
  %v40 = vld [vmem:[%s5] sm:$0xff]
  %v41 = vld [vmem:[%s5 + $0x8] sm:$0xff]
  %v42 = vmul.f32 %v36, 0.5
  %v43 = vmul.f32 %v37, 0.5
  %v44 = vmul.f32 %v42, %v42
  %v45 = vsub.f32 %v43, %v44
  %v46 = vmax.f32 %v45, 0.0
  %v47 = vadd.f32 %v46, 0.0001
  %v48 = vrsqrt.pop %v47
  %v49 = vmul.f32 %v48, %v47
  %v50 = vmul.f32 %v49, %v48
  %v51 = vmul.f32 0.5, %v50
  %v52 = vsub.f32 1.5, %v51
  %v53 = vmul.f32 %v48, %v52
  %vm54 = vweird.f32 %v47
  %vm55 = vweird.f32 %v48
  %vm56 = vmor %vm54, %vm55
  %v57 = vsel %vm56, %v48, %v53
  %v58 = vmul.f32 %v38, %v57
  %v59 = vmul.f32 %v42, %v58
  %v60 = vsub.f32 %v39, %v59
  %v62 = vperm.slane %v58, 0
  %v63 = vperm.slane %v58, 1
  %v64 = vperm.slane %v58, 2
  %v65 = vperm.slane %v58, 3
  %v66 = vperm.slane %v58, 4
  %v67 = vperm.slane %v58, 5
  %v68 = vperm.slane %v58, 6
  %v69 = vperm.slane %v58, 7
  %v70 = vrot.slane %v63, 6
  %v71 = vrot.slane %v64, 4
  %v72 = vrot.slane %v65, 2
  %v73 = vrot.slane %v67, 6
  %v74 = vrot.slane %v68, 4
  %v75 = vrot.slane %v69, 2
  %vm76 = vcmask 1041408
  %v77 = vsel %vm76, %v62, %v70
  %vm78 = vcmask 1045508
  %v79 = vsel %vm78, %v71, %v72
  %vm80 = vcmask 1043456
  %v81 = vsel %vm80, %v77, %v79
  %v82 = vsel %vm76, %v66, %v73
  %v83 = vsel %vm78, %v74, %v75
  %v84 = vsel %vm80, %v82, %v83
  %v87 = vmul.f32 %v34, %v81
  %v88 = vmul.f32 %v35, %v84
  %v89 = vadd.f32 %v40, %v87
  %v90 = vadd.f32 %v41, %v88
  %v92 = vperm.slane %v60, 0
  %v93 = vperm.slane %v60, 1
  %v94 = vperm.slane %v60, 2
  %v95 = vperm.slane %v60, 3
  %v96 = vperm.slane %v60, 4
  %v97 = vperm.slane %v60, 5
  %v98 = vperm.slane %v60, 6
  %v99 = vperm.slane %v60, 7
  %v100 = vrot.slane %v93, 6
  %v101 = vrot.slane %v94, 4
  %v102 = vrot.slane %v95, 2
  %v103 = vrot.slane %v97, 6
  %v104 = vrot.slane %v98, 4
  %v105 = vrot.slane %v99, 2
  %v106 = vsel %vm76, %v92, %v100
  %v107 = vsel %vm78, %v101, %v102
  %v108 = vsel %vm80, %v106, %v107
  %v109 = vsel %vm76, %v96, %v103
  %v110 = vsel %vm78, %v104, %v105
  %v111 = vsel %vm80, %v109, %v110
  %v114 = vadd.f32 %v89, %v108
  %v115 = vadd.f32 %v90, %v111
  %v116 = vsub.f32 %v114, 1.0
  %v117 = vsub.f32 %v115, 1.0
  %vm118 = vcmp.ge.f32.partialorder %v116, 0.0
  %vm119 = vcmp.ge.f32.partialorder %v117, 0.0
  %v120 = vsel %vm118, 1.0, 0.0
  %v121 = vsel %vm119, 1.0, 0.0
  %vm122 = vcmp.gt.f32.partialorder %v116, 0.0
  %vm123 = vcmp.gt.f32.partialorder %v117, 0.0
  %v124 = vsel %vm122, 1.0, 0.0
  %v125 = vsel %vm123, 1.0, 0.0
  %v126 = vsub.f32 %v114, %v124
  %v127 = vsub.f32 %v115, %v125
  %128 = vst [vmem:[%s9] sm:$0xff] %v126
  %129 = vst [vmem:[%s9 + $0x8] sm:$0xff] %v127
  %v130 = vld [vmem:[%s8] sm:$0x3]
  %v131 = vld [vmem:[%s7] sm:$0x1]
  %v133 = vperm.slane %v131, 0
  %v135 = vadd.f32 %v130, %v133
  %138 = vst [vmem:[#allocation1] ss:$4 sm:$0xff] %v120
  %s139 = scalar_lea.vmem [#allocation1], 32
  %140 = vst [vmem:[%s139] ss:$4 sm:$0xff] %v121
  %v141 = vld.sshfl [vmem:[#allocation1] sm:$0xff pattern:$0x73625140]
  %v142 = vld.sshfl [vmem:[#allocation1 + $0x8] sm:$0xff pattern:$0x73625140]
  %v143 = vld.sshfl [vmem:[#allocation1 + $0x10] sm:$0xff pattern:$0x73625140]
  %v144 = vld.sshfl [vmem:[#allocation1 + $0x18] sm:$0xff pattern:$0x73625140]
  %v145 = vld.sshfl [vmem:[#allocation1 + $0x20] sm:$0xff pattern:$0x73625140]
  %v146 = vld.sshfl [vmem:[#allocation1 + $0x28] sm:$0xff pattern:$0x73625140]
  %v147 = vld.sshfl [vmem:[#allocation1 + $0x30] sm:$0xff pattern:$0x73625140]
  %v148 = vld.sshfl [vmem:[#allocation1 + $0x38] sm:$0xff pattern:$0x73625140]
  %v157 = vpack.c.bf16 %v141, %v141
  %v158 = vpack.c.bf16 %v142, %v142
  %v159 = vpack.c.bf16 %v143, %v143
  %v160 = vpack.c.bf16 %v144, %v144
  %v161 = vpack.c.bf16 %v145, %v145
  %v162 = vpack.c.bf16 %v146, %v146
  %v163 = vpack.c.bf16 %v147, %v147
  %v164 = vpack.c.bf16 %v148, %v148
  %v165 = vld [vmem:[%s6] sm:$0xf]
  %v166 = vld [vmem:[%s6 + $0x4] sm:$0xf]
  %v167 = vld [vmem:[%s6 + $0x8] sm:$0xf]
  %v168 = vld [vmem:[%s6 + $0xc] sm:$0xf]
  %v169 = vld [vmem:[%s6 + $0x10] sm:$0xf]
  %v170 = vld [vmem:[%s6 + $0x14] sm:$0xf]
  %v171 = vld [vmem:[%s6 + $0x18] sm:$0xf]
  %v172 = vld [vmem:[%s6 + $0x1c] sm:$0xf]
  %v173 = vld [vmem:[%s6 + $0x20] sm:$0xf]
  %v174 = vld [vmem:[%s6 + $0x24] sm:$0xf]
  %v175 = vld [vmem:[%s6 + $0x28] sm:$0xf]
  %v176 = vld [vmem:[%s6 + $0x2c] sm:$0xf]
  %v177 = vld [vmem:[%s6 + $0x30] sm:$0xf]
  %v178 = vld [vmem:[%s6 + $0x34] sm:$0xf]
  %v179 = vld [vmem:[%s6 + $0x38] sm:$0xf]
  %v180 = vld [vmem:[%s6 + $0x3c] sm:$0xf]
  %v181 = vld [vmem:[%s6 + $0x40] sm:$0xf]
  %v182 = vld [vmem:[%s6 + $0x44] sm:$0xf]
  %v183 = vld [vmem:[%s6 + $0x48] sm:$0xf]
  %v184 = vld [vmem:[%s6 + $0x4c] sm:$0xf]
  %v185 = vld [vmem:[%s6 + $0x50] sm:$0xf]
  %v186 = vld [vmem:[%s6 + $0x54] sm:$0xf]
  %v187 = vld [vmem:[%s6 + $0x58] sm:$0xf]
  %v188 = vld [vmem:[%s6 + $0x5c] sm:$0xf]
  %v189 = vld [vmem:[%s6 + $0x60] sm:$0xf]
  %v190 = vld [vmem:[%s6 + $0x64] sm:$0xf]
  %v191 = vld [vmem:[%s6 + $0x68] sm:$0xf]
  %v192 = vld [vmem:[%s6 + $0x6c] sm:$0xf]
  %v193 = vld [vmem:[%s6 + $0x70] sm:$0xf]
  %v194 = vld [vmem:[%s6 + $0x74] sm:$0xf]
  %v195 = vld [vmem:[%s6 + $0x78] sm:$0xf]
  %v196 = vld [vmem:[%s6 + $0x7c] sm:$0xf]
  %v197 = vld [vmem:[%s6 + $0x80] sm:$0xf]
  %v198 = vld [vmem:[%s6 + $0x84] sm:$0xf]
  %v199 = vld [vmem:[%s6 + $0x88] sm:$0xf]
  %v200 = vld [vmem:[%s6 + $0x8c] sm:$0xf]
  %v201 = vld [vmem:[%s6 + $0x90] sm:$0xf]
  %v202 = vld [vmem:[%s6 + $0x94] sm:$0xf]
  %v203 = vld [vmem:[%s6 + $0x98] sm:$0xf]
  %v204 = vld [vmem:[%s6 + $0x9c] sm:$0xf]
  %v205 = vld [vmem:[%s6 + $0xa0] sm:$0xf]
  %v206 = vld [vmem:[%s6 + $0xa4] sm:$0xf]
  %v207 = vld [vmem:[%s6 + $0xa8] sm:$0xf]
  %v208 = vld [vmem:[%s6 + $0xac] sm:$0xf]
  %v209 = vld [vmem:[%s6 + $0xb0] sm:$0xf]
  %v210 = vld [vmem:[%s6 + $0xb4] sm:$0xf]
  %v211 = vld [vmem:[%s6 + $0xb8] sm:$0xf]
  %v212 = vld [vmem:[%s6 + $0xbc] sm:$0xf]
  %v213 = vld [vmem:[%s6 + $0xc0] sm:$0xf]
  %v214 = vld [vmem:[%s6 + $0xc4] sm:$0xf]
  %v215 = vld [vmem:[%s6 + $0xc8] sm:$0xf]
  %v216 = vld [vmem:[%s6 + $0xcc] sm:$0xf]
  %v217 = vld [vmem:[%s6 + $0xd0] sm:$0xf]
  %v218 = vld [vmem:[%s6 + $0xd4] sm:$0xf]
  %v219 = vld [vmem:[%s6 + $0xd8] sm:$0xf]
  %v220 = vld [vmem:[%s6 + $0xdc] sm:$0xf]
  %v221 = vld [vmem:[%s6 + $0xe0] sm:$0xf]
  %v222 = vld [vmem:[%s6 + $0xe4] sm:$0xf]
  %v223 = vld [vmem:[%s6 + $0xe8] sm:$0xf]
  %v224 = vld [vmem:[%s6 + $0xec] sm:$0xf]
  %v225 = vld [vmem:[%s6 + $0xf0] sm:$0xf]
  %v226 = vld [vmem:[%s6 + $0xf4] sm:$0xf]
  %v227 = vld [vmem:[%s6 + $0xf8] sm:$0xf]
  %v228 = vld [vmem:[%s6 + $0xfc] sm:$0xf]
  %v229 = vld [vmem:[%s6 + $0x100] sm:$0xf]
  %v230 = vld [vmem:[%s6 + $0x104] sm:$0xf]
  %v231 = vld [vmem:[%s6 + $0x108] sm:$0xf]
  %v232 = vld [vmem:[%s6 + $0x10c] sm:$0xf]
  %v233 = vld [vmem:[%s6 + $0x110] sm:$0xf]
  %v234 = vld [vmem:[%s6 + $0x114] sm:$0xf]
  %v235 = vld [vmem:[%s6 + $0x118] sm:$0xf]
  %v236 = vld [vmem:[%s6 + $0x11c] sm:$0xf]
  %v237 = vld [vmem:[%s6 + $0x120] sm:$0xf]
  %v238 = vld [vmem:[%s6 + $0x124] sm:$0xf]
  %v239 = vld [vmem:[%s6 + $0x128] sm:$0xf]
  %v240 = vld [vmem:[%s6 + $0x12c] sm:$0xf]
  %v241 = vld [vmem:[%s6 + $0x130] sm:$0xf]
  %v242 = vld [vmem:[%s6 + $0x134] sm:$0xf]
  %v243 = vld [vmem:[%s6 + $0x138] sm:$0xf]
  %v244 = vld [vmem:[%s6 + $0x13c] sm:$0xf]
  %v245 = vld [vmem:[%s6 + $0x140] sm:$0xf]
  %v246 = vld [vmem:[%s6 + $0x144] sm:$0xf]
  %v247 = vld [vmem:[%s6 + $0x148] sm:$0xf]
  %v248 = vld [vmem:[%s6 + $0x14c] sm:$0xf]
  %v249 = vld [vmem:[%s6 + $0x150] sm:$0xf]
  %v250 = vld [vmem:[%s6 + $0x154] sm:$0xf]
  %v251 = vld [vmem:[%s6 + $0x158] sm:$0xf]
  %v252 = vld [vmem:[%s6 + $0x15c] sm:$0xf]
  %v253 = vld [vmem:[%s6 + $0x160] sm:$0xf]
  %v254 = vld [vmem:[%s6 + $0x164] sm:$0xf]
  %v255 = vld [vmem:[%s6 + $0x168] sm:$0xf]
  %v256 = vld [vmem:[%s6 + $0x16c] sm:$0xf]
  %v257 = vld [vmem:[%s6 + $0x170] sm:$0xf]
  %v258 = vld [vmem:[%s6 + $0x174] sm:$0xf]
  %v259 = vld [vmem:[%s6 + $0x178] sm:$0xf]
  %v260 = vld [vmem:[%s6 + $0x17c] sm:$0xf]
  %v261 = vld [vmem:[%s6 + $0x180] sm:$0xf]
  %v262 = vld [vmem:[%s6 + $0x184] sm:$0xf]
  %v263 = vld [vmem:[%s6 + $0x188] sm:$0xf]
  %v264 = vld [vmem:[%s6 + $0x18c] sm:$0xf]
  %v265 = vld [vmem:[%s6 + $0x190] sm:$0xf]
  %v266 = vld [vmem:[%s6 + $0x194] sm:$0xf]
  %v267 = vld [vmem:[%s6 + $0x198] sm:$0xf]
  %v268 = vld [vmem:[%s6 + $0x19c] sm:$0xf]
  %v269 = vld [vmem:[%s6 + $0x1a0] sm:$0xf]
  %v270 = vld [vmem:[%s6 + $0x1a4] sm:$0xf]
  %v271 = vld [vmem:[%s6 + $0x1a8] sm:$0xf]
  %v272 = vld [vmem:[%s6 + $0x1ac] sm:$0xf]
  %v273 = vld [vmem:[%s6 + $0x1b0] sm:$0xf]
  %v274 = vld [vmem:[%s6 + $0x1b4] sm:$0xf]
  %v275 = vld [vmem:[%s6 + $0x1b8] sm:$0xf]
  %v276 = vld [vmem:[%s6 + $0x1bc] sm:$0xf]
  %v277 = vld [vmem:[%s6 + $0x1c0] sm:$0xf]
  %v278 = vld [vmem:[%s6 + $0x1c4] sm:$0xf]
  %v279 = vld [vmem:[%s6 + $0x1c8] sm:$0xf]
  %v280 = vld [vmem:[%s6 + $0x1cc] sm:$0xf]
  %v281 = vld [vmem:[%s6 + $0x1d0] sm:$0xf]
  %v282 = vld [vmem:[%s6 + $0x1d4] sm:$0xf]
  %v283 = vld [vmem:[%s6 + $0x1d8] sm:$0xf]
  %v284 = vld [vmem:[%s6 + $0x1dc] sm:$0xf]
  %v285 = vld [vmem:[%s6 + $0x1e0] sm:$0xf]
  %v286 = vld [vmem:[%s6 + $0x1e4] sm:$0xf]
  %v287 = vld [vmem:[%s6 + $0x1e8] sm:$0xf]
  %v288 = vld [vmem:[%s6 + $0x1ec] sm:$0xf]
  %v289 = vld [vmem:[%s6 + $0x1f0] sm:$0xf]
  %v290 = vld [vmem:[%s6 + $0x1f4] sm:$0xf]
  %v291 = vld [vmem:[%s6 + $0x1f8] sm:$0xf]
  %v292 = vld [vmem:[%s6 + $0x1fc] sm:$0xf]
  %v421 = vunpack.c.l.b16 %v165
  %v422 = vunpack.c.l.b16 %v166
  %v423 = vunpack.c.l.b16 %v167
  %v424 = vunpack.c.l.b16 %v168
  %v425 = vunpack.c.l.b16 %v169
  %v426 = vunpack.c.l.b16 %v170
  %v427 = vunpack.c.l.b16 %v171
  %v428 = vunpack.c.l.b16 %v172
  %v429 = vunpack.c.l.b16 %v173
  %v430 = vunpack.c.l.b16 %v174
  %v431 = vunpack.c.l.b16 %v175
  %v432 = vunpack.c.l.b16 %v176
  %v433 = vunpack.c.l.b16 %v177
  %v434 = vunpack.c.l.b16 %v178
  %v435 = vunpack.c.l.b16 %v179
  %v436 = vunpack.c.l.b16 %v180
  %v437 = vunpack.c.l.b16 %v181
  %v438 = vunpack.c.l.b16 %v182
  %v439 = vunpack.c.l.b16 %v183
  %v440 = vunpack.c.l.b16 %v184
  %v441 = vunpack.c.l.b16 %v185
  %v442 = vunpack.c.l.b16 %v186
  %v443 = vunpack.c.l.b16 %v187
  %v444 = vunpack.c.l.b16 %v188
  %v445 = vunpack.c.l.b16 %v189
  %v446 = vunpack.c.l.b16 %v190
  %v447 = vunpack.c.l.b16 %v191
  %v448 = vunpack.c.l.b16 %v192
  %v449 = vunpack.c.l.b16 %v193
  %v450 = vunpack.c.l.b16 %v194
  %v451 = vunpack.c.l.b16 %v195
  %v452 = vunpack.c.l.b16 %v196
  %v453 = vunpack.c.l.b16 %v197
  %v454 = vunpack.c.l.b16 %v198
  %v455 = vunpack.c.l.b16 %v199
  %v456 = vunpack.c.l.b16 %v200
  %v457 = vunpack.c.l.b16 %v201
  %v458 = vunpack.c.l.b16 %v202
  %v459 = vunpack.c.l.b16 %v203
  %v460 = vunpack.c.l.b16 %v204
  %v461 = vunpack.c.l.b16 %v205
  %v462 = vunpack.c.l.b16 %v206
  %v463 = vunpack.c.l.b16 %v207
  %v464 = vunpack.c.l.b16 %v208
  %v465 = vunpack.c.l.b16 %v209
  %v466 = vunpack.c.l.b16 %v210
  %v467 = vunpack.c.l.b16 %v211
  %v468 = vunpack.c.l.b16 %v212
  %v469 = vunpack.c.l.b16 %v213
  %v470 = vunpack.c.l.b16 %v214
  %v471 = vunpack.c.l.b16 %v215
  %v472 = vunpack.c.l.b16 %v216
  %v473 = vunpack.c.l.b16 %v217
  %v474 = vunpack.c.l.b16 %v218
  %v475 = vunpack.c.l.b16 %v219
  %v476 = vunpack.c.l.b16 %v220
  %v477 = vunpack.c.l.b16 %v221
  %v478 = vunpack.c.l.b16 %v222
  %v479 = vunpack.c.l.b16 %v223
  %v480 = vunpack.c.l.b16 %v224
  %v481 = vunpack.c.l.b16 %v225
  %v482 = vunpack.c.l.b16 %v226
  %v483 = vunpack.c.l.b16 %v227
  %v484 = vunpack.c.l.b16 %v228
  %v485 = vunpack.c.l.b16 %v229
  %v486 = vunpack.c.l.b16 %v230
  %v487 = vunpack.c.l.b16 %v231
  %v488 = vunpack.c.l.b16 %v232
  %v489 = vunpack.c.l.b16 %v233
  %v490 = vunpack.c.l.b16 %v234
  %v491 = vunpack.c.l.b16 %v235
  %v492 = vunpack.c.l.b16 %v236
  %v493 = vunpack.c.l.b16 %v237
  %v494 = vunpack.c.l.b16 %v238
  %v495 = vunpack.c.l.b16 %v239
  %v496 = vunpack.c.l.b16 %v240
  %v497 = vunpack.c.l.b16 %v241
  %v498 = vunpack.c.l.b16 %v242
  %v499 = vunpack.c.l.b16 %v243
  %v500 = vunpack.c.l.b16 %v244
  %v501 = vunpack.c.l.b16 %v245
  %v502 = vunpack.c.l.b16 %v246
  %v503 = vunpack.c.l.b16 %v247
  %v504 = vunpack.c.l.b16 %v248
  %v505 = vunpack.c.l.b16 %v249
  %v506 = vunpack.c.l.b16 %v250
  %v507 = vunpack.c.l.b16 %v251
  %v508 = vunpack.c.l.b16 %v252
  %v509 = vunpack.c.l.b16 %v253
  %v510 = vunpack.c.l.b16 %v254
  %v511 = vunpack.c.l.b16 %v255
  %v512 = vunpack.c.l.b16 %v256
  %v513 = vunpack.c.l.b16 %v257
  %v514 = vunpack.c.l.b16 %v258
  %v515 = vunpack.c.l.b16 %v259
  %v516 = vunpack.c.l.b16 %v260
  %v517 = vunpack.c.l.b16 %v261
  %v518 = vunpack.c.l.b16 %v262
  %v519 = vunpack.c.l.b16 %v263
  %v520 = vunpack.c.l.b16 %v264
  %v521 = vunpack.c.l.b16 %v265
  %v522 = vunpack.c.l.b16 %v266
  %v523 = vunpack.c.l.b16 %v267
  %v524 = vunpack.c.l.b16 %v268
  %v525 = vunpack.c.l.b16 %v269
  %v526 = vunpack.c.l.b16 %v270
  %v527 = vunpack.c.l.b16 %v271
  %v528 = vunpack.c.l.b16 %v272
  %v529 = vunpack.c.l.b16 %v273
  %v530 = vunpack.c.l.b16 %v274
  %v531 = vunpack.c.l.b16 %v275
  %v532 = vunpack.c.l.b16 %v276
  %v533 = vunpack.c.l.b16 %v277
  %v534 = vunpack.c.l.b16 %v278
  %v535 = vunpack.c.l.b16 %v279
  %v536 = vunpack.c.l.b16 %v280
  %v537 = vunpack.c.l.b16 %v281
  %v538 = vunpack.c.l.b16 %v282
  %v539 = vunpack.c.l.b16 %v283
  %v540 = vunpack.c.l.b16 %v284
  %v541 = vunpack.c.l.b16 %v285
  %v542 = vunpack.c.l.b16 %v286
  %v543 = vunpack.c.l.b16 %v287
  %v544 = vunpack.c.l.b16 %v288
  %v545 = vunpack.c.l.b16 %v289
  %v546 = vunpack.c.l.b16 %v290
  %v547 = vunpack.c.l.b16 %v291
  %v548 = vunpack.c.l.b16 %v292
  %v549 = vpack.c.b16 %v422, %v421
  %v550 = vpack.c.b16 %v424, %v423
  %v551 = vpack.c.b16 %v426, %v425
  %v552 = vpack.c.b16 %v428, %v427
  %v553 = vpack.c.b16 %v430, %v429
  %v554 = vpack.c.b16 %v432, %v431
  %v555 = vpack.c.b16 %v434, %v433
  %v556 = vpack.c.b16 %v436, %v435
  %v557 = vpack.c.b16 %v438, %v437
  %v558 = vpack.c.b16 %v440, %v439
  %v559 = vpack.c.b16 %v442, %v441
  %v560 = vpack.c.b16 %v444, %v443
  %v561 = vpack.c.b16 %v446, %v445
  %v562 = vpack.c.b16 %v448, %v447
  %v563 = vpack.c.b16 %v450, %v449
  %v564 = vpack.c.b16 %v452, %v451
  %v565 = vpack.c.b16 %v454, %v453
  %v566 = vpack.c.b16 %v456, %v455
  %v567 = vpack.c.b16 %v458, %v457
  %v568 = vpack.c.b16 %v460, %v459
  %v569 = vpack.c.b16 %v462, %v461
  %v570 = vpack.c.b16 %v464, %v463
  %v571 = vpack.c.b16 %v466, %v465
  %v572 = vpack.c.b16 %v468, %v467
  %v573 = vpack.c.b16 %v470, %v469
  %v574 = vpack.c.b16 %v472, %v471
  %v575 = vpack.c.b16 %v474, %v473
  %v576 = vpack.c.b16 %v476, %v475
  %v577 = vpack.c.b16 %v478, %v477
  %v578 = vpack.c.b16 %v480, %v479
  %v579 = vpack.c.b16 %v482, %v481
  %v580 = vpack.c.b16 %v484, %v483
  %v581 = vpack.c.b16 %v486, %v485
  %v582 = vpack.c.b16 %v488, %v487
  %v583 = vpack.c.b16 %v490, %v489
  %v584 = vpack.c.b16 %v492, %v491
  %v585 = vpack.c.b16 %v494, %v493
  %v586 = vpack.c.b16 %v496, %v495
  %v587 = vpack.c.b16 %v498, %v497
  %v588 = vpack.c.b16 %v500, %v499
  %v589 = vpack.c.b16 %v502, %v501
  %v590 = vpack.c.b16 %v504, %v503
  %v591 = vpack.c.b16 %v506, %v505
  %v592 = vpack.c.b16 %v508, %v507
  %v593 = vpack.c.b16 %v510, %v509
  %v594 = vpack.c.b16 %v512, %v511
  %v595 = vpack.c.b16 %v514, %v513
  %v596 = vpack.c.b16 %v516, %v515
  %v597 = vpack.c.b16 %v518, %v517
  %v598 = vpack.c.b16 %v520, %v519
  %v599 = vpack.c.b16 %v522, %v521
  %v600 = vpack.c.b16 %v524, %v523
  %v601 = vpack.c.b16 %v526, %v525
  %v602 = vpack.c.b16 %v528, %v527
  %v603 = vpack.c.b16 %v530, %v529
  %v604 = vpack.c.b16 %v532, %v531
  %v605 = vpack.c.b16 %v534, %v533
  %v606 = vpack.c.b16 %v536, %v535
  %v607 = vpack.c.b16 %v538, %v537
  %v608 = vpack.c.b16 %v540, %v539
  %v609 = vpack.c.b16 %v542, %v541
  %v610 = vpack.c.b16 %v544, %v543
  %v611 = vpack.c.b16 %v546, %v545
  %v612 = vpack.c.b16 %v548, %v547
  %677 = vmatpush.bf16.msra.mxu0 %v556
  %678 = vmatpush.bf16.msra.mxu0 %v555
  %679 = vmatpush.bf16.msra.mxu0 %v554
  %680 = vmatpush.bf16.msra.mxu0 %v553
  %681 = vmatpush.bf16.msra.mxu0 %v552
  %682 = vmatpush.bf16.msra.mxu0 %v551
  %683 = vmatpush.bf16.msra.mxu0 %v550
  %684 = vmatpush.bf16.msra.mxu0 %v549
  %685 = vmatmul.bf16.gmra.mxu0 %v157
  %v686 = vpop.f32.mrf.mxu0
  %v687 = vadd.f32 0.0, %v686
  %v688 = vpop.f32.mrf.mxu0
  %689 = vdwg.mxu0
  %690 = vmatpush.bf16.msra.mxu0 %v564
  %691 = vmatpush.bf16.msra.mxu0 %v563
  %692 = vmatpush.bf16.msra.mxu0 %v562
  %693 = vmatpush.bf16.msra.mxu0 %v561
  %694 = vmatpush.bf16.msra.mxu0 %v560
  %695 = vmatpush.bf16.msra.mxu0 %v559
  %696 = vmatpush.bf16.msra.mxu0 %v558
  %697 = vmatpush.bf16.msra.mxu0 %v557
  %698 = vmatmul.bf16.gmra.mxu0 %v158
  %v699 = vpop.f32.mrf.mxu0
  %v700 = vadd.f32 %v687, %v699
  %v701 = vpop.f32.mrf.mxu0
  %702 = vdwg.mxu0
  %703 = vmatpush.bf16.msra.mxu0 %v572
  %704 = vmatpush.bf16.msra.mxu0 %v571
  %705 = vmatpush.bf16.msra.mxu0 %v570
  %706 = vmatpush.bf16.msra.mxu0 %v569
  %707 = vmatpush.bf16.msra.mxu0 %v568
  %708 = vmatpush.bf16.msra.mxu0 %v567
  %709 = vmatpush.bf16.msra.mxu0 %v566
  %710 = vmatpush.bf16.msra.mxu0 %v565
  %711 = vmatmul.bf16.gmra.mxu0 %v159
  %v712 = vpop.f32.mrf.mxu0
  %v713 = vadd.f32 %v700, %v712
  %v714 = vpop.f32.mrf.mxu0
  %715 = vdwg.mxu0
  %716 = vmatpush.bf16.msra.mxu0 %v580
  %717 = vmatpush.bf16.msra.mxu0 %v579
  %718 = vmatpush.bf16.msra.mxu0 %v578
  %719 = vmatpush.bf16.msra.mxu0 %v577
  %720 = vmatpush.bf16.msra.mxu0 %v576
  %721 = vmatpush.bf16.msra.mxu0 %v575
  %722 = vmatpush.bf16.msra.mxu0 %v574
  %723 = vmatpush.bf16.msra.mxu0 %v573
  %724 = vmatmul.bf16.gmra.mxu0 %v160
  %v725 = vpop.f32.mrf.mxu0
  %v726 = vadd.f32 %v713, %v725
  %v727 = vpop.f32.mrf.mxu0
  %728 = vdwg.mxu0
  %729 = vmatpush.bf16.msra.mxu0 %v588
  %730 = vmatpush.bf16.msra.mxu0 %v587
  %731 = vmatpush.bf16.msra.mxu0 %v586
  %732 = vmatpush.bf16.msra.mxu0 %v585
  %733 = vmatpush.bf16.msra.mxu0 %v584
  %734 = vmatpush.bf16.msra.mxu0 %v583
  %735 = vmatpush.bf16.msra.mxu0 %v582
  %736 = vmatpush.bf16.msra.mxu0 %v581
  %737 = vmatmul.bf16.gmra.mxu0 %v161
  %v738 = vpop.f32.mrf.mxu0
  %v739 = vadd.f32 %v726, %v738
  %v740 = vpop.f32.mrf.mxu0
  %741 = vdwg.mxu0
  %742 = vmatpush.bf16.msra.mxu0 %v596
  %743 = vmatpush.bf16.msra.mxu0 %v595
  %744 = vmatpush.bf16.msra.mxu0 %v594
  %745 = vmatpush.bf16.msra.mxu0 %v593
  %746 = vmatpush.bf16.msra.mxu0 %v592
  %747 = vmatpush.bf16.msra.mxu0 %v591
  %748 = vmatpush.bf16.msra.mxu0 %v590
  %749 = vmatpush.bf16.msra.mxu0 %v589
  %750 = vmatmul.bf16.gmra.mxu0 %v162
  %v751 = vpop.f32.mrf.mxu0
  %v752 = vadd.f32 %v739, %v751
  %v753 = vpop.f32.mrf.mxu0
  %754 = vdwg.mxu0
  %755 = vmatpush.bf16.msra.mxu0 %v604
  %756 = vmatpush.bf16.msra.mxu0 %v603
  %757 = vmatpush.bf16.msra.mxu0 %v602
  %758 = vmatpush.bf16.msra.mxu0 %v601
  %759 = vmatpush.bf16.msra.mxu0 %v600
  %760 = vmatpush.bf16.msra.mxu0 %v599
  %761 = vmatpush.bf16.msra.mxu0 %v598
  %762 = vmatpush.bf16.msra.mxu0 %v597
  %763 = vmatmul.bf16.gmra.mxu0 %v163
  %v764 = vpop.f32.mrf.mxu0
  %v765 = vadd.f32 %v752, %v764
  %v766 = vpop.f32.mrf.mxu0
  %767 = vdwg.mxu0
  %768 = vmatpush.bf16.msra.mxu0 %v612
  %769 = vmatpush.bf16.msra.mxu0 %v611
  %770 = vmatpush.bf16.msra.mxu0 %v610
  %771 = vmatpush.bf16.msra.mxu0 %v609
  %772 = vmatpush.bf16.msra.mxu0 %v608
  %773 = vmatpush.bf16.msra.mxu0 %v607
  %774 = vmatpush.bf16.msra.mxu0 %v606
  %775 = vmatpush.bf16.msra.mxu0 %v605
  %776 = vmatmul.bf16.gmra.mxu0 %v164
  %v777 = vpop.f32.mrf.mxu0
  %v778 = vadd.f32 %v765, %v777
  %v779 = vpop.f32.mrf.mxu0
  %780 = vdwg.mxu0
  %v781 = vadd.f32 %v135, %v778
  %782 = vst [vmem:[%s10] sm:$0x3] %v781
  // Predicated region
  $region38: #{snn_vgg9_forward.69} parent=0 // pred_check
    _
  $region39: #{snn_vgg9_forward.69} parent=0 // pred_check_branch
    %784 = sbr.rel (0) target = $region41
  $region40: #{snn_vgg9_forward.69} parent=0 // pred_region
    _
  $region41: #{snn_vgg9_forward.69} parent=0 // pred_fallthru
    _
  // Predicated region
  $region42: #{snn_vgg9_forward.69} parent=0 // pred_check
    _
  $region43: #{snn_vgg9_forward.69} parent=0 // pred_check_branch
    %786 = sbr.rel (0) target = $region45
  $region44: #{snn_vgg9_forward.69} parent=0 // pred_region
    _
  $region45: #{snn_vgg9_forward.69} parent=0 // pred_fallthru
    _
  // Predicated region
  $region46: #{snn_vgg9_forward.69} parent=0 // pred_check
    _
  $region47: #{snn_vgg9_forward.69} parent=0 // pred_check_branch
    %788 = sbr.rel (0) target = $region49
  $region48: #{snn_vgg9_forward.69} parent=0 // pred_region
    _
  $region49: #{snn_vgg9_forward.69} parent=0 // pred_fallthru
    _
  // Predicated region
  $region50: #{snn_vgg9_forward.69} parent=0 // pred_check
    _
  $region51: #{snn_vgg9_forward.69} parent=0 // pred_check_branch
    %790 = sbr.rel (0) target = $region53
  $region52: #{snn_vgg9_forward.69} parent=0 // pred_region
    _
  $region53: #{snn_vgg9_forward.69} parent=0 // pred_fallthru
    _

</llo_original>
